<compile_context>
chip_gen: v7x
topology: tpu7x:2x2x1
jax: 0.10.0
libtpu: 0.0.40
codegen_flags: <defaults>
</compile_context>

<pallas_src>
import functools
import math

import jax
import jax.numpy as jnp
from jax.experimental import pallas as pl
from jax.experimental.pallas import tpu as pltpu

NEG_INF = -1e9


# ----------------------------------------------------------------------------
# Small wrapper-side helpers
# ----------------------------------------------------------------------------

def _vmem_limit():
    """Generation-aware scoped-VMEM limit (v5e/v6e: 128 MiB physical, v7x: 64 MiB)."""
    try:
        cap = int(pltpu.get_tpu_info().vmem_capacity_bytes)
    except Exception:  # pragma: no cover - conservative fallback
        cap = 64 * 1024 * 1024
    return max(32 * 1024 * 1024, min(cap * 3 // 4, 100 * 1024 * 1024))


def _full(shape):
    """Whole-array BlockSpec for a grid=(1,) kernel (operand resident in VMEM)."""
    return pl.BlockSpec(shape, lambda i: (0,) * len(shape))


# ----------------------------------------------------------------------------
# In-kernel helpers (traced inside the Pallas kernels, not separate calls)
# ----------------------------------------------------------------------------

def _layernorm(z, g, b, eps=1e-5):
    mean = jnp.mean(z, axis=-1, keepdims=True)
    var = jnp.mean((z - mean) ** 2, axis=-1, keepdims=True)
    return (z - mean) * jax.lax.rsqrt(var + eps) * g + b


def _ffn(x, w1, b1, w2, b2):
    h = jnp.dot(x.astype(jnp.bfloat16), w1, preferred_element_type=jnp.float32) + b1
    h = jnp.maximum(h, 0.0)
    return jnp.dot(h.astype(jnp.bfloat16), w2, preferred_element_type=jnp.float32) + b2


def _mha_core(q_all, k_all, v_all, masks_add, wo, bo, batch, num_heads, d_k, lq, lk):
    """Multi-head attention with the batch folded into rows.

    q_all (B*lq, D), k_all/v_all (B*lk, D) f32; masks_add: list of B additive masks
    broadcastable to (lq, lk); wo (D, D) bf16; bo (1, D) f32.
    One fused softmax over all (batch, head) score rows; per-head P@V outputs are
    concatenated into their lane slots so the output projection is ONE (B*lq,D)@(D,D).
    """
    scale = 1.0 / math.sqrt(d_k)

    # 1) scores for every (batch, head), stacked along rows -> ONE fused softmax.
    s_parts = []
    for b in range(batch):
        qb = q_all[b * lq:(b + 1) * lq, :].astype(jnp.bfloat16)
        kb = k_all[b * lk:(b + 1) * lk, :].astype(jnp.bfloat16)
        for h in range(num_heads):
            sl = slice(h * d_k, (h + 1) * d_k)
            s = jax.lax.dot_general(qb[:, sl], kb[:, sl], (((1,), (1,)), ((), ())),
                                    preferred_element_type=jnp.float32)
            s_parts.append(s * scale + masks_add[b])
    s_all = jnp.concatenate(s_parts, axis=0)                       # (B*H*lq, lk) f32
    s_all = s_all - jnp.max(s_all, axis=-1, keepdims=True)
    p_all = jnp.exp(s_all)
    p_all = (p_all * pl.reciprocal(jnp.sum(p_all, axis=-1, keepdims=True),
                                   approx=True)).astype(jnp.bfloat16)

    # 2) per-head P@V written into its lane slot -> ONE (B*lq, D)@(D, D) W_o matmul.
    rows = []
    for b in range(batch):
        vb = v_all[b * lk:(b + 1) * lk, :].astype(jnp.bfloat16)
        heads = []
        for h in range(num_heads):
            r0 = (b * num_heads + h) * lq
            heads.append(jnp.dot(p_all[r0:r0 + lq, :], vb[:, h * d_k:(h + 1) * d_k],
                                 preferred_element_type=jnp.float32))
        rows.append(jnp.concatenate(heads, axis=1))                # (lq, D)
    o = jnp.concatenate(rows, axis=0)                              # (B*lq, D) f32
    return jnp.dot(o.astype(jnp.bfloat16), wo,
                   preferred_element_type=jnp.float32) + bo


# ----------------------------------------------------------------------------
# Fused stack kernels (one pallas_call for the whole encoder / decoder)
# ----------------------------------------------------------------------------

def encoder_stack_kernel(x_ref, smask_ref,
                         wqkv_ref, bqkv_ref, wo_ref, bo_ref,
                         ln1g_ref, ln1b_ref,
                         w1_ref, b1_ref, w2_ref, b2_ref,
                         ln2g_ref, ln2b_ref,
                         mem_ref, *, num_layers, num_heads, d_k, batch, seq):
    B, S, H = batch, seq, num_heads
    D = H * d_k
    x = x_ref[...].reshape(B * S, D)                   # batch folded into rows
    smask = smask_ref[...]                             # (B, 1, S) additive f32
    smasks = [smask[b] for b in range(B)]

    def layer(l, x):
        qkv = jnp.dot(x.astype(jnp.bfloat16), wqkv_ref[l],
                      preferred_element_type=jnp.float32) + bqkv_ref[l]
        attn = _mha_core(qkv[:, :D], qkv[:, D:2 * D], qkv[:, 2 * D:], smasks,
                         wo_ref[l], bo_ref[l], B, H, d_k, S, S)
        x1 = _layernorm(x + attn, ln1g_ref[l], ln1b_ref[l])
        f = _ffn(x1, w1_ref[l], b1_ref[l], w2_ref[l], b2_ref[l])
        return _layernorm(x1 + f, ln2g_ref[l], ln2b_ref[l])

    x = jax.lax.fori_loop(0, num_layers, layer, x, unroll=True)
    mem_ref[...] = x.reshape(B, S, D).astype(mem_ref.dtype)        # bf16 memory out


def decoder_stack_kernel(tgt_ref, mem_ref, smask_ref, pe_ref,
                         ohw_ref, ohb_ref,
                         wqkvs_ref, bqkvs_ref, wos_ref, bos_ref,
                         ln1g_ref, ln1b_ref,
                         wqc_ref, bqc_ref, wkvc_ref, bkvc_ref, woc_ref, boc_ref,
                         ln2g_ref, ln2b_ref,
                         w1_ref, b1_ref, w2_ref, b2_ref,
                         ln3g_ref, ln3b_ref,
                         outw_ref, outb_ref,
                         logits_ref, *, num_layers, num_heads, d_k, batch, lt, ss):
    B, Lt, Ss, H = batch, lt, ss, num_heads
    D = H * d_k
    tgt = tgt_ref[...]                                  # (B, Lt, V) f32
    V = tgt.shape[2]
    mem = mem_ref[...].reshape(B * Ss, D)               # (B*Ss, D) bf16 memory
    smask = smask_ref[...]                              # (B, 1, Ss) additive f32
    smasks = [smask[b] for b in range(B)]

    # target mask built IN-KERNEL: padding (mean over vocab != 0) & causal via iota.
    pad_add = jnp.where(jnp.mean(tgt, axis=2) != 0.0, 0.0, NEG_INF)        # (B, Lt)
    row = jax.lax.broadcasted_iota(jnp.int32, (Lt, Lt), 0)
    col = jax.lax.broadcasted_iota(jnp.int32, (Lt, Lt), 1)
    causal_add = jnp.where(col <= row, 0.0, NEG_INF)                       # (Lt, Lt)
    tmasks = [causal_add + pad_add[b:b + 1, :] for b in range(B)]

    # one-hot / soft-target -> d_model projection + positional encoding, fused in.
    y = jnp.dot(tgt.reshape(B * Lt, V).astype(jnp.bfloat16), ohw_ref[...],
                preferred_element_type=jnp.float32) + ohb_ref[...]
    y = (y.reshape(B, Lt, D) + pe_ref[...]).reshape(B * Lt, D)

    def layer(l, y):
        # masked self-attention + residual + LN1
        qkv = jnp.dot(y.astype(jnp.bfloat16), wqkvs_ref[l],
                      preferred_element_type=jnp.float32) + bqkvs_ref[l]
        attn = _mha_core(qkv[:, :D], qkv[:, D:2 * D], qkv[:, 2 * D:], tmasks,
                         wos_ref[l], bos_ref[l], B, H, d_k, Lt, Lt)
        y1 = _layernorm(y + attn, ln1g_ref[l], ln1b_ref[l])

        # cross-attention over encoder memory + residual + LN2
        q = jnp.dot(y1.astype(jnp.bfloat16), wqc_ref[l],
                    preferred_element_type=jnp.float32) + bqc_ref[l]
        kv = jnp.dot(mem, wkvc_ref[l],
                     preferred_element_type=jnp.float32) + bkvc_ref[l]
        attn = _mha_core(q, kv[:, :D], kv[:, D:], smasks,
                         woc_ref[l], boc_ref[l], B, H, d_k, Lt, Ss)
        y2 = _layernorm(y1 + attn, ln2g_ref[l], ln2b_ref[l])

        # feed-forward + residual + LN3
        f = _ffn(y2, w1_ref[l], b1_ref[l], w2_ref[l], b2_ref[l])
        return _layernorm(y2 + f, ln3g_ref[l], ln3b_ref[l])

    y = jax.lax.fori_loop(0, num_layers, layer, y, unroll=True)

    # output head (lane-padded to a multiple of 128 for lane-dense stores)
    logits = jnp.dot(y.astype(jnp.bfloat16), outw_ref[...],
                     preferred_element_type=jnp.float32) + outb_ref[...]
    logits_ref[...] = logits.reshape(B, Lt, logits.shape[1])


# ----------------------------------------------------------------------------
# pallas_call wrappers
# ----------------------------------------------------------------------------

def encoder_stack(x, src_add, ep, cfg):
    B, S, D = x.shape
    L, H, dff = cfg["num_layers"], cfg["num_heads"], cfg["d_ff"]
    dk = D // H
    kern = functools.partial(encoder_stack_kernel, num_layers=L, num_heads=H,
                             d_k=dk, batch=B, seq=S)

    flops = int(L * B * (8 * S * D * D + 4 * H * S * S * dk + 4 * S * D * dff))
    bytes_acc = int(4 * B * S * D + 2 * B * S * D + 4 * B * S
                    + L * (2 * (4 * D * D + 2 * D * dff) + 4 * (9 * D + dff)))

    in_specs = [
        _full((B, S, D)),                                  # x (embedded + PE)
        _full((B, 1, S)),                                  # additive src mask
        _full((L, D, 3 * D)), _full((L, 1, 3 * D)),        # fused QKV (stacked over L)
        _full((L, D, D)), _full((L, 1, D)),                # output proj
        _full((L, 1, D)), _full((L, 1, D)),                # LN1
        _full((L, D, dff)), _full((L, 1, dff)),            # FFN w1/b1
        _full((L, dff, D)), _full((L, 1, D)),              # FFN w2/b2
        _full((L, 1, D)), _full((L, 1, D)),                # LN2
    ]
    return pl.pallas_call(
        kern,
        out_shape=jax.ShapeDtypeStruct((B, S, D), jnp.bfloat16),   # bf16 memory
        grid=(1,),
        in_specs=in_specs,
        out_specs=_full((B, S, D)),
        compiler_params=pltpu.CompilerParams(
            dimension_semantics=("arbitrary",),
            vmem_limit_bytes=_vmem_limit()),
        cost_estimate=pl.CostEstimate(flops=flops,
                                      transcendentals=int(L * B * H * S * S),
                                      bytes_accessed=bytes_acc),
    )(x, src_add,
      ep["wqkv"], ep["bqkv"], ep["wo"], ep["bo"],
      ep["ln1_g"], ep["ln1_b"],
      ep["w1"], ep["b1"], ep["w2"], ep["b2"],
      ep["ln2_g"], ep["ln2_b"])


def decoder_stack(tgt, memory, src_add, pe_t, params, cfg):
    B, Lt, V = tgt.shape
    Ss, D = memory.shape[1], memory.shape[2]
    L, H, dff = cfg["num_layers"], cfg["num_heads"], cfg["d_ff"]
    dk = D // H
    dp = params["dec"]
    Vp = params["out_w"].shape[1]
    kern = functools.partial(decoder_stack_kernel, num_layers=L, num_heads=H,
                             d_k=dk, batch=B, lt=Lt, ss=Ss)

    flops = int(2 * B * Lt * V * D + 2 * B * Lt * D * Vp
                + L * B * (12 * Lt * D * D + 4 * Ss * D * D
                           + 4 * H * Lt * Lt * dk + 4 * H * Lt * Ss * dk
                           + 4 * Lt * D * dff))
    bytes_acc = int(4 * B * Lt * V + 2 * B * Ss * D + 4 * B * Ss + 4 * Lt * D
                    + 4 * B * Lt * Vp + 2 * (V * D + D * Vp)
                    + L * (2 * (8 * D * D + 2 * D * dff) + 4 * (14 * D + dff)))

    in_specs = [
        _full((B, Lt, V)),                                 # tgt (one-hot / soft targets)
        _full((B, Ss, D)),                                 # encoder memory (bf16)
        _full((B, 1, Ss)),                                 # additive src mask
        _full((1, Lt, D)),                                 # positional encoding slice
        _full((V, D)), _full((1, D)),                      # onehot -> d_model
        _full((L, D, 3 * D)), _full((L, 1, 3 * D)),        # self-attn fused QKV
        _full((L, D, D)), _full((L, 1, D)),                # self-attn out proj
        _full((L, 1, D)), _full((L, 1, D)),                # LN1
        _full((L, D, D)), _full((L, 1, D)),                # cross-attn Q
        _full((L, D, 2 * D)), _full((L, 1, 2 * D)),        # cross-attn fused KV
        _full((L, D, D)), _full((L, 1, D)),                # cross-attn out proj
        _full((L, 1, D)), _full((L, 1, D)),                # LN2
        _full((L, D, dff)), _full((L, 1, dff)),            # FFN w1/b1
        _full((L, dff, D)), _full((L, 1, D)),              # FFN w2/b2
        _full((L, 1, D)), _full((L, 1, D)),                # LN3
        _full((D, Vp)), _full((1, Vp)),                    # output head (lane-padded)
    ]
    return pl.pallas_call(
        kern,
        out_shape=jax.ShapeDtypeStruct((B, Lt, Vp), jnp.float32),
        grid=(1,),
        in_specs=in_specs,
        out_specs=_full((B, Lt, Vp)),
        compiler_params=pltpu.CompilerParams(
            dimension_semantics=("arbitrary",),
            vmem_limit_bytes=_vmem_limit()),
        cost_estimate=pl.CostEstimate(flops=flops,
                                      transcendentals=int(L * B * H * Lt * (Lt + Ss)),
                                      bytes_accessed=bytes_acc),
    )(tgt, memory, src_add, pe_t,
      params["onehot_w"], params["onehot_b"],
      dp["wqkv_s"], dp["bqkv_s"], dp["wo_s"], dp["bo_s"],
      dp["ln1_g"], dp["ln1_b"],
      dp["wq_c"], dp["bq_c"], dp["wkv_c"], dp["bkv_c"], dp["wo_c"], dp["bo_c"],
      dp["ln2_g"], dp["ln2_b"],
      dp["w1"], dp["b1"], dp["w2"], dp["b2"],
      dp["ln3_g"], dp["ln3_b"],
      params["out_w"], params["out_b"])


# ----------------------------------------------------------------------------
# Model glue (plain JAX) + forward
# ----------------------------------------------------------------------------

def positional_encoding(max_len, d_model):
    position = jnp.arange(max_len, dtype=jnp.float32)[:, None]
    div_term = jnp.exp(
        jnp.arange(0, d_model, 2, dtype=jnp.float32) * (-math.log(10000.0) / d_model))
    pe = jnp.zeros((max_len, d_model), jnp.float32)
    pe = pe.at[:, 0::2].set(jnp.sin(position * div_term))
    pe = pe.at[:, 1::2].set(jnp.cos(position * div_term))
    return pe[None]  # (1, max_len, d_model)


def inst_transformer_forward(params, src, tgt, cfg):
    V = cfg["tgt_vocab"]
    B, Ss = src.shape
    Lt = tgt.shape[1]
    pe = params["pe"]

    # additive src mask (0 keep / -1e9 masked), built once and shared by both stacks
    src_add = jnp.where(src != 0, 0.0, NEG_INF).astype(jnp.float32)[:, None, :]  # (B,1,Ss)

    # encoder: embedding gather + PE in JAX glue, whole layer stack in one kernel
    x = jnp.take(params["enc_emb"], src, axis=0) + pe[:, :Ss, :]
    memory = encoder_stack(x, src_add, params["enc"], cfg)           # (B,Ss,D) bf16

    # decoder: onehot-proj + PE + all layers + output head in one kernel
    logits = decoder_stack(tgt, memory, src_add, pe[:, :Lt, :], params, cfg)
    return logits[:, :, :V]


# ----------------------------------------------------------------------------
# Deterministic parameter init (per-layer weights stacked along a leading L axis)
# ----------------------------------------------------------------------------

def init_params(key, cfg):
    D, dff, L = cfg["d_model"], cfg["d_ff"], cfg["num_layers"]
    sv, tv = cfg["src_vocab"], cfg["tgt_vocab"]
    keys = iter(jax.random.split(key, 4096))

    def w(shape, scale=0.02):
        return (scale * jax.random.normal(next(keys), shape)).astype(jnp.float32)

    bf = lambda a: a.astype(jnp.bfloat16)
    ones = lambda: jnp.ones((1, D), jnp.float32)
    zeros = lambda: jnp.zeros((1, D), jnp.float32)

    def enc_layer():
        wq, wk, wv, wo = (w((D, D)) for _ in range(4))
        bq, bk, bv, bo = (w((D,)) for _ in range(4))
        return {
            "wqkv": bf(jnp.concatenate([wq, wk, wv], axis=1)),
            "bqkv": jnp.concatenate([bq, bk, bv])[None],
            "wo": bf(wo), "bo": bo[None],
            "ln1_g": ones(), "ln1_b": zeros(),
            "w1": bf(w((D, dff))), "b1": w((dff,))[None],
            "w2": bf(w((dff, D))), "b2": w((D,))[None],
            "ln2_g": ones(), "ln2_b": zeros(),
        }

    def dec_layer():
        wq, wk, wv, wo = (w((D, D)) for _ in range(4))
        bq, bk, bv, bo = (w((D,)) for _ in range(4))
        cq, ck, cv, co = (w((D, D)) for _ in range(4))
        cbq, cbk, cbv, cbo = (w((D,)) for _ in range(4))
        return {
            "wqkv_s": bf(jnp.concatenate([wq, wk, wv], axis=1)),
            "bqkv_s": jnp.concatenate([bq, bk, bv])[None],
            "wo_s": bf(wo), "bo_s": bo[None],
            "ln1_g": ones(), "ln1_b": zeros(),
            "wq_c": bf(cq), "bq_c": cbq[None],
            "wkv_c": bf(jnp.concatenate([ck, cv], axis=1)),
            "bkv_c": jnp.concatenate([cbk, cbv])[None],
            "wo_c": bf(co), "bo_c": cbo[None],
            "ln2_g": ones(), "ln2_b": zeros(),
            "w1": bf(w((D, dff))), "b1": w((dff,))[None],
            "w2": bf(w((dff, D))), "b2": w((D,))[None],
            "ln3_g": ones(), "ln3_b": zeros(),
        }

    def stack(make):
        layers = [make() for _ in range(L)]
        return {k: jnp.stack([lyr[k] for lyr in layers], axis=0) for k in layers[0]}

    # output head, lane-padded to a multiple of 128 (zero columns, sliced off in forward)
    n_pad = ((tv + 127) // 128) * 128
    out_w = jnp.zeros((D, n_pad), jnp.float32).at[:, :tv].set(w((D, tv)))
    out_b = jnp.zeros((n_pad,), jnp.float32).at[:tv].set(w((tv,)))

    return {
        "enc_emb": w((sv, D)),
        "onehot_w": bf(w((tv, D))), "onehot_b": w((D,))[None],
        "enc": stack(enc_layer),
        "dec": stack(dec_layer),
        "out_w": bf(out_w), "out_b": out_b[None],
        "pe": positional_encoding(cfg["max_len"], D),
    }


# ----------------------------------------------------------------------------
# Main
# ----------------------------------------------------------------------------

if __name__ == "__main__":
    cfg = dict(
        src_vocab=50,
        tgt_vocab=40,
        d_model=32,
        num_heads=4,
        d_ff=64,
        num_layers=2,
        max_len=128,
    )

    key = jax.random.PRNGKey(0)
    kp, ks, kt = jax.random.split(key, 3)

    params = init_params(kp, cfg)

    B, Ss, Lt = 2, 8, 8
    # src: integer token ids (with zeros so the padding mask matters)
    src = jax.random.randint(ks, (B, Ss), 0, cfg["src_vocab"], dtype=jnp.int32)
    src = src.at[:, -1].set(0)
    # tgt: float "one-hot-like" input of shape (B, Lt, tgt_vocab); last step padded
    tgt_ids = jax.random.randint(kt, (B, Lt), 1, cfg["tgt_vocab"], dtype=jnp.int32)
    tgt = jax.nn.one_hot(tgt_ids, cfg["tgt_vocab"], dtype=jnp.float32)
    tgt = tgt.at[:, -1, :].set(0.0)

    fwd = jax.jit(functools.partial(inst_transformer_forward, cfg=cfg))
    out = jax.block_until_ready(fwd(params, src, tgt))

    assert out.shape == (B, Lt, cfg["tgt_vocab"])
    assert jnp.all(jnp.isfinite(out))
    print("KERNEL_OK")
</pallas_src>

<mosaic_0001>
module attributes {stable_mosaic.version = 11 : i64} {
  func.func @encoder_stack_kernel(%arg0: i32, %arg1: memref<2x8x32xf32, #tpu.memory_space<vmem>>, %arg2: memref<2x1x8xf32, #tpu.memory_space<vmem>>, %arg3: memref<2x32x96xbf16, #tpu.memory_space<vmem>>, %arg4: memref<2x1x96xf32, #tpu.memory_space<vmem>>, %arg5: memref<2x32x32xbf16, #tpu.memory_space<vmem>>, %arg6: memref<2x1x32xf32, #tpu.memory_space<vmem>>, %arg7: memref<2x1x32xf32, #tpu.memory_space<vmem>>, %arg8: memref<2x1x32xf32, #tpu.memory_space<vmem>>, %arg9: memref<2x32x64xbf16, #tpu.memory_space<vmem>>, %arg10: memref<2x1x64xf32, #tpu.memory_space<vmem>>, %arg11: memref<2x64x32xbf16, #tpu.memory_space<vmem>>, %arg12: memref<2x1x32xf32, #tpu.memory_space<vmem>>, %arg13: memref<2x1x32xf32, #tpu.memory_space<vmem>>, %arg14: memref<2x1x32xf32, #tpu.memory_space<vmem>>, %arg15: memref<2x8x32xbf16, #tpu.memory_space<vmem>>) attributes {dimension_semantics = [#tpu.dimension_semantics<arbitrary>], iteration_bounds = array<i64: 1>, scalar_prefetch = 0 : i64, scratch_operands = 0 : i64, tpu.core_type = #tpu.core_type<tc>, window_params = [{pipeline_mode = #tpu.pipeline_mode<synchronous>, transform_indices = @transform_0, window_bounds = array<i64: 2, 8, 32>}, {pipeline_mode = #tpu.pipeline_mode<synchronous>, transform_indices = @transform_1, window_bounds = array<i64: 2, 1, 8>}, {pipeline_mode = #tpu.pipeline_mode<synchronous>, transform_indices = @transform_2, window_bounds = array<i64: 2, 32, 96>}, {pipeline_mode = #tpu.pipeline_mode<synchronous>, transform_indices = @transform_3, window_bounds = array<i64: 2, 1, 96>}, {pipeline_mode = #tpu.pipeline_mode<synchronous>, transform_indices = @transform_4, window_bounds = array<i64: 2, 32, 32>}, {pipeline_mode = #tpu.pipeline_mode<synchronous>, transform_indices = @transform_5, window_bounds = array<i64: 2, 1, 32>}, {pipeline_mode = #tpu.pipeline_mode<synchronous>, transform_indices = @transform_6, window_bounds = array<i64: 2, 1, 32>}, {pipeline_mode = #tpu.pipeline_mode<synchronous>, transform_indices = @transform_7, window_bounds = array<i64: 2, 1, 32>}, {pipeline_mode = #tpu.pipeline_mode<synchronous>, transform_indices = @transform_8, window_bounds = array<i64: 2, 32, 64>}, {pipeline_mode = #tpu.pipeline_mode<synchronous>, transform_indices = @transform_9, window_bounds = array<i64: 2, 1, 64>}, {pipeline_mode = #tpu.pipeline_mode<synchronous>, transform_indices = @transform_10, window_bounds = array<i64: 2, 64, 32>}, {pipeline_mode = #tpu.pipeline_mode<synchronous>, transform_indices = @transform_11, window_bounds = array<i64: 2, 1, 32>}, {pipeline_mode = #tpu.pipeline_mode<synchronous>, transform_indices = @transform_12, window_bounds = array<i64: 2, 1, 32>}, {pipeline_mode = #tpu.pipeline_mode<synchronous>, transform_indices = @transform_13, window_bounds = array<i64: 2, 1, 32>}, {pipeline_mode = #tpu.pipeline_mode<synchronous>, transform_indices = @transform_14, window_bounds = array<i64: 2, 8, 32>}]} {
    %c0 = arith.constant 0 : index
    %c0_0 = arith.constant 0 : index
    %c0_1 = arith.constant 0 : index
    %0 = vector.load %arg1[%c0, %c0_0, %c0_1] : memref<2x8x32xf32, #tpu.memory_space<vmem>>, vector<2x8x32xf32>
    %1 = vector.shape_cast %0 : vector<2x8x32xf32> to vector<16x32xf32>
    %c0_2 = arith.constant 0 : index
    %c0_3 = arith.constant 0 : index
    %c0_4 = arith.constant 0 : index
    %2 = vector.load %arg2[%c0_2, %c0_3, %c0_4] : memref<2x1x8xf32, #tpu.memory_space<vmem>>, vector<2x1x8xf32>
    %3 = vector.extract_strided_slice %2 {offsets = [0, 0, 0], sizes = [1, 1, 8], strides = [1, 1, 1]} : vector<2x1x8xf32> to vector<1x1x8xf32>
    %4 = vector.shape_cast %3 : vector<1x1x8xf32> to vector<1x8xf32>
    %5 = vector.extract_strided_slice %2 {offsets = [1, 0, 0], sizes = [1, 1, 8], strides = [1, 1, 1]} : vector<2x1x8xf32> to vector<1x1x8xf32>
    %6 = vector.shape_cast %5 : vector<1x1x8xf32> to vector<1x8xf32>
    %c0_i32 = arith.constant 0 : i32
    %7 = arith.truncf %1 : vector<16x32xf32> to vector<16x32xbf16>
    %8 = arith.index_cast %c0_i32 : i32 to index
    %c0_5 = arith.constant 0 : index
    %c0_6 = arith.constant 0 : index
    %9 = vector.load %arg3[%8, %c0_5, %c0_6] : memref<2x32x96xbf16, #tpu.memory_space<vmem>>, vector<1x32x96xbf16>
    %10 = vector.shape_cast %9 : vector<1x32x96xbf16> to vector<32x96xbf16>
    %cst = arith.constant dense<0.000000e+00> : vector<16x96xf32>
    %11 = tpu.matmul %7, %10, %cst {dimension_numbers = #tpu.dot_dimension_numbers<[1], [0], [0], [1], [0, 0, 1, 1], [], []>} : vector<16x32xbf16>, vector<32x96xbf16>, vector<16x96xf32> -> vector<16x96xf32>
    %12 = arith.index_cast %c0_i32 : i32 to index
    %c0_7 = arith.constant 0 : index
    %c0_8 = arith.constant 0 : index
    %13 = vector.load %arg4[%12, %c0_7, %c0_8] : memref<2x1x96xf32, #tpu.memory_space<vmem>>, vector<1x1x96xf32>
    %14 = vector.shape_cast %13 : vector<1x1x96xf32> to vector<1x96xf32>
    %15 = vector.broadcast %14 : vector<1x96xf32> to vector<16x96xf32>
    %16 = arith.addf %11, %15 : vector<16x96xf32>
    %17 = vector.extract_strided_slice %16 {offsets = [0, 0], sizes = [16, 32], strides = [1, 1]} : vector<16x96xf32> to vector<16x32xf32>
    %18 = vector.extract_strided_slice %16 {offsets = [0, 32], sizes = [16, 32], strides = [1, 1]} : vector<16x96xf32> to vector<16x32xf32>
    %19 = vector.extract_strided_slice %16 {offsets = [0, 64], sizes = [16, 32], strides = [1, 1]} : vector<16x96xf32> to vector<16x32xf32>
    %20 = arith.index_cast %c0_i32 : i32 to index
    %c0_9 = arith.constant 0 : index
    %c0_10 = arith.constant 0 : index
    %21 = vector.load %arg5[%20, %c0_9, %c0_10] : memref<2x32x32xbf16, #tpu.memory_space<vmem>>, vector<1x32x32xbf16>
    %22 = vector.shape_cast %21 : vector<1x32x32xbf16> to vector<32x32xbf16>
    %23 = arith.index_cast %c0_i32 : i32 to index
    %c0_11 = arith.constant 0 : index
    %c0_12 = arith.constant 0 : index
    %24 = vector.load %arg6[%23, %c0_11, %c0_12] : memref<2x1x32xf32, #tpu.memory_space<vmem>>, vector<1x1x32xf32>
    %25 = vector.shape_cast %24 : vector<1x1x32xf32> to vector<1x32xf32>
    %26 = vector.extract_strided_slice %17 {offsets = [0, 0], sizes = [8, 32], strides = [1, 1]} : vector<16x32xf32> to vector<8x32xf32>
    %27 = arith.truncf %26 : vector<8x32xf32> to vector<8x32xbf16>
    %28 = vector.extract_strided_slice %18 {offsets = [0, 0], sizes = [8, 32], strides = [1, 1]} : vector<16x32xf32> to vector<8x32xf32>
    %29 = arith.truncf %28 : vector<8x32xf32> to vector<8x32xbf16>
    %30 = vector.extract_strided_slice %27 {offsets = [0, 0], sizes = [8, 8], strides = [1, 1]} : vector<8x32xbf16> to vector<8x8xbf16>
    %31 = vector.extract_strided_slice %29 {offsets = [0, 0], sizes = [8, 8], strides = [1, 1]} : vector<8x32xbf16> to vector<8x8xbf16>
    %cst_13 = arith.constant dense<0.000000e+00> : vector<8x8xf32>
    %32 = tpu.matmul %30, %31, %cst_13 {dimension_numbers = #tpu.dot_dimension_numbers<[1], [1], [0], [0], [0, 0, 1, 0], [], []>} : vector<8x8xbf16>, vector<8x8xbf16>, vector<8x8xf32> -> vector<8x8xf32>
    %cst_14 = arith.constant 0.353553385 : f32
    %33 = vector.broadcast %cst_14 : f32 to vector<8x8xf32>
    %34 = arith.mulf %32, %33 : vector<8x8xf32>
    %35 = vector.broadcast %4 : vector<1x8xf32> to vector<8x8xf32>
    %36 = arith.addf %34, %35 : vector<8x8xf32>
    %37 = vector.extract_strided_slice %27 {offsets = [0, 8], sizes = [8, 8], strides = [1, 1]} : vector<8x32xbf16> to vector<8x8xbf16>
    %38 = vector.extract_strided_slice %29 {offsets = [0, 8], sizes = [8, 8], strides = [1, 1]} : vector<8x32xbf16> to vector<8x8xbf16>
    %cst_15 = arith.constant dense<0.000000e+00> : vector<8x8xf32>
    %39 = tpu.matmul %37, %38, %cst_15 {dimension_numbers = #tpu.dot_dimension_numbers<[1], [1], [0], [0], [0, 0, 1, 0], [], []>} : vector<8x8xbf16>, vector<8x8xbf16>, vector<8x8xf32> -> vector<8x8xf32>
    %cst_16 = arith.constant 0.353553385 : f32
    %40 = vector.broadcast %cst_16 : f32 to vector<8x8xf32>
    %41 = arith.mulf %39, %40 : vector<8x8xf32>
    %42 = vector.broadcast %4 : vector<1x8xf32> to vector<8x8xf32>
    %43 = arith.addf %41, %42 : vector<8x8xf32>
    %44 = vector.extract_strided_slice %27 {offsets = [0, 16], sizes = [8, 8], strides = [1, 1]} : vector<8x32xbf16> to vector<8x8xbf16>
    %45 = vector.extract_strided_slice %29 {offsets = [0, 16], sizes = [8, 8], strides = [1, 1]} : vector<8x32xbf16> to vector<8x8xbf16>
    %cst_17 = arith.constant dense<0.000000e+00> : vector<8x8xf32>
    %46 = tpu.matmul %44, %45, %cst_17 {dimension_numbers = #tpu.dot_dimension_numbers<[1], [1], [0], [0], [0, 0, 1, 0], [], []>} : vector<8x8xbf16>, vector<8x8xbf16>, vector<8x8xf32> -> vector<8x8xf32>
    %cst_18 = arith.constant 0.353553385 : f32
    %47 = vector.broadcast %cst_18 : f32 to vector<8x8xf32>
    %48 = arith.mulf %46, %47 : vector<8x8xf32>
    %49 = vector.broadcast %4 : vector<1x8xf32> to vector<8x8xf32>
    %50 = arith.addf %48, %49 : vector<8x8xf32>
    %51 = vector.extract_strided_slice %27 {offsets = [0, 24], sizes = [8, 8], strides = [1, 1]} : vector<8x32xbf16> to vector<8x8xbf16>
    %52 = vector.extract_strided_slice %29 {offsets = [0, 24], sizes = [8, 8], strides = [1, 1]} : vector<8x32xbf16> to vector<8x8xbf16>
    %cst_19 = arith.constant dense<0.000000e+00> : vector<8x8xf32>
    %53 = tpu.matmul %51, %52, %cst_19 {dimension_numbers = #tpu.dot_dimension_numbers<[1], [1], [0], [0], [0, 0, 1, 0], [], []>} : vector<8x8xbf16>, vector<8x8xbf16>, vector<8x8xf32> -> vector<8x8xf32>
    %cst_20 = arith.constant 0.353553385 : f32
    %54 = vector.broadcast %cst_20 : f32 to vector<8x8xf32>
    %55 = arith.mulf %53, %54 : vector<8x8xf32>
    %56 = vector.broadcast %4 : vector<1x8xf32> to vector<8x8xf32>
    %57 = arith.addf %55, %56 : vector<8x8xf32>
    %58 = vector.extract_strided_slice %17 {offsets = [8, 0], sizes = [8, 32], strides = [1, 1]} : vector<16x32xf32> to vector<8x32xf32>
    %59 = arith.truncf %58 : vector<8x32xf32> to vector<8x32xbf16>
    %60 = vector.extract_strided_slice %18 {offsets = [8, 0], sizes = [8, 32], strides = [1, 1]} : vector<16x32xf32> to vector<8x32xf32>
    %61 = arith.truncf %60 : vector<8x32xf32> to vector<8x32xbf16>
    %62 = vector.extract_strided_slice %59 {offsets = [0, 0], sizes = [8, 8], strides = [1, 1]} : vector<8x32xbf16> to vector<8x8xbf16>
    %63 = vector.extract_strided_slice %61 {offsets = [0, 0], sizes = [8, 8], strides = [1, 1]} : vector<8x32xbf16> to vector<8x8xbf16>
    %cst_21 = arith.constant dense<0.000000e+00> : vector<8x8xf32>
    %64 = tpu.matmul %62, %63, %cst_21 {dimension_numbers = #tpu.dot_dimension_numbers<[1], [1], [0], [0], [0, 0, 1, 0], [], []>} : vector<8x8xbf16>, vector<8x8xbf16>, vector<8x8xf32> -> vector<8x8xf32>
    %cst_22 = arith.constant 0.353553385 : f32
    %65 = vector.broadcast %cst_22 : f32 to vector<8x8xf32>
    %66 = arith.mulf %64, %65 : vector<8x8xf32>
    %67 = vector.broadcast %6 : vector<1x8xf32> to vector<8x8xf32>
    %68 = arith.addf %66, %67 : vector<8x8xf32>
    %69 = vector.extract_strided_slice %59 {offsets = [0, 8], sizes = [8, 8], strides = [1, 1]} : vector<8x32xbf16> to vector<8x8xbf16>
    %70 = vector.extract_strided_slice %61 {offsets = [0, 8], sizes = [8, 8], strides = [1, 1]} : vector<8x32xbf16> to vector<8x8xbf16>
    %cst_23 = arith.constant dense<0.000000e+00> : vector<8x8xf32>
    %71 = tpu.matmul %69, %70, %cst_23 {dimension_numbers = #tpu.dot_dimension_numbers<[1], [1], [0], [0], [0, 0, 1, 0], [], []>} : vector<8x8xbf16>, vector<8x8xbf16>, vector<8x8xf32> -> vector<8x8xf32>
    %cst_24 = arith.constant 0.353553385 : f32
    %72 = vector.broadcast %cst_24 : f32 to vector<8x8xf32>
    %73 = arith.mulf %71, %72 : vector<8x8xf32>
    %74 = vector.broadcast %6 : vector<1x8xf32> to vector<8x8xf32>
    %75 = arith.addf %73, %74 : vector<8x8xf32>
    %76 = vector.extract_strided_slice %59 {offsets = [0, 16], sizes = [8, 8], strides = [1, 1]} : vector<8x32xbf16> to vector<8x8xbf16>
    %77 = vector.extract_strided_slice %61 {offsets = [0, 16], sizes = [8, 8], strides = [1, 1]} : vector<8x32xbf16> to vector<8x8xbf16>
    %cst_25 = arith.constant dense<0.000000e+00> : vector<8x8xf32>
    %78 = tpu.matmul %76, %77, %cst_25 {dimension_numbers = #tpu.dot_dimension_numbers<[1], [1], [0], [0], [0, 0, 1, 0], [], []>} : vector<8x8xbf16>, vector<8x8xbf16>, vector<8x8xf32> -> vector<8x8xf32>
    %cst_26 = arith.constant 0.353553385 : f32
    %79 = vector.broadcast %cst_26 : f32 to vector<8x8xf32>
    %80 = arith.mulf %78, %79 : vector<8x8xf32>
    %81 = vector.broadcast %6 : vector<1x8xf32> to vector<8x8xf32>
    %82 = arith.addf %80, %81 : vector<8x8xf32>
    %83 = vector.extract_strided_slice %59 {offsets = [0, 24], sizes = [8, 8], strides = [1, 1]} : vector<8x32xbf16> to vector<8x8xbf16>
    %84 = vector.extract_strided_slice %61 {offsets = [0, 24], sizes = [8, 8], strides = [1, 1]} : vector<8x32xbf16> to vector<8x8xbf16>
    %cst_27 = arith.constant dense<0.000000e+00> : vector<8x8xf32>
    %85 = tpu.matmul %83, %84, %cst_27 {dimension_numbers = #tpu.dot_dimension_numbers<[1], [1], [0], [0], [0, 0, 1, 0], [], []>} : vector<8x8xbf16>, vector<8x8xbf16>, vector<8x8xf32> -> vector<8x8xf32>
    %cst_28 = arith.constant 0.353553385 : f32
    %86 = vector.broadcast %cst_28 : f32 to vector<8x8xf32>
    %87 = arith.mulf %85, %86 : vector<8x8xf32>
    %88 = vector.broadcast %6 : vector<1x8xf32> to vector<8x8xf32>
    %89 = arith.addf %87, %88 : vector<8x8xf32>
    %90 = tpu.concatenate %36, %43, %50, %57, %68, %75, %82, %89 in 0 : vector<8x8xf32>, vector<8x8xf32>, vector<8x8xf32>, vector<8x8xf32>, vector<8x8xf32>, vector<8x8xf32>, vector<8x8xf32>, vector<8x8xf32> -> vector<64x8xf32>
    %cst_29 = arith.constant dense<0xFF800000> : vector<64xf32>
    %91 = vector.multi_reduction <maximumf>, %90, %cst_29 [1] : vector<64x8xf32> to vector<64xf32>
    %92 = vector.shape_cast %91 : vector<64xf32> to vector<64x1xf32>
    %93 = vector.broadcast %92 : vector<64x1xf32> to vector<64x8xf32>
    %94 = arith.subf %90, %93 : vector<64x8xf32>
    %95 = math.exp %94 : vector<64x8xf32>
    %cst_30 = arith.constant dense<0.000000e+00> : vector<64xf32>
    %96 = vector.multi_reduction <add>, %95, %cst_30 [1] : vector<64x8xf32> to vector<64xf32>
    %97 = vector.shape_cast %96 : vector<64xf32> to vector<64x1xf32>
    %98 = tpu.reciprocal %97 {approx = true} : vector<64x1xf32> -> vector<64x1xf32>
    %99 = vector.broadcast %98 : vector<64x1xf32> to vector<64x8xf32>
    %100 = arith.mulf %95, %99 : vector<64x8xf32>
    %101 = arith.truncf %100 : vector<64x8xf32> to vector<64x8xbf16>
    %102 = vector.extract_strided_slice %19 {offsets = [0, 0], sizes = [8, 32], strides = [1, 1]} : vector<16x32xf32> to vector<8x32xf32>
    %103 = arith.truncf %102 : vector<8x32xf32> to vector<8x32xbf16>
    %104 = vector.extract_strided_slice %101 {offsets = [0, 0], sizes = [8, 8], strides = [1, 1]} : vector<64x8xbf16> to vector<8x8xbf16>
    %105 = vector.extract_strided_slice %103 {offsets = [0, 0], sizes = [8, 8], strides = [1, 1]} : vector<8x32xbf16> to vector<8x8xbf16>
    %cst_31 = arith.constant dense<0.000000e+00> : vector<8x8xf32>
    %106 = tpu.matmul %104, %105, %cst_31 {dimension_numbers = #tpu.dot_dimension_numbers<[1], [0], [0], [1], [0, 0, 1, 1], [], []>} : vector<8x8xbf16>, vector<8x8xbf16>, vector<8x8xf32> -> vector<8x8xf32>
    %107 = vector.extract_strided_slice %101 {offsets = [8, 0], sizes = [8, 8], strides = [1, 1]} : vector<64x8xbf16> to vector<8x8xbf16>
    %108 = vector.extract_strided_slice %103 {offsets = [0, 8], sizes = [8, 8], strides = [1, 1]} : vector<8x32xbf16> to vector<8x8xbf16>
    %cst_32 = arith.constant dense<0.000000e+00> : vector<8x8xf32>
    %109 = tpu.matmul %107, %108, %cst_32 {dimension_numbers = #tpu.dot_dimension_numbers<[1], [0], [0], [1], [0, 0, 1, 1], [], []>} : vector<8x8xbf16>, vector<8x8xbf16>, vector<8x8xf32> -> vector<8x8xf32>
    %110 = vector.extract_strided_slice %101 {offsets = [16, 0], sizes = [8, 8], strides = [1, 1]} : vector<64x8xbf16> to vector<8x8xbf16>
    %111 = vector.extract_strided_slice %103 {offsets = [0, 16], sizes = [8, 8], strides = [1, 1]} : vector<8x32xbf16> to vector<8x8xbf16>
    %cst_33 = arith.constant dense<0.000000e+00> : vector<8x8xf32>
    %112 = tpu.matmul %110, %111, %cst_33 {dimension_numbers = #tpu.dot_dimension_numbers<[1], [0], [0], [1], [0, 0, 1, 1], [], []>} : vector<8x8xbf16>, vector<8x8xbf16>, vector<8x8xf32> -> vector<8x8xf32>
    %113 = vector.extract_strided_slice %101 {offsets = [24, 0], sizes = [8, 8], strides = [1, 1]} : vector<64x8xbf16> to vector<8x8xbf16>
    %114 = vector.extract_strided_slice %103 {offsets = [0, 24], sizes = [8, 8], strides = [1, 1]} : vector<8x32xbf16> to vector<8x8xbf16>
    %cst_34 = arith.constant dense<0.000000e+00> : vector<8x8xf32>
    %115 = tpu.matmul %113, %114, %cst_34 {dimension_numbers = #tpu.dot_dimension_numbers<[1], [0], [0], [1], [0, 0, 1, 1], [], []>} : vector<8x8xbf16>, vector<8x8xbf16>, vector<8x8xf32> -> vector<8x8xf32>
    %116 = tpu.concatenate %106, %109, %112, %115 in 1 : vector<8x8xf32>, vector<8x8xf32>, vector<8x8xf32>, vector<8x8xf32> -> vector<8x32xf32>
    %117 = vector.extract_strided_slice %19 {offsets = [8, 0], sizes = [8, 32], strides = [1, 1]} : vector<16x32xf32> to vector<8x32xf32>
    %118 = arith.truncf %117 : vector<8x32xf32> to vector<8x32xbf16>
    %119 = vector.extract_strided_slice %101 {offsets = [32, 0], sizes = [8, 8], strides = [1, 1]} : vector<64x8xbf16> to vector<8x8xbf16>
    %120 = vector.extract_strided_slice %118 {offsets = [0, 0], sizes = [8, 8], strides = [1, 1]} : vector<8x32xbf16> to vector<8x8xbf16>
    %cst_35 = arith.constant dense<0.000000e+00> : vector<8x8xf32>
    %121 = tpu.matmul %119, %120, %cst_35 {dimension_numbers = #tpu.dot_dimension_numbers<[1], [0], [0], [1], [0, 0, 1, 1], [], []>} : vector<8x8xbf16>, vector<8x8xbf16>, vector<8x8xf32> -> vector<8x8xf32>
    %122 = vector.extract_strided_slice %101 {offsets = [40, 0], sizes = [8, 8], strides = [1, 1]} : vector<64x8xbf16> to vector<8x8xbf16>
    %123 = vector.extract_strided_slice %118 {offsets = [0, 8], sizes = [8, 8], strides = [1, 1]} : vector<8x32xbf16> to vector<8x8xbf16>
    %cst_36 = arith.constant dense<0.000000e+00> : vector<8x8xf32>
    %124 = tpu.matmul %122, %123, %cst_36 {dimension_numbers = #tpu.dot_dimension_numbers<[1], [0], [0], [1], [0, 0, 1, 1], [], []>} : vector<8x8xbf16>, vector<8x8xbf16>, vector<8x8xf32> -> vector<8x8xf32>
    %125 = vector.extract_strided_slice %101 {offsets = [48, 0], sizes = [8, 8], strides = [1, 1]} : vector<64x8xbf16> to vector<8x8xbf16>
    %126 = vector.extract_strided_slice %118 {offsets = [0, 16], sizes = [8, 8], strides = [1, 1]} : vector<8x32xbf16> to vector<8x8xbf16>
    %cst_37 = arith.constant dense<0.000000e+00> : vector<8x8xf32>
    %127 = tpu.matmul %125, %126, %cst_37 {dimension_numbers = #tpu.dot_dimension_numbers<[1], [0], [0], [1], [0, 0, 1, 1], [], []>} : vector<8x8xbf16>, vector<8x8xbf16>, vector<8x8xf32> -> vector<8x8xf32>
    %128 = vector.extract_strided_slice %101 {offsets = [56, 0], sizes = [8, 8], strides = [1, 1]} : vector<64x8xbf16> to vector<8x8xbf16>
    %129 = vector.extract_strided_slice %118 {offsets = [0, 24], sizes = [8, 8], strides = [1, 1]} : vector<8x32xbf16> to vector<8x8xbf16>
    %cst_38 = arith.constant dense<0.000000e+00> : vector<8x8xf32>
    %130 = tpu.matmul %128, %129, %cst_38 {dimension_numbers = #tpu.dot_dimension_numbers<[1], [0], [0], [1], [0, 0, 1, 1], [], []>} : vector<8x8xbf16>, vector<8x8xbf16>, vector<8x8xf32> -> vector<8x8xf32>
    %131 = tpu.concatenate %121, %124, %127, %130 in 1 : vector<8x8xf32>, vector<8x8xf32>, vector<8x8xf32>, vector<8x8xf32> -> vector<8x32xf32>
    %132 = tpu.concatenate %116, %131 in 0 : vector<8x32xf32>, vector<8x32xf32> -> vector<16x32xf32>
    %133 = arith.truncf %132 : vector<16x32xf32> to vector<16x32xbf16>
    %cst_39 = arith.constant dense<0.000000e+00> : vector<16x32xf32>
    %134 = tpu.matmul %133, %22, %cst_39 {dimension_numbers = #tpu.dot_dimension_numbers<[1], [0], [0], [1], [0, 0, 1, 1], [], []>} : vector<16x32xbf16>, vector<32x32xbf16>, vector<16x32xf32> -> vector<16x32xf32>
    %135 = vector.broadcast %25 : vector<1x32xf32> to vector<16x32xf32>
    %136 = arith.addf %134, %135 : vector<16x32xf32>
    %137 = arith.addf %1, %136 : vector<16x32xf32>
    %138 = arith.index_cast %c0_i32 : i32 to index
    %c0_40 = arith.constant 0 : index
    %c0_41 = arith.constant 0 : index
    %139 = vector.load %arg7[%138, %c0_40, %c0_41] : memref<2x1x32xf32, #tpu.memory_space<vmem>>, vector<1x1x32xf32>
    %140 = vector.shape_cast %139 : vector<1x1x32xf32> to vector<1x32xf32>
    %141 = arith.index_cast %c0_i32 : i32 to index
    %c0_42 = arith.constant 0 : index
    %c0_43 = arith.constant 0 : index
    %142 = vector.load %arg8[%141, %c0_42, %c0_43] : memref<2x1x32xf32, #tpu.memory_space<vmem>>, vector<1x1x32xf32>
    %143 = vector.shape_cast %142 : vector<1x1x32xf32> to vector<1x32xf32>
    %cst_44 = arith.constant dense<0.000000e+00> : vector<16xf32>
    %144 = vector.multi_reduction <add>, %137, %cst_44 [1] : vector<16x32xf32> to vector<16xf32>
    %145 = vector.shape_cast %144 : vector<16xf32> to vector<16x1xf32>
    %cst_45 = arith.constant 3.200000e+01 : f32
    %146 = vector.broadcast %cst_45 : f32 to vector<16x1xf32>
    %147 = arith.divf %145, %146 : vector<16x1xf32>
    %148 = vector.broadcast %147 : vector<16x1xf32> to vector<16x32xf32>
    %149 = arith.subf %137, %148 : vector<16x32xf32>
    %150 = arith.mulf %149, %149 : vector<16x32xf32>
    %cst_46 = arith.constant dense<0.000000e+00> : vector<16xf32>
    %151 = vector.multi_reduction <add>, %150, %cst_46 [1] : vector<16x32xf32> to vector<16xf32>
    %152 = vector.shape_cast %151 : vector<16xf32> to vector<16x1xf32>
    %cst_47 = arith.constant 3.200000e+01 : f32
    %153 = vector.broadcast %cst_47 : f32 to vector<16x1xf32>
    %154 = arith.divf %152, %153 : vector<16x1xf32>
    %155 = vector.broadcast %147 : vector<16x1xf32> to vector<16x32xf32>
    %156 = arith.subf %137, %155 : vector<16x32xf32>
    %cst_48 = arith.constant 9.99999974E-6 : f32
    %157 = vector.broadcast %cst_48 : f32 to vector<16x1xf32>
    %158 = arith.addf %154, %157 : vector<16x1xf32>
    %159 = math.rsqrt %158 : vector<16x1xf32>
    %160 = vector.broadcast %159 : vector<16x1xf32> to vector<16x32xf32>
    %161 = arith.mulf %156, %160 : vector<16x32xf32>
    %162 = vector.broadcast %140 : vector<1x32xf32> to vector<16x32xf32>
    %163 = arith.mulf %161, %162 : vector<16x32xf32>
    %164 = vector.broadcast %143 : vector<1x32xf32> to vector<16x32xf32>
    %165 = arith.addf %163, %164 : vector<16x32xf32>
    %166 = arith.index_cast %c0_i32 : i32 to index
    %c0_49 = arith.constant 0 : index
    %c0_50 = arith.constant 0 : index
    %167 = vector.load %arg9[%166, %c0_49, %c0_50] : memref<2x32x64xbf16, #tpu.memory_space<vmem>>, vector<1x32x64xbf16>
    %168 = vector.shape_cast %167 : vector<1x32x64xbf16> to vector<32x64xbf16>
    %169 = arith.index_cast %c0_i32 : i32 to index
    %c0_51 = arith.constant 0 : index
    %c0_52 = arith.constant 0 : index
    %170 = vector.load %arg10[%169, %c0_51, %c0_52] : memref<2x1x64xf32, #tpu.memory_space<vmem>>, vector<1x1x64xf32>
    %171 = vector.shape_cast %170 : vector<1x1x64xf32> to vector<1x64xf32>
    %172 = arith.index_cast %c0_i32 : i32 to index
    %c0_53 = arith.constant 0 : index
    %c0_54 = arith.constant 0 : index
    %173 = vector.load %arg11[%172, %c0_53, %c0_54] : memref<2x64x32xbf16, #tpu.memory_space<vmem>>, vector<1x64x32xbf16>
    %174 = vector.shape_cast %173 : vector<1x64x32xbf16> to vector<64x32xbf16>
    %175 = arith.index_cast %c0_i32 : i32 to index
    %c0_55 = arith.constant 0 : index
    %c0_56 = arith.constant 0 : index
    %176 = vector.load %arg12[%175, %c0_55, %c0_56] : memref<2x1x32xf32, #tpu.memory_space<vmem>>, vector<1x1x32xf32>
    %177 = vector.shape_cast %176 : vector<1x1x32xf32> to vector<1x32xf32>
    %178 = arith.truncf %165 : vector<16x32xf32> to vector<16x32xbf16>
    %cst_57 = arith.constant dense<0.000000e+00> : vector<16x64xf32>
    %179 = tpu.matmul %178, %168, %cst_57 {dimension_numbers = #tpu.dot_dimension_numbers<[1], [0], [0], [1], [0, 0, 1, 1], [], []>} : vector<16x32xbf16>, vector<32x64xbf16>, vector<16x64xf32> -> vector<16x64xf32>
    %180 = vector.broadcast %171 : vector<1x64xf32> to vector<16x64xf32>
    %181 = arith.addf %179, %180 : vector<16x64xf32>
    %cst_58 = arith.constant 0.000000e+00 : f32
    %182 = vector.broadcast %cst_58 : f32 to vector<16x64xf32>
    %183 = arith.maximumf %181, %182 : vector<16x64xf32>
    %184 = arith.truncf %183 : vector<16x64xf32> to vector<16x64xbf16>
    %cst_59 = arith.constant dense<0.000000e+00> : vector<16x32xf32>
    %185 = tpu.matmul %184, %174, %cst_59 {dimension_numbers = #tpu.dot_dimension_numbers<[1], [0], [0], [1], [0, 0, 1, 1], [], []>} : vector<16x64xbf16>, vector<64x32xbf16>, vector<16x32xf32> -> vector<16x32xf32>
    %186 = vector.broadcast %177 : vector<1x32xf32> to vector<16x32xf32>
    %187 = arith.addf %185, %186 : vector<16x32xf32>
    %188 = arith.addf %165, %187 : vector<16x32xf32>
    %189 = arith.index_cast %c0_i32 : i32 to index
    %c0_60 = arith.constant 0 : index
    %c0_61 = arith.constant 0 : index
    %190 = vector.load %arg13[%189, %c0_60, %c0_61] : memref<2x1x32xf32, #tpu.memory_space<vmem>>, vector<1x1x32xf32>
    %191 = vector.shape_cast %190 : vector<1x1x32xf32> to vector<1x32xf32>
    %192 = arith.index_cast %c0_i32 : i32 to index
    %c0_62 = arith.constant 0 : index
    %c0_63 = arith.constant 0 : index
    %193 = vector.load %arg14[%192, %c0_62, %c0_63] : memref<2x1x32xf32, #tpu.memory_space<vmem>>, vector<1x1x32xf32>
    %194 = vector.shape_cast %193 : vector<1x1x32xf32> to vector<1x32xf32>
    %cst_64 = arith.constant dense<0.000000e+00> : vector<16xf32>
    %195 = vector.multi_reduction <add>, %188, %cst_64 [1] : vector<16x32xf32> to vector<16xf32>
    %196 = vector.shape_cast %195 : vector<16xf32> to vector<16x1xf32>
    %cst_65 = arith.constant 3.200000e+01 : f32
    %197 = vector.broadcast %cst_65 : f32 to vector<16x1xf32>
    %198 = arith.divf %196, %197 : vector<16x1xf32>
    %199 = vector.broadcast %198 : vector<16x1xf32> to vector<16x32xf32>
    %200 = arith.subf %188, %199 : vector<16x32xf32>
    %201 = arith.mulf %200, %200 : vector<16x32xf32>
    %cst_66 = arith.constant dense<0.000000e+00> : vector<16xf32>
    %202 = vector.multi_reduction <add>, %201, %cst_66 [1] : vector<16x32xf32> to vector<16xf32>
    %203 = vector.shape_cast %202 : vector<16xf32> to vector<16x1xf32>
    %cst_67 = arith.constant 3.200000e+01 : f32
    %204 = vector.broadcast %cst_67 : f32 to vector<16x1xf32>
    %205 = arith.divf %203, %204 : vector<16x1xf32>
    %206 = vector.broadcast %198 : vector<16x1xf32> to vector<16x32xf32>
    %207 = arith.subf %188, %206 : vector<16x32xf32>
    %cst_68 = arith.constant 9.99999974E-6 : f32
    %208 = vector.broadcast %cst_68 : f32 to vector<16x1xf32>
    %209 = arith.addf %205, %208 : vector<16x1xf32>
    %210 = math.rsqrt %209 : vector<16x1xf32>
    %211 = vector.broadcast %210 : vector<16x1xf32> to vector<16x32xf32>
    %212 = arith.mulf %207, %211 : vector<16x32xf32>
    %213 = vector.broadcast %191 : vector<1x32xf32> to vector<16x32xf32>
    %214 = arith.mulf %212, %213 : vector<16x32xf32>
    %215 = vector.broadcast %194 : vector<1x32xf32> to vector<16x32xf32>
    %216 = arith.addf %214, %215 : vector<16x32xf32>
    %c1_i32 = arith.constant 1 : i32
    %217 = arith.truncf %216 : vector<16x32xf32> to vector<16x32xbf16>
    %218 = arith.index_cast %c1_i32 : i32 to index
    %c0_69 = arith.constant 0 : index
    %c0_70 = arith.constant 0 : index
    %219 = vector.load %arg3[%218, %c0_69, %c0_70] : memref<2x32x96xbf16, #tpu.memory_space<vmem>>, vector<1x32x96xbf16>
    %220 = vector.shape_cast %219 : vector<1x32x96xbf16> to vector<32x96xbf16>
    %cst_71 = arith.constant dense<0.000000e+00> : vector<16x96xf32>
    %221 = tpu.matmul %217, %220, %cst_71 {dimension_numbers = #tpu.dot_dimension_numbers<[1], [0], [0], [1], [0, 0, 1, 1], [], []>} : vector<16x32xbf16>, vector<32x96xbf16>, vector<16x96xf32> -> vector<16x96xf32>
    %222 = arith.index_cast %c1_i32 : i32 to index
    %c0_72 = arith.constant 0 : index
    %c0_73 = arith.constant 0 : index
    %223 = vector.load %arg4[%222, %c0_72, %c0_73] : memref<2x1x96xf32, #tpu.memory_space<vmem>>, vector<1x1x96xf32>
    %224 = vector.shape_cast %223 : vector<1x1x96xf32> to vector<1x96xf32>
    %225 = vector.broadcast %224 : vector<1x96xf32> to vector<16x96xf32>
    %226 = arith.addf %221, %225 : vector<16x96xf32>
    %227 = vector.extract_strided_slice %226 {offsets = [0, 0], sizes = [16, 32], strides = [1, 1]} : vector<16x96xf32> to vector<16x32xf32>
    %228 = vector.extract_strided_slice %226 {offsets = [0, 32], sizes = [16, 32], strides = [1, 1]} : vector<16x96xf32> to vector<16x32xf32>
    %229 = vector.extract_strided_slice %226 {offsets = [0, 64], sizes = [16, 32], strides = [1, 1]} : vector<16x96xf32> to vector<16x32xf32>
    %230 = arith.index_cast %c1_i32 : i32 to index
    %c0_74 = arith.constant 0 : index
    %c0_75 = arith.constant 0 : index
    %231 = vector.load %arg5[%230, %c0_74, %c0_75] : memref<2x32x32xbf16, #tpu.memory_space<vmem>>, vector<1x32x32xbf16>
    %232 = vector.shape_cast %231 : vector<1x32x32xbf16> to vector<32x32xbf16>
    %233 = arith.index_cast %c1_i32 : i32 to index
    %c0_76 = arith.constant 0 : index
    %c0_77 = arith.constant 0 : index
    %234 = vector.load %arg6[%233, %c0_76, %c0_77] : memref<2x1x32xf32, #tpu.memory_space<vmem>>, vector<1x1x32xf32>
    %235 = vector.shape_cast %234 : vector<1x1x32xf32> to vector<1x32xf32>
    %236 = vector.extract_strided_slice %227 {offsets = [0, 0], sizes = [8, 32], strides = [1, 1]} : vector<16x32xf32> to vector<8x32xf32>
    %237 = arith.truncf %236 : vector<8x32xf32> to vector<8x32xbf16>
    %238 = vector.extract_strided_slice %228 {offsets = [0, 0], sizes = [8, 32], strides = [1, 1]} : vector<16x32xf32> to vector<8x32xf32>
    %239 = arith.truncf %238 : vector<8x32xf32> to vector<8x32xbf16>
    %240 = vector.extract_strided_slice %237 {offsets = [0, 0], sizes = [8, 8], strides = [1, 1]} : vector<8x32xbf16> to vector<8x8xbf16>
    %241 = vector.extract_strided_slice %239 {offsets = [0, 0], sizes = [8, 8], strides = [1, 1]} : vector<8x32xbf16> to vector<8x8xbf16>
    %cst_78 = arith.constant dense<0.000000e+00> : vector<8x8xf32>
    %242 = tpu.matmul %240, %241, %cst_78 {dimension_numbers = #tpu.dot_dimension_numbers<[1], [1], [0], [0], [0, 0, 1, 0], [], []>} : vector<8x8xbf16>, vector<8x8xbf16>, vector<8x8xf32> -> vector<8x8xf32>
    %cst_79 = arith.constant 0.353553385 : f32
    %243 = vector.broadcast %cst_79 : f32 to vector<8x8xf32>
    %244 = arith.mulf %242, %243 : vector<8x8xf32>
    %245 = vector.broadcast %4 : vector<1x8xf32> to vector<8x8xf32>
    %246 = arith.addf %244, %245 : vector<8x8xf32>
    %247 = vector.extract_strided_slice %237 {offsets = [0, 8], sizes = [8, 8], strides = [1, 1]} : vector<8x32xbf16> to vector<8x8xbf16>
    %248 = vector.extract_strided_slice %239 {offsets = [0, 8], sizes = [8, 8], strides = [1, 1]} : vector<8x32xbf16> to vector<8x8xbf16>
    %cst_80 = arith.constant dense<0.000000e+00> : vector<8x8xf32>
    %249 = tpu.matmul %247, %248, %cst_80 {dimension_numbers = #tpu.dot_dimension_numbers<[1], [1], [0], [0], [0, 0, 1, 0], [], []>} : vector<8x8xbf16>, vector<8x8xbf16>, vector<8x8xf32> -> vector<8x8xf32>
    %cst_81 = arith.constant 0.353553385 : f32
    %250 = vector.broadcast %cst_81 : f32 to vector<8x8xf32>
    %251 = arith.mulf %249, %250 : vector<8x8xf32>
    %252 = vector.broadcast %4 : vector<1x8xf32> to vector<8x8xf32>
    %253 = arith.addf %251, %252 : vector<8x8xf32>
    %254 = vector.extract_strided_slice %237 {offsets = [0, 16], sizes = [8, 8], strides = [1, 1]} : vector<8x32xbf16> to vector<8x8xbf16>
    %255 = vector.extract_strided_slice %239 {offsets = [0, 16], sizes = [8, 8], strides = [1, 1]} : vector<8x32xbf16> to vector<8x8xbf16>
    %cst_82 = arith.constant dense<0.000000e+00> : vector<8x8xf32>
    %256 = tpu.matmul %254, %255, %cst_82 {dimension_numbers = #tpu.dot_dimension_numbers<[1], [1], [0], [0], [0, 0, 1, 0], [], []>} : vector<8x8xbf16>, vector<8x8xbf16>, vector<8x8xf32> -> vector<8x8xf32>
    %cst_83 = arith.constant 0.353553385 : f32
    %257 = vector.broadcast %cst_83 : f32 to vector<8x8xf32>
    %258 = arith.mulf %256, %257 : vector<8x8xf32>
    %259 = vector.broadcast %4 : vector<1x8xf32> to vector<8x8xf32>
    %260 = arith.addf %258, %259 : vector<8x8xf32>
    %261 = vector.extract_strided_slice %237 {offsets = [0, 24], sizes = [8, 8], strides = [1, 1]} : vector<8x32xbf16> to vector<8x8xbf16>
    %262 = vector.extract_strided_slice %239 {offsets = [0, 24], sizes = [8, 8], strides = [1, 1]} : vector<8x32xbf16> to vector<8x8xbf16>
    %cst_84 = arith.constant dense<0.000000e+00> : vector<8x8xf32>
    %263 = tpu.matmul %261, %262, %cst_84 {dimension_numbers = #tpu.dot_dimension_numbers<[1], [1], [0], [0], [0, 0, 1, 0], [], []>} : vector<8x8xbf16>, vector<8x8xbf16>, vector<8x8xf32> -> vector<8x8xf32>
    %cst_85 = arith.constant 0.353553385 : f32
    %264 = vector.broadcast %cst_85 : f32 to vector<8x8xf32>
    %265 = arith.mulf %263, %264 : vector<8x8xf32>
    %266 = vector.broadcast %4 : vector<1x8xf32> to vector<8x8xf32>
    %267 = arith.addf %265, %266 : vector<8x8xf32>
    %268 = vector.extract_strided_slice %227 {offsets = [8, 0], sizes = [8, 32], strides = [1, 1]} : vector<16x32xf32> to vector<8x32xf32>
    %269 = arith.truncf %268 : vector<8x32xf32> to vector<8x32xbf16>
    %270 = vector.extract_strided_slice %228 {offsets = [8, 0], sizes = [8, 32], strides = [1, 1]} : vector<16x32xf32> to vector<8x32xf32>
    %271 = arith.truncf %270 : vector<8x32xf32> to vector<8x32xbf16>
    %272 = vector.extract_strided_slice %269 {offsets = [0, 0], sizes = [8, 8], strides = [1, 1]} : vector<8x32xbf16> to vector<8x8xbf16>
    %273 = vector.extract_strided_slice %271 {offsets = [0, 0], sizes = [8, 8], strides = [1, 1]} : vector<8x32xbf16> to vector<8x8xbf16>
    %cst_86 = arith.constant dense<0.000000e+00> : vector<8x8xf32>
    %274 = tpu.matmul %272, %273, %cst_86 {dimension_numbers = #tpu.dot_dimension_numbers<[1], [1], [0], [0], [0, 0, 1, 0], [], []>} : vector<8x8xbf16>, vector<8x8xbf16>, vector<8x8xf32> -> vector<8x8xf32>
    %cst_87 = arith.constant 0.353553385 : f32
    %275 = vector.broadcast %cst_87 : f32 to vector<8x8xf32>
    %276 = arith.mulf %274, %275 : vector<8x8xf32>
    %277 = vector.broadcast %6 : vector<1x8xf32> to vector<8x8xf32>
    %278 = arith.addf %276, %277 : vector<8x8xf32>
    %279 = vector.extract_strided_slice %269 {offsets = [0, 8], sizes = [8, 8], strides = [1, 1]} : vector<8x32xbf16> to vector<8x8xbf16>
    %280 = vector.extract_strided_slice %271 {offsets = [0, 8], sizes = [8, 8], strides = [1, 1]} : vector<8x32xbf16> to vector<8x8xbf16>
    %cst_88 = arith.constant dense<0.000000e+00> : vector<8x8xf32>
    %281 = tpu.matmul %279, %280, %cst_88 {dimension_numbers = #tpu.dot_dimension_numbers<[1], [1], [0], [0], [0, 0, 1, 0], [], []>} : vector<8x8xbf16>, vector<8x8xbf16>, vector<8x8xf32> -> vector<8x8xf32>
    %cst_89 = arith.constant 0.353553385 : f32
    %282 = vector.broadcast %cst_89 : f32 to vector<8x8xf32>
    %283 = arith.mulf %281, %282 : vector<8x8xf32>
    %284 = vector.broadcast %6 : vector<1x8xf32> to vector<8x8xf32>
    %285 = arith.addf %283, %284 : vector<8x8xf32>
    %286 = vector.extract_strided_slice %269 {offsets = [0, 16], sizes = [8, 8], strides = [1, 1]} : vector<8x32xbf16> to vector<8x8xbf16>
    %287 = vector.extract_strided_slice %271 {offsets = [0, 16], sizes = [8, 8], strides = [1, 1]} : vector<8x32xbf16> to vector<8x8xbf16>
    %cst_90 = arith.constant dense<0.000000e+00> : vector<8x8xf32>
    %288 = tpu.matmul %286, %287, %cst_90 {dimension_numbers = #tpu.dot_dimension_numbers<[1], [1], [0], [0], [0, 0, 1, 0], [], []>} : vector<8x8xbf16>, vector<8x8xbf16>, vector<8x8xf32> -> vector<8x8xf32>
    %cst_91 = arith.constant 0.353553385 : f32
    %289 = vector.broadcast %cst_91 : f32 to vector<8x8xf32>
    %290 = arith.mulf %288, %289 : vector<8x8xf32>
    %291 = vector.broadcast %6 : vector<1x8xf32> to vector<8x8xf32>
    %292 = arith.addf %290, %291 : vector<8x8xf32>
    %293 = vector.extract_strided_slice %269 {offsets = [0, 24], sizes = [8, 8], strides = [1, 1]} : vector<8x32xbf16> to vector<8x8xbf16>
    %294 = vector.extract_strided_slice %271 {offsets = [0, 24], sizes = [8, 8], strides = [1, 1]} : vector<8x32xbf16> to vector<8x8xbf16>
    %cst_92 = arith.constant dense<0.000000e+00> : vector<8x8xf32>
    %295 = tpu.matmul %293, %294, %cst_92 {dimension_numbers = #tpu.dot_dimension_numbers<[1], [1], [0], [0], [0, 0, 1, 0], [], []>} : vector<8x8xbf16>, vector<8x8xbf16>, vector<8x8xf32> -> vector<8x8xf32>
    %cst_93 = arith.constant 0.353553385 : f32
    %296 = vector.broadcast %cst_93 : f32 to vector<8x8xf32>
    %297 = arith.mulf %295, %296 : vector<8x8xf32>
    %298 = vector.broadcast %6 : vector<1x8xf32> to vector<8x8xf32>
    %299 = arith.addf %297, %298 : vector<8x8xf32>
    %300 = tpu.concatenate %246, %253, %260, %267, %278, %285, %292, %299 in 0 : vector<8x8xf32>, vector<8x8xf32>, vector<8x8xf32>, vector<8x8xf32>, vector<8x8xf32>, vector<8x8xf32>, vector<8x8xf32>, vector<8x8xf32> -> vector<64x8xf32>
    %cst_94 = arith.constant dense<0xFF800000> : vector<64xf32>
    %301 = vector.multi_reduction <maximumf>, %300, %cst_94 [1] : vector<64x8xf32> to vector<64xf32>
    %302 = vector.shape_cast %301 : vector<64xf32> to vector<64x1xf32>
    %303 = vector.broadcast %302 : vector<64x1xf32> to vector<64x8xf32>
    %304 = arith.subf %300, %303 : vector<64x8xf32>
    %305 = math.exp %304 : vector<64x8xf32>
    %cst_95 = arith.constant dense<0.000000e+00> : vector<64xf32>
    %306 = vector.multi_reduction <add>, %305, %cst_95 [1] : vector<64x8xf32> to vector<64xf32>
    %307 = vector.shape_cast %306 : vector<64xf32> to vector<64x1xf32>
    %308 = tpu.reciprocal %307 {approx = true} : vector<64x1xf32> -> vector<64x1xf32>
    %309 = vector.broadcast %308 : vector<64x1xf32> to vector<64x8xf32>
    %310 = arith.mulf %305, %309 : vector<64x8xf32>
    %311 = arith.truncf %310 : vector<64x8xf32> to vector<64x8xbf16>
    %312 = vector.extract_strided_slice %229 {offsets = [0, 0], sizes = [8, 32], strides = [1, 1]} : vector<16x32xf32> to vector<8x32xf32>
    %313 = arith.truncf %312 : vector<8x32xf32> to vector<8x32xbf16>
    %314 = vector.extract_strided_slice %311 {offsets = [0, 0], sizes = [8, 8], strides = [1, 1]} : vector<64x8xbf16> to vector<8x8xbf16>
    %315 = vector.extract_strided_slice %313 {offsets = [0, 0], sizes = [8, 8], strides = [1, 1]} : vector<8x32xbf16> to vector<8x8xbf16>
    %cst_96 = arith.constant dense<0.000000e+00> : vector<8x8xf32>
    %316 = tpu.matmul %314, %315, %cst_96 {dimension_numbers = #tpu.dot_dimension_numbers<[1], [0], [0], [1], [0, 0, 1, 1], [], []>} : vector<8x8xbf16>, vector<8x8xbf16>, vector<8x8xf32> -> vector<8x8xf32>
    %317 = vector.extract_strided_slice %311 {offsets = [8, 0], sizes = [8, 8], strides = [1, 1]} : vector<64x8xbf16> to vector<8x8xbf16>
    %318 = vector.extract_strided_slice %313 {offsets = [0, 8], sizes = [8, 8], strides = [1, 1]} : vector<8x32xbf16> to vector<8x8xbf16>
    %cst_97 = arith.constant dense<0.000000e+00> : vector<8x8xf32>
    %319 = tpu.matmul %317, %318, %cst_97 {dimension_numbers = #tpu.dot_dimension_numbers<[1], [0], [0], [1], [0, 0, 1, 1], [], []>} : vector<8x8xbf16>, vector<8x8xbf16>, vector<8x8xf32> -> vector<8x8xf32>
    %320 = vector.extract_strided_slice %311 {offsets = [16, 0], sizes = [8, 8], strides = [1, 1]} : vector<64x8xbf16> to vector<8x8xbf16>
    %321 = vector.extract_strided_slice %313 {offsets = [0, 16], sizes = [8, 8], strides = [1, 1]} : vector<8x32xbf16> to vector<8x8xbf16>
    %cst_98 = arith.constant dense<0.000000e+00> : vector<8x8xf32>
    %322 = tpu.matmul %320, %321, %cst_98 {dimension_numbers = #tpu.dot_dimension_numbers<[1], [0], [0], [1], [0, 0, 1, 1], [], []>} : vector<8x8xbf16>, vector<8x8xbf16>, vector<8x8xf32> -> vector<8x8xf32>
    %323 = vector.extract_strided_slice %311 {offsets = [24, 0], sizes = [8, 8], strides = [1, 1]} : vector<64x8xbf16> to vector<8x8xbf16>
    %324 = vector.extract_strided_slice %313 {offsets = [0, 24], sizes = [8, 8], strides = [1, 1]} : vector<8x32xbf16> to vector<8x8xbf16>
    %cst_99 = arith.constant dense<0.000000e+00> : vector<8x8xf32>
    %325 = tpu.matmul %323, %324, %cst_99 {dimension_numbers = #tpu.dot_dimension_numbers<[1], [0], [0], [1], [0, 0, 1, 1], [], []>} : vector<8x8xbf16>, vector<8x8xbf16>, vector<8x8xf32> -> vector<8x8xf32>
    %326 = tpu.concatenate %316, %319, %322, %325 in 1 : vector<8x8xf32>, vector<8x8xf32>, vector<8x8xf32>, vector<8x8xf32> -> vector<8x32xf32>
    %327 = vector.extract_strided_slice %229 {offsets = [8, 0], sizes = [8, 32], strides = [1, 1]} : vector<16x32xf32> to vector<8x32xf32>
    %328 = arith.truncf %327 : vector<8x32xf32> to vector<8x32xbf16>
    %329 = vector.extract_strided_slice %311 {offsets = [32, 0], sizes = [8, 8], strides = [1, 1]} : vector<64x8xbf16> to vector<8x8xbf16>
    %330 = vector.extract_strided_slice %328 {offsets = [0, 0], sizes = [8, 8], strides = [1, 1]} : vector<8x32xbf16> to vector<8x8xbf16>
    %cst_100 = arith.constant dense<0.000000e+00> : vector<8x8xf32>
    %331 = tpu.matmul %329, %330, %cst_100 {dimension_numbers = #tpu.dot_dimension_numbers<[1], [0], [0], [1], [0, 0, 1, 1], [], []>} : vector<8x8xbf16>, vector<8x8xbf16>, vector<8x8xf32> -> vector<8x8xf32>
    %332 = vector.extract_strided_slice %311 {offsets = [40, 0], sizes = [8, 8], strides = [1, 1]} : vector<64x8xbf16> to vector<8x8xbf16>
    %333 = vector.extract_strided_slice %328 {offsets = [0, 8], sizes = [8, 8], strides = [1, 1]} : vector<8x32xbf16> to vector<8x8xbf16>
    %cst_101 = arith.constant dense<0.000000e+00> : vector<8x8xf32>
    %334 = tpu.matmul %332, %333, %cst_101 {dimension_numbers = #tpu.dot_dimension_numbers<[1], [0], [0], [1], [0, 0, 1, 1], [], []>} : vector<8x8xbf16>, vector<8x8xbf16>, vector<8x8xf32> -> vector<8x8xf32>
    %335 = vector.extract_strided_slice %311 {offsets = [48, 0], sizes = [8, 8], strides = [1, 1]} : vector<64x8xbf16> to vector<8x8xbf16>
    %336 = vector.extract_strided_slice %328 {offsets = [0, 16], sizes = [8, 8], strides = [1, 1]} : vector<8x32xbf16> to vector<8x8xbf16>
    %cst_102 = arith.constant dense<0.000000e+00> : vector<8x8xf32>
    %337 = tpu.matmul %335, %336, %cst_102 {dimension_numbers = #tpu.dot_dimension_numbers<[1], [0], [0], [1], [0, 0, 1, 1], [], []>} : vector<8x8xbf16>, vector<8x8xbf16>, vector<8x8xf32> -> vector<8x8xf32>
    %338 = vector.extract_strided_slice %311 {offsets = [56, 0], sizes = [8, 8], strides = [1, 1]} : vector<64x8xbf16> to vector<8x8xbf16>
    %339 = vector.extract_strided_slice %328 {offsets = [0, 24], sizes = [8, 8], strides = [1, 1]} : vector<8x32xbf16> to vector<8x8xbf16>
    %cst_103 = arith.constant dense<0.000000e+00> : vector<8x8xf32>
    %340 = tpu.matmul %338, %339, %cst_103 {dimension_numbers = #tpu.dot_dimension_numbers<[1], [0], [0], [1], [0, 0, 1, 1], [], []>} : vector<8x8xbf16>, vector<8x8xbf16>, vector<8x8xf32> -> vector<8x8xf32>
    %341 = tpu.concatenate %331, %334, %337, %340 in 1 : vector<8x8xf32>, vector<8x8xf32>, vector<8x8xf32>, vector<8x8xf32> -> vector<8x32xf32>
    %342 = tpu.concatenate %326, %341 in 0 : vector<8x32xf32>, vector<8x32xf32> -> vector<16x32xf32>
    %343 = arith.truncf %342 : vector<16x32xf32> to vector<16x32xbf16>
    %cst_104 = arith.constant dense<0.000000e+00> : vector<16x32xf32>
    %344 = tpu.matmul %343, %232, %cst_104 {dimension_numbers = #tpu.dot_dimension_numbers<[1], [0], [0], [1], [0, 0, 1, 1], [], []>} : vector<16x32xbf16>, vector<32x32xbf16>, vector<16x32xf32> -> vector<16x32xf32>
    %345 = vector.broadcast %235 : vector<1x32xf32> to vector<16x32xf32>
    %346 = arith.addf %344, %345 : vector<16x32xf32>
    %347 = arith.addf %216, %346 : vector<16x32xf32>
    %348 = arith.index_cast %c1_i32 : i32 to index
    %c0_105 = arith.constant 0 : index
    %c0_106 = arith.constant 0 : index
    %349 = vector.load %arg7[%348, %c0_105, %c0_106] : memref<2x1x32xf32, #tpu.memory_space<vmem>>, vector<1x1x32xf32>
    %350 = vector.shape_cast %349 : vector<1x1x32xf32> to vector<1x32xf32>
    %351 = arith.index_cast %c1_i32 : i32 to index
    %c0_107 = arith.constant 0 : index
    %c0_108 = arith.constant 0 : index
    %352 = vector.load %arg8[%351, %c0_107, %c0_108] : memref<2x1x32xf32, #tpu.memory_space<vmem>>, vector<1x1x32xf32>
    %353 = vector.shape_cast %352 : vector<1x1x32xf32> to vector<1x32xf32>
    %cst_109 = arith.constant dense<0.000000e+00> : vector<16xf32>
    %354 = vector.multi_reduction <add>, %347, %cst_109 [1] : vector<16x32xf32> to vector<16xf32>
    %355 = vector.shape_cast %354 : vector<16xf32> to vector<16x1xf32>
    %cst_110 = arith.constant 3.200000e+01 : f32
    %356 = vector.broadcast %cst_110 : f32 to vector<16x1xf32>
    %357 = arith.divf %355, %356 : vector<16x1xf32>
    %358 = vector.broadcast %357 : vector<16x1xf32> to vector<16x32xf32>
    %359 = arith.subf %347, %358 : vector<16x32xf32>
    %360 = arith.mulf %359, %359 : vector<16x32xf32>
    %cst_111 = arith.constant dense<0.000000e+00> : vector<16xf32>
    %361 = vector.multi_reduction <add>, %360, %cst_111 [1] : vector<16x32xf32> to vector<16xf32>
    %362 = vector.shape_cast %361 : vector<16xf32> to vector<16x1xf32>
    %cst_112 = arith.constant 3.200000e+01 : f32
    %363 = vector.broadcast %cst_112 : f32 to vector<16x1xf32>
    %364 = arith.divf %362, %363 : vector<16x1xf32>
    %365 = vector.broadcast %357 : vector<16x1xf32> to vector<16x32xf32>
    %366 = arith.subf %347, %365 : vector<16x32xf32>
    %cst_113 = arith.constant 9.99999974E-6 : f32
    %367 = vector.broadcast %cst_113 : f32 to vector<16x1xf32>
    %368 = arith.addf %364, %367 : vector<16x1xf32>
    %369 = math.rsqrt %368 : vector<16x1xf32>
    %370 = vector.broadcast %369 : vector<16x1xf32> to vector<16x32xf32>
    %371 = arith.mulf %366, %370 : vector<16x32xf32>
    %372 = vector.broadcast %350 : vector<1x32xf32> to vector<16x32xf32>
    %373 = arith.mulf %371, %372 : vector<16x32xf32>
    %374 = vector.broadcast %353 : vector<1x32xf32> to vector<16x32xf32>
    %375 = arith.addf %373, %374 : vector<16x32xf32>
    %376 = arith.index_cast %c1_i32 : i32 to index
    %c0_114 = arith.constant 0 : index
    %c0_115 = arith.constant 0 : index
    %377 = vector.load %arg9[%376, %c0_114, %c0_115] : memref<2x32x64xbf16, #tpu.memory_space<vmem>>, vector<1x32x64xbf16>
    %378 = vector.shape_cast %377 : vector<1x32x64xbf16> to vector<32x64xbf16>
    %379 = arith.index_cast %c1_i32 : i32 to index
    %c0_116 = arith.constant 0 : index
    %c0_117 = arith.constant 0 : index
    %380 = vector.load %arg10[%379, %c0_116, %c0_117] : memref<2x1x64xf32, #tpu.memory_space<vmem>>, vector<1x1x64xf32>
    %381 = vector.shape_cast %380 : vector<1x1x64xf32> to vector<1x64xf32>
    %382 = arith.index_cast %c1_i32 : i32 to index
    %c0_118 = arith.constant 0 : index
    %c0_119 = arith.constant 0 : index
    %383 = vector.load %arg11[%382, %c0_118, %c0_119] : memref<2x64x32xbf16, #tpu.memory_space<vmem>>, vector<1x64x32xbf16>
    %384 = vector.shape_cast %383 : vector<1x64x32xbf16> to vector<64x32xbf16>
    %385 = arith.index_cast %c1_i32 : i32 to index
    %c0_120 = arith.constant 0 : index
    %c0_121 = arith.constant 0 : index
    %386 = vector.load %arg12[%385, %c0_120, %c0_121] : memref<2x1x32xf32, #tpu.memory_space<vmem>>, vector<1x1x32xf32>
    %387 = vector.shape_cast %386 : vector<1x1x32xf32> to vector<1x32xf32>
    %388 = arith.truncf %375 : vector<16x32xf32> to vector<16x32xbf16>
    %cst_122 = arith.constant dense<0.000000e+00> : vector<16x64xf32>
    %389 = tpu.matmul %388, %378, %cst_122 {dimension_numbers = #tpu.dot_dimension_numbers<[1], [0], [0], [1], [0, 0, 1, 1], [], []>} : vector<16x32xbf16>, vector<32x64xbf16>, vector<16x64xf32> -> vector<16x64xf32>
    %390 = vector.broadcast %381 : vector<1x64xf32> to vector<16x64xf32>
    %391 = arith.addf %389, %390 : vector<16x64xf32>
    %cst_123 = arith.constant 0.000000e+00 : f32
    %392 = vector.broadcast %cst_123 : f32 to vector<16x64xf32>
    %393 = arith.maximumf %391, %392 : vector<16x64xf32>
    %394 = arith.truncf %393 : vector<16x64xf32> to vector<16x64xbf16>
    %cst_124 = arith.constant dense<0.000000e+00> : vector<16x32xf32>
    %395 = tpu.matmul %394, %384, %cst_124 {dimension_numbers = #tpu.dot_dimension_numbers<[1], [0], [0], [1], [0, 0, 1, 1], [], []>} : vector<16x64xbf16>, vector<64x32xbf16>, vector<16x32xf32> -> vector<16x32xf32>
    %396 = vector.broadcast %387 : vector<1x32xf32> to vector<16x32xf32>
    %397 = arith.addf %395, %396 : vector<16x32xf32>
    %398 = arith.addf %375, %397 : vector<16x32xf32>
    %399 = arith.index_cast %c1_i32 : i32 to index
    %c0_125 = arith.constant 0 : index
    %c0_126 = arith.constant 0 : index
    %400 = vector.load %arg13[%399, %c0_125, %c0_126] : memref<2x1x32xf32, #tpu.memory_space<vmem>>, vector<1x1x32xf32>
    %401 = vector.shape_cast %400 : vector<1x1x32xf32> to vector<1x32xf32>
    %402 = arith.index_cast %c1_i32 : i32 to index
    %c0_127 = arith.constant 0 : index
    %c0_128 = arith.constant 0 : index
    %403 = vector.load %arg14[%402, %c0_127, %c0_128] : memref<2x1x32xf32, #tpu.memory_space<vmem>>, vector<1x1x32xf32>
    %404 = vector.shape_cast %403 : vector<1x1x32xf32> to vector<1x32xf32>
    %cst_129 = arith.constant dense<0.000000e+00> : vector<16xf32>
    %405 = vector.multi_reduction <add>, %398, %cst_129 [1] : vector<16x32xf32> to vector<16xf32>
    %406 = vector.shape_cast %405 : vector<16xf32> to vector<16x1xf32>
    %cst_130 = arith.constant 3.200000e+01 : f32
    %407 = vector.broadcast %cst_130 : f32 to vector<16x1xf32>
    %408 = arith.divf %406, %407 : vector<16x1xf32>
    %409 = vector.broadcast %408 : vector<16x1xf32> to vector<16x32xf32>
    %410 = arith.subf %398, %409 : vector<16x32xf32>
    %411 = arith.mulf %410, %410 : vector<16x32xf32>
    %cst_131 = arith.constant dense<0.000000e+00> : vector<16xf32>
    %412 = vector.multi_reduction <add>, %411, %cst_131 [1] : vector<16x32xf32> to vector<16xf32>
    %413 = vector.shape_cast %412 : vector<16xf32> to vector<16x1xf32>
    %cst_132 = arith.constant 3.200000e+01 : f32
    %414 = vector.broadcast %cst_132 : f32 to vector<16x1xf32>
    %415 = arith.divf %413, %414 : vector<16x1xf32>
    %416 = vector.broadcast %408 : vector<16x1xf32> to vector<16x32xf32>
    %417 = arith.subf %398, %416 : vector<16x32xf32>
    %cst_133 = arith.constant 9.99999974E-6 : f32
    %418 = vector.broadcast %cst_133 : f32 to vector<16x1xf32>
    %419 = arith.addf %415, %418 : vector<16x1xf32>
    %420 = math.rsqrt %419 : vector<16x1xf32>
    %421 = vector.broadcast %420 : vector<16x1xf32> to vector<16x32xf32>
    %422 = arith.mulf %417, %421 : vector<16x32xf32>
    %423 = vector.broadcast %401 : vector<1x32xf32> to vector<16x32xf32>
    %424 = arith.mulf %422, %423 : vector<16x32xf32>
    %425 = vector.broadcast %404 : vector<1x32xf32> to vector<16x32xf32>
    %426 = arith.addf %424, %425 : vector<16x32xf32>
    %c2_i32 = arith.constant 2 : i32
    %427 = vector.shape_cast %426 : vector<16x32xf32> to vector<2x8x32xf32>
    %428 = arith.truncf %427 : vector<2x8x32xf32> to vector<2x8x32xbf16>
    %c0_134 = arith.constant 0 : index
    %c0_135 = arith.constant 0 : index
    %c0_136 = arith.constant 0 : index
    %429 = vector.load %arg15[%c0_134, %c0_135, %c0_136] : memref<2x8x32xbf16, #tpu.memory_space<vmem>>, vector<2x8x32xbf16>
    tpu.vector_store %arg15[%c0_134, %c0_135, %c0_136], %428 {strides = array<i32>} : memref<2x8x32xbf16, #tpu.memory_space<vmem>>, vector<2x8x32xbf16>,
    return
  }
  func.func @transform_0(%arg0: i32) -> (i32, i32, i32) {
    %c0_i32 = arith.constant 0 : i32
    %c0_i32_0 = arith.constant 0 : i32
    %c0_i32_1 = arith.constant 0 : i32
    %c0_i32_2 = arith.constant 0 : i32
    return %c0_i32, %c0_i32_0, %c0_i32_1 : i32, i32, i32
  }
  func.func @transform_1(%arg0: i32) -> (i32, i32, i32) {
    %c0_i32 = arith.constant 0 : i32
    %c0_i32_0 = arith.constant 0 : i32
    %c0_i32_1 = arith.constant 0 : i32
    %c0_i32_2 = arith.constant 0 : i32
    return %c0_i32, %c0_i32_0, %c0_i32_1 : i32, i32, i32
  }
  func.func @transform_2(%arg0: i32) -> (i32, i32, i32) {
    %c0_i32 = arith.constant 0 : i32
    %c0_i32_0 = arith.constant 0 : i32
    %c0_i32_1 = arith.constant 0 : i32
    %c0_i32_2 = arith.constant 0 : i32
    return %c0_i32, %c0_i32_0, %c0_i32_1 : i32, i32, i32
  }
  func.func @transform_3(%arg0: i32) -> (i32, i32, i32) {
    %c0_i32 = arith.constant 0 : i32
    %c0_i32_0 = arith.constant 0 : i32
    %c0_i32_1 = arith.constant 0 : i32
    %c0_i32_2 = arith.constant 0 : i32
    return %c0_i32, %c0_i32_0, %c0_i32_1 : i32, i32, i32
  }
  func.func @transform_4(%arg0: i32) -> (i32, i32, i32) {
    %c0_i32 = arith.constant 0 : i32
    %c0_i32_0 = arith.constant 0 : i32
    %c0_i32_1 = arith.constant 0 : i32
    %c0_i32_2 = arith.constant 0 : i32
    return %c0_i32, %c0_i32_0, %c0_i32_1 : i32, i32, i32
  }
  func.func @transform_5(%arg0: i32) -> (i32, i32, i32) {
    %c0_i32 = arith.constant 0 : i32
    %c0_i32_0 = arith.constant 0 : i32
    %c0_i32_1 = arith.constant 0 : i32
    %c0_i32_2 = arith.constant 0 : i32
    return %c0_i32, %c0_i32_0, %c0_i32_1 : i32, i32, i32
  }
  func.func @transform_6(%arg0: i32) -> (i32, i32, i32) {
    %c0_i32 = arith.constant 0 : i32
    %c0_i32_0 = arith.constant 0 : i32
    %c0_i32_1 = arith.constant 0 : i32
    %c0_i32_2 = arith.constant 0 : i32
    return %c0_i32, %c0_i32_0, %c0_i32_1 : i32, i32, i32
  }
  func.func @transform_7(%arg0: i32) -> (i32, i32, i32) {
    %c0_i32 = arith.constant 0 : i32
    %c0_i32_0 = arith.constant 0 : i32
    %c0_i32_1 = arith.constant 0 : i32
    %c0_i32_2 = arith.constant 0 : i32
    return %c0_i32, %c0_i32_0, %c0_i32_1 : i32, i32, i32
  }
  func.func @transform_8(%arg0: i32) -> (i32, i32, i32) {
    %c0_i32 = arith.constant 0 : i32
    %c0_i32_0 = arith.constant 0 : i32
    %c0_i32_1 = arith.constant 0 : i32
    %c0_i32_2 = arith.constant 0 : i32
    return %c0_i32, %c0_i32_0, %c0_i32_1 : i32, i32, i32
  }
  func.func @transform_9(%arg0: i32) -> (i32, i32, i32) {
    %c0_i32 = arith.constant 0 : i32
    %c0_i32_0 = arith.constant 0 : i32
    %c0_i32_1 = arith.constant 0 : i32
    %c0_i32_2 = arith.constant 0 : i32
    return %c0_i32, %c0_i32_0, %c0_i32_1 : i32, i32, i32
  }
  func.func @transform_10(%arg0: i32) -> (i32, i32, i32) {
    %c0_i32 = arith.constant 0 : i32
    %c0_i32_0 = arith.constant 0 : i32
    %c0_i32_1 = arith.constant 0 : i32
    %c0_i32_2 = arith.constant 0 : i32
    return %c0_i32, %c0_i32_0, %c0_i32_1 : i32, i32, i32
  }
  func.func @transform_11(%arg0: i32) -> (i32, i32, i32) {
    %c0_i32 = arith.constant 0 : i32
    %c0_i32_0 = arith.constant 0 : i32
    %c0_i32_1 = arith.constant 0 : i32
    %c0_i32_2 = arith.constant 0 : i32
    return %c0_i32, %c0_i32_0, %c0_i32_1 : i32, i32, i32
  }
  func.func @transform_12(%arg0: i32) -> (i32, i32, i32) {
    %c0_i32 = arith.constant 0 : i32
    %c0_i32_0 = arith.constant 0 : i32
    %c0_i32_1 = arith.constant 0 : i32
    %c0_i32_2 = arith.constant 0 : i32
    return %c0_i32, %c0_i32_0, %c0_i32_1 : i32, i32, i32
  }
  func.func @transform_13(%arg0: i32) -> (i32, i32, i32) {
    %c0_i32 = arith.constant 0 : i32
    %c0_i32_0 = arith.constant 0 : i32
    %c0_i32_1 = arith.constant 0 : i32
    %c0_i32_2 = arith.constant 0 : i32
    return %c0_i32, %c0_i32_0, %c0_i32_1 : i32, i32, i32
  }
  func.func @transform_14(%arg0: i32) -> (i32, i32, i32) {
    %c0_i32 = arith.constant 0 : i32
    %c0_i32_0 = arith.constant 0 : i32
    %c0_i32_1 = arith.constant 0 : i32
    %c0_i32_2 = arith.constant 0 : i32
    return %c0_i32, %c0_i32_0, %c0_i32_1 : i32, i32, i32
  }
}

module attributes {stable_mosaic.version = 11 : i64} {
  func.func @decoder_stack_kernel(%arg0: i32, %arg1: memref<2x8x40xf32, #tpu.memory_space<vmem>>, %arg2: memref<2x8x32xbf16, #tpu.memory_space<vmem>>, %arg3: memref<2x1x8xf32, #tpu.memory_space<vmem>>, %arg4: memref<1x8x32xf32, #tpu.memory_space<vmem>>, %arg5: memref<40x32xbf16, #tpu.memory_space<vmem>>, %arg6: memref<1x32xf32, #tpu.memory_space<vmem>>, %arg7: memref<2x32x96xbf16, #tpu.memory_space<vmem>>, %arg8: memref<2x1x96xf32, #tpu.memory_space<vmem>>, %arg9: memref<2x32x32xbf16, #tpu.memory_space<vmem>>, %arg10: memref<2x1x32xf32, #tpu.memory_space<vmem>>, %arg11: memref<2x1x32xf32, #tpu.memory_space<vmem>>, %arg12: memref<2x1x32xf32, #tpu.memory_space<vmem>>, %arg13: memref<2x32x32xbf16, #tpu.memory_space<vmem>>, %arg14: memref<2x1x32xf32, #tpu.memory_space<vmem>>, %arg15: memref<2x32x64xbf16, #tpu.memory_space<vmem>>, %arg16: memref<2x1x64xf32, #tpu.memory_space<vmem>>, %arg17: memref<2x32x32xbf16, #tpu.memory_space<vmem>>, %arg18: memref<2x1x32xf32, #tpu.memory_space<vmem>>, %arg19: memref<2x1x32xf32, #tpu.memory_space<vmem>>, %arg20: memref<2x1x32xf32, #tpu.memory_space<vmem>>, %arg21: memref<2x32x64xbf16, #tpu.memory_space<vmem>>, %arg22: memref<2x1x64xf32, #tpu.memory_space<vmem>>, %arg23: memref<2x64x32xbf16, #tpu.memory_space<vmem>>, %arg24: memref<2x1x32xf32, #tpu.memory_space<vmem>>, %arg25: memref<2x1x32xf32, #tpu.memory_space<vmem>>, %arg26: memref<2x1x32xf32, #tpu.memory_space<vmem>>, %arg27: memref<32x128xbf16, #tpu.memory_space<vmem>>, %arg28: memref<1x128xf32, #tpu.memory_space<vmem>>, %arg29: memref<2x8x128xf32, #tpu.memory_space<vmem>>) attributes {dimension_semantics = [#tpu.dimension_semantics<arbitrary>], iteration_bounds = array<i64: 1>, scalar_prefetch = 0 : i64, scratch_operands = 0 : i64, tpu.core_type = #tpu.core_type<tc>, window_params = [{pipeline_mode = #tpu.pipeline_mode<synchronous>, transform_indices = @transform_0, window_bounds = array<i64: 2, 8, 40>}, {pipeline_mode = #tpu.pipeline_mode<synchronous>, transform_indices = @transform_1, window_bounds = array<i64: 2, 8, 32>}, {pipeline_mode = #tpu.pipeline_mode<synchronous>, transform_indices = @transform_2, window_bounds = array<i64: 2, 1, 8>}, {pipeline_mode = #tpu.pipeline_mode<synchronous>, transform_indices = @transform_3, window_bounds = array<i64: 1, 8, 32>}, {pipeline_mode = #tpu.pipeline_mode<synchronous>, transform_indices = @transform_4, window_bounds = array<i64: 40, 32>}, {pipeline_mode = #tpu.pipeline_mode<synchronous>, transform_indices = @transform_5, window_bounds = array<i64: 1, 32>}, {pipeline_mode = #tpu.pipeline_mode<synchronous>, transform_indices = @transform_6, window_bounds = array<i64: 2, 32, 96>}, {pipeline_mode = #tpu.pipeline_mode<synchronous>, transform_indices = @transform_7, window_bounds = array<i64: 2, 1, 96>}, {pipeline_mode = #tpu.pipeline_mode<synchronous>, transform_indices = @transform_8, window_bounds = array<i64: 2, 32, 32>}, {pipeline_mode = #tpu.pipeline_mode<synchronous>, transform_indices = @transform_9, window_bounds = array<i64: 2, 1, 32>}, {pipeline_mode = #tpu.pipeline_mode<synchronous>, transform_indices = @transform_10, window_bounds = array<i64: 2, 1, 32>}, {pipeline_mode = #tpu.pipeline_mode<synchronous>, transform_indices = @transform_11, window_bounds = array<i64: 2, 1, 32>}, {pipeline_mode = #tpu.pipeline_mode<synchronous>, transform_indices = @transform_12, window_bounds = array<i64: 2, 32, 32>}, {pipeline_mode = #tpu.pipeline_mode<synchronous>, transform_indices = @transform_13, window_bounds = array<i64: 2, 1, 32>}, {pipeline_mode = #tpu.pipeline_mode<synchronous>, transform_indices = @transform_14, window_bounds = array<i64: 2, 32, 64>}, {pipeline_mode = #tpu.pipeline_mode<synchronous>, transform_indices = @transform_15, window_bounds = array<i64: 2, 1, 64>}, {pipeline_mode = #tpu.pipeline_mode<synchronous>, transform_indices = @transform_16, window_bounds = array<i64: 2, 32, 32>}, {pipeline_mode = #tpu.pipeline_mode<synchronous>, transform_indices = @transform_17, window_bounds = array<i64: 2, 1, 32>}, {pipeline_mode = #tpu.pipeline_mode<synchronous>, transform_indices = @transform_18, window_bounds = array<i64: 2, 1, 32>}, {pipeline_mode = #tpu.pipeline_mode<synchronous>, transform_indices = @transform_19, window_bounds = array<i64: 2, 1, 32>}, {pipeline_mode = #tpu.pipeline_mode<synchronous>, transform_indices = @transform_20, window_bounds = array<i64: 2, 32, 64>}, {pipeline_mode = #tpu.pipeline_mode<synchronous>, transform_indices = @transform_21, window_bounds = array<i64: 2, 1, 64>}, {pipeline_mode = #tpu.pipeline_mode<synchronous>, transform_indices = @transform_22, window_bounds = array<i64: 2, 64, 32>}, {pipeline_mode = #tpu.pipeline_mode<synchronous>, transform_indices = @transform_23, window_bounds = array<i64: 2, 1, 32>}, {pipeline_mode = #tpu.pipeline_mode<synchronous>, transform_indices = @transform_24, window_bounds = array<i64: 2, 1, 32>}, {pipeline_mode = #tpu.pipeline_mode<synchronous>, transform_indices = @transform_25, window_bounds = array<i64: 2, 1, 32>}, {pipeline_mode = #tpu.pipeline_mode<synchronous>, transform_indices = @transform_26, window_bounds = array<i64: 32, 128>}, {pipeline_mode = #tpu.pipeline_mode<synchronous>, transform_indices = @transform_27, window_bounds = array<i64: 1, 128>}, {pipeline_mode = #tpu.pipeline_mode<synchronous>, transform_indices = @transform_28, window_bounds = array<i64: 2, 8, 128>}]} {
    %c0 = arith.constant 0 : index
    %c0_0 = arith.constant 0 : index
    %c0_1 = arith.constant 0 : index
    %0 = vector.load %arg1[%c0, %c0_0, %c0_1] : memref<2x8x40xf32, #tpu.memory_space<vmem>>, vector<2x8x40xf32>
    %c0_2 = arith.constant 0 : index
    %c0_3 = arith.constant 0 : index
    %c0_4 = arith.constant 0 : index
    %1 = vector.load %arg2[%c0_2, %c0_3, %c0_4] : memref<2x8x32xbf16, #tpu.memory_space<vmem>>, vector<2x8x32xbf16>
    %2 = vector.shape_cast %1 : vector<2x8x32xbf16> to vector<16x32xbf16>
    %c0_5 = arith.constant 0 : index
    %c0_6 = arith.constant 0 : index
    %c0_7 = arith.constant 0 : index
    %3 = vector.load %arg3[%c0_5, %c0_6, %c0_7] : memref<2x1x8xf32, #tpu.memory_space<vmem>>, vector<2x1x8xf32>
    %4 = vector.extract_strided_slice %3 {offsets = [0, 0, 0], sizes = [1, 1, 8], strides = [1, 1, 1]} : vector<2x1x8xf32> to vector<1x1x8xf32>
    %5 = vector.shape_cast %4 : vector<1x1x8xf32> to vector<1x8xf32>
    %6 = vector.extract_strided_slice %3 {offsets = [1, 0, 0], sizes = [1, 1, 8], strides = [1, 1, 1]} : vector<2x1x8xf32> to vector<1x1x8xf32>
    %7 = vector.shape_cast %6 : vector<1x1x8xf32> to vector<1x8xf32>
    %cst = arith.constant dense<0.000000e+00> : vector<2x8xf32>
    %8 = vector.multi_reduction <add>, %0, %cst [2] : vector<2x8x40xf32> to vector<2x8xf32>
    %cst_8 = arith.constant 4.000000e+01 : f32
    %9 = vector.broadcast %cst_8 : f32 to vector<2x8xf32>
    %10 = arith.divf %8, %9 : vector<2x8xf32>
    %cst_9 = arith.constant 0.000000e+00 : f32
    %11 = vector.broadcast %cst_9 : f32 to vector<2x8xf32>
    %12 = arith.cmpf one, %10, %11 : vector<2x8xf32>
    %cst_10 = arith.constant 0.000000e+00 : f32
    %cst_11 = arith.constant -1.000000e+09 : f32
    %13 = vector.broadcast %cst_10 : f32 to vector<2x8xf32>
    %14 = vector.broadcast %cst_11 : f32 to vector<2x8xf32>
    %15 = arith.select %12, %13, %14 : vector<2x8xi1>, vector<2x8xf32>
    %16 = tpu.iota {dimensions = array<i32: 0>} : vector<8x8xi32>
    %17 = tpu.iota {dimensions = array<i32: 1>} : vector<8x8xi32>
    %18 = arith.cmpi sle, %17, %16 : vector<8x8xi32>
    %cst_12 = arith.constant 0.000000e+00 : f32
    %cst_13 = arith.constant -1.000000e+09 : f32
    %19 = vector.broadcast %cst_12 : f32 to vector<8x8xf32>
    %20 = vector.broadcast %cst_13 : f32 to vector<8x8xf32>
    %21 = arith.select %18, %19, %20 : vector<8x8xi1>, vector<8x8xf32>
    %22 = vector.extract_strided_slice %15 {offsets = [0, 0], sizes = [1, 8], strides = [1, 1]} : vector<2x8xf32> to vector<1x8xf32>
    %23 = vector.broadcast %22 : vector<1x8xf32> to vector<8x8xf32>
    %24 = arith.addf %21, %23 : vector<8x8xf32>
    %25 = vector.extract_strided_slice %15 {offsets = [1, 0], sizes = [1, 8], strides = [1, 1]} : vector<2x8xf32> to vector<1x8xf32>
    %26 = vector.broadcast %25 : vector<1x8xf32> to vector<8x8xf32>
    %27 = arith.addf %21, %26 : vector<8x8xf32>
    %28 = vector.shape_cast %0 : vector<2x8x40xf32> to vector<16x40xf32>
    %29 = arith.truncf %28 : vector<16x40xf32> to vector<16x40xbf16>
    %c0_14 = arith.constant 0 : index
    %c0_15 = arith.constant 0 : index
    %30 = vector.load %arg5[%c0_14, %c0_15] : memref<40x32xbf16, #tpu.memory_space<vmem>>, vector<40x32xbf16>
    %cst_16 = arith.constant dense<0.000000e+00> : vector<16x32xf32>
    %31 = tpu.matmul %29, %30, %cst_16 {dimension_numbers = #tpu.dot_dimension_numbers<[1], [0], [0], [1], [0, 0, 1, 1], [], []>} : vector<16x40xbf16>, vector<40x32xbf16>, vector<16x32xf32> -> vector<16x32xf32>
    %c0_17 = arith.constant 0 : index
    %c0_18 = arith.constant 0 : index
    %32 = vector.load %arg6[%c0_17, %c0_18] : memref<1x32xf32, #tpu.memory_space<vmem>>, vector<1x32xf32>
    %33 = vector.broadcast %32 : vector<1x32xf32> to vector<16x32xf32>
    %34 = arith.addf %31, %33 : vector<16x32xf32>
    %35 = vector.shape_cast %34 : vector<16x32xf32> to vector<2x8x32xf32>
    %c0_19 = arith.constant 0 : index
    %c0_20 = arith.constant 0 : index
    %c0_21 = arith.constant 0 : index
    %36 = vector.load %arg4[%c0_19, %c0_20, %c0_21] : memref<1x8x32xf32, #tpu.memory_space<vmem>>, vector<1x8x32xf32>
    %37 = vector.broadcast %36 : vector<1x8x32xf32> to vector<2x8x32xf32>
    %38 = arith.addf %35, %37 : vector<2x8x32xf32>
    %39 = vector.shape_cast %38 : vector<2x8x32xf32> to vector<16x32xf32>
    %c0_i32 = arith.constant 0 : i32
    %40 = arith.truncf %39 : vector<16x32xf32> to vector<16x32xbf16>
    %41 = arith.index_cast %c0_i32 : i32 to index
    %c0_22 = arith.constant 0 : index
    %c0_23 = arith.constant 0 : index
    %42 = vector.load %arg7[%41, %c0_22, %c0_23] : memref<2x32x96xbf16, #tpu.memory_space<vmem>>, vector<1x32x96xbf16>
    %43 = vector.shape_cast %42 : vector<1x32x96xbf16> to vector<32x96xbf16>
    %cst_24 = arith.constant dense<0.000000e+00> : vector<16x96xf32>
    %44 = tpu.matmul %40, %43, %cst_24 {dimension_numbers = #tpu.dot_dimension_numbers<[1], [0], [0], [1], [0, 0, 1, 1], [], []>} : vector<16x32xbf16>, vector<32x96xbf16>, vector<16x96xf32> -> vector<16x96xf32>
    %45 = arith.index_cast %c0_i32 : i32 to index
    %c0_25 = arith.constant 0 : index
    %c0_26 = arith.constant 0 : index
    %46 = vector.load %arg8[%45, %c0_25, %c0_26] : memref<2x1x96xf32, #tpu.memory_space<vmem>>, vector<1x1x96xf32>
    %47 = vector.shape_cast %46 : vector<1x1x96xf32> to vector<1x96xf32>
    %48 = vector.broadcast %47 : vector<1x96xf32> to vector<16x96xf32>
    %49 = arith.addf %44, %48 : vector<16x96xf32>
    %50 = vector.extract_strided_slice %49 {offsets = [0, 0], sizes = [16, 32], strides = [1, 1]} : vector<16x96xf32> to vector<16x32xf32>
    %51 = vector.extract_strided_slice %49 {offsets = [0, 32], sizes = [16, 32], strides = [1, 1]} : vector<16x96xf32> to vector<16x32xf32>
    %52 = vector.extract_strided_slice %49 {offsets = [0, 64], sizes = [16, 32], strides = [1, 1]} : vector<16x96xf32> to vector<16x32xf32>
    %53 = arith.index_cast %c0_i32 : i32 to index
    %c0_27 = arith.constant 0 : index
    %c0_28 = arith.constant 0 : index
    %54 = vector.load %arg9[%53, %c0_27, %c0_28] : memref<2x32x32xbf16, #tpu.memory_space<vmem>>, vector<1x32x32xbf16>
    %55 = vector.shape_cast %54 : vector<1x32x32xbf16> to vector<32x32xbf16>
    %56 = arith.index_cast %c0_i32 : i32 to index
    %c0_29 = arith.constant 0 : index
    %c0_30 = arith.constant 0 : index
    %57 = vector.load %arg10[%56, %c0_29, %c0_30] : memref<2x1x32xf32, #tpu.memory_space<vmem>>, vector<1x1x32xf32>
    %58 = vector.shape_cast %57 : vector<1x1x32xf32> to vector<1x32xf32>
    %59 = vector.extract_strided_slice %50 {offsets = [0, 0], sizes = [8, 32], strides = [1, 1]} : vector<16x32xf32> to vector<8x32xf32>
    %60 = arith.truncf %59 : vector<8x32xf32> to vector<8x32xbf16>
    %61 = vector.extract_strided_slice %51 {offsets = [0, 0], sizes = [8, 32], strides = [1, 1]} : vector<16x32xf32> to vector<8x32xf32>
    %62 = arith.truncf %61 : vector<8x32xf32> to vector<8x32xbf16>
    %63 = vector.extract_strided_slice %60 {offsets = [0, 0], sizes = [8, 8], strides = [1, 1]} : vector<8x32xbf16> to vector<8x8xbf16>
    %64 = vector.extract_strided_slice %62 {offsets = [0, 0], sizes = [8, 8], strides = [1, 1]} : vector<8x32xbf16> to vector<8x8xbf16>
    %cst_31 = arith.constant dense<0.000000e+00> : vector<8x8xf32>
    %65 = tpu.matmul %63, %64, %cst_31 {dimension_numbers = #tpu.dot_dimension_numbers<[1], [1], [0], [0], [0, 0, 1, 0], [], []>} : vector<8x8xbf16>, vector<8x8xbf16>, vector<8x8xf32> -> vector<8x8xf32>
    %cst_32 = arith.constant 0.353553385 : f32
    %66 = vector.broadcast %cst_32 : f32 to vector<8x8xf32>
    %67 = arith.mulf %65, %66 : vector<8x8xf32>
    %68 = arith.addf %67, %24 : vector<8x8xf32>
    %69 = vector.extract_strided_slice %60 {offsets = [0, 8], sizes = [8, 8], strides = [1, 1]} : vector<8x32xbf16> to vector<8x8xbf16>
    %70 = vector.extract_strided_slice %62 {offsets = [0, 8], sizes = [8, 8], strides = [1, 1]} : vector<8x32xbf16> to vector<8x8xbf16>
    %cst_33 = arith.constant dense<0.000000e+00> : vector<8x8xf32>
    %71 = tpu.matmul %69, %70, %cst_33 {dimension_numbers = #tpu.dot_dimension_numbers<[1], [1], [0], [0], [0, 0, 1, 0], [], []>} : vector<8x8xbf16>, vector<8x8xbf16>, vector<8x8xf32> -> vector<8x8xf32>
    %cst_34 = arith.constant 0.353553385 : f32
    %72 = vector.broadcast %cst_34 : f32 to vector<8x8xf32>
    %73 = arith.mulf %71, %72 : vector<8x8xf32>
    %74 = arith.addf %73, %24 : vector<8x8xf32>
    %75 = vector.extract_strided_slice %60 {offsets = [0, 16], sizes = [8, 8], strides = [1, 1]} : vector<8x32xbf16> to vector<8x8xbf16>
    %76 = vector.extract_strided_slice %62 {offsets = [0, 16], sizes = [8, 8], strides = [1, 1]} : vector<8x32xbf16> to vector<8x8xbf16>
    %cst_35 = arith.constant dense<0.000000e+00> : vector<8x8xf32>
    %77 = tpu.matmul %75, %76, %cst_35 {dimension_numbers = #tpu.dot_dimension_numbers<[1], [1], [0], [0], [0, 0, 1, 0], [], []>} : vector<8x8xbf16>, vector<8x8xbf16>, vector<8x8xf32> -> vector<8x8xf32>
    %cst_36 = arith.constant 0.353553385 : f32
    %78 = vector.broadcast %cst_36 : f32 to vector<8x8xf32>
    %79 = arith.mulf %77, %78 : vector<8x8xf32>
    %80 = arith.addf %79, %24 : vector<8x8xf32>
    %81 = vector.extract_strided_slice %60 {offsets = [0, 24], sizes = [8, 8], strides = [1, 1]} : vector<8x32xbf16> to vector<8x8xbf16>
    %82 = vector.extract_strided_slice %62 {offsets = [0, 24], sizes = [8, 8], strides = [1, 1]} : vector<8x32xbf16> to vector<8x8xbf16>
    %cst_37 = arith.constant dense<0.000000e+00> : vector<8x8xf32>
    %83 = tpu.matmul %81, %82, %cst_37 {dimension_numbers = #tpu.dot_dimension_numbers<[1], [1], [0], [0], [0, 0, 1, 0], [], []>} : vector<8x8xbf16>, vector<8x8xbf16>, vector<8x8xf32> -> vector<8x8xf32>
    %cst_38 = arith.constant 0.353553385 : f32
    %84 = vector.broadcast %cst_38 : f32 to vector<8x8xf32>
    %85 = arith.mulf %83, %84 : vector<8x8xf32>
    %86 = arith.addf %85, %24 : vector<8x8xf32>
    %87 = vector.extract_strided_slice %50 {offsets = [8, 0], sizes = [8, 32], strides = [1, 1]} : vector<16x32xf32> to vector<8x32xf32>
    %88 = arith.truncf %87 : vector<8x32xf32> to vector<8x32xbf16>
    %89 = vector.extract_strided_slice %51 {offsets = [8, 0], sizes = [8, 32], strides = [1, 1]} : vector<16x32xf32> to vector<8x32xf32>
    %90 = arith.truncf %89 : vector<8x32xf32> to vector<8x32xbf16>
    %91 = vector.extract_strided_slice %88 {offsets = [0, 0], sizes = [8, 8], strides = [1, 1]} : vector<8x32xbf16> to vector<8x8xbf16>
    %92 = vector.extract_strided_slice %90 {offsets = [0, 0], sizes = [8, 8], strides = [1, 1]} : vector<8x32xbf16> to vector<8x8xbf16>
    %cst_39 = arith.constant dense<0.000000e+00> : vector<8x8xf32>
    %93 = tpu.matmul %91, %92, %cst_39 {dimension_numbers = #tpu.dot_dimension_numbers<[1], [1], [0], [0], [0, 0, 1, 0], [], []>} : vector<8x8xbf16>, vector<8x8xbf16>, vector<8x8xf32> -> vector<8x8xf32>
    %cst_40 = arith.constant 0.353553385 : f32
    %94 = vector.broadcast %cst_40 : f32 to vector<8x8xf32>
    %95 = arith.mulf %93, %94 : vector<8x8xf32>
    %96 = arith.addf %95, %27 : vector<8x8xf32>
    %97 = vector.extract_strided_slice %88 {offsets = [0, 8], sizes = [8, 8], strides = [1, 1]} : vector<8x32xbf16> to vector<8x8xbf16>
    %98 = vector.extract_strided_slice %90 {offsets = [0, 8], sizes = [8, 8], strides = [1, 1]} : vector<8x32xbf16> to vector<8x8xbf16>
    %cst_41 = arith.constant dense<0.000000e+00> : vector<8x8xf32>
    %99 = tpu.matmul %97, %98, %cst_41 {dimension_numbers = #tpu.dot_dimension_numbers<[1], [1], [0], [0], [0, 0, 1, 0], [], []>} : vector<8x8xbf16>, vector<8x8xbf16>, vector<8x8xf32> -> vector<8x8xf32>
    %cst_42 = arith.constant 0.353553385 : f32
    %100 = vector.broadcast %cst_42 : f32 to vector<8x8xf32>
    %101 = arith.mulf %99, %100 : vector<8x8xf32>
    %102 = arith.addf %101, %27 : vector<8x8xf32>
    %103 = vector.extract_strided_slice %88 {offsets = [0, 16], sizes = [8, 8], strides = [1, 1]} : vector<8x32xbf16> to vector<8x8xbf16>
    %104 = vector.extract_strided_slice %90 {offsets = [0, 16], sizes = [8, 8], strides = [1, 1]} : vector<8x32xbf16> to vector<8x8xbf16>
    %cst_43 = arith.constant dense<0.000000e+00> : vector<8x8xf32>
    %105 = tpu.matmul %103, %104, %cst_43 {dimension_numbers = #tpu.dot_dimension_numbers<[1], [1], [0], [0], [0, 0, 1, 0], [], []>} : vector<8x8xbf16>, vector<8x8xbf16>, vector<8x8xf32> -> vector<8x8xf32>
    %cst_44 = arith.constant 0.353553385 : f32
    %106 = vector.broadcast %cst_44 : f32 to vector<8x8xf32>
    %107 = arith.mulf %105, %106 : vector<8x8xf32>
    %108 = arith.addf %107, %27 : vector<8x8xf32>
    %109 = vector.extract_strided_slice %88 {offsets = [0, 24], sizes = [8, 8], strides = [1, 1]} : vector<8x32xbf16> to vector<8x8xbf16>
    %110 = vector.extract_strided_slice %90 {offsets = [0, 24], sizes = [8, 8], strides = [1, 1]} : vector<8x32xbf16> to vector<8x8xbf16>
    %cst_45 = arith.constant dense<0.000000e+00> : vector<8x8xf32>
    %111 = tpu.matmul %109, %110, %cst_45 {dimension_numbers = #tpu.dot_dimension_numbers<[1], [1], [0], [0], [0, 0, 1, 0], [], []>} : vector<8x8xbf16>, vector<8x8xbf16>, vector<8x8xf32> -> vector<8x8xf32>
    %cst_46 = arith.constant 0.353553385 : f32
    %112 = vector.broadcast %cst_46 : f32 to vector<8x8xf32>
    %113 = arith.mulf %111, %112 : vector<8x8xf32>
    %114 = arith.addf %113, %27 : vector<8x8xf32>
    %115 = tpu.concatenate %68, %74, %80, %86, %96, %102, %108, %114 in 0 : vector<8x8xf32>, vector<8x8xf32>, vector<8x8xf32>, vector<8x8xf32>, vector<8x8xf32>, vector<8x8xf32>, vector<8x8xf32>, vector<8x8xf32> -> vector<64x8xf32>
    %cst_47 = arith.constant dense<0xFF800000> : vector<64xf32>
    %116 = vector.multi_reduction <maximumf>, %115, %cst_47 [1] : vector<64x8xf32> to vector<64xf32>
    %117 = vector.shape_cast %116 : vector<64xf32> to vector<64x1xf32>
    %118 = vector.broadcast %117 : vector<64x1xf32> to vector<64x8xf32>
    %119 = arith.subf %115, %118 : vector<64x8xf32>
    %120 = math.exp %119 : vector<64x8xf32>
    %cst_48 = arith.constant dense<0.000000e+00> : vector<64xf32>
    %121 = vector.multi_reduction <add>, %120, %cst_48 [1] : vector<64x8xf32> to vector<64xf32>
    %122 = vector.shape_cast %121 : vector<64xf32> to vector<64x1xf32>
    %123 = tpu.reciprocal %122 {approx = true} : vector<64x1xf32> -> vector<64x1xf32>
    %124 = vector.broadcast %123 : vector<64x1xf32> to vector<64x8xf32>
    %125 = arith.mulf %120, %124 : vector<64x8xf32>
    %126 = arith.truncf %125 : vector<64x8xf32> to vector<64x8xbf16>
    %127 = vector.extract_strided_slice %52 {offsets = [0, 0], sizes = [8, 32], strides = [1, 1]} : vector<16x32xf32> to vector<8x32xf32>
    %128 = arith.truncf %127 : vector<8x32xf32> to vector<8x32xbf16>
    %129 = vector.extract_strided_slice %126 {offsets = [0, 0], sizes = [8, 8], strides = [1, 1]} : vector<64x8xbf16> to vector<8x8xbf16>
    %130 = vector.extract_strided_slice %128 {offsets = [0, 0], sizes = [8, 8], strides = [1, 1]} : vector<8x32xbf16> to vector<8x8xbf16>
    %cst_49 = arith.constant dense<0.000000e+00> : vector<8x8xf32>
    %131 = tpu.matmul %129, %130, %cst_49 {dimension_numbers = #tpu.dot_dimension_numbers<[1], [0], [0], [1], [0, 0, 1, 1], [], []>} : vector<8x8xbf16>, vector<8x8xbf16>, vector<8x8xf32> -> vector<8x8xf32>
    %132 = vector.extract_strided_slice %126 {offsets = [8, 0], sizes = [8, 8], strides = [1, 1]} : vector<64x8xbf16> to vector<8x8xbf16>
    %133 = vector.extract_strided_slice %128 {offsets = [0, 8], sizes = [8, 8], strides = [1, 1]} : vector<8x32xbf16> to vector<8x8xbf16>
    %cst_50 = arith.constant dense<0.000000e+00> : vector<8x8xf32>
    %134 = tpu.matmul %132, %133, %cst_50 {dimension_numbers = #tpu.dot_dimension_numbers<[1], [0], [0], [1], [0, 0, 1, 1], [], []>} : vector<8x8xbf16>, vector<8x8xbf16>, vector<8x8xf32> -> vector<8x8xf32>
    %135 = vector.extract_strided_slice %126 {offsets = [16, 0], sizes = [8, 8], strides = [1, 1]} : vector<64x8xbf16> to vector<8x8xbf16>
    %136 = vector.extract_strided_slice %128 {offsets = [0, 16], sizes = [8, 8], strides = [1, 1]} : vector<8x32xbf16> to vector<8x8xbf16>
    %cst_51 = arith.constant dense<0.000000e+00> : vector<8x8xf32>
    %137 = tpu.matmul %135, %136, %cst_51 {dimension_numbers = #tpu.dot_dimension_numbers<[1], [0], [0], [1], [0, 0, 1, 1], [], []>} : vector<8x8xbf16>, vector<8x8xbf16>, vector<8x8xf32> -> vector<8x8xf32>
    %138 = vector.extract_strided_slice %126 {offsets = [24, 0], sizes = [8, 8], strides = [1, 1]} : vector<64x8xbf16> to vector<8x8xbf16>
    %139 = vector.extract_strided_slice %128 {offsets = [0, 24], sizes = [8, 8], strides = [1, 1]} : vector<8x32xbf16> to vector<8x8xbf16>
    %cst_52 = arith.constant dense<0.000000e+00> : vector<8x8xf32>
    %140 = tpu.matmul %138, %139, %cst_52 {dimension_numbers = #tpu.dot_dimension_numbers<[1], [0], [0], [1], [0, 0, 1, 1], [], []>} : vector<8x8xbf16>, vector<8x8xbf16>, vector<8x8xf32> -> vector<8x8xf32>
    %141 = tpu.concatenate %131, %134, %137, %140 in 1 : vector<8x8xf32>, vector<8x8xf32>, vector<8x8xf32>, vector<8x8xf32> -> vector<8x32xf32>
    %142 = vector.extract_strided_slice %52 {offsets = [8, 0], sizes = [8, 32], strides = [1, 1]} : vector<16x32xf32> to vector<8x32xf32>
    %143 = arith.truncf %142 : vector<8x32xf32> to vector<8x32xbf16>
    %144 = vector.extract_strided_slice %126 {offsets = [32, 0], sizes = [8, 8], strides = [1, 1]} : vector<64x8xbf16> to vector<8x8xbf16>
    %145 = vector.extract_strided_slice %143 {offsets = [0, 0], sizes = [8, 8], strides = [1, 1]} : vector<8x32xbf16> to vector<8x8xbf16>
    %cst_53 = arith.constant dense<0.000000e+00> : vector<8x8xf32>
    %146 = tpu.matmul %144, %145, %cst_53 {dimension_numbers = #tpu.dot_dimension_numbers<[1], [0], [0], [1], [0, 0, 1, 1], [], []>} : vector<8x8xbf16>, vector<8x8xbf16>, vector<8x8xf32> -> vector<8x8xf32>
    %147 = vector.extract_strided_slice %126 {offsets = [40, 0], sizes = [8, 8], strides = [1, 1]} : vector<64x8xbf16> to vector<8x8xbf16>
    %148 = vector.extract_strided_slice %143 {offsets = [0, 8], sizes = [8, 8], strides = [1, 1]} : vector<8x32xbf16> to vector<8x8xbf16>
    %cst_54 = arith.constant dense<0.000000e+00> : vector<8x8xf32>
    %149 = tpu.matmul %147, %148, %cst_54 {dimension_numbers = #tpu.dot_dimension_numbers<[1], [0], [0], [1], [0, 0, 1, 1], [], []>} : vector<8x8xbf16>, vector<8x8xbf16>, vector<8x8xf32> -> vector<8x8xf32>
    %150 = vector.extract_strided_slice %126 {offsets = [48, 0], sizes = [8, 8], strides = [1, 1]} : vector<64x8xbf16> to vector<8x8xbf16>
    %151 = vector.extract_strided_slice %143 {offsets = [0, 16], sizes = [8, 8], strides = [1, 1]} : vector<8x32xbf16> to vector<8x8xbf16>
    %cst_55 = arith.constant dense<0.000000e+00> : vector<8x8xf32>
    %152 = tpu.matmul %150, %151, %cst_55 {dimension_numbers = #tpu.dot_dimension_numbers<[1], [0], [0], [1], [0, 0, 1, 1], [], []>} : vector<8x8xbf16>, vector<8x8xbf16>, vector<8x8xf32> -> vector<8x8xf32>
    %153 = vector.extract_strided_slice %126 {offsets = [56, 0], sizes = [8, 8], strides = [1, 1]} : vector<64x8xbf16> to vector<8x8xbf16>
    %154 = vector.extract_strided_slice %143 {offsets = [0, 24], sizes = [8, 8], strides = [1, 1]} : vector<8x32xbf16> to vector<8x8xbf16>
    %cst_56 = arith.constant dense<0.000000e+00> : vector<8x8xf32>
    %155 = tpu.matmul %153, %154, %cst_56 {dimension_numbers = #tpu.dot_dimension_numbers<[1], [0], [0], [1], [0, 0, 1, 1], [], []>} : vector<8x8xbf16>, vector<8x8xbf16>, vector<8x8xf32> -> vector<8x8xf32>
    %156 = tpu.concatenate %146, %149, %152, %155 in 1 : vector<8x8xf32>, vector<8x8xf32>, vector<8x8xf32>, vector<8x8xf32> -> vector<8x32xf32>
    %157 = tpu.concatenate %141, %156 in 0 : vector<8x32xf32>, vector<8x32xf32> -> vector<16x32xf32>
    %158 = arith.truncf %157 : vector<16x32xf32> to vector<16x32xbf16>
    %cst_57 = arith.constant dense<0.000000e+00> : vector<16x32xf32>
    %159 = tpu.matmul %158, %55, %cst_57 {dimension_numbers = #tpu.dot_dimension_numbers<[1], [0], [0], [1], [0, 0, 1, 1], [], []>} : vector<16x32xbf16>, vector<32x32xbf16>, vector<16x32xf32> -> vector<16x32xf32>
    %160 = vector.broadcast %58 : vector<1x32xf32> to vector<16x32xf32>
    %161 = arith.addf %159, %160 : vector<16x32xf32>
    %162 = arith.addf %39, %161 : vector<16x32xf32>
    %163 = arith.index_cast %c0_i32 : i32 to index
    %c0_58 = arith.constant 0 : index
    %c0_59 = arith.constant 0 : index
    %164 = vector.load %arg11[%163, %c0_58, %c0_59] : memref<2x1x32xf32, #tpu.memory_space<vmem>>, vector<1x1x32xf32>
    %165 = vector.shape_cast %164 : vector<1x1x32xf32> to vector<1x32xf32>
    %166 = arith.index_cast %c0_i32 : i32 to index
    %c0_60 = arith.constant 0 : index
    %c0_61 = arith.constant 0 : index
    %167 = vector.load %arg12[%166, %c0_60, %c0_61] : memref<2x1x32xf32, #tpu.memory_space<vmem>>, vector<1x1x32xf32>
    %168 = vector.shape_cast %167 : vector<1x1x32xf32> to vector<1x32xf32>
    %cst_62 = arith.constant dense<0.000000e+00> : vector<16xf32>
    %169 = vector.multi_reduction <add>, %162, %cst_62 [1] : vector<16x32xf32> to vector<16xf32>
    %170 = vector.shape_cast %169 : vector<16xf32> to vector<16x1xf32>
    %cst_63 = arith.constant 3.200000e+01 : f32
    %171 = vector.broadcast %cst_63 : f32 to vector<16x1xf32>
    %172 = arith.divf %170, %171 : vector<16x1xf32>
    %173 = vector.broadcast %172 : vector<16x1xf32> to vector<16x32xf32>
    %174 = arith.subf %162, %173 : vector<16x32xf32>
    %175 = arith.mulf %174, %174 : vector<16x32xf32>
    %cst_64 = arith.constant dense<0.000000e+00> : vector<16xf32>
    %176 = vector.multi_reduction <add>, %175, %cst_64 [1] : vector<16x32xf32> to vector<16xf32>
    %177 = vector.shape_cast %176 : vector<16xf32> to vector<16x1xf32>
    %cst_65 = arith.constant 3.200000e+01 : f32
    %178 = vector.broadcast %cst_65 : f32 to vector<16x1xf32>
    %179 = arith.divf %177, %178 : vector<16x1xf32>
    %180 = vector.broadcast %172 : vector<16x1xf32> to vector<16x32xf32>
    %181 = arith.subf %162, %180 : vector<16x32xf32>
    %cst_66 = arith.constant 9.99999974E-6 : f32
    %182 = vector.broadcast %cst_66 : f32 to vector<16x1xf32>
    %183 = arith.addf %179, %182 : vector<16x1xf32>
    %184 = math.rsqrt %183 : vector<16x1xf32>
    %185 = vector.broadcast %184 : vector<16x1xf32> to vector<16x32xf32>
    %186 = arith.mulf %181, %185 : vector<16x32xf32>
    %187 = vector.broadcast %165 : vector<1x32xf32> to vector<16x32xf32>
    %188 = arith.mulf %186, %187 : vector<16x32xf32>
    %189 = vector.broadcast %168 : vector<1x32xf32> to vector<16x32xf32>
    %190 = arith.addf %188, %189 : vector<16x32xf32>
    %191 = arith.truncf %190 : vector<16x32xf32> to vector<16x32xbf16>
    %192 = arith.index_cast %c0_i32 : i32 to index
    %c0_67 = arith.constant 0 : index
    %c0_68 = arith.constant 0 : index
    %193 = vector.load %arg13[%192, %c0_67, %c0_68] : memref<2x32x32xbf16, #tpu.memory_space<vmem>>, vector<1x32x32xbf16>
    %194 = vector.shape_cast %193 : vector<1x32x32xbf16> to vector<32x32xbf16>
    %cst_69 = arith.constant dense<0.000000e+00> : vector<16x32xf32>
    %195 = tpu.matmul %191, %194, %cst_69 {dimension_numbers = #tpu.dot_dimension_numbers<[1], [0], [0], [1], [0, 0, 1, 1], [], []>} : vector<16x32xbf16>, vector<32x32xbf16>, vector<16x32xf32> -> vector<16x32xf32>
    %196 = arith.index_cast %c0_i32 : i32 to index
    %c0_70 = arith.constant 0 : index
    %c0_71 = arith.constant 0 : index
    %197 = vector.load %arg14[%196, %c0_70, %c0_71] : memref<2x1x32xf32, #tpu.memory_space<vmem>>, vector<1x1x32xf32>
    %198 = vector.shape_cast %197 : vector<1x1x32xf32> to vector<1x32xf32>
    %199 = vector.broadcast %198 : vector<1x32xf32> to vector<16x32xf32>
    %200 = arith.addf %195, %199 : vector<16x32xf32>
    %201 = arith.index_cast %c0_i32 : i32 to index
    %c0_72 = arith.constant 0 : index
    %c0_73 = arith.constant 0 : index
    %202 = vector.load %arg15[%201, %c0_72, %c0_73] : memref<2x32x64xbf16, #tpu.memory_space<vmem>>, vector<1x32x64xbf16>
    %203 = vector.shape_cast %202 : vector<1x32x64xbf16> to vector<32x64xbf16>
    %cst_74 = arith.constant dense<0.000000e+00> : vector<16x64xf32>
    %204 = tpu.matmul %2, %203, %cst_74 {dimension_numbers = #tpu.dot_dimension_numbers<[1], [0], [0], [1], [0, 0, 1, 1], [], []>} : vector<16x32xbf16>, vector<32x64xbf16>, vector<16x64xf32> -> vector<16x64xf32>
    %205 = arith.index_cast %c0_i32 : i32 to index
    %c0_75 = arith.constant 0 : index
    %c0_76 = arith.constant 0 : index
    %206 = vector.load %arg16[%205, %c0_75, %c0_76] : memref<2x1x64xf32, #tpu.memory_space<vmem>>, vector<1x1x64xf32>
    %207 = vector.shape_cast %206 : vector<1x1x64xf32> to vector<1x64xf32>
    %208 = vector.broadcast %207 : vector<1x64xf32> to vector<16x64xf32>
    %209 = arith.addf %204, %208 : vector<16x64xf32>
    %210 = vector.extract_strided_slice %209 {offsets = [0, 0], sizes = [16, 32], strides = [1, 1]} : vector<16x64xf32> to vector<16x32xf32>
    %211 = vector.extract_strided_slice %209 {offsets = [0, 32], sizes = [16, 32], strides = [1, 1]} : vector<16x64xf32> to vector<16x32xf32>
    %212 = arith.index_cast %c0_i32 : i32 to index
    %c0_77 = arith.constant 0 : index
    %c0_78 = arith.constant 0 : index
    %213 = vector.load %arg17[%212, %c0_77, %c0_78] : memref<2x32x32xbf16, #tpu.memory_space<vmem>>, vector<1x32x32xbf16>
    %214 = vector.shape_cast %213 : vector<1x32x32xbf16> to vector<32x32xbf16>
    %215 = arith.index_cast %c0_i32 : i32 to index
    %c0_79 = arith.constant 0 : index
    %c0_80 = arith.constant 0 : index
    %216 = vector.load %arg18[%215, %c0_79, %c0_80] : memref<2x1x32xf32, #tpu.memory_space<vmem>>, vector<1x1x32xf32>
    %217 = vector.shape_cast %216 : vector<1x1x32xf32> to vector<1x32xf32>
    %218 = vector.extract_strided_slice %200 {offsets = [0, 0], sizes = [8, 32], strides = [1, 1]} : vector<16x32xf32> to vector<8x32xf32>
    %219 = arith.truncf %218 : vector<8x32xf32> to vector<8x32xbf16>
    %220 = vector.extract_strided_slice %210 {offsets = [0, 0], sizes = [8, 32], strides = [1, 1]} : vector<16x32xf32> to vector<8x32xf32>
    %221 = arith.truncf %220 : vector<8x32xf32> to vector<8x32xbf16>
    %222 = vector.extract_strided_slice %219 {offsets = [0, 0], sizes = [8, 8], strides = [1, 1]} : vector<8x32xbf16> to vector<8x8xbf16>
    %223 = vector.extract_strided_slice %221 {offsets = [0, 0], sizes = [8, 8], strides = [1, 1]} : vector<8x32xbf16> to vector<8x8xbf16>
    %cst_81 = arith.constant dense<0.000000e+00> : vector<8x8xf32>
    %224 = tpu.matmul %222, %223, %cst_81 {dimension_numbers = #tpu.dot_dimension_numbers<[1], [1], [0], [0], [0, 0, 1, 0], [], []>} : vector<8x8xbf16>, vector<8x8xbf16>, vector<8x8xf32> -> vector<8x8xf32>
    %cst_82 = arith.constant 0.353553385 : f32
    %225 = vector.broadcast %cst_82 : f32 to vector<8x8xf32>
    %226 = arith.mulf %224, %225 : vector<8x8xf32>
    %227 = vector.broadcast %5 : vector<1x8xf32> to vector<8x8xf32>
    %228 = arith.addf %226, %227 : vector<8x8xf32>
    %229 = vector.extract_strided_slice %219 {offsets = [0, 8], sizes = [8, 8], strides = [1, 1]} : vector<8x32xbf16> to vector<8x8xbf16>
    %230 = vector.extract_strided_slice %221 {offsets = [0, 8], sizes = [8, 8], strides = [1, 1]} : vector<8x32xbf16> to vector<8x8xbf16>
    %cst_83 = arith.constant dense<0.000000e+00> : vector<8x8xf32>
    %231 = tpu.matmul %229, %230, %cst_83 {dimension_numbers = #tpu.dot_dimension_numbers<[1], [1], [0], [0], [0, 0, 1, 0], [], []>} : vector<8x8xbf16>, vector<8x8xbf16>, vector<8x8xf32> -> vector<8x8xf32>
    %cst_84 = arith.constant 0.353553385 : f32
    %232 = vector.broadcast %cst_84 : f32 to vector<8x8xf32>
    %233 = arith.mulf %231, %232 : vector<8x8xf32>
    %234 = vector.broadcast %5 : vector<1x8xf32> to vector<8x8xf32>
    %235 = arith.addf %233, %234 : vector<8x8xf32>
    %236 = vector.extract_strided_slice %219 {offsets = [0, 16], sizes = [8, 8], strides = [1, 1]} : vector<8x32xbf16> to vector<8x8xbf16>
    %237 = vector.extract_strided_slice %221 {offsets = [0, 16], sizes = [8, 8], strides = [1, 1]} : vector<8x32xbf16> to vector<8x8xbf16>
    %cst_85 = arith.constant dense<0.000000e+00> : vector<8x8xf32>
    %238 = tpu.matmul %236, %237, %cst_85 {dimension_numbers = #tpu.dot_dimension_numbers<[1], [1], [0], [0], [0, 0, 1, 0], [], []>} : vector<8x8xbf16>, vector<8x8xbf16>, vector<8x8xf32> -> vector<8x8xf32>
    %cst_86 = arith.constant 0.353553385 : f32
    %239 = vector.broadcast %cst_86 : f32 to vector<8x8xf32>
    %240 = arith.mulf %238, %239 : vector<8x8xf32>
    %241 = vector.broadcast %5 : vector<1x8xf32> to vector<8x8xf32>
    %242 = arith.addf %240, %241 : vector<8x8xf32>
    %243 = vector.extract_strided_slice %219 {offsets = [0, 24], sizes = [8, 8], strides = [1, 1]} : vector<8x32xbf16> to vector<8x8xbf16>
    %244 = vector.extract_strided_slice %221 {offsets = [0, 24], sizes = [8, 8], strides = [1, 1]} : vector<8x32xbf16> to vector<8x8xbf16>
    %cst_87 = arith.constant dense<0.000000e+00> : vector<8x8xf32>
    %245 = tpu.matmul %243, %244, %cst_87 {dimension_numbers = #tpu.dot_dimension_numbers<[1], [1], [0], [0], [0, 0, 1, 0], [], []>} : vector<8x8xbf16>, vector<8x8xbf16>, vector<8x8xf32> -> vector<8x8xf32>
    %cst_88 = arith.constant 0.353553385 : f32
    %246 = vector.broadcast %cst_88 : f32 to vector<8x8xf32>
    %247 = arith.mulf %245, %246 : vector<8x8xf32>
    %248 = vector.broadcast %5 : vector<1x8xf32> to vector<8x8xf32>
    %249 = arith.addf %247, %248 : vector<8x8xf32>
    %250 = vector.extract_strided_slice %200 {offsets = [8, 0], sizes = [8, 32], strides = [1, 1]} : vector<16x32xf32> to vector<8x32xf32>
    %251 = arith.truncf %250 : vector<8x32xf32> to vector<8x32xbf16>
    %252 = vector.extract_strided_slice %210 {offsets = [8, 0], sizes = [8, 32], strides = [1, 1]} : vector<16x32xf32> to vector<8x32xf32>
    %253 = arith.truncf %252 : vector<8x32xf32> to vector<8x32xbf16>
    %254 = vector.extract_strided_slice %251 {offsets = [0, 0], sizes = [8, 8], strides = [1, 1]} : vector<8x32xbf16> to vector<8x8xbf16>
    %255 = vector.extract_strided_slice %253 {offsets = [0, 0], sizes = [8, 8], strides = [1, 1]} : vector<8x32xbf16> to vector<8x8xbf16>
    %cst_89 = arith.constant dense<0.000000e+00> : vector<8x8xf32>
    %256 = tpu.matmul %254, %255, %cst_89 {dimension_numbers = #tpu.dot_dimension_numbers<[1], [1], [0], [0], [0, 0, 1, 0], [], []>} : vector<8x8xbf16>, vector<8x8xbf16>, vector<8x8xf32> -> vector<8x8xf32>
    %cst_90 = arith.constant 0.353553385 : f32
    %257 = vector.broadcast %cst_90 : f32 to vector<8x8xf32>
    %258 = arith.mulf %256, %257 : vector<8x8xf32>
    %259 = vector.broadcast %7 : vector<1x8xf32> to vector<8x8xf32>
    %260 = arith.addf %258, %259 : vector<8x8xf32>
    %261 = vector.extract_strided_slice %251 {offsets = [0, 8], sizes = [8, 8], strides = [1, 1]} : vector<8x32xbf16> to vector<8x8xbf16>
    %262 = vector.extract_strided_slice %253 {offsets = [0, 8], sizes = [8, 8], strides = [1, 1]} : vector<8x32xbf16> to vector<8x8xbf16>
    %cst_91 = arith.constant dense<0.000000e+00> : vector<8x8xf32>
    %263 = tpu.matmul %261, %262, %cst_91 {dimension_numbers = #tpu.dot_dimension_numbers<[1], [1], [0], [0], [0, 0, 1, 0], [], []>} : vector<8x8xbf16>, vector<8x8xbf16>, vector<8x8xf32> -> vector<8x8xf32>
    %cst_92 = arith.constant 0.353553385 : f32
    %264 = vector.broadcast %cst_92 : f32 to vector<8x8xf32>
    %265 = arith.mulf %263, %264 : vector<8x8xf32>
    %266 = vector.broadcast %7 : vector<1x8xf32> to vector<8x8xf32>
    %267 = arith.addf %265, %266 : vector<8x8xf32>
    %268 = vector.extract_strided_slice %251 {offsets = [0, 16], sizes = [8, 8], strides = [1, 1]} : vector<8x32xbf16> to vector<8x8xbf16>
    %269 = vector.extract_strided_slice %253 {offsets = [0, 16], sizes = [8, 8], strides = [1, 1]} : vector<8x32xbf16> to vector<8x8xbf16>
    %cst_93 = arith.constant dense<0.000000e+00> : vector<8x8xf32>
    %270 = tpu.matmul %268, %269, %cst_93 {dimension_numbers = #tpu.dot_dimension_numbers<[1], [1], [0], [0], [0, 0, 1, 0], [], []>} : vector<8x8xbf16>, vector<8x8xbf16>, vector<8x8xf32> -> vector<8x8xf32>
    %cst_94 = arith.constant 0.353553385 : f32
    %271 = vector.broadcast %cst_94 : f32 to vector<8x8xf32>
    %272 = arith.mulf %270, %271 : vector<8x8xf32>
    %273 = vector.broadcast %7 : vector<1x8xf32> to vector<8x8xf32>
    %274 = arith.addf %272, %273 : vector<8x8xf32>
    %275 = vector.extract_strided_slice %251 {offsets = [0, 24], sizes = [8, 8], strides = [1, 1]} : vector<8x32xbf16> to vector<8x8xbf16>
    %276 = vector.extract_strided_slice %253 {offsets = [0, 24], sizes = [8, 8], strides = [1, 1]} : vector<8x32xbf16> to vector<8x8xbf16>
    %cst_95 = arith.constant dense<0.000000e+00> : vector<8x8xf32>
    %277 = tpu.matmul %275, %276, %cst_95 {dimension_numbers = #tpu.dot_dimension_numbers<[1], [1], [0], [0], [0, 0, 1, 0], [], []>} : vector<8x8xbf16>, vector<8x8xbf16>, vector<8x8xf32> -> vector<8x8xf32>
    %cst_96 = arith.constant 0.353553385 : f32
    %278 = vector.broadcast %cst_96 : f32 to vector<8x8xf32>
    %279 = arith.mulf %277, %278 : vector<8x8xf32>
    %280 = vector.broadcast %7 : vector<1x8xf32> to vector<8x8xf32>
    %281 = arith.addf %279, %280 : vector<8x8xf32>
    %282 = tpu.concatenate %228, %235, %242, %249, %260, %267, %274, %281 in 0 : vector<8x8xf32>, vector<8x8xf32>, vector<8x8xf32>, vector<8x8xf32>, vector<8x8xf32>, vector<8x8xf32>, vector<8x8xf32>, vector<8x8xf32> -> vector<64x8xf32>
    %cst_97 = arith.constant dense<0xFF800000> : vector<64xf32>
    %283 = vector.multi_reduction <maximumf>, %282, %cst_97 [1] : vector<64x8xf32> to vector<64xf32>
    %284 = vector.shape_cast %283 : vector<64xf32> to vector<64x1xf32>
    %285 = vector.broadcast %284 : vector<64x1xf32> to vector<64x8xf32>
    %286 = arith.subf %282, %285 : vector<64x8xf32>
    %287 = math.exp %286 : vector<64x8xf32>
    %cst_98 = arith.constant dense<0.000000e+00> : vector<64xf32>
    %288 = vector.multi_reduction <add>, %287, %cst_98 [1] : vector<64x8xf32> to vector<64xf32>
    %289 = vector.shape_cast %288 : vector<64xf32> to vector<64x1xf32>
    %290 = tpu.reciprocal %289 {approx = true} : vector<64x1xf32> -> vector<64x1xf32>
    %291 = vector.broadcast %290 : vector<64x1xf32> to vector<64x8xf32>
    %292 = arith.mulf %287, %291 : vector<64x8xf32>
    %293 = arith.truncf %292 : vector<64x8xf32> to vector<64x8xbf16>
    %294 = vector.extract_strided_slice %211 {offsets = [0, 0], sizes = [8, 32], strides = [1, 1]} : vector<16x32xf32> to vector<8x32xf32>
    %295 = arith.truncf %294 : vector<8x32xf32> to vector<8x32xbf16>
    %296 = vector.extract_strided_slice %293 {offsets = [0, 0], sizes = [8, 8], strides = [1, 1]} : vector<64x8xbf16> to vector<8x8xbf16>
    %297 = vector.extract_strided_slice %295 {offsets = [0, 0], sizes = [8, 8], strides = [1, 1]} : vector<8x32xbf16> to vector<8x8xbf16>
    %cst_99 = arith.constant dense<0.000000e+00> : vector<8x8xf32>
    %298 = tpu.matmul %296, %297, %cst_99 {dimension_numbers = #tpu.dot_dimension_numbers<[1], [0], [0], [1], [0, 0, 1, 1], [], []>} : vector<8x8xbf16>, vector<8x8xbf16>, vector<8x8xf32> -> vector<8x8xf32>
    %299 = vector.extract_strided_slice %293 {offsets = [8, 0], sizes = [8, 8], strides = [1, 1]} : vector<64x8xbf16> to vector<8x8xbf16>
    %300 = vector.extract_strided_slice %295 {offsets = [0, 8], sizes = [8, 8], strides = [1, 1]} : vector<8x32xbf16> to vector<8x8xbf16>
    %cst_100 = arith.constant dense<0.000000e+00> : vector<8x8xf32>
    %301 = tpu.matmul %299, %300, %cst_100 {dimension_numbers = #tpu.dot_dimension_numbers<[1], [0], [0], [1], [0, 0, 1, 1], [], []>} : vector<8x8xbf16>, vector<8x8xbf16>, vector<8x8xf32> -> vector<8x8xf32>
    %302 = vector.extract_strided_slice %293 {offsets = [16, 0], sizes = [8, 8], strides = [1, 1]} : vector<64x8xbf16> to vector<8x8xbf16>
    %303 = vector.extract_strided_slice %295 {offsets = [0, 16], sizes = [8, 8], strides = [1, 1]} : vector<8x32xbf16> to vector<8x8xbf16>
    %cst_101 = arith.constant dense<0.000000e+00> : vector<8x8xf32>
    %304 = tpu.matmul %302, %303, %cst_101 {dimension_numbers = #tpu.dot_dimension_numbers<[1], [0], [0], [1], [0, 0, 1, 1], [], []>} : vector<8x8xbf16>, vector<8x8xbf16>, vector<8x8xf32> -> vector<8x8xf32>
    %305 = vector.extract_strided_slice %293 {offsets = [24, 0], sizes = [8, 8], strides = [1, 1]} : vector<64x8xbf16> to vector<8x8xbf16>
    %306 = vector.extract_strided_slice %295 {offsets = [0, 24], sizes = [8, 8], strides = [1, 1]} : vector<8x32xbf16> to vector<8x8xbf16>
    %cst_102 = arith.constant dense<0.000000e+00> : vector<8x8xf32>
    %307 = tpu.matmul %305, %306, %cst_102 {dimension_numbers = #tpu.dot_dimension_numbers<[1], [0], [0], [1], [0, 0, 1, 1], [], []>} : vector<8x8xbf16>, vector<8x8xbf16>, vector<8x8xf32> -> vector<8x8xf32>
    %308 = tpu.concatenate %298, %301, %304, %307 in 1 : vector<8x8xf32>, vector<8x8xf32>, vector<8x8xf32>, vector<8x8xf32> -> vector<8x32xf32>
    %309 = vector.extract_strided_slice %211 {offsets = [8, 0], sizes = [8, 32], strides = [1, 1]} : vector<16x32xf32> to vector<8x32xf32>
    %310 = arith.truncf %309 : vector<8x32xf32> to vector<8x32xbf16>
    %311 = vector.extract_strided_slice %293 {offsets = [32, 0], sizes = [8, 8], strides = [1, 1]} : vector<64x8xbf16> to vector<8x8xbf16>
    %312 = vector.extract_strided_slice %310 {offsets = [0, 0], sizes = [8, 8], strides = [1, 1]} : vector<8x32xbf16> to vector<8x8xbf16>
    %cst_103 = arith.constant dense<0.000000e+00> : vector<8x8xf32>
    %313 = tpu.matmul %311, %312, %cst_103 {dimension_numbers = #tpu.dot_dimension_numbers<[1], [0], [0], [1], [0, 0, 1, 1], [], []>} : vector<8x8xbf16>, vector<8x8xbf16>, vector<8x8xf32> -> vector<8x8xf32>
    %314 = vector.extract_strided_slice %293 {offsets = [40, 0], sizes = [8, 8], strides = [1, 1]} : vector<64x8xbf16> to vector<8x8xbf16>
    %315 = vector.extract_strided_slice %310 {offsets = [0, 8], sizes = [8, 8], strides = [1, 1]} : vector<8x32xbf16> to vector<8x8xbf16>
    %cst_104 = arith.constant dense<0.000000e+00> : vector<8x8xf32>
    %316 = tpu.matmul %314, %315, %cst_104 {dimension_numbers = #tpu.dot_dimension_numbers<[1], [0], [0], [1], [0, 0, 1, 1], [], []>} : vector<8x8xbf16>, vector<8x8xbf16>, vector<8x8xf32> -> vector<8x8xf32>
    %317 = vector.extract_strided_slice %293 {offsets = [48, 0], sizes = [8, 8], strides = [1, 1]} : vector<64x8xbf16> to vector<8x8xbf16>
    %318 = vector.extract_strided_slice %310 {offsets = [0, 16], sizes = [8, 8], strides = [1, 1]} : vector<8x32xbf16> to vector<8x8xbf16>
    %cst_105 = arith.constant dense<0.000000e+00> : vector<8x8xf32>
    %319 = tpu.matmul %317, %318, %cst_105 {dimension_numbers = #tpu.dot_dimension_numbers<[1], [0], [0], [1], [0, 0, 1, 1], [], []>} : vector<8x8xbf16>, vector<8x8xbf16>, vector<8x8xf32> -> vector<8x8xf32>
    %320 = vector.extract_strided_slice %293 {offsets = [56, 0], sizes = [8, 8], strides = [1, 1]} : vector<64x8xbf16> to vector<8x8xbf16>
    %321 = vector.extract_strided_slice %310 {offsets = [0, 24], sizes = [8, 8], strides = [1, 1]} : vector<8x32xbf16> to vector<8x8xbf16>
    %cst_106 = arith.constant dense<0.000000e+00> : vector<8x8xf32>
    %322 = tpu.matmul %320, %321, %cst_106 {dimension_numbers = #tpu.dot_dimension_numbers<[1], [0], [0], [1], [0, 0, 1, 1], [], []>} : vector<8x8xbf16>, vector<8x8xbf16>, vector<8x8xf32> -> vector<8x8xf32>
    %323 = tpu.concatenate %313, %316, %319, %322 in 1 : vector<8x8xf32>, vector<8x8xf32>, vector<8x8xf32>, vector<8x8xf32> -> vector<8x32xf32>
    %324 = tpu.concatenate %308, %323 in 0 : vector<8x32xf32>, vector<8x32xf32> -> vector<16x32xf32>
    %325 = arith.truncf %324 : vector<16x32xf32> to vector<16x32xbf16>
    %cst_107 = arith.constant dense<0.000000e+00> : vector<16x32xf32>
    %326 = tpu.matmul %325, %214, %cst_107 {dimension_numbers = #tpu.dot_dimension_numbers<[1], [0], [0], [1], [0, 0, 1, 1], [], []>} : vector<16x32xbf16>, vector<32x32xbf16>, vector<16x32xf32> -> vector<16x32xf32>
    %327 = vector.broadcast %217 : vector<1x32xf32> to vector<16x32xf32>
    %328 = arith.addf %326, %327 : vector<16x32xf32>
    %329 = arith.addf %190, %328 : vector<16x32xf32>
    %330 = arith.index_cast %c0_i32 : i32 to index
    %c0_108 = arith.constant 0 : index
    %c0_109 = arith.constant 0 : index
    %331 = vector.load %arg19[%330, %c0_108, %c0_109] : memref<2x1x32xf32, #tpu.memory_space<vmem>>, vector<1x1x32xf32>
    %332 = vector.shape_cast %331 : vector<1x1x32xf32> to vector<1x32xf32>
    %333 = arith.index_cast %c0_i32 : i32 to index
    %c0_110 = arith.constant 0 : index
    %c0_111 = arith.constant 0 : index
    %334 = vector.load %arg20[%333, %c0_110, %c0_111] : memref<2x1x32xf32, #tpu.memory_space<vmem>>, vector<1x1x32xf32>
    %335 = vector.shape_cast %334 : vector<1x1x32xf32> to vector<1x32xf32>
    %cst_112 = arith.constant dense<0.000000e+00> : vector<16xf32>
    %336 = vector.multi_reduction <add>, %329, %cst_112 [1] : vector<16x32xf32> to vector<16xf32>
    %337 = vector.shape_cast %336 : vector<16xf32> to vector<16x1xf32>
    %cst_113 = arith.constant 3.200000e+01 : f32
    %338 = vector.broadcast %cst_113 : f32 to vector<16x1xf32>
    %339 = arith.divf %337, %338 : vector<16x1xf32>
    %340 = vector.broadcast %339 : vector<16x1xf32> to vector<16x32xf32>
    %341 = arith.subf %329, %340 : vector<16x32xf32>
    %342 = arith.mulf %341, %341 : vector<16x32xf32>
    %cst_114 = arith.constant dense<0.000000e+00> : vector<16xf32>
    %343 = vector.multi_reduction <add>, %342, %cst_114 [1] : vector<16x32xf32> to vector<16xf32>
    %344 = vector.shape_cast %343 : vector<16xf32> to vector<16x1xf32>
    %cst_115 = arith.constant 3.200000e+01 : f32
    %345 = vector.broadcast %cst_115 : f32 to vector<16x1xf32>
    %346 = arith.divf %344, %345 : vector<16x1xf32>
    %347 = vector.broadcast %339 : vector<16x1xf32> to vector<16x32xf32>
    %348 = arith.subf %329, %347 : vector<16x32xf32>
    %cst_116 = arith.constant 9.99999974E-6 : f32
    %349 = vector.broadcast %cst_116 : f32 to vector<16x1xf32>
    %350 = arith.addf %346, %349 : vector<16x1xf32>
    %351 = math.rsqrt %350 : vector<16x1xf32>
    %352 = vector.broadcast %351 : vector<16x1xf32> to vector<16x32xf32>
    %353 = arith.mulf %348, %352 : vector<16x32xf32>
    %354 = vector.broadcast %332 : vector<1x32xf32> to vector<16x32xf32>
    %355 = arith.mulf %353, %354 : vector<16x32xf32>
    %356 = vector.broadcast %335 : vector<1x32xf32> to vector<16x32xf32>
    %357 = arith.addf %355, %356 : vector<16x32xf32>
    %358 = arith.index_cast %c0_i32 : i32 to index
    %c0_117 = arith.constant 0 : index
    %c0_118 = arith.constant 0 : index
    %359 = vector.load %arg21[%358, %c0_117, %c0_118] : memref<2x32x64xbf16, #tpu.memory_space<vmem>>, vector<1x32x64xbf16>
    %360 = vector.shape_cast %359 : vector<1x32x64xbf16> to vector<32x64xbf16>
    %361 = arith.index_cast %c0_i32 : i32 to index
    %c0_119 = arith.constant 0 : index
    %c0_120 = arith.constant 0 : index
    %362 = vector.load %arg22[%361, %c0_119, %c0_120] : memref<2x1x64xf32, #tpu.memory_space<vmem>>, vector<1x1x64xf32>
    %363 = vector.shape_cast %362 : vector<1x1x64xf32> to vector<1x64xf32>
    %364 = arith.index_cast %c0_i32 : i32 to index
    %c0_121 = arith.constant 0 : index
    %c0_122 = arith.constant 0 : index
    %365 = vector.load %arg23[%364, %c0_121, %c0_122] : memref<2x64x32xbf16, #tpu.memory_space<vmem>>, vector<1x64x32xbf16>
    %366 = vector.shape_cast %365 : vector<1x64x32xbf16> to vector<64x32xbf16>
    %367 = arith.index_cast %c0_i32 : i32 to index
    %c0_123 = arith.constant 0 : index
    %c0_124 = arith.constant 0 : index
    %368 = vector.load %arg24[%367, %c0_123, %c0_124] : memref<2x1x32xf32, #tpu.memory_space<vmem>>, vector<1x1x32xf32>
    %369 = vector.shape_cast %368 : vector<1x1x32xf32> to vector<1x32xf32>
    %370 = arith.truncf %357 : vector<16x32xf32> to vector<16x32xbf16>
    %cst_125 = arith.constant dense<0.000000e+00> : vector<16x64xf32>
    %371 = tpu.matmul %370, %360, %cst_125 {dimension_numbers = #tpu.dot_dimension_numbers<[1], [0], [0], [1], [0, 0, 1, 1], [], []>} : vector<16x32xbf16>, vector<32x64xbf16>, vector<16x64xf32> -> vector<16x64xf32>
    %372 = vector.broadcast %363 : vector<1x64xf32> to vector<16x64xf32>
    %373 = arith.addf %371, %372 : vector<16x64xf32>
    %cst_126 = arith.constant 0.000000e+00 : f32
    %374 = vector.broadcast %cst_126 : f32 to vector<16x64xf32>
    %375 = arith.maximumf %373, %374 : vector<16x64xf32>
    %376 = arith.truncf %375 : vector<16x64xf32> to vector<16x64xbf16>
    %cst_127 = arith.constant dense<0.000000e+00> : vector<16x32xf32>
    %377 = tpu.matmul %376, %366, %cst_127 {dimension_numbers = #tpu.dot_dimension_numbers<[1], [0], [0], [1], [0, 0, 1, 1], [], []>} : vector<16x64xbf16>, vector<64x32xbf16>, vector<16x32xf32> -> vector<16x32xf32>
    %378 = vector.broadcast %369 : vector<1x32xf32> to vector<16x32xf32>
    %379 = arith.addf %377, %378 : vector<16x32xf32>
    %380 = arith.addf %357, %379 : vector<16x32xf32>
    %381 = arith.index_cast %c0_i32 : i32 to index
    %c0_128 = arith.constant 0 : index
    %c0_129 = arith.constant 0 : index
    %382 = vector.load %arg25[%381, %c0_128, %c0_129] : memref<2x1x32xf32, #tpu.memory_space<vmem>>, vector<1x1x32xf32>
    %383 = vector.shape_cast %382 : vector<1x1x32xf32> to vector<1x32xf32>
    %384 = arith.index_cast %c0_i32 : i32 to index
    %c0_130 = arith.constant 0 : index
    %c0_131 = arith.constant 0 : index
    %385 = vector.load %arg26[%384, %c0_130, %c0_131] : memref<2x1x32xf32, #tpu.memory_space<vmem>>, vector<1x1x32xf32>
    %386 = vector.shape_cast %385 : vector<1x1x32xf32> to vector<1x32xf32>
    %cst_132 = arith.constant dense<0.000000e+00> : vector<16xf32>
    %387 = vector.multi_reduction <add>, %380, %cst_132 [1] : vector<16x32xf32> to vector<16xf32>
    %388 = vector.shape_cast %387 : vector<16xf32> to vector<16x1xf32>
    %cst_133 = arith.constant 3.200000e+01 : f32
    %389 = vector.broadcast %cst_133 : f32 to vector<16x1xf32>
    %390 = arith.divf %388, %389 : vector<16x1xf32>
    %391 = vector.broadcast %390 : vector<16x1xf32> to vector<16x32xf32>
    %392 = arith.subf %380, %391 : vector<16x32xf32>
    %393 = arith.mulf %392, %392 : vector<16x32xf32>
    %cst_134 = arith.constant dense<0.000000e+00> : vector<16xf32>
    %394 = vector.multi_reduction <add>, %393, %cst_134 [1] : vector<16x32xf32> to vector<16xf32>
    %395 = vector.shape_cast %394 : vector<16xf32> to vector<16x1xf32>
    %cst_135 = arith.constant 3.200000e+01 : f32
    %396 = vector.broadcast %cst_135 : f32 to vector<16x1xf32>
    %397 = arith.divf %395, %396 : vector<16x1xf32>
    %398 = vector.broadcast %390 : vector<16x1xf32> to vector<16x32xf32>
    %399 = arith.subf %380, %398 : vector<16x32xf32>
    %cst_136 = arith.constant 9.99999974E-6 : f32
    %400 = vector.broadcast %cst_136 : f32 to vector<16x1xf32>
    %401 = arith.addf %397, %400 : vector<16x1xf32>
    %402 = math.rsqrt %401 : vector<16x1xf32>
    %403 = vector.broadcast %402 : vector<16x1xf32> to vector<16x32xf32>
    %404 = arith.mulf %399, %403 : vector<16x32xf32>
    %405 = vector.broadcast %383 : vector<1x32xf32> to vector<16x32xf32>
    %406 = arith.mulf %404, %405 : vector<16x32xf32>
    %407 = vector.broadcast %386 : vector<1x32xf32> to vector<16x32xf32>
    %408 = arith.addf %406, %407 : vector<16x32xf32>
    %c1_i32 = arith.constant 1 : i32
    %409 = arith.truncf %408 : vector<16x32xf32> to vector<16x32xbf16>
    %410 = arith.index_cast %c1_i32 : i32 to index
    %c0_137 = arith.constant 0 : index
    %c0_138 = arith.constant 0 : index
    %411 = vector.load %arg7[%410, %c0_137, %c0_138] : memref<2x32x96xbf16, #tpu.memory_space<vmem>>, vector<1x32x96xbf16>
    %412 = vector.shape_cast %411 : vector<1x32x96xbf16> to vector<32x96xbf16>
    %cst_139 = arith.constant dense<0.000000e+00> : vector<16x96xf32>
    %413 = tpu.matmul %409, %412, %cst_139 {dimension_numbers = #tpu.dot_dimension_numbers<[1], [0], [0], [1], [0, 0, 1, 1], [], []>} : vector<16x32xbf16>, vector<32x96xbf16>, vector<16x96xf32> -> vector<16x96xf32>
    %414 = arith.index_cast %c1_i32 : i32 to index
    %c0_140 = arith.constant 0 : index
    %c0_141 = arith.constant 0 : index
    %415 = vector.load %arg8[%414, %c0_140, %c0_141] : memref<2x1x96xf32, #tpu.memory_space<vmem>>, vector<1x1x96xf32>
    %416 = vector.shape_cast %415 : vector<1x1x96xf32> to vector<1x96xf32>
    %417 = vector.broadcast %416 : vector<1x96xf32> to vector<16x96xf32>
    %418 = arith.addf %413, %417 : vector<16x96xf32>
    %419 = vector.extract_strided_slice %418 {offsets = [0, 0], sizes = [16, 32], strides = [1, 1]} : vector<16x96xf32> to vector<16x32xf32>
    %420 = vector.extract_strided_slice %418 {offsets = [0, 32], sizes = [16, 32], strides = [1, 1]} : vector<16x96xf32> to vector<16x32xf32>
    %421 = vector.extract_strided_slice %418 {offsets = [0, 64], sizes = [16, 32], strides = [1, 1]} : vector<16x96xf32> to vector<16x32xf32>
    %422 = arith.index_cast %c1_i32 : i32 to index
    %c0_142 = arith.constant 0 : index
    %c0_143 = arith.constant 0 : index
    %423 = vector.load %arg9[%422, %c0_142, %c0_143] : memref<2x32x32xbf16, #tpu.memory_space<vmem>>, vector<1x32x32xbf16>
    %424 = vector.shape_cast %423 : vector<1x32x32xbf16> to vector<32x32xbf16>
    %425 = arith.index_cast %c1_i32 : i32 to index
    %c0_144 = arith.constant 0 : index
    %c0_145 = arith.constant 0 : index
    %426 = vector.load %arg10[%425, %c0_144, %c0_145] : memref<2x1x32xf32, #tpu.memory_space<vmem>>, vector<1x1x32xf32>
    %427 = vector.shape_cast %426 : vector<1x1x32xf32> to vector<1x32xf32>
    %428 = vector.extract_strided_slice %419 {offsets = [0, 0], sizes = [8, 32], strides = [1, 1]} : vector<16x32xf32> to vector<8x32xf32>
    %429 = arith.truncf %428 : vector<8x32xf32> to vector<8x32xbf16>
    %430 = vector.extract_strided_slice %420 {offsets = [0, 0], sizes = [8, 32], strides = [1, 1]} : vector<16x32xf32> to vector<8x32xf32>
    %431 = arith.truncf %430 : vector<8x32xf32> to vector<8x32xbf16>
    %432 = vector.extract_strided_slice %429 {offsets = [0, 0], sizes = [8, 8], strides = [1, 1]} : vector<8x32xbf16> to vector<8x8xbf16>
    %433 = vector.extract_strided_slice %431 {offsets = [0, 0], sizes = [8, 8], strides = [1, 1]} : vector<8x32xbf16> to vector<8x8xbf16>
    %cst_146 = arith.constant dense<0.000000e+00> : vector<8x8xf32>
    %434 = tpu.matmul %432, %433, %cst_146 {dimension_numbers = #tpu.dot_dimension_numbers<[1], [1], [0], [0], [0, 0, 1, 0], [], []>} : vector<8x8xbf16>, vector<8x8xbf16>, vector<8x8xf32> -> vector<8x8xf32>
    %cst_147 = arith.constant 0.353553385 : f32
    %435 = vector.broadcast %cst_147 : f32 to vector<8x8xf32>
    %436 = arith.mulf %434, %435 : vector<8x8xf32>
    %437 = arith.addf %436, %24 : vector<8x8xf32>
    %438 = vector.extract_strided_slice %429 {offsets = [0, 8], sizes = [8, 8], strides = [1, 1]} : vector<8x32xbf16> to vector<8x8xbf16>
    %439 = vector.extract_strided_slice %431 {offsets = [0, 8], sizes = [8, 8], strides = [1, 1]} : vector<8x32xbf16> to vector<8x8xbf16>
    %cst_148 = arith.constant dense<0.000000e+00> : vector<8x8xf32>
    %440 = tpu.matmul %438, %439, %cst_148 {dimension_numbers = #tpu.dot_dimension_numbers<[1], [1], [0], [0], [0, 0, 1, 0], [], []>} : vector<8x8xbf16>, vector<8x8xbf16>, vector<8x8xf32> -> vector<8x8xf32>
    %cst_149 = arith.constant 0.353553385 : f32
    %441 = vector.broadcast %cst_149 : f32 to vector<8x8xf32>
    %442 = arith.mulf %440, %441 : vector<8x8xf32>
    %443 = arith.addf %442, %24 : vector<8x8xf32>
    %444 = vector.extract_strided_slice %429 {offsets = [0, 16], sizes = [8, 8], strides = [1, 1]} : vector<8x32xbf16> to vector<8x8xbf16>
    %445 = vector.extract_strided_slice %431 {offsets = [0, 16], sizes = [8, 8], strides = [1, 1]} : vector<8x32xbf16> to vector<8x8xbf16>
    %cst_150 = arith.constant dense<0.000000e+00> : vector<8x8xf32>
    %446 = tpu.matmul %444, %445, %cst_150 {dimension_numbers = #tpu.dot_dimension_numbers<[1], [1], [0], [0], [0, 0, 1, 0], [], []>} : vector<8x8xbf16>, vector<8x8xbf16>, vector<8x8xf32> -> vector<8x8xf32>
    %cst_151 = arith.constant 0.353553385 : f32
    %447 = vector.broadcast %cst_151 : f32 to vector<8x8xf32>
    %448 = arith.mulf %446, %447 : vector<8x8xf32>
    %449 = arith.addf %448, %24 : vector<8x8xf32>
    %450 = vector.extract_strided_slice %429 {offsets = [0, 24], sizes = [8, 8], strides = [1, 1]} : vector<8x32xbf16> to vector<8x8xbf16>
    %451 = vector.extract_strided_slice %431 {offsets = [0, 24], sizes = [8, 8], strides = [1, 1]} : vector<8x32xbf16> to vector<8x8xbf16>
    %cst_152 = arith.constant dense<0.000000e+00> : vector<8x8xf32>
    %452 = tpu.matmul %450, %451, %cst_152 {dimension_numbers = #tpu.dot_dimension_numbers<[1], [1], [0], [0], [0, 0, 1, 0], [], []>} : vector<8x8xbf16>, vector<8x8xbf16>, vector<8x8xf32> -> vector<8x8xf32>
    %cst_153 = arith.constant 0.353553385 : f32
    %453 = vector.broadcast %cst_153 : f32 to vector<8x8xf32>
    %454 = arith.mulf %452, %453 : vector<8x8xf32>
    %455 = arith.addf %454, %24 : vector<8x8xf32>
    %456 = vector.extract_strided_slice %419 {offsets = [8, 0], sizes = [8, 32], strides = [1, 1]} : vector<16x32xf32> to vector<8x32xf32>
    %457 = arith.truncf %456 : vector<8x32xf32> to vector<8x32xbf16>
    %458 = vector.extract_strided_slice %420 {offsets = [8, 0], sizes = [8, 32], strides = [1, 1]} : vector<16x32xf32> to vector<8x32xf32>
    %459 = arith.truncf %458 : vector<8x32xf32> to vector<8x32xbf16>
    %460 = vector.extract_strided_slice %457 {offsets = [0, 0], sizes = [8, 8], strides = [1, 1]} : vector<8x32xbf16> to vector<8x8xbf16>
    %461 = vector.extract_strided_slice %459 {offsets = [0, 0], sizes = [8, 8], strides = [1, 1]} : vector<8x32xbf16> to vector<8x8xbf16>
    %cst_154 = arith.constant dense<0.000000e+00> : vector<8x8xf32>
    %462 = tpu.matmul %460, %461, %cst_154 {dimension_numbers = #tpu.dot_dimension_numbers<[1], [1], [0], [0], [0, 0, 1, 0], [], []>} : vector<8x8xbf16>, vector<8x8xbf16>, vector<8x8xf32> -> vector<8x8xf32>
    %cst_155 = arith.constant 0.353553385 : f32
    %463 = vector.broadcast %cst_155 : f32 to vector<8x8xf32>
    %464 = arith.mulf %462, %463 : vector<8x8xf32>
    %465 = arith.addf %464, %27 : vector<8x8xf32>
    %466 = vector.extract_strided_slice %457 {offsets = [0, 8], sizes = [8, 8], strides = [1, 1]} : vector<8x32xbf16> to vector<8x8xbf16>
    %467 = vector.extract_strided_slice %459 {offsets = [0, 8], sizes = [8, 8], strides = [1, 1]} : vector<8x32xbf16> to vector<8x8xbf16>
    %cst_156 = arith.constant dense<0.000000e+00> : vector<8x8xf32>
    %468 = tpu.matmul %466, %467, %cst_156 {dimension_numbers = #tpu.dot_dimension_numbers<[1], [1], [0], [0], [0, 0, 1, 0], [], []>} : vector<8x8xbf16>, vector<8x8xbf16>, vector<8x8xf32> -> vector<8x8xf32>
    %cst_157 = arith.constant 0.353553385 : f32
    %469 = vector.broadcast %cst_157 : f32 to vector<8x8xf32>
    %470 = arith.mulf %468, %469 : vector<8x8xf32>
    %471 = arith.addf %470, %27 : vector<8x8xf32>
    %472 = vector.extract_strided_slice %457 {offsets = [0, 16], sizes = [8, 8], strides = [1, 1]} : vector<8x32xbf16> to vector<8x8xbf16>
    %473 = vector.extract_strided_slice %459 {offsets = [0, 16], sizes = [8, 8], strides = [1, 1]} : vector<8x32xbf16> to vector<8x8xbf16>
    %cst_158 = arith.constant dense<0.000000e+00> : vector<8x8xf32>
    %474 = tpu.matmul %472, %473, %cst_158 {dimension_numbers = #tpu.dot_dimension_numbers<[1], [1], [0], [0], [0, 0, 1, 0], [], []>} : vector<8x8xbf16>, vector<8x8xbf16>, vector<8x8xf32> -> vector<8x8xf32>
    %cst_159 = arith.constant 0.353553385 : f32
    %475 = vector.broadcast %cst_159 : f32 to vector<8x8xf32>
    %476 = arith.mulf %474, %475 : vector<8x8xf32>
    %477 = arith.addf %476, %27 : vector<8x8xf32>
    %478 = vector.extract_strided_slice %457 {offsets = [0, 24], sizes = [8, 8], strides = [1, 1]} : vector<8x32xbf16> to vector<8x8xbf16>
    %479 = vector.extract_strided_slice %459 {offsets = [0, 24], sizes = [8, 8], strides = [1, 1]} : vector<8x32xbf16> to vector<8x8xbf16>
    %cst_160 = arith.constant dense<0.000000e+00> : vector<8x8xf32>
    %480 = tpu.matmul %478, %479, %cst_160 {dimension_numbers = #tpu.dot_dimension_numbers<[1], [1], [0], [0], [0, 0, 1, 0], [], []>} : vector<8x8xbf16>, vector<8x8xbf16>, vector<8x8xf32> -> vector<8x8xf32>
    %cst_161 = arith.constant 0.353553385 : f32
    %481 = vector.broadcast %cst_161 : f32 to vector<8x8xf32>
    %482 = arith.mulf %480, %481 : vector<8x8xf32>
    %483 = arith.addf %482, %27 : vector<8x8xf32>
    %484 = tpu.concatenate %437, %443, %449, %455, %465, %471, %477, %483 in 0 : vector<8x8xf32>, vector<8x8xf32>, vector<8x8xf32>, vector<8x8xf32>, vector<8x8xf32>, vector<8x8xf32>, vector<8x8xf32>, vector<8x8xf32> -> vector<64x8xf32>
    %cst_162 = arith.constant dense<0xFF800000> : vector<64xf32>
    %485 = vector.multi_reduction <maximumf>, %484, %cst_162 [1] : vector<64x8xf32> to vector<64xf32>
    %486 = vector.shape_cast %485 : vector<64xf32> to vector<64x1xf32>
    %487 = vector.broadcast %486 : vector<64x1xf32> to vector<64x8xf32>
    %488 = arith.subf %484, %487 : vector<64x8xf32>
    %489 = math.exp %488 : vector<64x8xf32>
    %cst_163 = arith.constant dense<0.000000e+00> : vector<64xf32>
    %490 = vector.multi_reduction <add>, %489, %cst_163 [1] : vector<64x8xf32> to vector<64xf32>
    %491 = vector.shape_cast %490 : vector<64xf32> to vector<64x1xf32>
    %492 = tpu.reciprocal %491 {approx = true} : vector<64x1xf32> -> vector<64x1xf32>
    %493 = vector.broadcast %492 : vector<64x1xf32> to vector<64x8xf32>
    %494 = arith.mulf %489, %493 : vector<64x8xf32>
    %495 = arith.truncf %494 : vector<64x8xf32> to vector<64x8xbf16>
    %496 = vector.extract_strided_slice %421 {offsets = [0, 0], sizes = [8, 32], strides = [1, 1]} : vector<16x32xf32> to vector<8x32xf32>
    %497 = arith.truncf %496 : vector<8x32xf32> to vector<8x32xbf16>
    %498 = vector.extract_strided_slice %495 {offsets = [0, 0], sizes = [8, 8], strides = [1, 1]} : vector<64x8xbf16> to vector<8x8xbf16>
    %499 = vector.extract_strided_slice %497 {offsets = [0, 0], sizes = [8, 8], strides = [1, 1]} : vector<8x32xbf16> to vector<8x8xbf16>
    %cst_164 = arith.constant dense<0.000000e+00> : vector<8x8xf32>
    %500 = tpu.matmul %498, %499, %cst_164 {dimension_numbers = #tpu.dot_dimension_numbers<[1], [0], [0], [1], [0, 0, 1, 1], [], []>} : vector<8x8xbf16>, vector<8x8xbf16>, vector<8x8xf32> -> vector<8x8xf32>
    %501 = vector.extract_strided_slice %495 {offsets = [8, 0], sizes = [8, 8], strides = [1, 1]} : vector<64x8xbf16> to vector<8x8xbf16>
    %502 = vector.extract_strided_slice %497 {offsets = [0, 8], sizes = [8, 8], strides = [1, 1]} : vector<8x32xbf16> to vector<8x8xbf16>
    %cst_165 = arith.constant dense<0.000000e+00> : vector<8x8xf32>
    %503 = tpu.matmul %501, %502, %cst_165 {dimension_numbers = #tpu.dot_dimension_numbers<[1], [0], [0], [1], [0, 0, 1, 1], [], []>} : vector<8x8xbf16>, vector<8x8xbf16>, vector<8x8xf32> -> vector<8x8xf32>
    %504 = vector.extract_strided_slice %495 {offsets = [16, 0], sizes = [8, 8], strides = [1, 1]} : vector<64x8xbf16> to vector<8x8xbf16>
    %505 = vector.extract_strided_slice %497 {offsets = [0, 16], sizes = [8, 8], strides = [1, 1]} : vector<8x32xbf16> to vector<8x8xbf16>
    %cst_166 = arith.constant dense<0.000000e+00> : vector<8x8xf32>
    %506 = tpu.matmul %504, %505, %cst_166 {dimension_numbers = #tpu.dot_dimension_numbers<[1], [0], [0], [1], [0, 0, 1, 1], [], []>} : vector<8x8xbf16>, vector<8x8xbf16>, vector<8x8xf32> -> vector<8x8xf32>
    %507 = vector.extract_strided_slice %495 {offsets = [24, 0], sizes = [8, 8], strides = [1, 1]} : vector<64x8xbf16> to vector<8x8xbf16>
    %508 = vector.extract_strided_slice %497 {offsets = [0, 24], sizes = [8, 8], strides = [1, 1]} : vector<8x32xbf16> to vector<8x8xbf16>
    %cst_167 = arith.constant dense<0.000000e+00> : vector<8x8xf32>
    %509 = tpu.matmul %507, %508, %cst_167 {dimension_numbers = #tpu.dot_dimension_numbers<[1], [0], [0], [1], [0, 0, 1, 1], [], []>} : vector<8x8xbf16>, vector<8x8xbf16>, vector<8x8xf32> -> vector<8x8xf32>
    %510 = tpu.concatenate %500, %503, %506, %509 in 1 : vector<8x8xf32>, vector<8x8xf32>, vector<8x8xf32>, vector<8x8xf32> -> vector<8x32xf32>
    %511 = vector.extract_strided_slice %421 {offsets = [8, 0], sizes = [8, 32], strides = [1, 1]} : vector<16x32xf32> to vector<8x32xf32>
    %512 = arith.truncf %511 : vector<8x32xf32> to vector<8x32xbf16>
    %513 = vector.extract_strided_slice %495 {offsets = [32, 0], sizes = [8, 8], strides = [1, 1]} : vector<64x8xbf16> to vector<8x8xbf16>
    %514 = vector.extract_strided_slice %512 {offsets = [0, 0], sizes = [8, 8], strides = [1, 1]} : vector<8x32xbf16> to vector<8x8xbf16>
    %cst_168 = arith.constant dense<0.000000e+00> : vector<8x8xf32>
    %515 = tpu.matmul %513, %514, %cst_168 {dimension_numbers = #tpu.dot_dimension_numbers<[1], [0], [0], [1], [0, 0, 1, 1], [], []>} : vector<8x8xbf16>, vector<8x8xbf16>, vector<8x8xf32> -> vector<8x8xf32>
    %516 = vector.extract_strided_slice %495 {offsets = [40, 0], sizes = [8, 8], strides = [1, 1]} : vector<64x8xbf16> to vector<8x8xbf16>
    %517 = vector.extract_strided_slice %512 {offsets = [0, 8], sizes = [8, 8], strides = [1, 1]} : vector<8x32xbf16> to vector<8x8xbf16>
    %cst_169 = arith.constant dense<0.000000e+00> : vector<8x8xf32>
    %518 = tpu.matmul %516, %517, %cst_169 {dimension_numbers = #tpu.dot_dimension_numbers<[1], [0], [0], [1], [0, 0, 1, 1], [], []>} : vector<8x8xbf16>, vector<8x8xbf16>, vector<8x8xf32> -> vector<8x8xf32>
    %519 = vector.extract_strided_slice %495 {offsets = [48, 0], sizes = [8, 8], strides = [1, 1]} : vector<64x8xbf16> to vector<8x8xbf16>
    %520 = vector.extract_strided_slice %512 {offsets = [0, 16], sizes = [8, 8], strides = [1, 1]} : vector<8x32xbf16> to vector<8x8xbf16>
    %cst_170 = arith.constant dense<0.000000e+00> : vector<8x8xf32>
    %521 = tpu.matmul %519, %520, %cst_170 {dimension_numbers = #tpu.dot_dimension_numbers<[1], [0], [0], [1], [0, 0, 1, 1], [], []>} : vector<8x8xbf16>, vector<8x8xbf16>, vector<8x8xf32> -> vector<8x8xf32>
    %522 = vector.extract_strided_slice %495 {offsets = [56, 0], sizes = [8, 8], strides = [1, 1]} : vector<64x8xbf16> to vector<8x8xbf16>
    %523 = vector.extract_strided_slice %512 {offsets = [0, 24], sizes = [8, 8], strides = [1, 1]} : vector<8x32xbf16> to vector<8x8xbf16>
    %cst_171 = arith.constant dense<0.000000e+00> : vector<8x8xf32>
    %524 = tpu.matmul %522, %523, %cst_171 {dimension_numbers = #tpu.dot_dimension_numbers<[1], [0], [0], [1], [0, 0, 1, 1], [], []>} : vector<8x8xbf16>, vector<8x8xbf16>, vector<8x8xf32> -> vector<8x8xf32>
    %525 = tpu.concatenate %515, %518, %521, %524 in 1 : vector<8x8xf32>, vector<8x8xf32>, vector<8x8xf32>, vector<8x8xf32> -> vector<8x32xf32>
    %526 = tpu.concatenate %510, %525 in 0 : vector<8x32xf32>, vector<8x32xf32> -> vector<16x32xf32>
    %527 = arith.truncf %526 : vector<16x32xf32> to vector<16x32xbf16>
    %cst_172 = arith.constant dense<0.000000e+00> : vector<16x32xf32>
    %528 = tpu.matmul %527, %424, %cst_172 {dimension_numbers = #tpu.dot_dimension_numbers<[1], [0], [0], [1], [0, 0, 1, 1], [], []>} : vector<16x32xbf16>, vector<32x32xbf16>, vector<16x32xf32> -> vector<16x32xf32>
    %529 = vector.broadcast %427 : vector<1x32xf32> to vector<16x32xf32>
    %530 = arith.addf %528, %529 : vector<16x32xf32>
    %531 = arith.addf %408, %530 : vector<16x32xf32>
    %532 = arith.index_cast %c1_i32 : i32 to index
    %c0_173 = arith.constant 0 : index
    %c0_174 = arith.constant 0 : index
    %533 = vector.load %arg11[%532, %c0_173, %c0_174] : memref<2x1x32xf32, #tpu.memory_space<vmem>>, vector<1x1x32xf32>
    %534 = vector.shape_cast %533 : vector<1x1x32xf32> to vector<1x32xf32>
    %535 = arith.index_cast %c1_i32 : i32 to index
    %c0_175 = arith.constant 0 : index
    %c0_176 = arith.constant 0 : index
    %536 = vector.load %arg12[%535, %c0_175, %c0_176] : memref<2x1x32xf32, #tpu.memory_space<vmem>>, vector<1x1x32xf32>
    %537 = vector.shape_cast %536 : vector<1x1x32xf32> to vector<1x32xf32>
    %cst_177 = arith.constant dense<0.000000e+00> : vector<16xf32>
    %538 = vector.multi_reduction <add>, %531, %cst_177 [1] : vector<16x32xf32> to vector<16xf32>
    %539 = vector.shape_cast %538 : vector<16xf32> to vector<16x1xf32>
    %cst_178 = arith.constant 3.200000e+01 : f32
    %540 = vector.broadcast %cst_178 : f32 to vector<16x1xf32>
    %541 = arith.divf %539, %540 : vector<16x1xf32>
    %542 = vector.broadcast %541 : vector<16x1xf32> to vector<16x32xf32>
    %543 = arith.subf %531, %542 : vector<16x32xf32>
    %544 = arith.mulf %543, %543 : vector<16x32xf32>
    %cst_179 = arith.constant dense<0.000000e+00> : vector<16xf32>
    %545 = vector.multi_reduction <add>, %544, %cst_179 [1] : vector<16x32xf32> to vector<16xf32>
    %546 = vector.shape_cast %545 : vector<16xf32> to vector<16x1xf32>
    %cst_180 = arith.constant 3.200000e+01 : f32
    %547 = vector.broadcast %cst_180 : f32 to vector<16x1xf32>
    %548 = arith.divf %546, %547 : vector<16x1xf32>
    %549 = vector.broadcast %541 : vector<16x1xf32> to vector<16x32xf32>
    %550 = arith.subf %531, %549 : vector<16x32xf32>
    %cst_181 = arith.constant 9.99999974E-6 : f32
    %551 = vector.broadcast %cst_181 : f32 to vector<16x1xf32>
    %552 = arith.addf %548, %551 : vector<16x1xf32>
    %553 = math.rsqrt %552 : vector<16x1xf32>
    %554 = vector.broadcast %553 : vector<16x1xf32> to vector<16x32xf32>
    %555 = arith.mulf %550, %554 : vector<16x32xf32>
    %556 = vector.broadcast %534 : vector<1x32xf32> to vector<16x32xf32>
    %557 = arith.mulf %555, %556 : vector<16x32xf32>
    %558 = vector.broadcast %537 : vector<1x32xf32> to vector<16x32xf32>
    %559 = arith.addf %557, %558 : vector<16x32xf32>
    %560 = arith.truncf %559 : vector<16x32xf32> to vector<16x32xbf16>
    %561 = arith.index_cast %c1_i32 : i32 to index
    %c0_182 = arith.constant 0 : index
    %c0_183 = arith.constant 0 : index
    %562 = vector.load %arg13[%561, %c0_182, %c0_183] : memref<2x32x32xbf16, #tpu.memory_space<vmem>>, vector<1x32x32xbf16>
    %563 = vector.shape_cast %562 : vector<1x32x32xbf16> to vector<32x32xbf16>
    %cst_184 = arith.constant dense<0.000000e+00> : vector<16x32xf32>
    %564 = tpu.matmul %560, %563, %cst_184 {dimension_numbers = #tpu.dot_dimension_numbers<[1], [0], [0], [1], [0, 0, 1, 1], [], []>} : vector<16x32xbf16>, vector<32x32xbf16>, vector<16x32xf32> -> vector<16x32xf32>
    %565 = arith.index_cast %c1_i32 : i32 to index
    %c0_185 = arith.constant 0 : index
    %c0_186 = arith.constant 0 : index
    %566 = vector.load %arg14[%565, %c0_185, %c0_186] : memref<2x1x32xf32, #tpu.memory_space<vmem>>, vector<1x1x32xf32>
    %567 = vector.shape_cast %566 : vector<1x1x32xf32> to vector<1x32xf32>
    %568 = vector.broadcast %567 : vector<1x32xf32> to vector<16x32xf32>
    %569 = arith.addf %564, %568 : vector<16x32xf32>
    %570 = arith.index_cast %c1_i32 : i32 to index
    %c0_187 = arith.constant 0 : index
    %c0_188 = arith.constant 0 : index
    %571 = vector.load %arg15[%570, %c0_187, %c0_188] : memref<2x32x64xbf16, #tpu.memory_space<vmem>>, vector<1x32x64xbf16>
    %572 = vector.shape_cast %571 : vector<1x32x64xbf16> to vector<32x64xbf16>
    %cst_189 = arith.constant dense<0.000000e+00> : vector<16x64xf32>
    %573 = tpu.matmul %2, %572, %cst_189 {dimension_numbers = #tpu.dot_dimension_numbers<[1], [0], [0], [1], [0, 0, 1, 1], [], []>} : vector<16x32xbf16>, vector<32x64xbf16>, vector<16x64xf32> -> vector<16x64xf32>
    %574 = arith.index_cast %c1_i32 : i32 to index
    %c0_190 = arith.constant 0 : index
    %c0_191 = arith.constant 0 : index
    %575 = vector.load %arg16[%574, %c0_190, %c0_191] : memref<2x1x64xf32, #tpu.memory_space<vmem>>, vector<1x1x64xf32>
    %576 = vector.shape_cast %575 : vector<1x1x64xf32> to vector<1x64xf32>
    %577 = vector.broadcast %576 : vector<1x64xf32> to vector<16x64xf32>
    %578 = arith.addf %573, %577 : vector<16x64xf32>
    %579 = vector.extract_strided_slice %578 {offsets = [0, 0], sizes = [16, 32], strides = [1, 1]} : vector<16x64xf32> to vector<16x32xf32>
    %580 = vector.extract_strided_slice %578 {offsets = [0, 32], sizes = [16, 32], strides = [1, 1]} : vector<16x64xf32> to vector<16x32xf32>
    %581 = arith.index_cast %c1_i32 : i32 to index
    %c0_192 = arith.constant 0 : index
    %c0_193 = arith.constant 0 : index
    %582 = vector.load %arg17[%581, %c0_192, %c0_193] : memref<2x32x32xbf16, #tpu.memory_space<vmem>>, vector<1x32x32xbf16>
    %583 = vector.shape_cast %582 : vector<1x32x32xbf16> to vector<32x32xbf16>
    %584 = arith.index_cast %c1_i32 : i32 to index
    %c0_194 = arith.constant 0 : index
    %c0_195 = arith.constant 0 : index
    %585 = vector.load %arg18[%584, %c0_194, %c0_195] : memref<2x1x32xf32, #tpu.memory_space<vmem>>, vector<1x1x32xf32>
    %586 = vector.shape_cast %585 : vector<1x1x32xf32> to vector<1x32xf32>
    %587 = vector.extract_strided_slice %569 {offsets = [0, 0], sizes = [8, 32], strides = [1, 1]} : vector<16x32xf32> to vector<8x32xf32>
    %588 = arith.truncf %587 : vector<8x32xf32> to vector<8x32xbf16>
    %589 = vector.extract_strided_slice %579 {offsets = [0, 0], sizes = [8, 32], strides = [1, 1]} : vector<16x32xf32> to vector<8x32xf32>
    %590 = arith.truncf %589 : vector<8x32xf32> to vector<8x32xbf16>
    %591 = vector.extract_strided_slice %588 {offsets = [0, 0], sizes = [8, 8], strides = [1, 1]} : vector<8x32xbf16> to vector<8x8xbf16>
    %592 = vector.extract_strided_slice %590 {offsets = [0, 0], sizes = [8, 8], strides = [1, 1]} : vector<8x32xbf16> to vector<8x8xbf16>
    %cst_196 = arith.constant dense<0.000000e+00> : vector<8x8xf32>
    %593 = tpu.matmul %591, %592, %cst_196 {dimension_numbers = #tpu.dot_dimension_numbers<[1], [1], [0], [0], [0, 0, 1, 0], [], []>} : vector<8x8xbf16>, vector<8x8xbf16>, vector<8x8xf32> -> vector<8x8xf32>
    %cst_197 = arith.constant 0.353553385 : f32
    %594 = vector.broadcast %cst_197 : f32 to vector<8x8xf32>
    %595 = arith.mulf %593, %594 : vector<8x8xf32>
    %596 = vector.broadcast %5 : vector<1x8xf32> to vector<8x8xf32>
    %597 = arith.addf %595, %596 : vector<8x8xf32>
    %598 = vector.extract_strided_slice %588 {offsets = [0, 8], sizes = [8, 8], strides = [1, 1]} : vector<8x32xbf16> to vector<8x8xbf16>
    %599 = vector.extract_strided_slice %590 {offsets = [0, 8], sizes = [8, 8], strides = [1, 1]} : vector<8x32xbf16> to vector<8x8xbf16>
    %cst_198 = arith.constant dense<0.000000e+00> : vector<8x8xf32>
    %600 = tpu.matmul %598, %599, %cst_198 {dimension_numbers = #tpu.dot_dimension_numbers<[1], [1], [0], [0], [0, 0, 1, 0], [], []>} : vector<8x8xbf16>, vector<8x8xbf16>, vector<8x8xf32> -> vector<8x8xf32>
    %cst_199 = arith.constant 0.353553385 : f32
    %601 = vector.broadcast %cst_199 : f32 to vector<8x8xf32>
    %602 = arith.mulf %600, %601 : vector<8x8xf32>
    %603 = vector.broadcast %5 : vector<1x8xf32> to vector<8x8xf32>
    %604 = arith.addf %602, %603 : vector<8x8xf32>
    %605 = vector.extract_strided_slice %588 {offsets = [0, 16], sizes = [8, 8], strides = [1, 1]} : vector<8x32xbf16> to vector<8x8xbf16>
    %606 = vector.extract_strided_slice %590 {offsets = [0, 16], sizes = [8, 8], strides = [1, 1]} : vector<8x32xbf16> to vector<8x8xbf16>
    %cst_200 = arith.constant dense<0.000000e+00> : vector<8x8xf32>
    %607 = tpu.matmul %605, %606, %cst_200 {dimension_numbers = #tpu.dot_dimension_numbers<[1], [1], [0], [0], [0, 0, 1, 0], [], []>} : vector<8x8xbf16>, vector<8x8xbf16>, vector<8x8xf32> -> vector<8x8xf32>
    %cst_201 = arith.constant 0.353553385 : f32
    %608 = vector.broadcast %cst_201 : f32 to vector<8x8xf32>
    %609 = arith.mulf %607, %608 : vector<8x8xf32>
    %610 = vector.broadcast %5 : vector<1x8xf32> to vector<8x8xf32>
    %611 = arith.addf %609, %610 : vector<8x8xf32>
    %612 = vector.extract_strided_slice %588 {offsets = [0, 24], sizes = [8, 8], strides = [1, 1]} : vector<8x32xbf16> to vector<8x8xbf16>
    %613 = vector.extract_strided_slice %590 {offsets = [0, 24], sizes = [8, 8], strides = [1, 1]} : vector<8x32xbf16> to vector<8x8xbf16>
    %cst_202 = arith.constant dense<0.000000e+00> : vector<8x8xf32>
    %614 = tpu.matmul %612, %613, %cst_202 {dimension_numbers = #tpu.dot_dimension_numbers<[1], [1], [0], [0], [0, 0, 1, 0], [], []>} : vector<8x8xbf16>, vector<8x8xbf16>, vector<8x8xf32> -> vector<8x8xf32>
    %cst_203 = arith.constant 0.353553385 : f32
    %615 = vector.broadcast %cst_203 : f32 to vector<8x8xf32>
    %616 = arith.mulf %614, %615 : vector<8x8xf32>
    %617 = vector.broadcast %5 : vector<1x8xf32> to vector<8x8xf32>
    %618 = arith.addf %616, %617 : vector<8x8xf32>
    %619 = vector.extract_strided_slice %569 {offsets = [8, 0], sizes = [8, 32], strides = [1, 1]} : vector<16x32xf32> to vector<8x32xf32>
    %620 = arith.truncf %619 : vector<8x32xf32> to vector<8x32xbf16>
    %621 = vector.extract_strided_slice %579 {offsets = [8, 0], sizes = [8, 32], strides = [1, 1]} : vector<16x32xf32> to vector<8x32xf32>
    %622 = arith.truncf %621 : vector<8x32xf32> to vector<8x32xbf16>
    %623 = vector.extract_strided_slice %620 {offsets = [0, 0], sizes = [8, 8], strides = [1, 1]} : vector<8x32xbf16> to vector<8x8xbf16>
    %624 = vector.extract_strided_slice %622 {offsets = [0, 0], sizes = [8, 8], strides = [1, 1]} : vector<8x32xbf16> to vector<8x8xbf16>
    %cst_204 = arith.constant dense<0.000000e+00> : vector<8x8xf32>
    %625 = tpu.matmul %623, %624, %cst_204 {dimension_numbers = #tpu.dot_dimension_numbers<[1], [1], [0], [0], [0, 0, 1, 0], [], []>} : vector<8x8xbf16>, vector<8x8xbf16>, vector<8x8xf32> -> vector<8x8xf32>
    %cst_205 = arith.constant 0.353553385 : f32
    %626 = vector.broadcast %cst_205 : f32 to vector<8x8xf32>
    %627 = arith.mulf %625, %626 : vector<8x8xf32>
    %628 = vector.broadcast %7 : vector<1x8xf32> to vector<8x8xf32>
    %629 = arith.addf %627, %628 : vector<8x8xf32>
    %630 = vector.extract_strided_slice %620 {offsets = [0, 8], sizes = [8, 8], strides = [1, 1]} : vector<8x32xbf16> to vector<8x8xbf16>
    %631 = vector.extract_strided_slice %622 {offsets = [0, 8], sizes = [8, 8], strides = [1, 1]} : vector<8x32xbf16> to vector<8x8xbf16>
    %cst_206 = arith.constant dense<0.000000e+00> : vector<8x8xf32>
    %632 = tpu.matmul %630, %631, %cst_206 {dimension_numbers = #tpu.dot_dimension_numbers<[1], [1], [0], [0], [0, 0, 1, 0], [], []>} : vector<8x8xbf16>, vector<8x8xbf16>, vector<8x8xf32> -> vector<8x8xf32>
    %cst_207 = arith.constant 0.353553385 : f32
    %633 = vector.broadcast %cst_207 : f32 to vector<8x8xf32>
    %634 = arith.mulf %632, %633 : vector<8x8xf32>
    %635 = vector.broadcast %7 : vector<1x8xf32> to vector<8x8xf32>
    %636 = arith.addf %634, %635 : vector<8x8xf32>
    %637 = vector.extract_strided_slice %620 {offsets = [0, 16], sizes = [8, 8], strides = [1, 1]} : vector<8x32xbf16> to vector<8x8xbf16>
    %638 = vector.extract_strided_slice %622 {offsets = [0, 16], sizes = [8, 8], strides = [1, 1]} : vector<8x32xbf16> to vector<8x8xbf16>
    %cst_208 = arith.constant dense<0.000000e+00> : vector<8x8xf32>
    %639 = tpu.matmul %637, %638, %cst_208 {dimension_numbers = #tpu.dot_dimension_numbers<[1], [1], [0], [0], [0, 0, 1, 0], [], []>} : vector<8x8xbf16>, vector<8x8xbf16>, vector<8x8xf32> -> vector<8x8xf32>
    %cst_209 = arith.constant 0.353553385 : f32
    %640 = vector.broadcast %cst_209 : f32 to vector<8x8xf32>
    %641 = arith.mulf %639, %640 : vector<8x8xf32>
    %642 = vector.broadcast %7 : vector<1x8xf32> to vector<8x8xf32>
    %643 = arith.addf %641, %642 : vector<8x8xf32>
    %644 = vector.extract_strided_slice %620 {offsets = [0, 24], sizes = [8, 8], strides = [1, 1]} : vector<8x32xbf16> to vector<8x8xbf16>
    %645 = vector.extract_strided_slice %622 {offsets = [0, 24], sizes = [8, 8], strides = [1, 1]} : vector<8x32xbf16> to vector<8x8xbf16>
    %cst_210 = arith.constant dense<0.000000e+00> : vector<8x8xf32>
    %646 = tpu.matmul %644, %645, %cst_210 {dimension_numbers = #tpu.dot_dimension_numbers<[1], [1], [0], [0], [0, 0, 1, 0], [], []>} : vector<8x8xbf16>, vector<8x8xbf16>, vector<8x8xf32> -> vector<8x8xf32>
    %cst_211 = arith.constant 0.353553385 : f32
    %647 = vector.broadcast %cst_211 : f32 to vector<8x8xf32>
    %648 = arith.mulf %646, %647 : vector<8x8xf32>
    %649 = vector.broadcast %7 : vector<1x8xf32> to vector<8x8xf32>
    %650 = arith.addf %648, %649 : vector<8x8xf32>
    %651 = tpu.concatenate %597, %604, %611, %618, %629, %636, %643, %650 in 0 : vector<8x8xf32>, vector<8x8xf32>, vector<8x8xf32>, vector<8x8xf32>, vector<8x8xf32>, vector<8x8xf32>, vector<8x8xf32>, vector<8x8xf32> -> vector<64x8xf32>
    %cst_212 = arith.constant dense<0xFF800000> : vector<64xf32>
    %652 = vector.multi_reduction <maximumf>, %651, %cst_212 [1] : vector<64x8xf32> to vector<64xf32>
    %653 = vector.shape_cast %652 : vector<64xf32> to vector<64x1xf32>
    %654 = vector.broadcast %653 : vector<64x1xf32> to vector<64x8xf32>
    %655 = arith.subf %651, %654 : vector<64x8xf32>
    %656 = math.exp %655 : vector<64x8xf32>
    %cst_213 = arith.constant dense<0.000000e+00> : vector<64xf32>
    %657 = vector.multi_reduction <add>, %656, %cst_213 [1] : vector<64x8xf32> to vector<64xf32>
    %658 = vector.shape_cast %657 : vector<64xf32> to vector<64x1xf32>
    %659 = tpu.reciprocal %658 {approx = true} : vector<64x1xf32> -> vector<64x1xf32>
    %660 = vector.broadcast %659 : vector<64x1xf32> to vector<64x8xf32>
    %661 = arith.mulf %656, %660 : vector<64x8xf32>
    %662 = arith.truncf %661 : vector<64x8xf32> to vector<64x8xbf16>
    %663 = vector.extract_strided_slice %580 {offsets = [0, 0], sizes = [8, 32], strides = [1, 1]} : vector<16x32xf32> to vector<8x32xf32>
    %664 = arith.truncf %663 : vector<8x32xf32> to vector<8x32xbf16>
    %665 = vector.extract_strided_slice %662 {offsets = [0, 0], sizes = [8, 8], strides = [1, 1]} : vector<64x8xbf16> to vector<8x8xbf16>
    %666 = vector.extract_strided_slice %664 {offsets = [0, 0], sizes = [8, 8], strides = [1, 1]} : vector<8x32xbf16> to vector<8x8xbf16>
    %cst_214 = arith.constant dense<0.000000e+00> : vector<8x8xf32>
    %667 = tpu.matmul %665, %666, %cst_214 {dimension_numbers = #tpu.dot_dimension_numbers<[1], [0], [0], [1], [0, 0, 1, 1], [], []>} : vector<8x8xbf16>, vector<8x8xbf16>, vector<8x8xf32> -> vector<8x8xf32>
    %668 = vector.extract_strided_slice %662 {offsets = [8, 0], sizes = [8, 8], strides = [1, 1]} : vector<64x8xbf16> to vector<8x8xbf16>
    %669 = vector.extract_strided_slice %664 {offsets = [0, 8], sizes = [8, 8], strides = [1, 1]} : vector<8x32xbf16> to vector<8x8xbf16>
    %cst_215 = arith.constant dense<0.000000e+00> : vector<8x8xf32>
    %670 = tpu.matmul %668, %669, %cst_215 {dimension_numbers = #tpu.dot_dimension_numbers<[1], [0], [0], [1], [0, 0, 1, 1], [], []>} : vector<8x8xbf16>, vector<8x8xbf16>, vector<8x8xf32> -> vector<8x8xf32>
    %671 = vector.extract_strided_slice %662 {offsets = [16, 0], sizes = [8, 8], strides = [1, 1]} : vector<64x8xbf16> to vector<8x8xbf16>
    %672 = vector.extract_strided_slice %664 {offsets = [0, 16], sizes = [8, 8], strides = [1, 1]} : vector<8x32xbf16> to vector<8x8xbf16>
    %cst_216 = arith.constant dense<0.000000e+00> : vector<8x8xf32>
    %673 = tpu.matmul %671, %672, %cst_216 {dimension_numbers = #tpu.dot_dimension_numbers<[1], [0], [0], [1], [0, 0, 1, 1], [], []>} : vector<8x8xbf16>, vector<8x8xbf16>, vector<8x8xf32> -> vector<8x8xf32>
    %674 = vector.extract_strided_slice %662 {offsets = [24, 0], sizes = [8, 8], strides = [1, 1]} : vector<64x8xbf16> to vector<8x8xbf16>
    %675 = vector.extract_strided_slice %664 {offsets = [0, 24], sizes = [8, 8], strides = [1, 1]} : vector<8x32xbf16> to vector<8x8xbf16>
    %cst_217 = arith.constant dense<0.000000e+00> : vector<8x8xf32>
    %676 = tpu.matmul %674, %675, %cst_217 {dimension_numbers = #tpu.dot_dimension_numbers<[1], [0], [0], [1], [0, 0, 1, 1], [], []>} : vector<8x8xbf16>, vector<8x8xbf16>, vector<8x8xf32> -> vector<8x8xf32>
    %677 = tpu.concatenate %667, %670, %673, %676 in 1 : vector<8x8xf32>, vector<8x8xf32>, vector<8x8xf32>, vector<8x8xf32> -> vector<8x32xf32>
    %678 = vector.extract_strided_slice %580 {offsets = [8, 0], sizes = [8, 32], strides = [1, 1]} : vector<16x32xf32> to vector<8x32xf32>
    %679 = arith.truncf %678 : vector<8x32xf32> to vector<8x32xbf16>
    %680 = vector.extract_strided_slice %662 {offsets = [32, 0], sizes = [8, 8], strides = [1, 1]} : vector<64x8xbf16> to vector<8x8xbf16>
    %681 = vector.extract_strided_slice %679 {offsets = [0, 0], sizes = [8, 8], strides = [1, 1]} : vector<8x32xbf16> to vector<8x8xbf16>
    %cst_218 = arith.constant dense<0.000000e+00> : vector<8x8xf32>
    %682 = tpu.matmul %680, %681, %cst_218 {dimension_numbers = #tpu.dot_dimension_numbers<[1], [0], [0], [1], [0, 0, 1, 1], [], []>} : vector<8x8xbf16>, vector<8x8xbf16>, vector<8x8xf32> -> vector<8x8xf32>
    %683 = vector.extract_strided_slice %662 {offsets = [40, 0], sizes = [8, 8], strides = [1, 1]} : vector<64x8xbf16> to vector<8x8xbf16>
    %684 = vector.extract_strided_slice %679 {offsets = [0, 8], sizes = [8, 8], strides = [1, 1]} : vector<8x32xbf16> to vector<8x8xbf16>
    %cst_219 = arith.constant dense<0.000000e+00> : vector<8x8xf32>
    %685 = tpu.matmul %683, %684, %cst_219 {dimension_numbers = #tpu.dot_dimension_numbers<[1], [0], [0], [1], [0, 0, 1, 1], [], []>} : vector<8x8xbf16>, vector<8x8xbf16>, vector<8x8xf32> -> vector<8x8xf32>
    %686 = vector.extract_strided_slice %662 {offsets = [48, 0], sizes = [8, 8], strides = [1, 1]} : vector<64x8xbf16> to vector<8x8xbf16>
    %687 = vector.extract_strided_slice %679 {offsets = [0, 16], sizes = [8, 8], strides = [1, 1]} : vector<8x32xbf16> to vector<8x8xbf16>
    %cst_220 = arith.constant dense<0.000000e+00> : vector<8x8xf32>
    %688 = tpu.matmul %686, %687, %cst_220 {dimension_numbers = #tpu.dot_dimension_numbers<[1], [0], [0], [1], [0, 0, 1, 1], [], []>} : vector<8x8xbf16>, vector<8x8xbf16>, vector<8x8xf32> -> vector<8x8xf32>
    %689 = vector.extract_strided_slice %662 {offsets = [56, 0], sizes = [8, 8], strides = [1, 1]} : vector<64x8xbf16> to vector<8x8xbf16>
    %690 = vector.extract_strided_slice %679 {offsets = [0, 24], sizes = [8, 8], strides = [1, 1]} : vector<8x32xbf16> to vector<8x8xbf16>
    %cst_221 = arith.constant dense<0.000000e+00> : vector<8x8xf32>
    %691 = tpu.matmul %689, %690, %cst_221 {dimension_numbers = #tpu.dot_dimension_numbers<[1], [0], [0], [1], [0, 0, 1, 1], [], []>} : vector<8x8xbf16>, vector<8x8xbf16>, vector<8x8xf32> -> vector<8x8xf32>
    %692 = tpu.concatenate %682, %685, %688, %691 in 1 : vector<8x8xf32>, vector<8x8xf32>, vector<8x8xf32>, vector<8x8xf32> -> vector<8x32xf32>
    %693 = tpu.concatenate %677, %692 in 0 : vector<8x32xf32>, vector<8x32xf32> -> vector<16x32xf32>
    %694 = arith.truncf %693 : vector<16x32xf32> to vector<16x32xbf16>
    %cst_222 = arith.constant dense<0.000000e+00> : vector<16x32xf32>
    %695 = tpu.matmul %694, %583, %cst_222 {dimension_numbers = #tpu.dot_dimension_numbers<[1], [0], [0], [1], [0, 0, 1, 1], [], []>} : vector<16x32xbf16>, vector<32x32xbf16>, vector<16x32xf32> -> vector<16x32xf32>
    %696 = vector.broadcast %586 : vector<1x32xf32> to vector<16x32xf32>
    %697 = arith.addf %695, %696 : vector<16x32xf32>
    %698 = arith.addf %559, %697 : vector<16x32xf32>
    %699 = arith.index_cast %c1_i32 : i32 to index
    %c0_223 = arith.constant 0 : index
    %c0_224 = arith.constant 0 : index
    %700 = vector.load %arg19[%699, %c0_223, %c0_224] : memref<2x1x32xf32, #tpu.memory_space<vmem>>, vector<1x1x32xf32>
    %701 = vector.shape_cast %700 : vector<1x1x32xf32> to vector<1x32xf32>
    %702 = arith.index_cast %c1_i32 : i32 to index
    %c0_225 = arith.constant 0 : index
    %c0_226 = arith.constant 0 : index
    %703 = vector.load %arg20[%702, %c0_225, %c0_226] : memref<2x1x32xf32, #tpu.memory_space<vmem>>, vector<1x1x32xf32>
    %704 = vector.shape_cast %703 : vector<1x1x32xf32> to vector<1x32xf32>
    %cst_227 = arith.constant dense<0.000000e+00> : vector<16xf32>
    %705 = vector.multi_reduction <add>, %698, %cst_227 [1] : vector<16x32xf32> to vector<16xf32>
    %706 = vector.shape_cast %705 : vector<16xf32> to vector<16x1xf32>
    %cst_228 = arith.constant 3.200000e+01 : f32
    %707 = vector.broadcast %cst_228 : f32 to vector<16x1xf32>
    %708 = arith.divf %706, %707 : vector<16x1xf32>
    %709 = vector.broadcast %708 : vector<16x1xf32> to vector<16x32xf32>
    %710 = arith.subf %698, %709 : vector<16x32xf32>
    %711 = arith.mulf %710, %710 : vector<16x32xf32>
    %cst_229 = arith.constant dense<0.000000e+00> : vector<16xf32>
    %712 = vector.multi_reduction <add>, %711, %cst_229 [1] : vector<16x32xf32> to vector<16xf32>
    %713 = vector.shape_cast %712 : vector<16xf32> to vector<16x1xf32>
    %cst_230 = arith.constant 3.200000e+01 : f32
    %714 = vector.broadcast %cst_230 : f32 to vector<16x1xf32>
    %715 = arith.divf %713, %714 : vector<16x1xf32>
    %716 = vector.broadcast %708 : vector<16x1xf32> to vector<16x32xf32>
    %717 = arith.subf %698, %716 : vector<16x32xf32>
    %cst_231 = arith.constant 9.99999974E-6 : f32
    %718 = vector.broadcast %cst_231 : f32 to vector<16x1xf32>
    %719 = arith.addf %715, %718 : vector<16x1xf32>
    %720 = math.rsqrt %719 : vector<16x1xf32>
    %721 = vector.broadcast %720 : vector<16x1xf32> to vector<16x32xf32>
    %722 = arith.mulf %717, %721 : vector<16x32xf32>
    %723 = vector.broadcast %701 : vector<1x32xf32> to vector<16x32xf32>
    %724 = arith.mulf %722, %723 : vector<16x32xf32>
    %725 = vector.broadcast %704 : vector<1x32xf32> to vector<16x32xf32>
    %726 = arith.addf %724, %725 : vector<16x32xf32>
    %727 = arith.index_cast %c1_i32 : i32 to index
    %c0_232 = arith.constant 0 : index
    %c0_233 = arith.constant 0 : index
    %728 = vector.load %arg21[%727, %c0_232, %c0_233] : memref<2x32x64xbf16, #tpu.memory_space<vmem>>, vector<1x32x64xbf16>
    %729 = vector.shape_cast %728 : vector<1x32x64xbf16> to vector<32x64xbf16>
    %730 = arith.index_cast %c1_i32 : i32 to index
    %c0_234 = arith.constant 0 : index
    %c0_235 = arith.constant 0 : index
    %731 = vector.load %arg22[%730, %c0_234, %c0_235] : memref<2x1x64xf32, #tpu.memory_space<vmem>>, vector<1x1x64xf32>
    %732 = vector.shape_cast %731 : vector<1x1x64xf32> to vector<1x64xf32>
    %733 = arith.index_cast %c1_i32 : i32 to index
    %c0_236 = arith.constant 0 : index
    %c0_237 = arith.constant 0 : index
    %734 = vector.load %arg23[%733, %c0_236, %c0_237] : memref<2x64x32xbf16, #tpu.memory_space<vmem>>, vector<1x64x32xbf16>
    %735 = vector.shape_cast %734 : vector<1x64x32xbf16> to vector<64x32xbf16>
    %736 = arith.index_cast %c1_i32 : i32 to index
    %c0_238 = arith.constant 0 : index
    %c0_239 = arith.constant 0 : index
    %737 = vector.load %arg24[%736, %c0_238, %c0_239] : memref<2x1x32xf32, #tpu.memory_space<vmem>>, vector<1x1x32xf32>
    %738 = vector.shape_cast %737 : vector<1x1x32xf32> to vector<1x32xf32>
    %739 = arith.truncf %726 : vector<16x32xf32> to vector<16x32xbf16>
    %cst_240 = arith.constant dense<0.000000e+00> : vector<16x64xf32>
    %740 = tpu.matmul %739, %729, %cst_240 {dimension_numbers = #tpu.dot_dimension_numbers<[1], [0], [0], [1], [0, 0, 1, 1], [], []>} : vector<16x32xbf16>, vector<32x64xbf16>, vector<16x64xf32> -> vector<16x64xf32>
    %741 = vector.broadcast %732 : vector<1x64xf32> to vector<16x64xf32>
    %742 = arith.addf %740, %741 : vector<16x64xf32>
    %cst_241 = arith.constant 0.000000e+00 : f32
    %743 = vector.broadcast %cst_241 : f32 to vector<16x64xf32>
    %744 = arith.maximumf %742, %743 : vector<16x64xf32>
    %745 = arith.truncf %744 : vector<16x64xf32> to vector<16x64xbf16>
    %cst_242 = arith.constant dense<0.000000e+00> : vector<16x32xf32>
    %746 = tpu.matmul %745, %735, %cst_242 {dimension_numbers = #tpu.dot_dimension_numbers<[1], [0], [0], [1], [0, 0, 1, 1], [], []>} : vector<16x64xbf16>, vector<64x32xbf16>, vector<16x32xf32> -> vector<16x32xf32>
    %747 = vector.broadcast %738 : vector<1x32xf32> to vector<16x32xf32>
    %748 = arith.addf %746, %747 : vector<16x32xf32>
    %749 = arith.addf %726, %748 : vector<16x32xf32>
    %750 = arith.index_cast %c1_i32 : i32 to index
    %c0_243 = arith.constant 0 : index
    %c0_244 = arith.constant 0 : index
    %751 = vector.load %arg25[%750, %c0_243, %c0_244] : memref<2x1x32xf32, #tpu.memory_space<vmem>>, vector<1x1x32xf32>
    %752 = vector.shape_cast %751 : vector<1x1x32xf32> to vector<1x32xf32>
    %753 = arith.index_cast %c1_i32 : i32 to index
    %c0_245 = arith.constant 0 : index
    %c0_246 = arith.constant 0 : index
    %754 = vector.load %arg26[%753, %c0_245, %c0_246] : memref<2x1x32xf32, #tpu.memory_space<vmem>>, vector<1x1x32xf32>
    %755 = vector.shape_cast %754 : vector<1x1x32xf32> to vector<1x32xf32>
    %cst_247 = arith.constant dense<0.000000e+00> : vector<16xf32>
    %756 = vector.multi_reduction <add>, %749, %cst_247 [1] : vector<16x32xf32> to vector<16xf32>
    %757 = vector.shape_cast %756 : vector<16xf32> to vector<16x1xf32>
    %cst_248 = arith.constant 3.200000e+01 : f32
    %758 = vector.broadcast %cst_248 : f32 to vector<16x1xf32>
    %759 = arith.divf %757, %758 : vector<16x1xf32>
    %760 = vector.broadcast %759 : vector<16x1xf32> to vector<16x32xf32>
    %761 = arith.subf %749, %760 : vector<16x32xf32>
    %762 = arith.mulf %761, %761 : vector<16x32xf32>
    %cst_249 = arith.constant dense<0.000000e+00> : vector<16xf32>
    %763 = vector.multi_reduction <add>, %762, %cst_249 [1] : vector<16x32xf32> to vector<16xf32>
    %764 = vector.shape_cast %763 : vector<16xf32> to vector<16x1xf32>
    %cst_250 = arith.constant 3.200000e+01 : f32
    %765 = vector.broadcast %cst_250 : f32 to vector<16x1xf32>
    %766 = arith.divf %764, %765 : vector<16x1xf32>
    %767 = vector.broadcast %759 : vector<16x1xf32> to vector<16x32xf32>
    %768 = arith.subf %749, %767 : vector<16x32xf32>
    %cst_251 = arith.constant 9.99999974E-6 : f32
    %769 = vector.broadcast %cst_251 : f32 to vector<16x1xf32>
    %770 = arith.addf %766, %769 : vector<16x1xf32>
    %771 = math.rsqrt %770 : vector<16x1xf32>
    %772 = vector.broadcast %771 : vector<16x1xf32> to vector<16x32xf32>
    %773 = arith.mulf %768, %772 : vector<16x32xf32>
    %774 = vector.broadcast %752 : vector<1x32xf32> to vector<16x32xf32>
    %775 = arith.mulf %773, %774 : vector<16x32xf32>
    %776 = vector.broadcast %755 : vector<1x32xf32> to vector<16x32xf32>
    %777 = arith.addf %775, %776 : vector<16x32xf32>
    %c2_i32 = arith.constant 2 : i32
    %778 = arith.truncf %777 : vector<16x32xf32> to vector<16x32xbf16>
    %c0_252 = arith.constant 0 : index
    %c0_253 = arith.constant 0 : index
    %779 = vector.load %arg27[%c0_252, %c0_253] : memref<32x128xbf16, #tpu.memory_space<vmem>>, vector<32x128xbf16>
    %cst_254 = arith.constant dense<0.000000e+00> : vector<16x128xf32>
    %780 = tpu.matmul %778, %779, %cst_254 {dimension_numbers = #tpu.dot_dimension_numbers<[1], [0], [0], [1], [0, 0, 1, 1], [], []>} : vector<16x32xbf16>, vector<32x128xbf16>, vector<16x128xf32> -> vector<16x128xf32>
    %c0_255 = arith.constant 0 : index
    %c0_256 = arith.constant 0 : index
    %781 = vector.load %arg28[%c0_255, %c0_256] : memref<1x128xf32, #tpu.memory_space<vmem>>, vector<1x128xf32>
    %782 = vector.broadcast %781 : vector<1x128xf32> to vector<16x128xf32>
    %783 = arith.addf %780, %782 : vector<16x128xf32>
    %784 = vector.shape_cast %783 : vector<16x128xf32> to vector<2x8x128xf32>
    %c0_257 = arith.constant 0 : index
    %c0_258 = arith.constant 0 : index
    %c0_259 = arith.constant 0 : index
    %785 = vector.load %arg29[%c0_257, %c0_258, %c0_259] : memref<2x8x128xf32, #tpu.memory_space<vmem>>, vector<2x8x128xf32>
    tpu.vector_store %arg29[%c0_257, %c0_258, %c0_259], %784 {strides = array<i32>} : memref<2x8x128xf32, #tpu.memory_space<vmem>>, vector<2x8x128xf32>,
    return
  }
  func.func @transform_0(%arg0: i32) -> (i32, i32, i32) {
    %c0_i32 = arith.constant 0 : i32
    %c0_i32_0 = arith.constant 0 : i32
    %c0_i32_1 = arith.constant 0 : i32
    %c0_i32_2 = arith.constant 0 : i32
    return %c0_i32, %c0_i32_0, %c0_i32_1 : i32, i32, i32
  }
  func.func @transform_1(%arg0: i32) -> (i32, i32, i32) {
    %c0_i32 = arith.constant 0 : i32
    %c0_i32_0 = arith.constant 0 : i32
    %c0_i32_1 = arith.constant 0 : i32
    %c0_i32_2 = arith.constant 0 : i32
    return %c0_i32, %c0_i32_0, %c0_i32_1 : i32, i32, i32
  }
  func.func @transform_2(%arg0: i32) -> (i32, i32, i32) {
    %c0_i32 = arith.constant 0 : i32
    %c0_i32_0 = arith.constant 0 : i32
    %c0_i32_1 = arith.constant 0 : i32
    %c0_i32_2 = arith.constant 0 : i32
    return %c0_i32, %c0_i32_0, %c0_i32_1 : i32, i32, i32
  }
  func.func @transform_3(%arg0: i32) -> (i32, i32, i32) {
    %c0_i32 = arith.constant 0 : i32
    %c0_i32_0 = arith.constant 0 : i32
    %c0_i32_1 = arith.constant 0 : i32
    %c0_i32_2 = arith.constant 0 : i32
    return %c0_i32, %c0_i32_0, %c0_i32_1 : i32, i32, i32
  }
  func.func @transform_4(%arg0: i32) -> (i32, i32) {
    %c0_i32 = arith.constant 0 : i32
    %c0_i32_0 = arith.constant 0 : i32
    %c0_i32_1 = arith.constant 0 : i32
    return %c0_i32, %c0_i32_0 : i32, i32
  }
  func.func @transform_5(%arg0: i32) -> (i32, i32) {
    %c0_i32 = arith.constant 0 : i32
    %c0_i32_0 = arith.constant 0 : i32
    %c0_i32_1 = arith.constant 0 : i32
    return %c0_i32, %c0_i32_0 : i32, i32
  }
  func.func @transform_6(%arg0: i32) -> (i32, i32, i32) {
    %c0_i32 = arith.constant 0 : i32
    %c0_i32_0 = arith.constant 0 : i32
    %c0_i32_1 = arith.constant 0 : i32
    %c0_i32_2 = arith.constant 0 : i32
    return %c0_i32, %c0_i32_0, %c0_i32_1 : i32, i32, i32
  }
  func.func @transform_7(%arg0: i32) -> (i32, i32, i32) {
    %c0_i32 = arith.constant 0 : i32
    %c0_i32_0 = arith.constant 0 : i32
    %c0_i32_1 = arith.constant 0 : i32
    %c0_i32_2 = arith.constant 0 : i32
    return %c0_i32, %c0_i32_0, %c0_i32_1 : i32, i32, i32
  }
  func.func @transform_8(%arg0: i32) -> (i32, i32, i32) {
    %c0_i32 = arith.constant 0 : i32
    %c0_i32_0 = arith.constant 0 : i32
    %c0_i32_1 = arith.constant 0 : i32
    %c0_i32_2 = arith.constant 0 : i32
    return %c0_i32, %c0_i32_0, %c0_i32_1 : i32, i32, i32
  }
  func.func @transform_9(%arg0: i32) -> (i32, i32, i32) {
    %c0_i32 = arith.constant 0 : i32
    %c0_i32_0 = arith.constant 0 : i32
    %c0_i32_1 = arith.constant 0 : i32
    %c0_i32_2 = arith.constant 0 : i32
    return %c0_i32, %c0_i32_0, %c0_i32_1 : i32, i32, i32
  }
  func.func @transform_10(%arg0: i32) -> (i32, i32, i32) {
    %c0_i32 = arith.constant 0 : i32
    %c0_i32_0 = arith.constant 0 : i32
    %c0_i32_1 = arith.constant 0 : i32
    %c0_i32_2 = arith.constant 0 : i32
    return %c0_i32, %c0_i32_0, %c0_i32_1 : i32, i32, i32
  }
  func.func @transform_11(%arg0: i32) -> (i32, i32, i32) {
    %c0_i32 = arith.constant 0 : i32
    %c0_i32_0 = arith.constant 0 : i32
    %c0_i32_1 = arith.constant 0 : i32
    %c0_i32_2 = arith.constant 0 : i32
    return %c0_i32, %c0_i32_0, %c0_i32_1 : i32, i32, i32
  }
  func.func @transform_12(%arg0: i32) -> (i32, i32, i32) {
    %c0_i32 = arith.constant 0 : i32
    %c0_i32_0 = arith.constant 0 : i32
    %c0_i32_1 = arith.constant 0 : i32
    %c0_i32_2 = arith.constant 0 : i32
    return %c0_i32, %c0_i32_0, %c0_i32_1 : i32, i32, i32
  }
  func.func @transform_13(%arg0: i32) -> (i32, i32, i32) {
    %c0_i32 = arith.constant 0 : i32
    %c0_i32_0 = arith.constant 0 : i32
    %c0_i32_1 = arith.constant 0 : i32
    %c0_i32_2 = arith.constant 0 : i32
    return %c0_i32, %c0_i32_0, %c0_i32_1 : i32, i32, i32
  }
  func.func @transform_14(%arg0: i32) -> (i32, i32, i32) {
    %c0_i32 = arith.constant 0 : i32
    %c0_i32_0 = arith.constant 0 : i32
    %c0_i32_1 = arith.constant 0 : i32
    %c0_i32_2 = arith.constant 0 : i32
    return %c0_i32, %c0_i32_0, %c0_i32_1 : i32, i32, i32
  }
  func.func @transform_15(%arg0: i32) -> (i32, i32, i32) {
    %c0_i32 = arith.constant 0 : i32
    %c0_i32_0 = arith.constant 0 : i32
    %c0_i32_1 = arith.constant 0 : i32
    %c0_i32_2 = arith.constant 0 : i32
    return %c0_i32, %c0_i32_0, %c0_i32_1 : i32, i32, i32
  }
  func.func @transform_16(%arg0: i32) -> (i32, i32, i32) {
    %c0_i32 = arith.constant 0 : i32
    %c0_i32_0 = arith.constant 0 : i32
    %c0_i32_1 = arith.constant 0 : i32
    %c0_i32_2 = arith.constant 0 : i32
    return %c0_i32, %c0_i32_0, %c0_i32_1 : i32, i32, i32
  }
  func.func @transform_17(%arg0: i32) -> (i32, i32, i32) {
    %c0_i32 = arith.constant 0 : i32
    %c0_i32_0 = arith.constant 0 : i32
    %c0_i32_1 = arith.constant 0 : i32
    %c0_i32_2 = arith.constant 0 : i32
    return %c0_i32, %c0_i32_0, %c0_i32_1 : i32, i32, i32
  }
  func.func @transform_18(%arg0: i32) -> (i32, i32, i32) {
    %c0_i32 = arith.constant 0 : i32
    %c0_i32_0 = arith.constant 0 : i32
    %c0_i32_1 = arith.constant 0 : i32
    %c0_i32_2 = arith.constant 0 : i32
    return %c0_i32, %c0_i32_0, %c0_i32_1 : i32, i32, i32
  }
  func.func @transform_19(%arg0: i32) -> (i32, i32, i32) {
    %c0_i32 = arith.constant 0 : i32
    %c0_i32_0 = arith.constant 0 : i32
    %c0_i32_1 = arith.constant 0 : i32
    %c0_i32_2 = arith.constant 0 : i32
    return %c0_i32, %c0_i32_0, %c0_i32_1 : i32, i32, i32
  }
  func.func @transform_20(%arg0: i32) -> (i32, i32, i32) {
    %c0_i32 = arith.constant 0 : i32
    %c0_i32_0 = arith.constant 0 : i32
    %c0_i32_1 = arith.constant 0 : i32
    %c0_i32_2 = arith.constant 0 : i32
    return %c0_i32, %c0_i32_0, %c0_i32_1 : i32, i32, i32
  }
  func.func @transform_21(%arg0: i32) -> (i32, i32, i32) {
    %c0_i32 = arith.constant 0 : i32
    %c0_i32_0 = arith.constant 0 : i32
    %c0_i32_1 = arith.constant 0 : i32
    %c0_i32_2 = arith.constant 0 : i32
    return %c0_i32, %c0_i32_0, %c0_i32_1 : i32, i32, i32
  }
  func.func @transform_22(%arg0: i32) -> (i32, i32, i32) {
    %c0_i32 = arith.constant 0 : i32
    %c0_i32_0 = arith.constant 0 : i32
    %c0_i32_1 = arith.constant 0 : i32
    %c0_i32_2 = arith.constant 0 : i32
    return %c0_i32, %c0_i32_0, %c0_i32_1 : i32, i32, i32
  }
  func.func @transform_23(%arg0: i32) -> (i32, i32, i32) {
    %c0_i32 = arith.constant 0 : i32
    %c0_i32_0 = arith.constant 0 : i32
    %c0_i32_1 = arith.constant 0 : i32
    %c0_i32_2 = arith.constant 0 : i32
    return %c0_i32, %c0_i32_0, %c0_i32_1 : i32, i32, i32
  }
  func.func @transform_24(%arg0: i32) -> (i32, i32, i32) {
    %c0_i32 = arith.constant 0 : i32
    %c0_i32_0 = arith.constant 0 : i32
    %c0_i32_1 = arith.constant 0 : i32
    %c0_i32_2 = arith.constant 0 : i32
    return %c0_i32, %c0_i32_0, %c0_i32_1 : i32, i32, i32
  }
  func.func @transform_25(%arg0: i32) -> (i32, i32, i32) {
    %c0_i32 = arith.constant 0 : i32
    %c0_i32_0 = arith.constant 0 : i32
    %c0_i32_1 = arith.constant 0 : i32
    %c0_i32_2 = arith.constant 0 : i32
    return %c0_i32, %c0_i32_0, %c0_i32_1 : i32, i32, i32
  }
  func.func @transform_26(%arg0: i32) -> (i32, i32) {
    %c0_i32 = arith.constant 0 : i32
    %c0_i32_0 = arith.constant 0 : i32
    %c0_i32_1 = arith.constant 0 : i32
    return %c0_i32, %c0_i32_0 : i32, i32
  }
  func.func @transform_27(%arg0: i32) -> (i32, i32) {
    %c0_i32 = arith.constant 0 : i32
    %c0_i32_0 = arith.constant 0 : i32
    %c0_i32_1 = arith.constant 0 : i32
    return %c0_i32, %c0_i32_0 : i32, i32
  }
  func.func @transform_28(%arg0: i32) -> (i32, i32, i32) {
    %c0_i32 = arith.constant 0 : i32
    %c0_i32_0 = arith.constant 0 : i32
    %c0_i32_1 = arith.constant 0 : i32
    %c0_i32_2 = arith.constant 0 : i32
    return %c0_i32, %c0_i32_0, %c0_i32_1 : i32, i32, i32
  }
}

</mosaic_0001>

<llo_original>
// kernel: inst_transformer_forward.2
$region0: #{inst_transformer_forward.2}
  #allocation0 [shape = 'u32[]', space=smem, size = 0x4, offset = 0x4, fixed_abs, tag = 'smem constant byte address 0x4 - core index']
  #allocation1 [shape = 'u32[144,128]{1,0:T(1,128)}', space=vmem, size = 0x12000, scoped, tag = 'internal scratch']
  %s0 = inlined_call_operand.vmem [shape: f32[2,8,32], index: 0, kind: input, shape index: {}]
  %s1 = inlined_call_operand.vmem [shape: f32[2,1,8], index: 1, kind: input, shape index: {}]
  %s2 = inlined_call_operand.vmem [shape: bf16[2,32,96], index: 2, kind: input, shape index: {}]
  %s3 = inlined_call_operand.vmem [shape: f32[2,1,96], index: 3, kind: input, shape index: {}]
  %s4 = inlined_call_operand.vmem [shape: bf16[2,32,32], index: 4, kind: input, shape index: {}]
  %s5 = inlined_call_operand.vmem [shape: f32[2,1,32], index: 5, kind: input, shape index: {}]
  %s6 = inlined_call_operand.vmem [shape: f32[2,1,32], index: 6, kind: input, shape index: {}]
  %s7 = inlined_call_operand.vmem [shape: f32[2,1,32], index: 7, kind: input, shape index: {}]
  %s8 = inlined_call_operand.vmem [shape: bf16[2,32,64], index: 8, kind: input, shape index: {}]
  %s9 = inlined_call_operand.vmem [shape: f32[2,1,64], index: 9, kind: input, shape index: {}]
  %s10 = inlined_call_operand.vmem [shape: bf16[2,64,32], index: 10, kind: input, shape index: {}]
  %s11 = inlined_call_operand.vmem [shape: f32[2,1,32], index: 11, kind: input, shape index: {}]
  %s12 = inlined_call_operand.vmem [shape: f32[2,1,32], index: 12, kind: input, shape index: {}]
  %s13 = inlined_call_operand.vmem [shape: f32[2,1,32], index: 13, kind: input, shape index: {}]
  %s14 = inlined_call_operand.vmem [shape: bf16[2,8,32], index: 14, kind: output, shape index: {}]
  %s15 = sld [smem:[#allocation0]]
  $region66: #{inst_transformer_forward.2} parent=0
    _
  %s17 = ssub.s32 1, %s15
  %s18 = scalar_select 0, %s17, %s15
  // Predicated region
  $region2: #{inst_transformer_forward.2} parent=0 // pred_check
    _
  $region3: #{inst_transformer_forward.2} parent=0 // pred_check_branch
    %20 = sbr.rel (0) target = $region5
  $region4: #{inst_transformer_forward.2} parent=0 // pred_region
    _
  $region5: #{inst_transformer_forward.2} parent=0 // pred_fallthru
    _
  // Predicated region
  $region6: #{inst_transformer_forward.2} parent=0 // pred_check
    _
  $region7: #{inst_transformer_forward.2} parent=0 // pred_check_branch
    %22 = sbr.rel (0) target = $region9
  $region8: #{inst_transformer_forward.2} parent=0 // pred_region
    _
  $region9: #{inst_transformer_forward.2} parent=0 // pred_fallthru
    _
  // Predicated region
  $region10: #{inst_transformer_forward.2} parent=0 // pred_check
    _
  $region11: #{inst_transformer_forward.2} parent=0 // pred_check_branch
    %24 = sbr.rel (0) target = $region13
  $region12: #{inst_transformer_forward.2} parent=0 // pred_region
    _
  $region13: #{inst_transformer_forward.2} parent=0 // pred_fallthru
    _
  // Predicated region
  $region14: #{inst_transformer_forward.2} parent=0 // pred_check
    _
  $region15: #{inst_transformer_forward.2} parent=0 // pred_check_branch
    %26 = sbr.rel (0) target = $region17
  $region16: #{inst_transformer_forward.2} parent=0 // pred_region
    _
  $region17: #{inst_transformer_forward.2} parent=0 // pred_fallthru
    _
  // Predicated region
  $region18: #{inst_transformer_forward.2} parent=0 // pred_check
    _
  $region19: #{inst_transformer_forward.2} parent=0 // pred_check_branch
    %28 = sbr.rel (0) target = $region21
  $region20: #{inst_transformer_forward.2} parent=0 // pred_region
    _
  $region21: #{inst_transformer_forward.2} parent=0 // pred_fallthru
    _
  // Predicated region
  $region22: #{inst_transformer_forward.2} parent=0 // pred_check
    _
  $region23: #{inst_transformer_forward.2} parent=0 // pred_check_branch
    %30 = sbr.rel (0) target = $region25
  $region24: #{inst_transformer_forward.2} parent=0 // pred_region
    _
  $region25: #{inst_transformer_forward.2} parent=0 // pred_fallthru
    _
  // Predicated region
  $region26: #{inst_transformer_forward.2} parent=0 // pred_check
    _
  $region27: #{inst_transformer_forward.2} parent=0 // pred_check_branch
    %32 = sbr.rel (0) target = $region29
  $region28: #{inst_transformer_forward.2} parent=0 // pred_region
    _
  $region29: #{inst_transformer_forward.2} parent=0 // pred_fallthru
    _
  // Predicated region
  $region30: #{inst_transformer_forward.2} parent=0 // pred_check
    _
  $region31: #{inst_transformer_forward.2} parent=0 // pred_check_branch
    %34 = sbr.rel (0) target = $region33
  $region32: #{inst_transformer_forward.2} parent=0 // pred_region
    _
  $region33: #{inst_transformer_forward.2} parent=0 // pred_fallthru
    _
  // Predicated region
  $region34: #{inst_transformer_forward.2} parent=0 // pred_check
    _
  $region35: #{inst_transformer_forward.2} parent=0 // pred_check_branch
    %36 = sbr.rel (0) target = $region37
  $region36: #{inst_transformer_forward.2} parent=0 // pred_region
    _
  $region37: #{inst_transformer_forward.2} parent=0 // pred_fallthru
    _
  // Predicated region
  $region38: #{inst_transformer_forward.2} parent=0 // pred_check
    _
  $region39: #{inst_transformer_forward.2} parent=0 // pred_check_branch
    %38 = sbr.rel (0) target = $region41
  $region40: #{inst_transformer_forward.2} parent=0 // pred_region
    _
  $region41: #{inst_transformer_forward.2} parent=0 // pred_fallthru
    _
  // Predicated region
  $region42: #{inst_transformer_forward.2} parent=0 // pred_check
    _
  $region43: #{inst_transformer_forward.2} parent=0 // pred_check_branch
    %40 = sbr.rel (0) target = $region45
  $region44: #{inst_transformer_forward.2} parent=0 // pred_region
    _
  $region45: #{inst_transformer_forward.2} parent=0 // pred_fallthru
    _
  // Predicated region
  $region46: #{inst_transformer_forward.2} parent=0 // pred_check
    _
  $region47: #{inst_transformer_forward.2} parent=0 // pred_check_branch
    %42 = sbr.rel (0) target = $region49
  $region48: #{inst_transformer_forward.2} parent=0 // pred_region
    _
  $region49: #{inst_transformer_forward.2} parent=0 // pred_fallthru
    _
  // Predicated region
  $region50: #{inst_transformer_forward.2} parent=0 // pred_check
    _
  $region51: #{inst_transformer_forward.2} parent=0 // pred_check_branch
    %44 = sbr.rel (0) target = $region53
  $region52: #{inst_transformer_forward.2} parent=0 // pred_region
    _
  $region53: #{inst_transformer_forward.2} parent=0 // pred_fallthru
    _
  // Predicated region
  $region54: #{inst_transformer_forward.2} parent=0 // pred_check
    _
  $region55: #{inst_transformer_forward.2} parent=0 // pred_check_branch
    %46 = sbr.rel (0) target = $region57
  $region56: #{inst_transformer_forward.2} parent=0 // pred_region
    _
  $region57: #{inst_transformer_forward.2} parent=0 // pred_fallthru
    _
  %v48 = vld [vmem:[%s0] sm:$0xff]
  %v49 = vld [vmem:[%s0 + $0x8] sm:$0xff]
  %v50 = vld [vmem:[%s1] sm:$0x1]
  %v51 = vld [vmem:[%s1 + $0x1] sm:$0x1]
  %v52 = vpack.c.bf16 %v49, %v48
  %v53 = vld [vmem:[%s2] sm:$0xf]
  %v54 = vld [vmem:[%s2 + $0x4] sm:$0xf]
  %v55 = vld [vmem:[%s2 + $0x8] sm:$0xf]
  %v56 = vld [vmem:[%s2 + $0xc] sm:$0xf]
  %v57 = vld [vmem:[%s3] sm:$0x1]
  %v59 = vlaneseq
  %v60 = vshrl.u32 %v59, 7
  %v61 = vsub.s32 0, %v60
  %v62 = vrot.slane %v57, %v61
  %v68 = vunpack.c.l.b16 %v53
  %v69 = vunpack.c.l.b16 %v54
  %v70 = vunpack.c.l.b16 %v55
  %v71 = vunpack.c.l.b16 %v56
  %v72 = vpack.c.b16 %v69, %v68
  %v73 = vpack.c.b16 %v71, %v70
  %vm76 = vcmask 261120
  %v78 = vsel %vm76, %v52, 0
  %80 = vmatprep.subr.bf16.mxu0 0
  %81 = vmatpush1.bf16.msra.mxu0 %v72
  %82 = vmatprep.subr.bf16.mxu0 0
  %83 = vmatpush1.bf16.msra.mxu0 %v73
  %84 = vmatprep.subr.bf16.mxu0 0
  %85 = vmatpush1.bf16.msra.mxu0 0
  %86 = vmatprep.subr.bf16.mxu0 0
  %87 = vmatpush1.bf16.msra.mxu0 0
  %88 = vmatprep.subr.bf16.mxu0 0
  %89 = vmatpush1.bf16.msra.mxu0 0
  %90 = vmatprep.subr.bf16.mxu0 0
  %91 = vmatpush1.bf16.msra.mxu0 0
  %92 = vmatprep.subr.bf16.mxu0 0
  %93 = vmatpush1.bf16.msra.mxu0 0
  %94 = vmatprep.subr.bf16.mxu0 0
  %95 = vmatpush1.bf16.msra.mxu0 0
  %96 = vmatprep.subr.bf16.mxu0 0
  %97 = vmatpush1.bf16.msra.mxu0 0
  %98 = vmatprep.subr.bf16.mxu0 0
  %99 = vmatpush1.bf16.msra.mxu0 0
  %100 = vmatprep.subr.bf16.mxu0 0
  %101 = vmatpush1.bf16.msra.mxu0 0
  %102 = vmatprep.subr.bf16.mxu0 0
  %103 = vmatpush1.bf16.msra.mxu0 0
  %104 = vmatprep.subr.bf16.mxu0 0
  %105 = vmatpush1.bf16.msra.mxu0 0
  %106 = vmatprep.subr.bf16.mxu0 0
  %107 = vmatpush1.bf16.msra.mxu0 0
  %108 = vmatprep.subr.bf16.mxu0 0
  %109 = vmatpush1.bf16.msra.mxu0 0
  %110 = vmatprep.subr.bf16.mxu0 0
  %111 = vmatpush1.bf16.msra.mxu0 0
  %112 = vmatprep.mubr.bf16.mxu0 0
  %113 = vmatmul.mubr.bf16.gmra.mrb[0].mxu0 %v78
  %v114 = vpop.f32.mrb[0].mxu0
  %v115 = vadd.f32 %v62, %v114
  %v116 = vpop.f32.mrb[0].mxu0
  %v117 = vpop.f32.mrb[0].mxu0
  %v118 = vadd.f32 %v62, %v117
  %v119 = vpop.f32.mrb[0].mxu0
  %120 = vdwg.mxu0
  %v121 = vld [vmem:[%s4] sm:$0xf]
  %v122 = vld [vmem:[%s4 + $0x4] sm:$0xf]
  %v123 = vld [vmem:[%s4 + $0x8] sm:$0xf]
  %v124 = vld [vmem:[%s4 + $0xc] sm:$0xf]
  %v125 = vld [vmem:[%s5] sm:$0x1]
  %v126 = vpack.c.bf16 %v115, %v115
  %128 = vrot.lane.b32.xlu0 %v126, 96
  %v129 = vpop.permute.xlu0 %128
  %vm130 = vcmask 64512
  %v132 = vsel %vm130, %v126, 0
  %v135 = vsel %vm130, %v129, 0
  %137 = vmatprep.subr.bf16.mxu0 0
  %138 = vmatpush1.bf16.xpose.msra.mxu0 %v135
  %139 = vmatprep.subr.bf16.mxu0 0
  %140 = vmatpush1.bf16.xpose.msra.mxu0 0
  %141 = vmatprep.subr.bf16.mxu0 0
  %142 = vmatpush1.bf16.xpose.msra.mxu0 0
  %143 = vmatprep.subr.bf16.mxu0 0
  %144 = vmatpush1.bf16.xpose.msra.mxu0 0
  %145 = vmatprep.subr.bf16.mxu0 0
  %146 = vmatpush1.bf16.xpose.msra.mxu0 0
  %147 = vmatprep.subr.bf16.mxu0 0
  %148 = vmatpush1.bf16.xpose.msra.mxu0 0
  %149 = vmatprep.subr.bf16.mxu0 0
  %150 = vmatpush1.bf16.xpose.msra.mxu0 0
  %151 = vmatprep.subr.bf16.mxu0 0
  %152 = vmatpush1.bf16.xpose.msra.mxu0 0
  %153 = vmatprep.subr.bf16.mxu0 0
  %154 = vmatpush1.bf16.xpose.msra.mxu0 0
  %155 = vmatprep.subr.bf16.mxu0 0
  %156 = vmatpush1.bf16.xpose.msra.mxu0 0
  %157 = vmatprep.subr.bf16.mxu0 0
  %158 = vmatpush1.bf16.xpose.msra.mxu0 0
  %159 = vmatprep.subr.bf16.mxu0 0
  %160 = vmatpush1.bf16.xpose.msra.mxu0 0
  %161 = vmatprep.subr.bf16.mxu0 0
  %162 = vmatpush1.bf16.xpose.msra.mxu0 0
  %163 = vmatprep.subr.bf16.mxu0 0
  %164 = vmatpush1.bf16.xpose.msra.mxu0 0
  %165 = vmatprep.subr.bf16.mxu0 0
  %166 = vmatpush1.bf16.xpose.msra.mxu0 0
  %167 = vmatprep.subr.bf16.mxu0 0
  %168 = vmatpush1.bf16.xpose.msra.mxu0 0
  %169 = vmatprep.mubr.bf16.mxu0 0
  %170 = vmatmul.mubr.bf16.gmra.mrb[0].mxu0 %v132
  %v171 = vpop.f32.mrb[0].mxu0
  %v172 = vadd.f32 0.0, %v171
  %v173 = vpop.f32.mrb[0].mxu0
  %v174 = vpop.f32.mrb[0].mxu0
  %v175 = vpop.f32.mrb[0].mxu0
  %176 = vdwg.mxu0
  %v177 = vmul.f32 %v172, 0.35355338
  %v179 = vlaneseq
  %v180 = vshrl.u32 %v179, 7
  %v181 = vsub.s32 0, %v180
  %v182 = vrot.slane %v50, %v181
  %v184 = vadd.f32 %v177, %v182
  %185 = vrot.lane.b32.xlu0 %v126, 120
  %v186 = vpop.permute.xlu0 %185
  %187 = vrot.lane.b32.xlu0 %v126, 88
  %v188 = vpop.permute.xlu0 %187
  %v190 = vsel %vm130, %v186, 0
  %v193 = vsel %vm130, %v188, 0
  %195 = vmatprep.subr.bf16.mxu0 0
  %196 = vmatpush1.bf16.xpose.msra.mxu0 %v193
  %197 = vmatprep.subr.bf16.mxu0 0
  %198 = vmatpush1.bf16.xpose.msra.mxu0 0
  %199 = vmatprep.subr.bf16.mxu0 0
  %200 = vmatpush1.bf16.xpose.msra.mxu0 0
  %201 = vmatprep.subr.bf16.mxu0 0
  %202 = vmatpush1.bf16.xpose.msra.mxu0 0
  %203 = vmatprep.subr.bf16.mxu0 0
  %204 = vmatpush1.bf16.xpose.msra.mxu0 0
  %205 = vmatprep.subr.bf16.mxu0 0
  %206 = vmatpush1.bf16.xpose.msra.mxu0 0
  %207 = vmatprep.subr.bf16.mxu0 0
  %208 = vmatpush1.bf16.xpose.msra.mxu0 0
  %209 = vmatprep.subr.bf16.mxu0 0
  %210 = vmatpush1.bf16.xpose.msra.mxu0 0
  %211 = vmatprep.subr.bf16.mxu0 0
  %212 = vmatpush1.bf16.xpose.msra.mxu0 0
  %213 = vmatprep.subr.bf16.mxu0 0
  %214 = vmatpush1.bf16.xpose.msra.mxu0 0
  %215 = vmatprep.subr.bf16.mxu0 0
  %216 = vmatpush1.bf16.xpose.msra.mxu0 0
  %217 = vmatprep.subr.bf16.mxu0 0
  %218 = vmatpush1.bf16.xpose.msra.mxu0 0
  %219 = vmatprep.subr.bf16.mxu0 0
  %220 = vmatpush1.bf16.xpose.msra.mxu0 0
  %221 = vmatprep.subr.bf16.mxu0 0
  %222 = vmatpush1.bf16.xpose.msra.mxu0 0
  %223 = vmatprep.subr.bf16.mxu0 0
  %224 = vmatpush1.bf16.xpose.msra.mxu0 0
  %225 = vmatprep.subr.bf16.mxu0 0
  %226 = vmatpush1.bf16.xpose.msra.mxu0 0
  %227 = vmatprep.mubr.bf16.mxu0 0
  %228 = vmatmul.mubr.bf16.gmra.mrb[0].mxu0 %v190
  %v229 = vpop.f32.mrb[0].mxu0
  %v230 = vadd.f32 0.0, %v229
  %v231 = vpop.f32.mrb[0].mxu0
  %v232 = vpop.f32.mrb[0].mxu0
  %v233 = vpop.f32.mrb[0].mxu0
  %234 = vdwg.mxu0
  %v235 = vmul.f32 %v230, 0.35355338
  %v236 = vadd.f32 %v235, %v182
  %237 = vrot.lane.b32.xlu0 %v126, 112
  %v238 = vpop.permute.xlu0 %237
  %239 = vrot.lane.b32.xlu0 %v126, 80
  %v240 = vpop.permute.xlu0 %239
  %v242 = vsel %vm130, %v238, 0
  %v245 = vsel %vm130, %v240, 0
  %247 = vmatprep.subr.bf16.mxu0 0
  %248 = vmatpush1.bf16.xpose.msra.mxu0 %v245
  %249 = vmatprep.subr.bf16.mxu0 0
  %250 = vmatpush1.bf16.xpose.msra.mxu0 0
  %251 = vmatprep.subr.bf16.mxu0 0
  %252 = vmatpush1.bf16.xpose.msra.mxu0 0
  %253 = vmatprep.subr.bf16.mxu0 0
  %254 = vmatpush1.bf16.xpose.msra.mxu0 0
  %255 = vmatprep.subr.bf16.mxu0 0
  %256 = vmatpush1.bf16.xpose.msra.mxu0 0
  %257 = vmatprep.subr.bf16.mxu0 0
  %258 = vmatpush1.bf16.xpose.msra.mxu0 0
  %259 = vmatprep.subr.bf16.mxu0 0
  %260 = vmatpush1.bf16.xpose.msra.mxu0 0
  %261 = vmatprep.subr.bf16.mxu0 0
  %262 = vmatpush1.bf16.xpose.msra.mxu0 0
  %263 = vmatprep.subr.bf16.mxu0 0
  %264 = vmatpush1.bf16.xpose.msra.mxu0 0
  %265 = vmatprep.subr.bf16.mxu0 0
  %266 = vmatpush1.bf16.xpose.msra.mxu0 0
  %267 = vmatprep.subr.bf16.mxu0 0
  %268 = vmatpush1.bf16.xpose.msra.mxu0 0
  %269 = vmatprep.subr.bf16.mxu0 0
  %270 = vmatpush1.bf16.xpose.msra.mxu0 0
  %271 = vmatprep.subr.bf16.mxu0 0
  %272 = vmatpush1.bf16.xpose.msra.mxu0 0
  %273 = vmatprep.subr.bf16.mxu0 0
  %274 = vmatpush1.bf16.xpose.msra.mxu0 0
  %275 = vmatprep.subr.bf16.mxu0 0
  %276 = vmatpush1.bf16.xpose.msra.mxu0 0
  %277 = vmatprep.subr.bf16.mxu0 0
  %278 = vmatpush1.bf16.xpose.msra.mxu0 0
  %279 = vmatprep.mubr.bf16.mxu0 0
  %280 = vmatmul.mubr.bf16.gmra.mrb[0].mxu0 %v242
  %v281 = vpop.f32.mrb[0].mxu0
  %v282 = vadd.f32 0.0, %v281
  %v283 = vpop.f32.mrb[0].mxu0
  %v284 = vpop.f32.mrb[0].mxu0
  %v285 = vpop.f32.mrb[0].mxu0
  %286 = vdwg.mxu0
  %v287 = vmul.f32 %v282, 0.35355338
  %v288 = vadd.f32 %v287, %v182
  %289 = vrot.lane.b32.xlu0 %v126, 104
  %v290 = vpop.permute.xlu0 %289
  %291 = vrot.lane.b32.xlu0 %v126, 72
  %v292 = vpop.permute.xlu0 %291
  %v294 = vsel %vm130, %v290, 0
  %v297 = vsel %vm130, %v292, 0
  %299 = vmatprep.subr.bf16.mxu0 0
  %300 = vmatpush1.bf16.xpose.msra.mxu0 %v297
  %301 = vmatprep.subr.bf16.mxu0 0
  %302 = vmatpush1.bf16.xpose.msra.mxu0 0
  %303 = vmatprep.subr.bf16.mxu0 0
  %304 = vmatpush1.bf16.xpose.msra.mxu0 0
  %305 = vmatprep.subr.bf16.mxu0 0
  %306 = vmatpush1.bf16.xpose.msra.mxu0 0
  %307 = vmatprep.subr.bf16.mxu0 0
  %308 = vmatpush1.bf16.xpose.msra.mxu0 0
  %309 = vmatprep.subr.bf16.mxu0 0
  %310 = vmatpush1.bf16.xpose.msra.mxu0 0
  %311 = vmatprep.subr.bf16.mxu0 0
  %312 = vmatpush1.bf16.xpose.msra.mxu0 0
  %313 = vmatprep.subr.bf16.mxu0 0
  %314 = vmatpush1.bf16.xpose.msra.mxu0 0
  %315 = vmatprep.subr.bf16.mxu0 0
  %316 = vmatpush1.bf16.xpose.msra.mxu0 0
  %317 = vmatprep.subr.bf16.mxu0 0
  %318 = vmatpush1.bf16.xpose.msra.mxu0 0
  %319 = vmatprep.subr.bf16.mxu0 0
  %320 = vmatpush1.bf16.xpose.msra.mxu0 0
  %321 = vmatprep.subr.bf16.mxu0 0
  %322 = vmatpush1.bf16.xpose.msra.mxu0 0
  %323 = vmatprep.subr.bf16.mxu0 0
  %324 = vmatpush1.bf16.xpose.msra.mxu0 0
  %325 = vmatprep.subr.bf16.mxu0 0
  %326 = vmatpush1.bf16.xpose.msra.mxu0 0
  %327 = vmatprep.subr.bf16.mxu0 0
  %328 = vmatpush1.bf16.xpose.msra.mxu0 0
  %329 = vmatprep.subr.bf16.mxu0 0
  %330 = vmatpush1.bf16.xpose.msra.mxu0 0
  %331 = vmatprep.mubr.bf16.mxu0 0
  %332 = vmatmul.mubr.bf16.gmra.mrb[0].mxu0 %v294
  %v333 = vpop.f32.mrb[0].mxu0
  %v334 = vadd.f32 0.0, %v333
  %v335 = vpop.f32.mrb[0].mxu0
  %v336 = vpop.f32.mrb[0].mxu0
  %v337 = vpop.f32.mrb[0].mxu0
  %338 = vdwg.mxu0
  %v339 = vmul.f32 %v334, 0.35355338
  %v340 = vadd.f32 %v339, %v182
  %v341 = vpack.c.bf16 %v118, %v118
  %343 = vrot.lane.b32.xlu0 %v341, 96
  %v344 = vpop.permute.xlu0 %343
  %v346 = vsel %vm130, %v341, 0
  %v349 = vsel %vm130, %v344, 0
  %351 = vmatprep.subr.bf16.mxu0 0
  %352 = vmatpush1.bf16.xpose.msra.mxu0 %v349
  %353 = vmatprep.subr.bf16.mxu0 0
  %354 = vmatpush1.bf16.xpose.msra.mxu0 0
  %355 = vmatprep.subr.bf16.mxu0 0
  %356 = vmatpush1.bf16.xpose.msra.mxu0 0
  %357 = vmatprep.subr.bf16.mxu0 0
  %358 = vmatpush1.bf16.xpose.msra.mxu0 0
  %359 = vmatprep.subr.bf16.mxu0 0
  %360 = vmatpush1.bf16.xpose.msra.mxu0 0
  %361 = vmatprep.subr.bf16.mxu0 0
  %362 = vmatpush1.bf16.xpose.msra.mxu0 0
  %363 = vmatprep.subr.bf16.mxu0 0
  %364 = vmatpush1.bf16.xpose.msra.mxu0 0
  %365 = vmatprep.subr.bf16.mxu0 0
  %366 = vmatpush1.bf16.xpose.msra.mxu0 0
  %367 = vmatprep.subr.bf16.mxu0 0
  %368 = vmatpush1.bf16.xpose.msra.mxu0 0
  %369 = vmatprep.subr.bf16.mxu0 0
  %370 = vmatpush1.bf16.xpose.msra.mxu0 0
  %371 = vmatprep.subr.bf16.mxu0 0
  %372 = vmatpush1.bf16.xpose.msra.mxu0 0
  %373 = vmatprep.subr.bf16.mxu0 0
  %374 = vmatpush1.bf16.xpose.msra.mxu0 0
  %375 = vmatprep.subr.bf16.mxu0 0
  %376 = vmatpush1.bf16.xpose.msra.mxu0 0
  %377 = vmatprep.subr.bf16.mxu0 0
  %378 = vmatpush1.bf16.xpose.msra.mxu0 0
  %379 = vmatprep.subr.bf16.mxu0 0
  %380 = vmatpush1.bf16.xpose.msra.mxu0 0
  %381 = vmatprep.subr.bf16.mxu0 0
  %382 = vmatpush1.bf16.xpose.msra.mxu0 0
  %383 = vmatprep.mubr.bf16.mxu0 0
  %384 = vmatmul.mubr.bf16.gmra.mrb[0].mxu0 %v346
  %v385 = vpop.f32.mrb[0].mxu0
  %v386 = vadd.f32 0.0, %v385
  %v387 = vpop.f32.mrb[0].mxu0
  %v388 = vpop.f32.mrb[0].mxu0
  %v389 = vpop.f32.mrb[0].mxu0
  %390 = vdwg.mxu0
  %v391 = vmul.f32 %v386, 0.35355338
  %v393 = vlaneseq
  %v394 = vshrl.u32 %v393, 7
  %v395 = vsub.s32 0, %v394
  %v396 = vrot.slane %v51, %v395
  %v398 = vadd.f32 %v391, %v396
  %399 = vrot.lane.b32.xlu0 %v341, 120
  %v400 = vpop.permute.xlu0 %399
  %401 = vrot.lane.b32.xlu0 %v341, 88
  %v402 = vpop.permute.xlu0 %401
  %v404 = vsel %vm130, %v400, 0
  %v407 = vsel %vm130, %v402, 0
  %409 = vmatprep.subr.bf16.mxu0 0
  %410 = vmatpush1.bf16.xpose.msra.mxu0 %v407
  %411 = vmatprep.subr.bf16.mxu0 0
  %412 = vmatpush1.bf16.xpose.msra.mxu0 0
  %413 = vmatprep.subr.bf16.mxu0 0
  %414 = vmatpush1.bf16.xpose.msra.mxu0 0
  %415 = vmatprep.subr.bf16.mxu0 0
  %416 = vmatpush1.bf16.xpose.msra.mxu0 0
  %417 = vmatprep.subr.bf16.mxu0 0
  %418 = vmatpush1.bf16.xpose.msra.mxu0 0
  %419 = vmatprep.subr.bf16.mxu0 0
  %420 = vmatpush1.bf16.xpose.msra.mxu0 0
  %421 = vmatprep.subr.bf16.mxu0 0
  %422 = vmatpush1.bf16.xpose.msra.mxu0 0
  %423 = vmatprep.subr.bf16.mxu0 0
  %424 = vmatpush1.bf16.xpose.msra.mxu0 0
  %425 = vmatprep.subr.bf16.mxu0 0
  %426 = vmatpush1.bf16.xpose.msra.mxu0 0
  %427 = vmatprep.subr.bf16.mxu0 0
  %428 = vmatpush1.bf16.xpose.msra.mxu0 0
  %429 = vmatprep.subr.bf16.mxu0 0
  %430 = vmatpush1.bf16.xpose.msra.mxu0 0
  %431 = vmatprep.subr.bf16.mxu0 0
  %432 = vmatpush1.bf16.xpose.msra.mxu0 0
  %433 = vmatprep.subr.bf16.mxu0 0
  %434 = vmatpush1.bf16.xpose.msra.mxu0 0
  %435 = vmatprep.subr.bf16.mxu0 0
  %436 = vmatpush1.bf16.xpose.msra.mxu0 0
  %437 = vmatprep.subr.bf16.mxu0 0
  %438 = vmatpush1.bf16.xpose.msra.mxu0 0
  %439 = vmatprep.subr.bf16.mxu0 0
  %440 = vmatpush1.bf16.xpose.msra.mxu0 0
  %441 = vmatprep.mubr.bf16.mxu0 0
  %442 = vmatmul.mubr.bf16.gmra.mrb[0].mxu0 %v404
  %v443 = vpop.f32.mrb[0].mxu0
  %v444 = vadd.f32 0.0, %v443
  %v445 = vpop.f32.mrb[0].mxu0
  %v446 = vpop.f32.mrb[0].mxu0
  %v447 = vpop.f32.mrb[0].mxu0
  %448 = vdwg.mxu0
  %v449 = vmul.f32 %v444, 0.35355338
  %v450 = vadd.f32 %v449, %v396
  %451 = vrot.lane.b32.xlu0 %v341, 112
  %v452 = vpop.permute.xlu0 %451
  %453 = vrot.lane.b32.xlu0 %v341, 80
  %v454 = vpop.permute.xlu0 %453
  %v456 = vsel %vm130, %v452, 0
  %v459 = vsel %vm130, %v454, 0
  %461 = vmatprep.subr.bf16.mxu0 0
  %462 = vmatpush1.bf16.xpose.msra.mxu0 %v459
  %463 = vmatprep.subr.bf16.mxu0 0
  %464 = vmatpush1.bf16.xpose.msra.mxu0 0
  %465 = vmatprep.subr.bf16.mxu0 0
  %466 = vmatpush1.bf16.xpose.msra.mxu0 0
  %467 = vmatprep.subr.bf16.mxu0 0
  %468 = vmatpush1.bf16.xpose.msra.mxu0 0
  %469 = vmatprep.subr.bf16.mxu0 0
  %470 = vmatpush1.bf16.xpose.msra.mxu0 0
  %471 = vmatprep.subr.bf16.mxu0 0
  %472 = vmatpush1.bf16.xpose.msra.mxu0 0
  %473 = vmatprep.subr.bf16.mxu0 0
  %474 = vmatpush1.bf16.xpose.msra.mxu0 0
  %475 = vmatprep.subr.bf16.mxu0 0
  %476 = vmatpush1.bf16.xpose.msra.mxu0 0
  %477 = vmatprep.subr.bf16.mxu0 0
  %478 = vmatpush1.bf16.xpose.msra.mxu0 0
  %479 = vmatprep.subr.bf16.mxu0 0
  %480 = vmatpush1.bf16.xpose.msra.mxu0 0
  %481 = vmatprep.subr.bf16.mxu0 0
  %482 = vmatpush1.bf16.xpose.msra.mxu0 0
  %483 = vmatprep.subr.bf16.mxu0 0
  %484 = vmatpush1.bf16.xpose.msra.mxu0 0
  %485 = vmatprep.subr.bf16.mxu0 0
  %486 = vmatpush1.bf16.xpose.msra.mxu0 0
  %487 = vmatprep.subr.bf16.mxu0 0
  %488 = vmatpush1.bf16.xpose.msra.mxu0 0
  %489 = vmatprep.subr.bf16.mxu0 0
  %490 = vmatpush1.bf16.xpose.msra.mxu0 0
  %491 = vmatprep.subr.bf16.mxu0 0
  %492 = vmatpush1.bf16.xpose.msra.mxu0 0
  %493 = vmatprep.mubr.bf16.mxu0 0
  %494 = vmatmul.mubr.bf16.gmra.mrb[0].mxu0 %v456
  %v495 = vpop.f32.mrb[0].mxu0
  %v496 = vadd.f32 0.0, %v495
  %v497 = vpop.f32.mrb[0].mxu0
  %v498 = vpop.f32.mrb[0].mxu0
  %v499 = vpop.f32.mrb[0].mxu0
  %500 = vdwg.mxu0
  %v501 = vmul.f32 %v496, 0.35355338
  %v502 = vadd.f32 %v501, %v396
  %503 = vrot.lane.b32.xlu0 %v341, 104
  %v504 = vpop.permute.xlu0 %503
  %505 = vrot.lane.b32.xlu0 %v341, 72
  %v506 = vpop.permute.xlu0 %505
  %v508 = vsel %vm130, %v504, 0
  %v511 = vsel %vm130, %v506, 0
  %513 = vmatprep.subr.bf16.mxu0 0
  %514 = vmatpush1.bf16.xpose.msra.mxu0 %v511
  %515 = vmatprep.subr.bf16.mxu0 0
  %516 = vmatpush1.bf16.xpose.msra.mxu0 0
  %517 = vmatprep.subr.bf16.mxu0 0
  %518 = vmatpush1.bf16.xpose.msra.mxu0 0
  %519 = vmatprep.subr.bf16.mxu0 0
  %520 = vmatpush1.bf16.xpose.msra.mxu0 0
  %521 = vmatprep.subr.bf16.mxu0 0
  %522 = vmatpush1.bf16.xpose.msra.mxu0 0
  %523 = vmatprep.subr.bf16.mxu0 0
  %524 = vmatpush1.bf16.xpose.msra.mxu0 0
  %525 = vmatprep.subr.bf16.mxu0 0
  %526 = vmatpush1.bf16.xpose.msra.mxu0 0
  %527 = vmatprep.subr.bf16.mxu0 0
  %528 = vmatpush1.bf16.xpose.msra.mxu0 0
  %529 = vmatprep.subr.bf16.mxu0 0
  %530 = vmatpush1.bf16.xpose.msra.mxu0 0
  %531 = vmatprep.subr.bf16.mxu0 0
  %532 = vmatpush1.bf16.xpose.msra.mxu0 0
  %533 = vmatprep.subr.bf16.mxu0 0
  %534 = vmatpush1.bf16.xpose.msra.mxu0 0
  %535 = vmatprep.subr.bf16.mxu0 0
  %536 = vmatpush1.bf16.xpose.msra.mxu0 0
  %537 = vmatprep.subr.bf16.mxu0 0
  %538 = vmatpush1.bf16.xpose.msra.mxu0 0
  %539 = vmatprep.subr.bf16.mxu0 0
  %540 = vmatpush1.bf16.xpose.msra.mxu0 0
  %541 = vmatprep.subr.bf16.mxu0 0
  %542 = vmatpush1.bf16.xpose.msra.mxu0 0
  %543 = vmatprep.subr.bf16.mxu0 0
  %544 = vmatpush1.bf16.xpose.msra.mxu0 0
  %545 = vmatprep.mubr.bf16.mxu0 0
  %546 = vmatmul.mubr.bf16.gmra.mrb[0].mxu0 %v508
  %v547 = vpop.f32.mrb[0].mxu0
  %v548 = vadd.f32 0.0, %v547
  %v549 = vpop.f32.mrb[0].mxu0
  %v550 = vpop.f32.mrb[0].mxu0
  %v551 = vpop.f32.mrb[0].mxu0
  %552 = vdwg.mxu0
  %v553 = vmul.f32 %v548, 0.35355338
  %v554 = vadd.f32 %v553, %v396
  %v555 = vsel %vm130, %v184, -inf
  %556 = vmax.xlane.f32.xlu0 %v555
  %v557 = vpop.xlane.xlu0 %556
  %v558 = vsel %vm130, %v236, -inf
  %559 = vmax.xlane.f32.xlu0 %v558
  %v560 = vpop.xlane.xlu0 %559
  %v561 = vsel %vm130, %v288, -inf
  %562 = vmax.xlane.f32.xlu0 %v561
  %v563 = vpop.xlane.xlu0 %562
  %v564 = vsel %vm130, %v340, -inf
  %565 = vmax.xlane.f32.xlu0 %v564
  %v566 = vpop.xlane.xlu0 %565
  %v567 = vsel %vm130, %v398, -inf
  %568 = vmax.xlane.f32.xlu0 %v567
  %v569 = vpop.xlane.xlu0 %568
  %v570 = vsel %vm130, %v450, -inf
  %571 = vmax.xlane.f32.xlu0 %v570
  %v572 = vpop.xlane.xlu0 %571
  %v573 = vsel %vm130, %v502, -inf
  %574 = vmax.xlane.f32.xlu0 %v573
  %v575 = vpop.xlane.xlu0 %574
  %v576 = vsel %vm130, %v554, -inf
  %577 = vmax.xlane.f32.xlu0 %v576
  %v578 = vpop.xlane.xlu0 %577
  %v579 = vsub.f32 %v184, %v557
  %v580 = vsub.f32 %v236, %v560
  %v581 = vsub.f32 %v288, %v563
  %v582 = vsub.f32 %v340, %v566
  %v583 = vsub.f32 %v398, %v569
  %v584 = vsub.f32 %v450, %v572
  %v585 = vsub.f32 %v502, %v575
  %v586 = vsub.f32 %v554, %v578
  %v587 = vmul.f32 %v579, 1.442695
  %v588 = vpow.pop %v587
  %v589 = vmul.f32 %v580, 1.442695
  %v590 = vpow.pop %v589
  %v591 = vmul.f32 %v581, 1.442695
  %v592 = vpow.pop %v591
  %v593 = vmul.f32 %v582, 1.442695
  %v594 = vpow.pop %v593
  %v595 = vmul.f32 %v583, 1.442695
  %v596 = vpow.pop %v595
  %v597 = vmul.f32 %v584, 1.442695
  %v598 = vpow.pop %v597
  %v599 = vmul.f32 %v585, 1.442695
  %v600 = vpow.pop %v599
  %v601 = vmul.f32 %v586, 1.442695
  %v602 = vpow.pop %v601
  %v603 = vsel %vm130, %v588, 0.0
  %604 = vadd.xlane.f32.xlu0 %v603
  %v605 = vpop.xlane.xlu0 %604
  %v606 = vsel %vm130, %v590, 0.0
  %607 = vadd.xlane.f32.xlu0 %v606
  %v608 = vpop.xlane.xlu0 %607
  %v609 = vsel %vm130, %v592, 0.0
  %610 = vadd.xlane.f32.xlu0 %v609
  %v611 = vpop.xlane.xlu0 %610
  %v612 = vsel %vm130, %v594, 0.0
  %613 = vadd.xlane.f32.xlu0 %v612
  %v614 = vpop.xlane.xlu0 %613
  %v615 = vsel %vm130, %v596, 0.0
  %616 = vadd.xlane.f32.xlu0 %v615
  %v617 = vpop.xlane.xlu0 %616
  %v618 = vsel %vm130, %v598, 0.0
  %619 = vadd.xlane.f32.xlu0 %v618
  %v620 = vpop.xlane.xlu0 %619
  %v621 = vsel %vm130, %v600, 0.0
  %622 = vadd.xlane.f32.xlu0 %v621
  %v623 = vpop.xlane.xlu0 %622
  %v624 = vsel %vm130, %v602, 0.0
  %625 = vadd.xlane.f32.xlu0 %v624
  %v626 = vpop.xlane.xlu0 %625
  %v627 = vrcp.pop %v605
  %v628 = vrcp.pop %v608
  %v629 = vrcp.pop %v611
  %v630 = vrcp.pop %v614
  %v631 = vrcp.pop %v617
  %v632 = vrcp.pop %v620
  %v633 = vrcp.pop %v623
  %v634 = vrcp.pop %v626
  %v635 = vmul.f32 %v588, %v627
  %v636 = vmul.f32 %v590, %v628
  %v637 = vmul.f32 %v592, %v629
  %v638 = vmul.f32 %v594, %v630
  %v639 = vmul.f32 %v596, %v631
  %v640 = vmul.f32 %v598, %v632
  %v641 = vmul.f32 %v600, %v633
  %v642 = vmul.f32 %v602, %v634
  %v643 = vpack.c.bf16 %v636, %v635
  %v644 = vpack.c.bf16 %v638, %v637
  %v645 = vpack.c.bf16 %v640, %v639
  %v646 = vpack.c.bf16 %v642, %v641
  %647 = vrot.lane.b32.xlu0 %v126, 64
  %v648 = vpop.permute.xlu0 %647
  %v650 = vsel %vm130, %v643, 0
  %vm652 = vcmask 1043456
  %v654 = vsel %vm652, %v648, 0
  %656 = vmatprep.subr.bf16.mxu0 0
  %657 = vmatpush1.bf16.msra.mxu0 %v654
  %658 = vmatprep.subr.bf16.mxu0 0
  %659 = vmatpush1.bf16.msra.mxu0 0
  %660 = vmatprep.subr.bf16.mxu0 0
  %661 = vmatpush1.bf16.msra.mxu0 0
  %662 = vmatprep.subr.bf16.mxu0 0
  %663 = vmatpush1.bf16.msra.mxu0 0
  %664 = vmatprep.subr.bf16.mxu0 0
  %665 = vmatpush1.bf16.msra.mxu0 0
  %666 = vmatprep.subr.bf16.mxu0 0
  %667 = vmatpush1.bf16.msra.mxu0 0
  %668 = vmatprep.subr.bf16.mxu0 0
  %669 = vmatpush1.bf16.msra.mxu0 0
  %670 = vmatprep.subr.bf16.mxu0 0
  %671 = vmatpush1.bf16.msra.mxu0 0
  %672 = vmatprep.subr.bf16.mxu0 0
  %673 = vmatpush1.bf16.msra.mxu0 0
  %674 = vmatprep.subr.bf16.mxu0 0
  %675 = vmatpush1.bf16.msra.mxu0 0
  %676 = vmatprep.subr.bf16.mxu0 0
  %677 = vmatpush1.bf16.msra.mxu0 0
  %678 = vmatprep.subr.bf16.mxu0 0
  %679 = vmatpush1.bf16.msra.mxu0 0
  %680 = vmatprep.subr.bf16.mxu0 0
  %681 = vmatpush1.bf16.msra.mxu0 0
  %682 = vmatprep.subr.bf16.mxu0 0
  %683 = vmatpush1.bf16.msra.mxu0 0
  %684 = vmatprep.subr.bf16.mxu0 0
  %685 = vmatpush1.bf16.msra.mxu0 0
  %686 = vmatprep.subr.bf16.mxu0 0
  %687 = vmatpush1.bf16.msra.mxu0 0
  %688 = vmatprep.mubr.bf16.mxu0 0
  %689 = vmatmul.mubr.bf16.gmra.mrb[0].mxu0 %v650
  %v690 = vpop.f32.mrb[0].mxu0
  %v691 = vadd.f32 0.0, %v690
  %v692 = vpop.f32.mrb[0].mxu0
  %v693 = vpop.f32.mrb[0].mxu0
  %v694 = vpop.f32.mrb[0].mxu0
  %695 = vdwg.mxu0
  %v697 = vrot.slane %v643, 4
  %698 = vrot.lane.b32.xlu0 %v126, 56
  %v699 = vpop.permute.xlu0 %698
  %v701 = vsel %vm130, %v697, 0
  %v704 = vsel %vm652, %v699, 0
  %706 = vmatprep.subr.bf16.mxu0 0
  %707 = vmatpush1.bf16.msra.mxu0 %v704
  %708 = vmatprep.subr.bf16.mxu0 0
  %709 = vmatpush1.bf16.msra.mxu0 0
  %710 = vmatprep.subr.bf16.mxu0 0
  %711 = vmatpush1.bf16.msra.mxu0 0
  %712 = vmatprep.subr.bf16.mxu0 0
  %713 = vmatpush1.bf16.msra.mxu0 0
  %714 = vmatprep.subr.bf16.mxu0 0
  %715 = vmatpush1.bf16.msra.mxu0 0
  %716 = vmatprep.subr.bf16.mxu0 0
  %717 = vmatpush1.bf16.msra.mxu0 0
  %718 = vmatprep.subr.bf16.mxu0 0
  %719 = vmatpush1.bf16.msra.mxu0 0
  %720 = vmatprep.subr.bf16.mxu0 0
  %721 = vmatpush1.bf16.msra.mxu0 0
  %722 = vmatprep.subr.bf16.mxu0 0
  %723 = vmatpush1.bf16.msra.mxu0 0
  %724 = vmatprep.subr.bf16.mxu0 0
  %725 = vmatpush1.bf16.msra.mxu0 0
  %726 = vmatprep.subr.bf16.mxu0 0
  %727 = vmatpush1.bf16.msra.mxu0 0
  %728 = vmatprep.subr.bf16.mxu0 0
  %729 = vmatpush1.bf16.msra.mxu0 0
  %730 = vmatprep.subr.bf16.mxu0 0
  %731 = vmatpush1.bf16.msra.mxu0 0
  %732 = vmatprep.subr.bf16.mxu0 0
  %733 = vmatpush1.bf16.msra.mxu0 0
  %734 = vmatprep.subr.bf16.mxu0 0
  %735 = vmatpush1.bf16.msra.mxu0 0
  %736 = vmatprep.subr.bf16.mxu0 0
  %737 = vmatpush1.bf16.msra.mxu0 0
  %738 = vmatprep.mubr.bf16.mxu0 0
  %739 = vmatmul.mubr.bf16.gmra.mrb[0].mxu0 %v701
  %v740 = vpop.f32.mrb[0].mxu0
  %v741 = vadd.f32 0.0, %v740
  %v742 = vpop.f32.mrb[0].mxu0
  %v743 = vpop.f32.mrb[0].mxu0
  %v744 = vpop.f32.mrb[0].mxu0
  %745 = vdwg.mxu0
  %746 = vrot.lane.b32.xlu0 %v126, 48
  %v747 = vpop.permute.xlu0 %746
  %v749 = vsel %vm130, %v644, 0
  %v752 = vsel %vm652, %v747, 0
  %754 = vmatprep.subr.bf16.mxu0 0
  %755 = vmatpush1.bf16.msra.mxu0 %v752
  %756 = vmatprep.subr.bf16.mxu0 0
  %757 = vmatpush1.bf16.msra.mxu0 0
  %758 = vmatprep.subr.bf16.mxu0 0
  %759 = vmatpush1.bf16.msra.mxu0 0
  %760 = vmatprep.subr.bf16.mxu0 0
  %761 = vmatpush1.bf16.msra.mxu0 0
  %762 = vmatprep.subr.bf16.mxu0 0
  %763 = vmatpush1.bf16.msra.mxu0 0
  %764 = vmatprep.subr.bf16.mxu0 0
  %765 = vmatpush1.bf16.msra.mxu0 0
  %766 = vmatprep.subr.bf16.mxu0 0
  %767 = vmatpush1.bf16.msra.mxu0 0
  %768 = vmatprep.subr.bf16.mxu0 0
  %769 = vmatpush1.bf16.msra.mxu0 0
  %770 = vmatprep.subr.bf16.mxu0 0
  %771 = vmatpush1.bf16.msra.mxu0 0
  %772 = vmatprep.subr.bf16.mxu0 0
  %773 = vmatpush1.bf16.msra.mxu0 0
  %774 = vmatprep.subr.bf16.mxu0 0
  %775 = vmatpush1.bf16.msra.mxu0 0
  %776 = vmatprep.subr.bf16.mxu0 0
  %777 = vmatpush1.bf16.msra.mxu0 0
  %778 = vmatprep.subr.bf16.mxu0 0
  %779 = vmatpush1.bf16.msra.mxu0 0
  %780 = vmatprep.subr.bf16.mxu0 0
  %781 = vmatpush1.bf16.msra.mxu0 0
  %782 = vmatprep.subr.bf16.mxu0 0
  %783 = vmatpush1.bf16.msra.mxu0 0
  %784 = vmatprep.subr.bf16.mxu0 0
  %785 = vmatpush1.bf16.msra.mxu0 0
  %786 = vmatprep.mubr.bf16.mxu0 0
  %787 = vmatmul.mubr.bf16.gmra.mrb[0].mxu0 %v749
  %v788 = vpop.f32.mrb[0].mxu0
  %v789 = vadd.f32 0.0, %v788
  %v790 = vpop.f32.mrb[0].mxu0
  %v791 = vpop.f32.mrb[0].mxu0
  %v792 = vpop.f32.mrb[0].mxu0
  %793 = vdwg.mxu0
  %v795 = vrot.slane %v644, 4
  %796 = vrot.lane.b32.xlu0 %v126, 40
  %v797 = vpop.permute.xlu0 %796
  %v799 = vsel %vm130, %v795, 0
  %v802 = vsel %vm652, %v797, 0
  %804 = vmatprep.subr.bf16.mxu0 0
  %805 = vmatpush1.bf16.msra.mxu0 %v802
  %806 = vmatprep.subr.bf16.mxu0 0
  %807 = vmatpush1.bf16.msra.mxu0 0
  %808 = vmatprep.subr.bf16.mxu0 0
  %809 = vmatpush1.bf16.msra.mxu0 0
  %810 = vmatprep.subr.bf16.mxu0 0
  %811 = vmatpush1.bf16.msra.mxu0 0
  %812 = vmatprep.subr.bf16.mxu0 0
  %813 = vmatpush1.bf16.msra.mxu0 0
  %814 = vmatprep.subr.bf16.mxu0 0
  %815 = vmatpush1.bf16.msra.mxu0 0
  %816 = vmatprep.subr.bf16.mxu0 0
  %817 = vmatpush1.bf16.msra.mxu0 0
  %818 = vmatprep.subr.bf16.mxu0 0
  %819 = vmatpush1.bf16.msra.mxu0 0
  %820 = vmatprep.subr.bf16.mxu0 0
  %821 = vmatpush1.bf16.msra.mxu0 0
  %822 = vmatprep.subr.bf16.mxu0 0
  %823 = vmatpush1.bf16.msra.mxu0 0
  %824 = vmatprep.subr.bf16.mxu0 0
  %825 = vmatpush1.bf16.msra.mxu0 0
  %826 = vmatprep.subr.bf16.mxu0 0
  %827 = vmatpush1.bf16.msra.mxu0 0
  %828 = vmatprep.subr.bf16.mxu0 0
  %829 = vmatpush1.bf16.msra.mxu0 0
  %830 = vmatprep.subr.bf16.mxu0 0
  %831 = vmatpush1.bf16.msra.mxu0 0
  %832 = vmatprep.subr.bf16.mxu0 0
  %833 = vmatpush1.bf16.msra.mxu0 0
  %834 = vmatprep.subr.bf16.mxu0 0
  %835 = vmatpush1.bf16.msra.mxu0 0
  %836 = vmatprep.mubr.bf16.mxu0 0
  %837 = vmatmul.mubr.bf16.gmra.mrb[0].mxu0 %v799
  %v838 = vpop.f32.mrb[0].mxu0
  %v839 = vadd.f32 0.0, %v838
  %v840 = vpop.f32.mrb[0].mxu0
  %v841 = vpop.f32.mrb[0].mxu0
  %v842 = vpop.f32.mrb[0].mxu0
  %843 = vdwg.mxu0
  %845 = vrot.lane.b32.xlu0 %v741, 8
  %v846 = vpop.permute.xlu0 %845
  %849 = vrot.lane.b32.xlu0 %v789, 16
  %v850 = vpop.permute.xlu0 %849
  %853 = vrot.lane.b32.xlu0 %v839, 24
  %v854 = vpop.permute.xlu0 %853
  %v856 = vsel %vm130, %v691, %v846
  %vm857 = vcmask 130048
  %v858 = vsel %vm857, %v856, %v850
  %vm859 = vcmask 195584
  %v860 = vsel %vm859, %v858, %v854
  %861 = vrot.lane.b32.xlu0 %v341, 64
  %v862 = vpop.permute.xlu0 %861
  %v864 = vsel %vm130, %v645, 0
  %v867 = vsel %vm652, %v862, 0
  %869 = vmatprep.subr.bf16.mxu0 0
  %870 = vmatpush1.bf16.msra.mxu0 %v867
  %871 = vmatprep.subr.bf16.mxu0 0
  %872 = vmatpush1.bf16.msra.mxu0 0
  %873 = vmatprep.subr.bf16.mxu0 0
  %874 = vmatpush1.bf16.msra.mxu0 0
  %875 = vmatprep.subr.bf16.mxu0 0
  %876 = vmatpush1.bf16.msra.mxu0 0
  %877 = vmatprep.subr.bf16.mxu0 0
  %878 = vmatpush1.bf16.msra.mxu0 0
  %879 = vmatprep.subr.bf16.mxu0 0
  %880 = vmatpush1.bf16.msra.mxu0 0
  %881 = vmatprep.subr.bf16.mxu0 0
  %882 = vmatpush1.bf16.msra.mxu0 0
  %883 = vmatprep.subr.bf16.mxu0 0
  %884 = vmatpush1.bf16.msra.mxu0 0
  %885 = vmatprep.subr.bf16.mxu0 0
  %886 = vmatpush1.bf16.msra.mxu0 0
  %887 = vmatprep.subr.bf16.mxu0 0
  %888 = vmatpush1.bf16.msra.mxu0 0
  %889 = vmatprep.subr.bf16.mxu0 0
  %890 = vmatpush1.bf16.msra.mxu0 0
  %891 = vmatprep.subr.bf16.mxu0 0
  %892 = vmatpush1.bf16.msra.mxu0 0
  %893 = vmatprep.subr.bf16.mxu0 0
  %894 = vmatpush1.bf16.msra.mxu0 0
  %895 = vmatprep.subr.bf16.mxu0 0
  %896 = vmatpush1.bf16.msra.mxu0 0
  %897 = vmatprep.subr.bf16.mxu0 0
  %898 = vmatpush1.bf16.msra.mxu0 0
  %899 = vmatprep.subr.bf16.mxu0 0
  %900 = vmatpush1.bf16.msra.mxu0 0
  %901 = vmatprep.mubr.bf16.mxu0 0
  %902 = vmatmul.mubr.bf16.gmra.mrb[0].mxu0 %v864
  %v903 = vpop.f32.mrb[0].mxu0
  %v904 = vadd.f32 0.0, %v903
  %v905 = vpop.f32.mrb[0].mxu0
  %v906 = vpop.f32.mrb[0].mxu0
  %v907 = vpop.f32.mrb[0].mxu0
  %908 = vdwg.mxu0
  %v910 = vrot.slane %v645, 4
  %911 = vrot.lane.b32.xlu0 %v341, 56
  %v912 = vpop.permute.xlu0 %911
  %v914 = vsel %vm130, %v910, 0
  %v917 = vsel %vm652, %v912, 0
  %919 = vmatprep.subr.bf16.mxu0 0
  %920 = vmatpush1.bf16.msra.mxu0 %v917
  %921 = vmatprep.subr.bf16.mxu0 0
  %922 = vmatpush1.bf16.msra.mxu0 0
  %923 = vmatprep.subr.bf16.mxu0 0
  %924 = vmatpush1.bf16.msra.mxu0 0
  %925 = vmatprep.subr.bf16.mxu0 0
  %926 = vmatpush1.bf16.msra.mxu0 0
  %927 = vmatprep.subr.bf16.mxu0 0
  %928 = vmatpush1.bf16.msra.mxu0 0
  %929 = vmatprep.subr.bf16.mxu0 0
  %930 = vmatpush1.bf16.msra.mxu0 0
  %931 = vmatprep.subr.bf16.mxu0 0
  %932 = vmatpush1.bf16.msra.mxu0 0
  %933 = vmatprep.subr.bf16.mxu0 0
  %934 = vmatpush1.bf16.msra.mxu0 0
  %935 = vmatprep.subr.bf16.mxu0 0
  %936 = vmatpush1.bf16.msra.mxu0 0
  %937 = vmatprep.subr.bf16.mxu0 0
  %938 = vmatpush1.bf16.msra.mxu0 0
  %939 = vmatprep.subr.bf16.mxu0 0
  %940 = vmatpush1.bf16.msra.mxu0 0
  %941 = vmatprep.subr.bf16.mxu0 0
  %942 = vmatpush1.bf16.msra.mxu0 0
  %943 = vmatprep.subr.bf16.mxu0 0
  %944 = vmatpush1.bf16.msra.mxu0 0
  %945 = vmatprep.subr.bf16.mxu0 0
  %946 = vmatpush1.bf16.msra.mxu0 0
  %947 = vmatprep.subr.bf16.mxu0 0
  %948 = vmatpush1.bf16.msra.mxu0 0
  %949 = vmatprep.subr.bf16.mxu0 0
  %950 = vmatpush1.bf16.msra.mxu0 0
  %951 = vmatprep.mubr.bf16.mxu0 0
  %952 = vmatmul.mubr.bf16.gmra.mrb[0].mxu0 %v914
  %v953 = vpop.f32.mrb[0].mxu0
  %v954 = vadd.f32 0.0, %v953
  %v955 = vpop.f32.mrb[0].mxu0
  %v956 = vpop.f32.mrb[0].mxu0
  %v957 = vpop.f32.mrb[0].mxu0
  %958 = vdwg.mxu0
  %959 = vrot.lane.b32.xlu0 %v341, 48
  %v960 = vpop.permute.xlu0 %959
  %v962 = vsel %vm130, %v646, 0
  %v965 = vsel %vm652, %v960, 0
  %967 = vmatprep.subr.bf16.mxu0 0
  %968 = vmatpush1.bf16.msra.mxu0 %v965
  %969 = vmatprep.subr.bf16.mxu0 0
  %970 = vmatpush1.bf16.msra.mxu0 0
  %971 = vmatprep.subr.bf16.mxu0 0
  %972 = vmatpush1.bf16.msra.mxu0 0
  %973 = vmatprep.subr.bf16.mxu0 0
  %974 = vmatpush1.bf16.msra.mxu0 0
  %975 = vmatprep.subr.bf16.mxu0 0
  %976 = vmatpush1.bf16.msra.mxu0 0
  %977 = vmatprep.subr.bf16.mxu0 0
  %978 = vmatpush1.bf16.msra.mxu0 0
  %979 = vmatprep.subr.bf16.mxu0 0
  %980 = vmatpush1.bf16.msra.mxu0 0
  %981 = vmatprep.subr.bf16.mxu0 0
  %982 = vmatpush1.bf16.msra.mxu0 0
  %983 = vmatprep.subr.bf16.mxu0 0
  %984 = vmatpush1.bf16.msra.mxu0 0
  %985 = vmatprep.subr.bf16.mxu0 0
  %986 = vmatpush1.bf16.msra.mxu0 0
  %987 = vmatprep.subr.bf16.mxu0 0
  %988 = vmatpush1.bf16.msra.mxu0 0
  %989 = vmatprep.subr.bf16.mxu0 0
  %990 = vmatpush1.bf16.msra.mxu0 0
  %991 = vmatprep.subr.bf16.mxu0 0
  %992 = vmatpush1.bf16.msra.mxu0 0
  %993 = vmatprep.subr.bf16.mxu0 0
  %994 = vmatpush1.bf16.msra.mxu0 0
  %995 = vmatprep.subr.bf16.mxu0 0
  %996 = vmatpush1.bf16.msra.mxu0 0
  %997 = vmatprep.subr.bf16.mxu0 0
  %998 = vmatpush1.bf16.msra.mxu0 0
  %999 = vmatprep.mubr.bf16.mxu0 0
  %1000 = vmatmul.mubr.bf16.gmra.mrb[0].mxu0 %v962
  %v1001 = vpop.f32.mrb[0].mxu0
  %v1002 = vadd.f32 0.0, %v1001
  %v1003 = vpop.f32.mrb[0].mxu0
  %v1004 = vpop.f32.mrb[0].mxu0
  %v1005 = vpop.f32.mrb[0].mxu0
  %1006 = vdwg.mxu0
  %v1008 = vrot.slane %v646, 4
  %1009 = vrot.lane.b32.xlu0 %v341, 40
  %v1010 = vpop.permute.xlu0 %1009
  %v1012 = vsel %vm130, %v1008, 0
  %v1015 = vsel %vm652, %v1010, 0
  %1017 = vmatprep.subr.bf16.mxu0 0
  %1018 = vmatpush1.bf16.msra.mxu0 %v1015
  %1019 = vmatprep.subr.bf16.mxu0 0
  %1020 = vmatpush1.bf16.msra.mxu0 0
  %1021 = vmatprep.subr.bf16.mxu0 0
  %1022 = vmatpush1.bf16.msra.mxu0 0
  %1023 = vmatprep.subr.bf16.mxu0 0
  %1024 = vmatpush1.bf16.msra.mxu0 0
  %1025 = vmatprep.subr.bf16.mxu0 0
  %1026 = vmatpush1.bf16.msra.mxu0 0
  %1027 = vmatprep.subr.bf16.mxu0 0
  %1028 = vmatpush1.bf16.msra.mxu0 0
  %1029 = vmatprep.subr.bf16.mxu0 0
  %1030 = vmatpush1.bf16.msra.mxu0 0
  %1031 = vmatprep.subr.bf16.mxu0 0
  %1032 = vmatpush1.bf16.msra.mxu0 0
  %1033 = vmatprep.subr.bf16.mxu0 0
  %1034 = vmatpush1.bf16.msra.mxu0 0
  %1035 = vmatprep.subr.bf16.mxu0 0
  %1036 = vmatpush1.bf16.msra.mxu0 0
  %1037 = vmatprep.subr.bf16.mxu0 0
  %1038 = vmatpush1.bf16.msra.mxu0 0
  %1039 = vmatprep.subr.bf16.mxu0 0
  %1040 = vmatpush1.bf16.msra.mxu0 0
  %1041 = vmatprep.subr.bf16.mxu0 0
  %1042 = vmatpush1.bf16.msra.mxu0 0
  %1043 = vmatprep.subr.bf16.mxu0 0
  %1044 = vmatpush1.bf16.msra.mxu0 0
  %1045 = vmatprep.subr.bf16.mxu0 0
  %1046 = vmatpush1.bf16.msra.mxu0 0
  %1047 = vmatprep.subr.bf16.mxu0 0
  %1048 = vmatpush1.bf16.msra.mxu0 0
  %1049 = vmatprep.mubr.bf16.mxu0 0
  %1050 = vmatmul.mubr.bf16.gmra.mrb[0].mxu0 %v1012
  %v1051 = vpop.f32.mrb[0].mxu0
  %v1052 = vadd.f32 0.0, %v1051
  %v1053 = vpop.f32.mrb[0].mxu0
  %v1054 = vpop.f32.mrb[0].mxu0
  %v1055 = vpop.f32.mrb[0].mxu0
  %1056 = vdwg.mxu0
  %1058 = vrot.lane.b32.xlu0 %v954, 8
  %v1059 = vpop.permute.xlu0 %1058
  %1062 = vrot.lane.b32.xlu0 %v1002, 16
  %v1063 = vpop.permute.xlu0 %1062
  %1066 = vrot.lane.b32.xlu0 %v1052, 24
  %v1067 = vpop.permute.xlu0 %1066
  %v1069 = vsel %vm130, %v904, %v1059
  %v1070 = vsel %vm857, %v1069, %v1063
  %v1071 = vsel %vm859, %v1070, %v1067
  %v1072 = vpack.c.bf16 %v1071, %v860
  %v1074 = vlaneseq
  %v1075 = vshrl.u32 %v1074, 7
  %v1076 = vsub.s32 0, %v1075
  %v1077 = vrot.slane %v125, %v1076
  %v1083 = vunpack.c.l.b16 %v121
  %v1084 = vunpack.c.l.b16 %v122
  %v1085 = vunpack.c.l.b16 %v123
  %v1086 = vunpack.c.l.b16 %v124
  %v1087 = vpack.c.b16 %v1084, %v1083
  %v1088 = vpack.c.b16 %v1086, %v1085
  %v1092 = vsel %vm76, %v1072, 0
  %1094 = vmatprep.subr.bf16.mxu0 0
  %1095 = vmatpush1.bf16.msra.mxu0 %v1087
  %1096 = vmatprep.subr.bf16.mxu0 0
  %1097 = vmatpush1.bf16.msra.mxu0 %v1088
  %1098 = vmatprep.subr.bf16.mxu0 0
  %1099 = vmatpush1.bf16.msra.mxu0 0
  %1100 = vmatprep.subr.bf16.mxu0 0
  %1101 = vmatpush1.bf16.msra.mxu0 0
  %1102 = vmatprep.subr.bf16.mxu0 0
  %1103 = vmatpush1.bf16.msra.mxu0 0
  %1104 = vmatprep.subr.bf16.mxu0 0
  %1105 = vmatpush1.bf16.msra.mxu0 0
  %1106 = vmatprep.subr.bf16.mxu0 0
  %1107 = vmatpush1.bf16.msra.mxu0 0
  %1108 = vmatprep.subr.bf16.mxu0 0
  %1109 = vmatpush1.bf16.msra.mxu0 0
  %1110 = vmatprep.subr.bf16.mxu0 0
  %1111 = vmatpush1.bf16.msra.mxu0 0
  %1112 = vmatprep.subr.bf16.mxu0 0
  %1113 = vmatpush1.bf16.msra.mxu0 0
  %1114 = vmatprep.subr.bf16.mxu0 0
  %1115 = vmatpush1.bf16.msra.mxu0 0
  %1116 = vmatprep.subr.bf16.mxu0 0
  %1117 = vmatpush1.bf16.msra.mxu0 0
  %1118 = vmatprep.subr.bf16.mxu0 0
  %1119 = vmatpush1.bf16.msra.mxu0 0
  %1120 = vmatprep.subr.bf16.mxu0 0
  %1121 = vmatpush1.bf16.msra.mxu0 0
  %1122 = vmatprep.subr.bf16.mxu0 0
  %1123 = vmatpush1.bf16.msra.mxu0 0
  %1124 = vmatprep.subr.bf16.mxu0 0
  %1125 = vmatpush1.bf16.msra.mxu0 0
  %1126 = vmatprep.mubr.bf16.mxu0 0
  %1127 = vmatmul.mubr.bf16.gmra.mrb[0].mxu0 %v1092
  %v1128 = vpop.f32.mrb[0].mxu0
  %v1129 = vadd.f32 %v1077, %v1128
  %v1130 = vpop.f32.mrb[0].mxu0
  %v1131 = vpop.f32.mrb[0].mxu0
  %v1132 = vadd.f32 %v1077, %v1131
  %v1133 = vpop.f32.mrb[0].mxu0
  %1134 = vdwg.mxu0
  %v1135 = vadd.f32 %v48, %v1129
  %v1136 = vadd.f32 %v49, %v1132
  %v1137 = vld [vmem:[%s6] sm:$0x1]
  %v1138 = vld [vmem:[%s7] sm:$0x1]
  %v1139 = vsel %vm76, %v1135, 0.0
  %1140 = vadd.xlane.f32.xlu0 %v1139
  %v1141 = vpop.xlane.xlu0 %1140
  %v1142 = vsel %vm76, %v1136, 0.0
  %1143 = vadd.xlane.f32.xlu0 %v1142
  %v1144 = vpop.xlane.xlu0 %1143
  %v1145 = vrcp.pop 32.0
  %v1146 = vmul.f32 %v1141, %v1145
  %v1147 = vmul.f32 %v1144, %v1145
  %v1148 = vsub.f32 %v1135, %v1146
  %v1149 = vsub.f32 %v1136, %v1147
  %v1150 = vmul.f32 %v1148, %v1148
  %v1151 = vmul.f32 %v1149, %v1149
  %v1152 = vsel %vm76, %v1150, 0.0
  %1153 = vadd.xlane.f32.xlu0 %v1152
  %v1154 = vpop.xlane.xlu0 %1153
  %v1155 = vsel %vm76, %v1151, 0.0
  %1156 = vadd.xlane.f32.xlu0 %v1155
  %v1157 = vpop.xlane.xlu0 %1156
  %v1158 = vmul.f32 %v1154, %v1145
  %v1159 = vmul.f32 %v1157, %v1145
  %v1160 = vadd.f32 %v1158, 1e-05
  %v1161 = vadd.f32 %v1159, 1e-05
  %v1162 = vrsqrt.pop %v1160
  %v1163 = vrsqrt.pop %v1161
  %v1164 = vmul.f32 %v1148, %v1162
  %v1165 = vmul.f32 %v1149, %v1163
  %v1167 = vlaneseq
  %v1168 = vshrl.u32 %v1167, 7
  %v1169 = vsub.s32 0, %v1168
  %v1170 = vrot.slane %v1137, %v1169
  %v1172 = vmul.f32 %v1164, %v1170
  %v1173 = vmul.f32 %v1165, %v1170
  %v1175 = vlaneseq
  %v1176 = vshrl.u32 %v1175, 7
  %v1177 = vsub.s32 0, %v1176
  %v1178 = vrot.slane %v1138, %v1177
  %v1180 = vadd.f32 %v1172, %v1178
  %v1181 = vadd.f32 %v1173, %v1178
  %v1182 = vld [vmem:[%s8] sm:$0xf]
  %v1183 = vld [vmem:[%s8 + $0x4] sm:$0xf]
  %v1184 = vld [vmem:[%s8 + $0x8] sm:$0xf]
  %v1185 = vld [vmem:[%s8 + $0xc] sm:$0xf]
  %v1186 = vld [vmem:[%s9] sm:$0x1]
  %v1187 = vld [vmem:[%s10] sm:$0xf]
  %v1188 = vld [vmem:[%s10 + $0x4] sm:$0xf]
  %v1189 = vld [vmem:[%s10 + $0x8] sm:$0xf]
  %v1190 = vld [vmem:[%s10 + $0xc] sm:$0xf]
  %v1191 = vld [vmem:[%s10 + $0x10] sm:$0xf]
  %v1192 = vld [vmem:[%s10 + $0x14] sm:$0xf]
  %v1193 = vld [vmem:[%s10 + $0x18] sm:$0xf]
  %v1194 = vld [vmem:[%s10 + $0x1c] sm:$0xf]
  %v1195 = vld [vmem:[%s11] sm:$0x1]
  %v1196 = vpack.c.bf16 %v1181, %v1180
  %v1198 = vlaneseq
  %v1199 = vshrl.u32 %v1198, 7
  %v1200 = vsub.s32 0, %v1199
  %v1201 = vrot.slane %v1186, %v1200
  %v1207 = vunpack.c.l.b16 %v1182
  %v1208 = vunpack.c.l.b16 %v1183
  %v1209 = vunpack.c.l.b16 %v1184
  %v1210 = vunpack.c.l.b16 %v1185
  %v1211 = vpack.c.b16 %v1208, %v1207
  %v1212 = vpack.c.b16 %v1210, %v1209
  %v1216 = vsel %vm76, %v1196, 0
  %1218 = vmatprep.subr.bf16.mxu0 0
  %1219 = vmatpush1.bf16.msra.mxu0 %v1211
  %1220 = vmatprep.subr.bf16.mxu0 0
  %1221 = vmatpush1.bf16.msra.mxu0 %v1212
  %1222 = vmatprep.subr.bf16.mxu0 0
  %1223 = vmatpush1.bf16.msra.mxu0 0
  %1224 = vmatprep.subr.bf16.mxu0 0
  %1225 = vmatpush1.bf16.msra.mxu0 0
  %1226 = vmatprep.subr.bf16.mxu0 0
  %1227 = vmatpush1.bf16.msra.mxu0 0
  %1228 = vmatprep.subr.bf16.mxu0 0
  %1229 = vmatpush1.bf16.msra.mxu0 0
  %1230 = vmatprep.subr.bf16.mxu0 0
  %1231 = vmatpush1.bf16.msra.mxu0 0
  %1232 = vmatprep.subr.bf16.mxu0 0
  %1233 = vmatpush1.bf16.msra.mxu0 0
  %1234 = vmatprep.subr.bf16.mxu0 0
  %1235 = vmatpush1.bf16.msra.mxu0 0
  %1236 = vmatprep.subr.bf16.mxu0 0
  %1237 = vmatpush1.bf16.msra.mxu0 0
  %1238 = vmatprep.subr.bf16.mxu0 0
  %1239 = vmatpush1.bf16.msra.mxu0 0
  %1240 = vmatprep.subr.bf16.mxu0 0
  %1241 = vmatpush1.bf16.msra.mxu0 0
  %1242 = vmatprep.subr.bf16.mxu0 0
  %1243 = vmatpush1.bf16.msra.mxu0 0
  %1244 = vmatprep.subr.bf16.mxu0 0
  %1245 = vmatpush1.bf16.msra.mxu0 0
  %1246 = vmatprep.subr.bf16.mxu0 0
  %1247 = vmatpush1.bf16.msra.mxu0 0
  %1248 = vmatprep.subr.bf16.mxu0 0
  %1249 = vmatpush1.bf16.msra.mxu0 0
  %1250 = vmatprep.mubr.bf16.mxu0 0
  %1251 = vmatmul.mubr.bf16.gmra.mrb[0].mxu0 %v1216
  %v1252 = vpop.f32.mrb[0].mxu0
  %v1253 = vadd.f32 %v1201, %v1252
  %v1254 = vpop.f32.mrb[0].mxu0
  %v1255 = vpop.f32.mrb[0].mxu0
  %v1256 = vadd.f32 %v1201, %v1255
  %v1257 = vpop.f32.mrb[0].mxu0
  %1258 = vdwg.mxu0
  %v1259 = vmax.f32 %v1253, 0.0
  %v1260 = vmax.f32 %v1256, 0.0
  %v1261 = vpack.c.bf16 %v1260, %v1259
  %v1263 = vlaneseq
  %v1264 = vshrl.u32 %v1263, 7
  %v1265 = vsub.s32 0, %v1264
  %v1266 = vrot.slane %v1195, %v1265
  %v1276 = vunpack.c.l.b16 %v1187
  %v1277 = vunpack.c.l.b16 %v1188
  %v1278 = vunpack.c.l.b16 %v1189
  %v1279 = vunpack.c.l.b16 %v1190
  %v1280 = vunpack.c.l.b16 %v1191
  %v1281 = vunpack.c.l.b16 %v1192
  %v1282 = vunpack.c.l.b16 %v1193
  %v1283 = vunpack.c.l.b16 %v1194
  %v1284 = vpack.c.b16 %v1277, %v1276
  %v1285 = vpack.c.b16 %v1279, %v1278
  %v1286 = vpack.c.b16 %v1281, %v1280
  %v1287 = vpack.c.b16 %v1283, %v1282
  %vm1292 = vcmask 523264
  %v1294 = vsel %vm1292, %v1261, 0
  %1296 = vmatprep.subr.bf16.mxu0 0
  %1297 = vmatpush1.bf16.msra.mxu0 %v1284
  %1298 = vmatprep.subr.bf16.mxu0 0
  %1299 = vmatpush1.bf16.msra.mxu0 %v1285
  %1300 = vmatprep.subr.bf16.mxu0 0
  %1301 = vmatpush1.bf16.msra.mxu0 %v1286
  %1302 = vmatprep.subr.bf16.mxu0 0
  %1303 = vmatpush1.bf16.msra.mxu0 %v1287
  %1304 = vmatprep.subr.bf16.mxu0 0
  %1305 = vmatpush1.bf16.msra.mxu0 0
  %1306 = vmatprep.subr.bf16.mxu0 0
  %1307 = vmatpush1.bf16.msra.mxu0 0
  %1308 = vmatprep.subr.bf16.mxu0 0
  %1309 = vmatpush1.bf16.msra.mxu0 0
  %1310 = vmatprep.subr.bf16.mxu0 0
  %1311 = vmatpush1.bf16.msra.mxu0 0
  %1312 = vmatprep.subr.bf16.mxu0 0
  %1313 = vmatpush1.bf16.msra.mxu0 0
  %1314 = vmatprep.subr.bf16.mxu0 0
  %1315 = vmatpush1.bf16.msra.mxu0 0
  %1316 = vmatprep.subr.bf16.mxu0 0
  %1317 = vmatpush1.bf16.msra.mxu0 0
  %1318 = vmatprep.subr.bf16.mxu0 0
  %1319 = vmatpush1.bf16.msra.mxu0 0
  %1320 = vmatprep.subr.bf16.mxu0 0
  %1321 = vmatpush1.bf16.msra.mxu0 0
  %1322 = vmatprep.subr.bf16.mxu0 0
  %1323 = vmatpush1.bf16.msra.mxu0 0
  %1324 = vmatprep.subr.bf16.mxu0 0
  %1325 = vmatpush1.bf16.msra.mxu0 0
  %1326 = vmatprep.subr.bf16.mxu0 0
  %1327 = vmatpush1.bf16.msra.mxu0 0
  %1328 = vmatprep.mubr.bf16.mxu0 0
  %1329 = vmatmul.mubr.bf16.gmra.mrb[0].mxu0 %v1294
  %v1330 = vpop.f32.mrb[0].mxu0
  %v1331 = vadd.f32 %v1266, %v1330
  %v1332 = vpop.f32.mrb[0].mxu0
  %v1333 = vpop.f32.mrb[0].mxu0
  %v1334 = vadd.f32 %v1266, %v1333
  %v1335 = vpop.f32.mrb[0].mxu0
  %1336 = vdwg.mxu0
  %v1337 = vadd.f32 %v1180, %v1331
  %v1338 = vadd.f32 %v1181, %v1334
  %v1339 = vld [vmem:[%s12] sm:$0x1]
  %v1340 = vld [vmem:[%s13] sm:$0x1]
  %v1341 = vsel %vm76, %v1337, 0.0
  %1342 = vadd.xlane.f32.xlu0 %v1341
  %v1343 = vpop.xlane.xlu0 %1342
  %v1344 = vsel %vm76, %v1338, 0.0
  %1345 = vadd.xlane.f32.xlu0 %v1344
  %v1346 = vpop.xlane.xlu0 %1345
  %v1347 = vmul.f32 %v1343, %v1145
  %v1348 = vmul.f32 %v1346, %v1145
  %v1349 = vsub.f32 %v1337, %v1347
  %v1350 = vsub.f32 %v1338, %v1348
  %v1351 = vmul.f32 %v1349, %v1349
  %v1352 = vmul.f32 %v1350, %v1350
  %v1353 = vsel %vm76, %v1351, 0.0
  %1354 = vadd.xlane.f32.xlu0 %v1353
  %v1355 = vpop.xlane.xlu0 %1354
  %v1356 = vsel %vm76, %v1352, 0.0
  %1357 = vadd.xlane.f32.xlu0 %v1356
  %v1358 = vpop.xlane.xlu0 %1357
  %v1359 = vmul.f32 %v1355, %v1145
  %v1360 = vmul.f32 %v1358, %v1145
  %v1361 = vadd.f32 %v1359, 1e-05
  %v1362 = vadd.f32 %v1360, 1e-05
  %v1363 = vrsqrt.pop %v1361
  %v1364 = vrsqrt.pop %v1362
  %v1365 = vmul.f32 %v1349, %v1363
  %v1366 = vmul.f32 %v1350, %v1364
  %v1368 = vlaneseq
  %v1369 = vshrl.u32 %v1368, 7
  %v1370 = vsub.s32 0, %v1369
  %v1371 = vrot.slane %v1339, %v1370
  %v1373 = vmul.f32 %v1365, %v1371
  %v1374 = vmul.f32 %v1366, %v1371
  %v1376 = vlaneseq
  %v1377 = vshrl.u32 %v1376, 7
  %v1378 = vsub.s32 0, %v1377
  %v1379 = vrot.slane %v1340, %v1378
  %v1381 = vadd.f32 %v1373, %v1379
  %v1382 = vadd.f32 %v1374, %v1379
  %v1383 = vpack.c.bf16 %v1382, %v1381
  %s1384 = scalar_lea.vmem %s2, 16
  %v1385 = vld [vmem:[%s1384] sm:$0xf]
  %v1386 = vld [vmem:[%s1384 + $0x4] sm:$0xf]
  %v1387 = vld [vmem:[%s1384 + $0x8] sm:$0xf]
  %v1388 = vld [vmem:[%s1384 + $0xc] sm:$0xf]
  %s1389 = scalar_lea.vmem %s3, 1
  %v1390 = vld [vmem:[%s1389] sm:$0x1]
  %v1392 = vlaneseq
  %v1393 = vshrl.u32 %v1392, 7
  %v1394 = vsub.s32 0, %v1393
  %v1395 = vrot.slane %v1390, %v1394
  %v1401 = vunpack.c.l.b16 %v1385
  %v1402 = vunpack.c.l.b16 %v1386
  %v1403 = vunpack.c.l.b16 %v1387
  %v1404 = vunpack.c.l.b16 %v1388
  %v1405 = vpack.c.b16 %v1402, %v1401
  %v1406 = vpack.c.b16 %v1404, %v1403
  %v1410 = vsel %vm76, %v1383, 0
  %1412 = vmatprep.subr.bf16.mxu0 0
  %1413 = vmatpush1.bf16.msra.mxu0 %v1405
  %1414 = vmatprep.subr.bf16.mxu0 0
  %1415 = vmatpush1.bf16.msra.mxu0 %v1406
  %1416 = vmatprep.subr.bf16.mxu0 0
  %1417 = vmatpush1.bf16.msra.mxu0 0
  %1418 = vmatprep.subr.bf16.mxu0 0
  %1419 = vmatpush1.bf16.msra.mxu0 0
  %1420 = vmatprep.subr.bf16.mxu0 0
  %1421 = vmatpush1.bf16.msra.mxu0 0
  %1422 = vmatprep.subr.bf16.mxu0 0
  %1423 = vmatpush1.bf16.msra.mxu0 0
  %1424 = vmatprep.subr.bf16.mxu0 0
  %1425 = vmatpush1.bf16.msra.mxu0 0
  %1426 = vmatprep.subr.bf16.mxu0 0
  %1427 = vmatpush1.bf16.msra.mxu0 0
  %1428 = vmatprep.subr.bf16.mxu0 0
  %1429 = vmatpush1.bf16.msra.mxu0 0
  %1430 = vmatprep.subr.bf16.mxu0 0
  %1431 = vmatpush1.bf16.msra.mxu0 0
  %1432 = vmatprep.subr.bf16.mxu0 0
  %1433 = vmatpush1.bf16.msra.mxu0 0
  %1434 = vmatprep.subr.bf16.mxu0 0
  %1435 = vmatpush1.bf16.msra.mxu0 0
  %1436 = vmatprep.subr.bf16.mxu0 0
  %1437 = vmatpush1.bf16.msra.mxu0 0
  %1438 = vmatprep.subr.bf16.mxu0 0
  %1439 = vmatpush1.bf16.msra.mxu0 0
  %1440 = vmatprep.subr.bf16.mxu0 0
  %1441 = vmatpush1.bf16.msra.mxu0 0
  %1442 = vmatprep.subr.bf16.mxu0 0
  %1443 = vmatpush1.bf16.msra.mxu0 0
  %1444 = vmatprep.mubr.bf16.mxu0 0
  %1445 = vmatmul.mubr.bf16.gmra.mrb[0].mxu0 %v1410
  %v1446 = vpop.f32.mrb[0].mxu0
  %v1447 = vadd.f32 %v1395, %v1446
  %v1448 = vpop.f32.mrb[0].mxu0
  %v1449 = vpop.f32.mrb[0].mxu0
  %v1450 = vadd.f32 %v1395, %v1449
  %v1451 = vpop.f32.mrb[0].mxu0
  %1452 = vdwg.mxu0
  %s1453 = scalar_lea.vmem %s4, 16
  %v1454 = vld [vmem:[%s1453] sm:$0xf]
  %v1455 = vld [vmem:[%s1453 + $0x4] sm:$0xf]
  %v1456 = vld [vmem:[%s1453 + $0x8] sm:$0xf]
  %v1457 = vld [vmem:[%s1453 + $0xc] sm:$0xf]
  %s1458 = scalar_lea.vmem %s5, 1
  %v1459 = vld [vmem:[%s1458] sm:$0x1]
  %v1460 = vpack.c.bf16 %v1447, %v1447
  %1462 = vrot.lane.b32.xlu0 %v1460, 96
  %v1463 = vpop.permute.xlu0 %1462
  %v1465 = vsel %vm130, %v1460, 0
  %v1468 = vsel %vm130, %v1463, 0
  %1470 = vmatprep.subr.bf16.mxu0 0
  %1471 = vmatpush1.bf16.xpose.msra.mxu0 %v1468
  %1472 = vmatprep.subr.bf16.mxu0 0
  %1473 = vmatpush1.bf16.xpose.msra.mxu0 0
  %1474 = vmatprep.subr.bf16.mxu0 0
  %1475 = vmatpush1.bf16.xpose.msra.mxu0 0
  %1476 = vmatprep.subr.bf16.mxu0 0
  %1477 = vmatpush1.bf16.xpose.msra.mxu0 0
  %1478 = vmatprep.subr.bf16.mxu0 0
  %1479 = vmatpush1.bf16.xpose.msra.mxu0 0
  %1480 = vmatprep.subr.bf16.mxu0 0
  %1481 = vmatpush1.bf16.xpose.msra.mxu0 0
  %1482 = vmatprep.subr.bf16.mxu0 0
  %1483 = vmatpush1.bf16.xpose.msra.mxu0 0
  %1484 = vmatprep.subr.bf16.mxu0 0
  %1485 = vmatpush1.bf16.xpose.msra.mxu0 0
  %1486 = vmatprep.subr.bf16.mxu0 0
  %1487 = vmatpush1.bf16.xpose.msra.mxu0 0
  %1488 = vmatprep.subr.bf16.mxu0 0
  %1489 = vmatpush1.bf16.xpose.msra.mxu0 0
  %1490 = vmatprep.subr.bf16.mxu0 0
  %1491 = vmatpush1.bf16.xpose.msra.mxu0 0
  %1492 = vmatprep.subr.bf16.mxu0 0
  %1493 = vmatpush1.bf16.xpose.msra.mxu0 0
  %1494 = vmatprep.subr.bf16.mxu0 0
  %1495 = vmatpush1.bf16.xpose.msra.mxu0 0
  %1496 = vmatprep.subr.bf16.mxu0 0
  %1497 = vmatpush1.bf16.xpose.msra.mxu0 0
  %1498 = vmatprep.subr.bf16.mxu0 0
  %1499 = vmatpush1.bf16.xpose.msra.mxu0 0
  %1500 = vmatprep.subr.bf16.mxu0 0
  %1501 = vmatpush1.bf16.xpose.msra.mxu0 0
  %1502 = vmatprep.mubr.bf16.mxu0 0
  %1503 = vmatmul.mubr.bf16.gmra.mrb[0].mxu0 %v1465
  %v1504 = vpop.f32.mrb[0].mxu0
  %v1505 = vadd.f32 0.0, %v1504
  %v1506 = vpop.f32.mrb[0].mxu0
  %v1507 = vpop.f32.mrb[0].mxu0
  %v1508 = vpop.f32.mrb[0].mxu0
  %1509 = vdwg.mxu0
  %v1510 = vmul.f32 %v1505, 0.35355338
  %v1511 = vadd.f32 %v1510, %v182
  %1512 = vrot.lane.b32.xlu0 %v1460, 120
  %v1513 = vpop.permute.xlu0 %1512
  %1514 = vrot.lane.b32.xlu0 %v1460, 88
  %v1515 = vpop.permute.xlu0 %1514
  %v1517 = vsel %vm130, %v1513, 0
  %v1520 = vsel %vm130, %v1515, 0
  %1522 = vmatprep.subr.bf16.mxu0 0
  %1523 = vmatpush1.bf16.xpose.msra.mxu0 %v1520
  %1524 = vmatprep.subr.bf16.mxu0 0
  %1525 = vmatpush1.bf16.xpose.msra.mxu0 0
  %1526 = vmatprep.subr.bf16.mxu0 0
  %1527 = vmatpush1.bf16.xpose.msra.mxu0 0
  %1528 = vmatprep.subr.bf16.mxu0 0
  %1529 = vmatpush1.bf16.xpose.msra.mxu0 0
  %1530 = vmatprep.subr.bf16.mxu0 0
  %1531 = vmatpush1.bf16.xpose.msra.mxu0 0
  %1532 = vmatprep.subr.bf16.mxu0 0
  %1533 = vmatpush1.bf16.xpose.msra.mxu0 0
  %1534 = vmatprep.subr.bf16.mxu0 0
  %1535 = vmatpush1.bf16.xpose.msra.mxu0 0
  %1536 = vmatprep.subr.bf16.mxu0 0
  %1537 = vmatpush1.bf16.xpose.msra.mxu0 0
  %1538 = vmatprep.subr.bf16.mxu0 0
  %1539 = vmatpush1.bf16.xpose.msra.mxu0 0
  %1540 = vmatprep.subr.bf16.mxu0 0
  %1541 = vmatpush1.bf16.xpose.msra.mxu0 0
  %1542 = vmatprep.subr.bf16.mxu0 0
  %1543 = vmatpush1.bf16.xpose.msra.mxu0 0
  %1544 = vmatprep.subr.bf16.mxu0 0
  %1545 = vmatpush1.bf16.xpose.msra.mxu0 0
  %1546 = vmatprep.subr.bf16.mxu0 0
  %1547 = vmatpush1.bf16.xpose.msra.mxu0 0
  %1548 = vmatprep.subr.bf16.mxu0 0
  %1549 = vmatpush1.bf16.xpose.msra.mxu0 0
  %1550 = vmatprep.subr.bf16.mxu0 0
  %1551 = vmatpush1.bf16.xpose.msra.mxu0 0
  %1552 = vmatprep.subr.bf16.mxu0 0
  %1553 = vmatpush1.bf16.xpose.msra.mxu0 0
  %1554 = vmatprep.mubr.bf16.mxu0 0
  %1555 = vmatmul.mubr.bf16.gmra.mrb[0].mxu0 %v1517
  %v1556 = vpop.f32.mrb[0].mxu0
  %v1557 = vadd.f32 0.0, %v1556
  %v1558 = vpop.f32.mrb[0].mxu0
  %v1559 = vpop.f32.mrb[0].mxu0
  %v1560 = vpop.f32.mrb[0].mxu0
  %1561 = vdwg.mxu0
  %v1562 = vmul.f32 %v1557, 0.35355338
  %v1563 = vadd.f32 %v1562, %v182
  %1564 = vrot.lane.b32.xlu0 %v1460, 112
  %v1565 = vpop.permute.xlu0 %1564
  %1566 = vrot.lane.b32.xlu0 %v1460, 80
  %v1567 = vpop.permute.xlu0 %1566
  %v1569 = vsel %vm130, %v1565, 0
  %v1572 = vsel %vm130, %v1567, 0
  %1574 = vmatprep.subr.bf16.mxu0 0
  %1575 = vmatpush1.bf16.xpose.msra.mxu0 %v1572
  %1576 = vmatprep.subr.bf16.mxu0 0
  %1577 = vmatpush1.bf16.xpose.msra.mxu0 0
  %1578 = vmatprep.subr.bf16.mxu0 0
  %1579 = vmatpush1.bf16.xpose.msra.mxu0 0
  %1580 = vmatprep.subr.bf16.mxu0 0
  %1581 = vmatpush1.bf16.xpose.msra.mxu0 0
  %1582 = vmatprep.subr.bf16.mxu0 0
  %1583 = vmatpush1.bf16.xpose.msra.mxu0 0
  %1584 = vmatprep.subr.bf16.mxu0 0
  %1585 = vmatpush1.bf16.xpose.msra.mxu0 0
  %1586 = vmatprep.subr.bf16.mxu0 0
  %1587 = vmatpush1.bf16.xpose.msra.mxu0 0
  %1588 = vmatprep.subr.bf16.mxu0 0
  %1589 = vmatpush1.bf16.xpose.msra.mxu0 0
  %1590 = vmatprep.subr.bf16.mxu0 0
  %1591 = vmatpush1.bf16.xpose.msra.mxu0 0
  %1592 = vmatprep.subr.bf16.mxu0 0
  %1593 = vmatpush1.bf16.xpose.msra.mxu0 0
  %1594 = vmatprep.subr.bf16.mxu0 0
  %1595 = vmatpush1.bf16.xpose.msra.mxu0 0
  %1596 = vmatprep.subr.bf16.mxu0 0
  %1597 = vmatpush1.bf16.xpose.msra.mxu0 0
  %1598 = vmatprep.subr.bf16.mxu0 0
  %1599 = vmatpush1.bf16.xpose.msra.mxu0 0
  %1600 = vmatprep.subr.bf16.mxu0 0
  %1601 = vmatpush1.bf16.xpose.msra.mxu0 0
  %1602 = vmatprep.subr.bf16.mxu0 0
  %1603 = vmatpush1.bf16.xpose.msra.mxu0 0
  %1604 = vmatprep.subr.bf16.mxu0 0
  %1605 = vmatpush1.bf16.xpose.msra.mxu0 0
  %1606 = vmatprep.mubr.bf16.mxu0 0
  %1607 = vmatmul.mubr.bf16.gmra.mrb[0].mxu0 %v1569
  %v1608 = vpop.f32.mrb[0].mxu0
  %v1609 = vadd.f32 0.0, %v1608
  %v1610 = vpop.f32.mrb[0].mxu0
  %v1611 = vpop.f32.mrb[0].mxu0
  %v1612 = vpop.f32.mrb[0].mxu0
  %1613 = vdwg.mxu0
  %v1614 = vmul.f32 %v1609, 0.35355338
  %v1615 = vadd.f32 %v1614, %v182
  %1616 = vrot.lane.b32.xlu0 %v1460, 104
  %v1617 = vpop.permute.xlu0 %1616
  %1618 = vrot.lane.b32.xlu0 %v1460, 72
  %v1619 = vpop.permute.xlu0 %1618
  %v1621 = vsel %vm130, %v1617, 0
  %v1624 = vsel %vm130, %v1619, 0
  %1626 = vmatprep.subr.bf16.mxu0 0
  %1627 = vmatpush1.bf16.xpose.msra.mxu0 %v1624
  %1628 = vmatprep.subr.bf16.mxu0 0
  %1629 = vmatpush1.bf16.xpose.msra.mxu0 0
  %1630 = vmatprep.subr.bf16.mxu0 0
  %1631 = vmatpush1.bf16.xpose.msra.mxu0 0
  %1632 = vmatprep.subr.bf16.mxu0 0
  %1633 = vmatpush1.bf16.xpose.msra.mxu0 0
  %1634 = vmatprep.subr.bf16.mxu0 0
  %1635 = vmatpush1.bf16.xpose.msra.mxu0 0
  %1636 = vmatprep.subr.bf16.mxu0 0
  %1637 = vmatpush1.bf16.xpose.msra.mxu0 0
  %1638 = vmatprep.subr.bf16.mxu0 0
  %1639 = vmatpush1.bf16.xpose.msra.mxu0 0
  %1640 = vmatprep.subr.bf16.mxu0 0
  %1641 = vmatpush1.bf16.xpose.msra.mxu0 0
  %1642 = vmatprep.subr.bf16.mxu0 0
  %1643 = vmatpush1.bf16.xpose.msra.mxu0 0
  %1644 = vmatprep.subr.bf16.mxu0 0
  %1645 = vmatpush1.bf16.xpose.msra.mxu0 0
  %1646 = vmatprep.subr.bf16.mxu0 0
  %1647 = vmatpush1.bf16.xpose.msra.mxu0 0
  %1648 = vmatprep.subr.bf16.mxu0 0
  %1649 = vmatpush1.bf16.xpose.msra.mxu0 0
  %1650 = vmatprep.subr.bf16.mxu0 0
  %1651 = vmatpush1.bf16.xpose.msra.mxu0 0
  %1652 = vmatprep.subr.bf16.mxu0 0
  %1653 = vmatpush1.bf16.xpose.msra.mxu0 0
  %1654 = vmatprep.subr.bf16.mxu0 0
  %1655 = vmatpush1.bf16.xpose.msra.mxu0 0
  %1656 = vmatprep.subr.bf16.mxu0 0
  %1657 = vmatpush1.bf16.xpose.msra.mxu0 0
  %1658 = vmatprep.mubr.bf16.mxu0 0
  %1659 = vmatmul.mubr.bf16.gmra.mrb[0].mxu0 %v1621
  %v1660 = vpop.f32.mrb[0].mxu0
  %v1661 = vadd.f32 0.0, %v1660
  %v1662 = vpop.f32.mrb[0].mxu0
  %v1663 = vpop.f32.mrb[0].mxu0
  %v1664 = vpop.f32.mrb[0].mxu0
  %1665 = vdwg.mxu0
  %v1666 = vmul.f32 %v1661, 0.35355338
  %v1667 = vadd.f32 %v1666, %v182
  %v1668 = vpack.c.bf16 %v1450, %v1450
  %1670 = vrot.lane.b32.xlu0 %v1668, 96
  %v1671 = vpop.permute.xlu0 %1670
  %v1673 = vsel %vm130, %v1668, 0
  %v1676 = vsel %vm130, %v1671, 0
  %1678 = vmatprep.subr.bf16.mxu0 0
  %1679 = vmatpush1.bf16.xpose.msra.mxu0 %v1676
  %1680 = vmatprep.subr.bf16.mxu0 0
  %1681 = vmatpush1.bf16.xpose.msra.mxu0 0
  %1682 = vmatprep.subr.bf16.mxu0 0
  %1683 = vmatpush1.bf16.xpose.msra.mxu0 0
  %1684 = vmatprep.subr.bf16.mxu0 0
  %1685 = vmatpush1.bf16.xpose.msra.mxu0 0
  %1686 = vmatprep.subr.bf16.mxu0 0
  %1687 = vmatpush1.bf16.xpose.msra.mxu0 0
  %1688 = vmatprep.subr.bf16.mxu0 0
  %1689 = vmatpush1.bf16.xpose.msra.mxu0 0
  %1690 = vmatprep.subr.bf16.mxu0 0
  %1691 = vmatpush1.bf16.xpose.msra.mxu0 0
  %1692 = vmatprep.subr.bf16.mxu0 0
  %1693 = vmatpush1.bf16.xpose.msra.mxu0 0
  %1694 = vmatprep.subr.bf16.mxu0 0
  %1695 = vmatpush1.bf16.xpose.msra.mxu0 0
  %1696 = vmatprep.subr.bf16.mxu0 0
  %1697 = vmatpush1.bf16.xpose.msra.mxu0 0
  %1698 = vmatprep.subr.bf16.mxu0 0
  %1699 = vmatpush1.bf16.xpose.msra.mxu0 0
  %1700 = vmatprep.subr.bf16.mxu0 0
  %1701 = vmatpush1.bf16.xpose.msra.mxu0 0
  %1702 = vmatprep.subr.bf16.mxu0 0
  %1703 = vmatpush1.bf16.xpose.msra.mxu0 0
  %1704 = vmatprep.subr.bf16.mxu0 0
  %1705 = vmatpush1.bf16.xpose.msra.mxu0 0
  %1706 = vmatprep.subr.bf16.mxu0 0
  %1707 = vmatpush1.bf16.xpose.msra.mxu0 0
  %1708 = vmatprep.subr.bf16.mxu0 0
  %1709 = vmatpush1.bf16.xpose.msra.mxu0 0
  %1710 = vmatprep.mubr.bf16.mxu0 0
  %1711 = vmatmul.mubr.bf16.gmra.mrb[0].mxu0 %v1673
  %v1712 = vpop.f32.mrb[0].mxu0
  %v1713 = vadd.f32 0.0, %v1712
  %v1714 = vpop.f32.mrb[0].mxu0
  %v1715 = vpop.f32.mrb[0].mxu0
  %v1716 = vpop.f32.mrb[0].mxu0
  %1717 = vdwg.mxu0
  %v1718 = vmul.f32 %v1713, 0.35355338
  %v1719 = vadd.f32 %v1718, %v396
  %1720 = vrot.lane.b32.xlu0 %v1668, 120
  %v1721 = vpop.permute.xlu0 %1720
  %1722 = vrot.lane.b32.xlu0 %v1668, 88
  %v1723 = vpop.permute.xlu0 %1722
  %v1725 = vsel %vm130, %v1721, 0
  %v1728 = vsel %vm130, %v1723, 0
  %1730 = vmatprep.subr.bf16.mxu0 0
  %1731 = vmatpush1.bf16.xpose.msra.mxu0 %v1728
  %1732 = vmatprep.subr.bf16.mxu0 0
  %1733 = vmatpush1.bf16.xpose.msra.mxu0 0
  %1734 = vmatprep.subr.bf16.mxu0 0
  %1735 = vmatpush1.bf16.xpose.msra.mxu0 0
  %1736 = vmatprep.subr.bf16.mxu0 0
  %1737 = vmatpush1.bf16.xpose.msra.mxu0 0
  %1738 = vmatprep.subr.bf16.mxu0 0
  %1739 = vmatpush1.bf16.xpose.msra.mxu0 0
  %1740 = vmatprep.subr.bf16.mxu0 0
  %1741 = vmatpush1.bf16.xpose.msra.mxu0 0
  %1742 = vmatprep.subr.bf16.mxu0 0
  %1743 = vmatpush1.bf16.xpose.msra.mxu0 0
  %1744 = vmatprep.subr.bf16.mxu0 0
  %1745 = vmatpush1.bf16.xpose.msra.mxu0 0
  %1746 = vmatprep.subr.bf16.mxu0 0
  %1747 = vmatpush1.bf16.xpose.msra.mxu0 0
  %1748 = vmatprep.subr.bf16.mxu0 0
  %1749 = vmatpush1.bf16.xpose.msra.mxu0 0
  %1750 = vmatprep.subr.bf16.mxu0 0
  %1751 = vmatpush1.bf16.xpose.msra.mxu0 0
  %1752 = vmatprep.subr.bf16.mxu0 0
  %1753 = vmatpush1.bf16.xpose.msra.mxu0 0
  %1754 = vmatprep.subr.bf16.mxu0 0
  %1755 = vmatpush1.bf16.xpose.msra.mxu0 0
  %1756 = vmatprep.subr.bf16.mxu0 0
  %1757 = vmatpush1.bf16.xpose.msra.mxu0 0
  %1758 = vmatprep.subr.bf16.mxu0 0
  %1759 = vmatpush1.bf16.xpose.msra.mxu0 0
  %1760 = vmatprep.subr.bf16.mxu0 0
  %1761 = vmatpush1.bf16.xpose.msra.mxu0 0
  %1762 = vmatprep.mubr.bf16.mxu0 0
  %1763 = vmatmul.mubr.bf16.gmra.mrb[0].mxu0 %v1725
  %v1764 = vpop.f32.mrb[0].mxu0
  %v1765 = vadd.f32 0.0, %v1764
  %v1766 = vpop.f32.mrb[0].mxu0
  %v1767 = vpop.f32.mrb[0].mxu0
  %v1768 = vpop.f32.mrb[0].mxu0
  %1769 = vdwg.mxu0
  %v1770 = vmul.f32 %v1765, 0.35355338
  %v1771 = vadd.f32 %v1770, %v396
  %1772 = vrot.lane.b32.xlu0 %v1668, 112
  %v1773 = vpop.permute.xlu0 %1772
  %1774 = vrot.lane.b32.xlu0 %v1668, 80
  %v1775 = vpop.permute.xlu0 %1774
  %v1777 = vsel %vm130, %v1773, 0
  %v1780 = vsel %vm130, %v1775, 0
  %1782 = vmatprep.subr.bf16.mxu0 0
  %1783 = vmatpush1.bf16.xpose.msra.mxu0 %v1780
  %1784 = vmatprep.subr.bf16.mxu0 0
  %1785 = vmatpush1.bf16.xpose.msra.mxu0 0
  %1786 = vmatprep.subr.bf16.mxu0 0
  %1787 = vmatpush1.bf16.xpose.msra.mxu0 0
  %1788 = vmatprep.subr.bf16.mxu0 0
  %1789 = vmatpush1.bf16.xpose.msra.mxu0 0
  %1790 = vmatprep.subr.bf16.mxu0 0
  %1791 = vmatpush1.bf16.xpose.msra.mxu0 0
  %1792 = vmatprep.subr.bf16.mxu0 0
  %1793 = vmatpush1.bf16.xpose.msra.mxu0 0
  %1794 = vmatprep.subr.bf16.mxu0 0
  %1795 = vmatpush1.bf16.xpose.msra.mxu0 0
  %1796 = vmatprep.subr.bf16.mxu0 0
  %1797 = vmatpush1.bf16.xpose.msra.mxu0 0
  %1798 = vmatprep.subr.bf16.mxu0 0
  %1799 = vmatpush1.bf16.xpose.msra.mxu0 0
  %1800 = vmatprep.subr.bf16.mxu0 0
  %1801 = vmatpush1.bf16.xpose.msra.mxu0 0
  %1802 = vmatprep.subr.bf16.mxu0 0
  %1803 = vmatpush1.bf16.xpose.msra.mxu0 0
  %1804 = vmatprep.subr.bf16.mxu0 0
  %1805 = vmatpush1.bf16.xpose.msra.mxu0 0
  %1806 = vmatprep.subr.bf16.mxu0 0
  %1807 = vmatpush1.bf16.xpose.msra.mxu0 0
  %1808 = vmatprep.subr.bf16.mxu0 0
  %1809 = vmatpush1.bf16.xpose.msra.mxu0 0
  %1810 = vmatprep.subr.bf16.mxu0 0
  %1811 = vmatpush1.bf16.xpose.msra.mxu0 0
  %1812 = vmatprep.subr.bf16.mxu0 0
  %1813 = vmatpush1.bf16.xpose.msra.mxu0 0
  %1814 = vmatprep.mubr.bf16.mxu0 0
  %1815 = vmatmul.mubr.bf16.gmra.mrb[0].mxu0 %v1777
  %v1816 = vpop.f32.mrb[0].mxu0
  %v1817 = vadd.f32 0.0, %v1816
  %v1818 = vpop.f32.mrb[0].mxu0
  %v1819 = vpop.f32.mrb[0].mxu0
  %v1820 = vpop.f32.mrb[0].mxu0
  %1821 = vdwg.mxu0
  %v1822 = vmul.f32 %v1817, 0.35355338
  %v1823 = vadd.f32 %v1822, %v396
  %1824 = vrot.lane.b32.xlu0 %v1668, 104
  %v1825 = vpop.permute.xlu0 %1824
  %1826 = vrot.lane.b32.xlu0 %v1668, 72
  %v1827 = vpop.permute.xlu0 %1826
  %v1829 = vsel %vm130, %v1825, 0
  %v1832 = vsel %vm130, %v1827, 0
  %1834 = vmatprep.subr.bf16.mxu0 0
  %1835 = vmatpush1.bf16.xpose.msra.mxu0 %v1832
  %1836 = vmatprep.subr.bf16.mxu0 0
  %1837 = vmatpush1.bf16.xpose.msra.mxu0 0
  %1838 = vmatprep.subr.bf16.mxu0 0
  %1839 = vmatpush1.bf16.xpose.msra.mxu0 0
  %1840 = vmatprep.subr.bf16.mxu0 0
  %1841 = vmatpush1.bf16.xpose.msra.mxu0 0
  %1842 = vmatprep.subr.bf16.mxu0 0
  %1843 = vmatpush1.bf16.xpose.msra.mxu0 0
  %1844 = vmatprep.subr.bf16.mxu0 0
  %1845 = vmatpush1.bf16.xpose.msra.mxu0 0
  %1846 = vmatprep.subr.bf16.mxu0 0
  %1847 = vmatpush1.bf16.xpose.msra.mxu0 0
  %1848 = vmatprep.subr.bf16.mxu0 0
  %1849 = vmatpush1.bf16.xpose.msra.mxu0 0
  %1850 = vmatprep.subr.bf16.mxu0 0
  %1851 = vmatpush1.bf16.xpose.msra.mxu0 0
  %1852 = vmatprep.subr.bf16.mxu0 0
  %1853 = vmatpush1.bf16.xpose.msra.mxu0 0
  %1854 = vmatprep.subr.bf16.mxu0 0
  %1855 = vmatpush1.bf16.xpose.msra.mxu0 0
  %1856 = vmatprep.subr.bf16.mxu0 0
  %1857 = vmatpush1.bf16.xpose.msra.mxu0 0
  %1858 = vmatprep.subr.bf16.mxu0 0
  %1859 = vmatpush1.bf16.xpose.msra.mxu0 0
  %1860 = vmatprep.subr.bf16.mxu0 0
  %1861 = vmatpush1.bf16.xpose.msra.mxu0 0
  %1862 = vmatprep.subr.bf16.mxu0 0
  %1863 = vmatpush1.bf16.xpose.msra.mxu0 0
  %1864 = vmatprep.subr.bf16.mxu0 0
  %1865 = vmatpush1.bf16.xpose.msra.mxu0 0
  %1866 = vmatprep.mubr.bf16.mxu0 0
  %1867 = vmatmul.mubr.bf16.gmra.mrb[0].mxu0 %v1829
  %v1868 = vpop.f32.mrb[0].mxu0
  %v1869 = vadd.f32 0.0, %v1868
  %v1870 = vpop.f32.mrb[0].mxu0
  %v1871 = vpop.f32.mrb[0].mxu0
  %v1872 = vpop.f32.mrb[0].mxu0
  %1873 = vdwg.mxu0
  %v1874 = vmul.f32 %v1869, 0.35355338
  %v1875 = vadd.f32 %v1874, %v396
  %v1876 = vsel %vm130, %v1511, -inf
  %1877 = vmax.xlane.f32.xlu0 %v1876
  %v1878 = vpop.xlane.xlu0 %1877
  %v1879 = vsel %vm130, %v1563, -inf
  %1880 = vmax.xlane.f32.xlu0 %v1879
  %v1881 = vpop.xlane.xlu0 %1880
  %v1882 = vsel %vm130, %v1615, -inf
  %1883 = vmax.xlane.f32.xlu0 %v1882
  %v1884 = vpop.xlane.xlu0 %1883
  %v1885 = vsel %vm130, %v1667, -inf
  %1886 = vmax.xlane.f32.xlu0 %v1885
  %v1887 = vpop.xlane.xlu0 %1886
  %v1888 = vsel %vm130, %v1719, -inf
  %1889 = vmax.xlane.f32.xlu0 %v1888
  %v1890 = vpop.xlane.xlu0 %1889
  %v1891 = vsel %vm130, %v1771, -inf
  %1892 = vmax.xlane.f32.xlu0 %v1891
  %v1893 = vpop.xlane.xlu0 %1892
  %v1894 = vsel %vm130, %v1823, -inf
  %1895 = vmax.xlane.f32.xlu0 %v1894
  %v1896 = vpop.xlane.xlu0 %1895
  %v1897 = vsel %vm130, %v1875, -inf
  %1898 = vmax.xlane.f32.xlu0 %v1897
  %v1899 = vpop.xlane.xlu0 %1898
  %v1900 = vsub.f32 %v1511, %v1878
  %v1901 = vsub.f32 %v1563, %v1881
  %v1902 = vsub.f32 %v1615, %v1884
  %v1903 = vsub.f32 %v1667, %v1887
  %v1904 = vsub.f32 %v1719, %v1890
  %v1905 = vsub.f32 %v1771, %v1893
  %v1906 = vsub.f32 %v1823, %v1896
  %v1907 = vsub.f32 %v1875, %v1899
  %v1908 = vmul.f32 %v1900, 1.442695
  %v1909 = vpow.pop %v1908
  %v1910 = vmul.f32 %v1901, 1.442695
  %v1911 = vpow.pop %v1910
  %v1912 = vmul.f32 %v1902, 1.442695
  %v1913 = vpow.pop %v1912
  %v1914 = vmul.f32 %v1903, 1.442695
  %v1915 = vpow.pop %v1914
  %v1916 = vmul.f32 %v1904, 1.442695
  %v1917 = vpow.pop %v1916
  %v1918 = vmul.f32 %v1905, 1.442695
  %v1919 = vpow.pop %v1918
  %v1920 = vmul.f32 %v1906, 1.442695
  %v1921 = vpow.pop %v1920
  %v1922 = vmul.f32 %v1907, 1.442695
  %v1923 = vpow.pop %v1922
  %v1924 = vsel %vm130, %v1909, 0.0
  %1925 = vadd.xlane.f32.xlu0 %v1924
  %v1926 = vpop.xlane.xlu0 %1925
  %v1927 = vsel %vm130, %v1911, 0.0
  %1928 = vadd.xlane.f32.xlu0 %v1927
  %v1929 = vpop.xlane.xlu0 %1928
  %v1930 = vsel %vm130, %v1913, 0.0
  %1931 = vadd.xlane.f32.xlu0 %v1930
  %v1932 = vpop.xlane.xlu0 %1931
  %v1933 = vsel %vm130, %v1915, 0.0
  %1934 = vadd.xlane.f32.xlu0 %v1933
  %v1935 = vpop.xlane.xlu0 %1934
  %v1936 = vsel %vm130, %v1917, 0.0
  %1937 = vadd.xlane.f32.xlu0 %v1936
  %v1938 = vpop.xlane.xlu0 %1937
  %v1939 = vsel %vm130, %v1919, 0.0
  %1940 = vadd.xlane.f32.xlu0 %v1939
  %v1941 = vpop.xlane.xlu0 %1940
  %v1942 = vsel %vm130, %v1921, 0.0
  %1943 = vadd.xlane.f32.xlu0 %v1942
  %v1944 = vpop.xlane.xlu0 %1943
  %v1945 = vsel %vm130, %v1923, 0.0
  %1946 = vadd.xlane.f32.xlu0 %v1945
  %v1947 = vpop.xlane.xlu0 %1946
  %v1948 = vrcp.pop %v1926
  %v1949 = vrcp.pop %v1929
  %v1950 = vrcp.pop %v1932
  %v1951 = vrcp.pop %v1935
  %v1952 = vrcp.pop %v1938
  %v1953 = vrcp.pop %v1941
  %v1954 = vrcp.pop %v1944
  %v1955 = vrcp.pop %v1947
  %v1956 = vmul.f32 %v1909, %v1948
  %v1957 = vmul.f32 %v1911, %v1949
  %v1958 = vmul.f32 %v1913, %v1950
  %v1959 = vmul.f32 %v1915, %v1951
  %v1960 = vmul.f32 %v1917, %v1952
  %v1961 = vmul.f32 %v1919, %v1953
  %v1962 = vmul.f32 %v1921, %v1954
  %v1963 = vmul.f32 %v1923, %v1955
  %v1964 = vpack.c.bf16 %v1957, %v1956
  %v1965 = vpack.c.bf16 %v1959, %v1958
  %v1966 = vpack.c.bf16 %v1961, %v1960
  %v1967 = vpack.c.bf16 %v1963, %v1962
  %1968 = vrot.lane.b32.xlu0 %v1460, 64
  %v1969 = vpop.permute.xlu0 %1968
  %v1971 = vsel %vm130, %v1964, 0
  %v1974 = vsel %vm652, %v1969, 0
  %1976 = vmatprep.subr.bf16.mxu0 0
  %1977 = vmatpush1.bf16.msra.mxu0 %v1974
  %1978 = vmatprep.subr.bf16.mxu0 0
  %1979 = vmatpush1.bf16.msra.mxu0 0
  %1980 = vmatprep.subr.bf16.mxu0 0
  %1981 = vmatpush1.bf16.msra.mxu0 0
  %1982 = vmatprep.subr.bf16.mxu0 0
  %1983 = vmatpush1.bf16.msra.mxu0 0
  %1984 = vmatprep.subr.bf16.mxu0 0
  %1985 = vmatpush1.bf16.msra.mxu0 0
  %1986 = vmatprep.subr.bf16.mxu0 0
  %1987 = vmatpush1.bf16.msra.mxu0 0
  %1988 = vmatprep.subr.bf16.mxu0 0
  %1989 = vmatpush1.bf16.msra.mxu0 0
  %1990 = vmatprep.subr.bf16.mxu0 0
  %1991 = vmatpush1.bf16.msra.mxu0 0
  %1992 = vmatprep.subr.bf16.mxu0 0
  %1993 = vmatpush1.bf16.msra.mxu0 0
  %1994 = vmatprep.subr.bf16.mxu0 0
  %1995 = vmatpush1.bf16.msra.mxu0 0
  %1996 = vmatprep.subr.bf16.mxu0 0
  %1997 = vmatpush1.bf16.msra.mxu0 0
  %1998 = vmatprep.subr.bf16.mxu0 0
  %1999 = vmatpush1.bf16.msra.mxu0 0
  %2000 = vmatprep.subr.bf16.mxu0 0
  %2001 = vmatpush1.bf16.msra.mxu0 0
  %2002 = vmatprep.subr.bf16.mxu0 0
  %2003 = vmatpush1.bf16.msra.mxu0 0
  %2004 = vmatprep.subr.bf16.mxu0 0
  %2005 = vmatpush1.bf16.msra.mxu0 0
  %2006 = vmatprep.subr.bf16.mxu0 0
  %2007 = vmatpush1.bf16.msra.mxu0 0
  %2008 = vmatprep.mubr.bf16.mxu0 0
  %2009 = vmatmul.mubr.bf16.gmra.mrb[0].mxu0 %v1971
  %v2010 = vpop.f32.mrb[0].mxu0
  %v2011 = vadd.f32 0.0, %v2010
  %v2012 = vpop.f32.mrb[0].mxu0
  %v2013 = vpop.f32.mrb[0].mxu0
  %v2014 = vpop.f32.mrb[0].mxu0
  %2015 = vdwg.mxu0
  %v2017 = vrot.slane %v1964, 4
  %2018 = vrot.lane.b32.xlu0 %v1460, 56
  %v2019 = vpop.permute.xlu0 %2018
  %v2021 = vsel %vm130, %v2017, 0
  %v2024 = vsel %vm652, %v2019, 0
  %2026 = vmatprep.subr.bf16.mxu0 0
  %2027 = vmatpush1.bf16.msra.mxu0 %v2024
  %2028 = vmatprep.subr.bf16.mxu0 0
  %2029 = vmatpush1.bf16.msra.mxu0 0
  %2030 = vmatprep.subr.bf16.mxu0 0
  %2031 = vmatpush1.bf16.msra.mxu0 0
  %2032 = vmatprep.subr.bf16.mxu0 0
  %2033 = vmatpush1.bf16.msra.mxu0 0
  %2034 = vmatprep.subr.bf16.mxu0 0
  %2035 = vmatpush1.bf16.msra.mxu0 0
  %2036 = vmatprep.subr.bf16.mxu0 0
  %2037 = vmatpush1.bf16.msra.mxu0 0
  %2038 = vmatprep.subr.bf16.mxu0 0
  %2039 = vmatpush1.bf16.msra.mxu0 0
  %2040 = vmatprep.subr.bf16.mxu0 0
  %2041 = vmatpush1.bf16.msra.mxu0 0
  %2042 = vmatprep.subr.bf16.mxu0 0
  %2043 = vmatpush1.bf16.msra.mxu0 0
  %2044 = vmatprep.subr.bf16.mxu0 0
  %2045 = vmatpush1.bf16.msra.mxu0 0
  %2046 = vmatprep.subr.bf16.mxu0 0
  %2047 = vmatpush1.bf16.msra.mxu0 0
  %2048 = vmatprep.subr.bf16.mxu0 0
  %2049 = vmatpush1.bf16.msra.mxu0 0
  %2050 = vmatprep.subr.bf16.mxu0 0
  %2051 = vmatpush1.bf16.msra.mxu0 0
  %2052 = vmatprep.subr.bf16.mxu0 0
  %2053 = vmatpush1.bf16.msra.mxu0 0
  %2054 = vmatprep.subr.bf16.mxu0 0
  %2055 = vmatpush1.bf16.msra.mxu0 0
  %2056 = vmatprep.subr.bf16.mxu0 0
  %2057 = vmatpush1.bf16.msra.mxu0 0
  %2058 = vmatprep.mubr.bf16.mxu0 0
  %2059 = vmatmul.mubr.bf16.gmra.mrb[0].mxu0 %v2021
  %v2060 = vpop.f32.mrb[0].mxu0
  %v2061 = vadd.f32 0.0, %v2060
  %v2062 = vpop.f32.mrb[0].mxu0
  %v2063 = vpop.f32.mrb[0].mxu0
  %v2064 = vpop.f32.mrb[0].mxu0
  %2065 = vdwg.mxu0
  %2066 = vrot.lane.b32.xlu0 %v1460, 48
  %v2067 = vpop.permute.xlu0 %2066
  %v2069 = vsel %vm130, %v1965, 0
  %v2072 = vsel %vm652, %v2067, 0
  %2074 = vmatprep.subr.bf16.mxu0 0
  %2075 = vmatpush1.bf16.msra.mxu0 %v2072
  %2076 = vmatprep.subr.bf16.mxu0 0
  %2077 = vmatpush1.bf16.msra.mxu0 0
  %2078 = vmatprep.subr.bf16.mxu0 0
  %2079 = vmatpush1.bf16.msra.mxu0 0
  %2080 = vmatprep.subr.bf16.mxu0 0
  %2081 = vmatpush1.bf16.msra.mxu0 0
  %2082 = vmatprep.subr.bf16.mxu0 0
  %2083 = vmatpush1.bf16.msra.mxu0 0
  %2084 = vmatprep.subr.bf16.mxu0 0
  %2085 = vmatpush1.bf16.msra.mxu0 0
  %2086 = vmatprep.subr.bf16.mxu0 0
  %2087 = vmatpush1.bf16.msra.mxu0 0
  %2088 = vmatprep.subr.bf16.mxu0 0
  %2089 = vmatpush1.bf16.msra.mxu0 0
  %2090 = vmatprep.subr.bf16.mxu0 0
  %2091 = vmatpush1.bf16.msra.mxu0 0
  %2092 = vmatprep.subr.bf16.mxu0 0
  %2093 = vmatpush1.bf16.msra.mxu0 0
  %2094 = vmatprep.subr.bf16.mxu0 0
  %2095 = vmatpush1.bf16.msra.mxu0 0
  %2096 = vmatprep.subr.bf16.mxu0 0
  %2097 = vmatpush1.bf16.msra.mxu0 0
  %2098 = vmatprep.subr.bf16.mxu0 0
  %2099 = vmatpush1.bf16.msra.mxu0 0
  %2100 = vmatprep.subr.bf16.mxu0 0
  %2101 = vmatpush1.bf16.msra.mxu0 0
  %2102 = vmatprep.subr.bf16.mxu0 0
  %2103 = vmatpush1.bf16.msra.mxu0 0
  %2104 = vmatprep.subr.bf16.mxu0 0
  %2105 = vmatpush1.bf16.msra.mxu0 0
  %2106 = vmatprep.mubr.bf16.mxu0 0
  %2107 = vmatmul.mubr.bf16.gmra.mrb[0].mxu0 %v2069
  %v2108 = vpop.f32.mrb[0].mxu0
  %v2109 = vadd.f32 0.0, %v2108
  %v2110 = vpop.f32.mrb[0].mxu0
  %v2111 = vpop.f32.mrb[0].mxu0
  %v2112 = vpop.f32.mrb[0].mxu0
  %2113 = vdwg.mxu0
  %v2115 = vrot.slane %v1965, 4
  %2116 = vrot.lane.b32.xlu0 %v1460, 40
  %v2117 = vpop.permute.xlu0 %2116
  %v2119 = vsel %vm130, %v2115, 0
  %v2122 = vsel %vm652, %v2117, 0
  %2124 = vmatprep.subr.bf16.mxu0 0
  %2125 = vmatpush1.bf16.msra.mxu0 %v2122
  %2126 = vmatprep.subr.bf16.mxu0 0
  %2127 = vmatpush1.bf16.msra.mxu0 0
  %2128 = vmatprep.subr.bf16.mxu0 0
  %2129 = vmatpush1.bf16.msra.mxu0 0
  %2130 = vmatprep.subr.bf16.mxu0 0
  %2131 = vmatpush1.bf16.msra.mxu0 0
  %2132 = vmatprep.subr.bf16.mxu0 0
  %2133 = vmatpush1.bf16.msra.mxu0 0
  %2134 = vmatprep.subr.bf16.mxu0 0
  %2135 = vmatpush1.bf16.msra.mxu0 0
  %2136 = vmatprep.subr.bf16.mxu0 0
  %2137 = vmatpush1.bf16.msra.mxu0 0
  %2138 = vmatprep.subr.bf16.mxu0 0
  %2139 = vmatpush1.bf16.msra.mxu0 0
  %2140 = vmatprep.subr.bf16.mxu0 0
  %2141 = vmatpush1.bf16.msra.mxu0 0
  %2142 = vmatprep.subr.bf16.mxu0 0
  %2143 = vmatpush1.bf16.msra.mxu0 0
  %2144 = vmatprep.subr.bf16.mxu0 0
  %2145 = vmatpush1.bf16.msra.mxu0 0
  %2146 = vmatprep.subr.bf16.mxu0 0
  %2147 = vmatpush1.bf16.msra.mxu0 0
  %2148 = vmatprep.subr.bf16.mxu0 0
  %2149 = vmatpush1.bf16.msra.mxu0 0
  %2150 = vmatprep.subr.bf16.mxu0 0
  %2151 = vmatpush1.bf16.msra.mxu0 0
  %2152 = vmatprep.subr.bf16.mxu0 0
  %2153 = vmatpush1.bf16.msra.mxu0 0
  %2154 = vmatprep.subr.bf16.mxu0 0
  %2155 = vmatpush1.bf16.msra.mxu0 0
  %2156 = vmatprep.mubr.bf16.mxu0 0
  %2157 = vmatmul.mubr.bf16.gmra.mrb[0].mxu0 %v2119
  %v2158 = vpop.f32.mrb[0].mxu0
  %v2159 = vadd.f32 0.0, %v2158
  %v2160 = vpop.f32.mrb[0].mxu0
  %v2161 = vpop.f32.mrb[0].mxu0
  %v2162 = vpop.f32.mrb[0].mxu0
  %2163 = vdwg.mxu0
  %2165 = vrot.lane.b32.xlu0 %v2061, 8
  %v2166 = vpop.permute.xlu0 %2165
  %2169 = vrot.lane.b32.xlu0 %v2109, 16
  %v2170 = vpop.permute.xlu0 %2169
  %2173 = vrot.lane.b32.xlu0 %v2159, 24
  %v2174 = vpop.permute.xlu0 %2173
  %v2176 = vsel %vm130, %v2011, %v2166
  %v2177 = vsel %vm857, %v2176, %v2170
  %v2178 = vsel %vm859, %v2177, %v2174
  %2179 = vrot.lane.b32.xlu0 %v1668, 64
  %v2180 = vpop.permute.xlu0 %2179
  %v2182 = vsel %vm130, %v1966, 0
  %v2185 = vsel %vm652, %v2180, 0
  %2187 = vmatprep.subr.bf16.mxu0 0
  %2188 = vmatpush1.bf16.msra.mxu0 %v2185
  %2189 = vmatprep.subr.bf16.mxu0 0
  %2190 = vmatpush1.bf16.msra.mxu0 0
  %2191 = vmatprep.subr.bf16.mxu0 0
  %2192 = vmatpush1.bf16.msra.mxu0 0
  %2193 = vmatprep.subr.bf16.mxu0 0
  %2194 = vmatpush1.bf16.msra.mxu0 0
  %2195 = vmatprep.subr.bf16.mxu0 0
  %2196 = vmatpush1.bf16.msra.mxu0 0
  %2197 = vmatprep.subr.bf16.mxu0 0
  %2198 = vmatpush1.bf16.msra.mxu0 0
  %2199 = vmatprep.subr.bf16.mxu0 0
  %2200 = vmatpush1.bf16.msra.mxu0 0
  %2201 = vmatprep.subr.bf16.mxu0 0
  %2202 = vmatpush1.bf16.msra.mxu0 0
  %2203 = vmatprep.subr.bf16.mxu0 0
  %2204 = vmatpush1.bf16.msra.mxu0 0
  %2205 = vmatprep.subr.bf16.mxu0 0
  %2206 = vmatpush1.bf16.msra.mxu0 0
  %2207 = vmatprep.subr.bf16.mxu0 0
  %2208 = vmatpush1.bf16.msra.mxu0 0
  %2209 = vmatprep.subr.bf16.mxu0 0
  %2210 = vmatpush1.bf16.msra.mxu0 0
  %2211 = vmatprep.subr.bf16.mxu0 0
  %2212 = vmatpush1.bf16.msra.mxu0 0
  %2213 = vmatprep.subr.bf16.mxu0 0
  %2214 = vmatpush1.bf16.msra.mxu0 0
  %2215 = vmatprep.subr.bf16.mxu0 0
  %2216 = vmatpush1.bf16.msra.mxu0 0
  %2217 = vmatprep.subr.bf16.mxu0 0
  %2218 = vmatpush1.bf16.msra.mxu0 0
  %2219 = vmatprep.mubr.bf16.mxu0 0
  %2220 = vmatmul.mubr.bf16.gmra.mrb[0].mxu0 %v2182
  %v2221 = vpop.f32.mrb[0].mxu0
  %v2222 = vadd.f32 0.0, %v2221
  %v2223 = vpop.f32.mrb[0].mxu0
  %v2224 = vpop.f32.mrb[0].mxu0
  %v2225 = vpop.f32.mrb[0].mxu0
  %2226 = vdwg.mxu0
  %v2228 = vrot.slane %v1966, 4
  %2229 = vrot.lane.b32.xlu0 %v1668, 56
  %v2230 = vpop.permute.xlu0 %2229
  %v2232 = vsel %vm130, %v2228, 0
  %v2235 = vsel %vm652, %v2230, 0
  %2237 = vmatprep.subr.bf16.mxu0 0
  %2238 = vmatpush1.bf16.msra.mxu0 %v2235
  %2239 = vmatprep.subr.bf16.mxu0 0
  %2240 = vmatpush1.bf16.msra.mxu0 0
  %2241 = vmatprep.subr.bf16.mxu0 0
  %2242 = vmatpush1.bf16.msra.mxu0 0
  %2243 = vmatprep.subr.bf16.mxu0 0
  %2244 = vmatpush1.bf16.msra.mxu0 0
  %2245 = vmatprep.subr.bf16.mxu0 0
  %2246 = vmatpush1.bf16.msra.mxu0 0
  %2247 = vmatprep.subr.bf16.mxu0 0
  %2248 = vmatpush1.bf16.msra.mxu0 0
  %2249 = vmatprep.subr.bf16.mxu0 0
  %2250 = vmatpush1.bf16.msra.mxu0 0
  %2251 = vmatprep.subr.bf16.mxu0 0
  %2252 = vmatpush1.bf16.msra.mxu0 0
  %2253 = vmatprep.subr.bf16.mxu0 0
  %2254 = vmatpush1.bf16.msra.mxu0 0
  %2255 = vmatprep.subr.bf16.mxu0 0
  %2256 = vmatpush1.bf16.msra.mxu0 0
  %2257 = vmatprep.subr.bf16.mxu0 0
  %2258 = vmatpush1.bf16.msra.mxu0 0
  %2259 = vmatprep.subr.bf16.mxu0 0
  %2260 = vmatpush1.bf16.msra.mxu0 0
  %2261 = vmatprep.subr.bf16.mxu0 0
  %2262 = vmatpush1.bf16.msra.mxu0 0
  %2263 = vmatprep.subr.bf16.mxu0 0
  %2264 = vmatpush1.bf16.msra.mxu0 0
  %2265 = vmatprep.subr.bf16.mxu0 0
  %2266 = vmatpush1.bf16.msra.mxu0 0
  %2267 = vmatprep.subr.bf16.mxu0 0
  %2268 = vmatpush1.bf16.msra.mxu0 0
  %2269 = vmatprep.mubr.bf16.mxu0 0
  %2270 = vmatmul.mubr.bf16.gmra.mrb[0].mxu0 %v2232
  %v2271 = vpop.f32.mrb[0].mxu0
  %v2272 = vadd.f32 0.0, %v2271
  %v2273 = vpop.f32.mrb[0].mxu0
  %v2274 = vpop.f32.mrb[0].mxu0
  %v2275 = vpop.f32.mrb[0].mxu0
  %2276 = vdwg.mxu0
  %2277 = vrot.lane.b32.xlu0 %v1668, 48
  %v2278 = vpop.permute.xlu0 %2277
  %v2280 = vsel %vm130, %v1967, 0
  %v2283 = vsel %vm652, %v2278, 0
  %2285 = vmatprep.subr.bf16.mxu0 0
  %2286 = vmatpush1.bf16.msra.mxu0 %v2283
  %2287 = vmatprep.subr.bf16.mxu0 0
  %2288 = vmatpush1.bf16.msra.mxu0 0
  %2289 = vmatprep.subr.bf16.mxu0 0
  %2290 = vmatpush1.bf16.msra.mxu0 0
  %2291 = vmatprep.subr.bf16.mxu0 0
  %2292 = vmatpush1.bf16.msra.mxu0 0
  %2293 = vmatprep.subr.bf16.mxu0 0
  %2294 = vmatpush1.bf16.msra.mxu0 0
  %2295 = vmatprep.subr.bf16.mxu0 0
  %2296 = vmatpush1.bf16.msra.mxu0 0
  %2297 = vmatprep.subr.bf16.mxu0 0
  %2298 = vmatpush1.bf16.msra.mxu0 0
  %2299 = vmatprep.subr.bf16.mxu0 0
  %2300 = vmatpush1.bf16.msra.mxu0 0
  %2301 = vmatprep.subr.bf16.mxu0 0
  %2302 = vmatpush1.bf16.msra.mxu0 0
  %2303 = vmatprep.subr.bf16.mxu0 0
  %2304 = vmatpush1.bf16.msra.mxu0 0
  %2305 = vmatprep.subr.bf16.mxu0 0
  %2306 = vmatpush1.bf16.msra.mxu0 0
  %2307 = vmatprep.subr.bf16.mxu0 0
  %2308 = vmatpush1.bf16.msra.mxu0 0
  %2309 = vmatprep.subr.bf16.mxu0 0
  %2310 = vmatpush1.bf16.msra.mxu0 0
  %2311 = vmatprep.subr.bf16.mxu0 0
  %2312 = vmatpush1.bf16.msra.mxu0 0
  %2313 = vmatprep.subr.bf16.mxu0 0
  %2314 = vmatpush1.bf16.msra.mxu0 0
  %2315 = vmatprep.subr.bf16.mxu0 0
  %2316 = vmatpush1.bf16.msra.mxu0 0
  %2317 = vmatprep.mubr.bf16.mxu0 0
  %2318 = vmatmul.mubr.bf16.gmra.mrb[0].mxu0 %v2280
  %v2319 = vpop.f32.mrb[0].mxu0
  %v2320 = vadd.f32 0.0, %v2319
  %v2321 = vpop.f32.mrb[0].mxu0
  %v2322 = vpop.f32.mrb[0].mxu0
  %v2323 = vpop.f32.mrb[0].mxu0
  %2324 = vdwg.mxu0
  %v2326 = vrot.slane %v1967, 4
  %2327 = vrot.lane.b32.xlu0 %v1668, 40
  %v2328 = vpop.permute.xlu0 %2327
  %v2330 = vsel %vm130, %v2326, 0
  %v2333 = vsel %vm652, %v2328, 0
  %2335 = vmatprep.subr.bf16.mxu0 0
  %2336 = vmatpush1.bf16.msra.mxu0 %v2333
  %2337 = vmatprep.subr.bf16.mxu0 0
  %2338 = vmatpush1.bf16.msra.mxu0 0
  %2339 = vmatprep.subr.bf16.mxu0 0
  %2340 = vmatpush1.bf16.msra.mxu0 0
  %2341 = vmatprep.subr.bf16.mxu0 0
  %2342 = vmatpush1.bf16.msra.mxu0 0
  %2343 = vmatprep.subr.bf16.mxu0 0
  %2344 = vmatpush1.bf16.msra.mxu0 0
  %2345 = vmatprep.subr.bf16.mxu0 0
  %2346 = vmatpush1.bf16.msra.mxu0 0
  %2347 = vmatprep.subr.bf16.mxu0 0
  %2348 = vmatpush1.bf16.msra.mxu0 0
  %2349 = vmatprep.subr.bf16.mxu0 0
  %2350 = vmatpush1.bf16.msra.mxu0 0
  %2351 = vmatprep.subr.bf16.mxu0 0
  %2352 = vmatpush1.bf16.msra.mxu0 0
  %2353 = vmatprep.subr.bf16.mxu0 0
  %2354 = vmatpush1.bf16.msra.mxu0 0
  %2355 = vmatprep.subr.bf16.mxu0 0
  %2356 = vmatpush1.bf16.msra.mxu0 0
  %2357 = vmatprep.subr.bf16.mxu0 0
  %2358 = vmatpush1.bf16.msra.mxu0 0
  %2359 = vmatprep.subr.bf16.mxu0 0
  %2360 = vmatpush1.bf16.msra.mxu0 0
  %2361 = vmatprep.subr.bf16.mxu0 0
  %2362 = vmatpush1.bf16.msra.mxu0 0
  %2363 = vmatprep.subr.bf16.mxu0 0
  %2364 = vmatpush1.bf16.msra.mxu0 0
  %2365 = vmatprep.subr.bf16.mxu0 0
  %2366 = vmatpush1.bf16.msra.mxu0 0
  %2367 = vmatprep.mubr.bf16.mxu0 0
  %2368 = vmatmul.mubr.bf16.gmra.mrb[0].mxu0 %v2330
  %v2369 = vpop.f32.mrb[0].mxu0
  %v2370 = vadd.f32 0.0, %v2369
  %v2371 = vpop.f32.mrb[0].mxu0
  %v2372 = vpop.f32.mrb[0].mxu0
  %v2373 = vpop.f32.mrb[0].mxu0
  %2374 = vdwg.mxu0
  %2376 = vrot.lane.b32.xlu0 %v2272, 8
  %v2377 = vpop.permute.xlu0 %2376
  %2380 = vrot.lane.b32.xlu0 %v2320, 16
  %v2381 = vpop.permute.xlu0 %2380
  %2384 = vrot.lane.b32.xlu0 %v2370, 24
  %v2385 = vpop.permute.xlu0 %2384
  %v2387 = vsel %vm130, %v2222, %v2377
  %v2388 = vsel %vm857, %v2387, %v2381
  %v2389 = vsel %vm859, %v2388, %v2385
  %v2390 = vpack.c.bf16 %v2389, %v2178
  %v2392 = vlaneseq
  %v2393 = vshrl.u32 %v2392, 7
  %v2394 = vsub.s32 0, %v2393
  %v2395 = vrot.slane %v1459, %v2394
  %v2401 = vunpack.c.l.b16 %v1454
  %v2402 = vunpack.c.l.b16 %v1455
  %v2403 = vunpack.c.l.b16 %v1456
  %v2404 = vunpack.c.l.b16 %v1457
  %v2405 = vpack.c.b16 %v2402, %v2401
  %v2406 = vpack.c.b16 %v2404, %v2403
  %v2410 = vsel %vm76, %v2390, 0
  %2412 = vmatprep.subr.bf16.mxu0 0
  %2413 = vmatpush1.bf16.msra.mxu0 %v2405
  %2414 = vmatprep.subr.bf16.mxu0 0
  %2415 = vmatpush1.bf16.msra.mxu0 %v2406
  %2416 = vmatprep.subr.bf16.mxu0 0
  %2417 = vmatpush1.bf16.msra.mxu0 0
  %2418 = vmatprep.subr.bf16.mxu0 0
  %2419 = vmatpush1.bf16.msra.mxu0 0
  %2420 = vmatprep.subr.bf16.mxu0 0
  %2421 = vmatpush1.bf16.msra.mxu0 0
  %2422 = vmatprep.subr.bf16.mxu0 0
  %2423 = vmatpush1.bf16.msra.mxu0 0
  %2424 = vmatprep.subr.bf16.mxu0 0
  %2425 = vmatpush1.bf16.msra.mxu0 0
  %2426 = vmatprep.subr.bf16.mxu0 0
  %2427 = vmatpush1.bf16.msra.mxu0 0
  %2428 = vmatprep.subr.bf16.mxu0 0
  %2429 = vmatpush1.bf16.msra.mxu0 0
  %2430 = vmatprep.subr.bf16.mxu0 0
  %2431 = vmatpush1.bf16.msra.mxu0 0
  %2432 = vmatprep.subr.bf16.mxu0 0
  %2433 = vmatpush1.bf16.msra.mxu0 0
  %2434 = vmatprep.subr.bf16.mxu0 0
  %2435 = vmatpush1.bf16.msra.mxu0 0
  %2436 = vmatprep.subr.bf16.mxu0 0
  %2437 = vmatpush1.bf16.msra.mxu0 0
  %2438 = vmatprep.subr.bf16.mxu0 0
  %2439 = vmatpush1.bf16.msra.mxu0 0
  %2440 = vmatprep.subr.bf16.mxu0 0
  %2441 = vmatpush1.bf16.msra.mxu0 0
  %2442 = vmatprep.subr.bf16.mxu0 0
  %2443 = vmatpush1.bf16.msra.mxu0 0
  %2444 = vmatprep.mubr.bf16.mxu0 0
  %2445 = vmatmul.mubr.bf16.gmra.mrb[0].mxu0 %v2410
  %v2446 = vpop.f32.mrb[0].mxu0
  %v2447 = vadd.f32 %v2395, %v2446
  %v2448 = vpop.f32.mrb[0].mxu0
  %v2449 = vpop.f32.mrb[0].mxu0
  %v2450 = vadd.f32 %v2395, %v2449
  %v2451 = vpop.f32.mrb[0].mxu0
  %2452 = vdwg.mxu0
  %v2453 = vadd.f32 %v1381, %v2447
  %v2454 = vadd.f32 %v1382, %v2450
  %s2455 = scalar_lea.vmem %s6, 1
  %v2456 = vld [vmem:[%s2455] sm:$0x1]
  %s2457 = scalar_lea.vmem %s7, 1
  %v2458 = vld [vmem:[%s2457] sm:$0x1]
  %v2459 = vsel %vm76, %v2453, 0.0
  %2460 = vadd.xlane.f32.xlu0 %v2459
  %v2461 = vpop.xlane.xlu0 %2460
  %v2462 = vsel %vm76, %v2454, 0.0
  %2463 = vadd.xlane.f32.xlu0 %v2462
  %v2464 = vpop.xlane.xlu0 %2463
  %v2465 = vmul.f32 %v2461, %v1145
  %v2466 = vmul.f32 %v2464, %v1145
  %v2467 = vsub.f32 %v2453, %v2465
  %v2468 = vsub.f32 %v2454, %v2466
  %v2469 = vmul.f32 %v2467, %v2467
  %v2470 = vmul.f32 %v2468, %v2468
  %v2471 = vsel %vm76, %v2469, 0.0
  %2472 = vadd.xlane.f32.xlu0 %v2471
  %v2473 = vpop.xlane.xlu0 %2472
  %v2474 = vsel %vm76, %v2470, 0.0
  %2475 = vadd.xlane.f32.xlu0 %v2474
  %v2476 = vpop.xlane.xlu0 %2475
  %v2477 = vmul.f32 %v2473, %v1145
  %v2478 = vmul.f32 %v2476, %v1145
  %v2479 = vadd.f32 %v2477, 1e-05
  %v2480 = vadd.f32 %v2478, 1e-05
  %v2481 = vrsqrt.pop %v2479
  %v2482 = vrsqrt.pop %v2480
  %v2483 = vmul.f32 %v2467, %v2481
  %v2484 = vmul.f32 %v2468, %v2482
  %v2486 = vlaneseq
  %v2487 = vshrl.u32 %v2486, 7
  %v2488 = vsub.s32 0, %v2487
  %v2489 = vrot.slane %v2456, %v2488
  %v2491 = vmul.f32 %v2483, %v2489
  %v2492 = vmul.f32 %v2484, %v2489
  %v2494 = vlaneseq
  %v2495 = vshrl.u32 %v2494, 7
  %v2496 = vsub.s32 0, %v2495
  %v2497 = vrot.slane %v2458, %v2496
  %v2499 = vadd.f32 %v2491, %v2497
  %v2500 = vadd.f32 %v2492, %v2497
  %s2501 = scalar_lea.vmem %s8, 16
  %v2502 = vld [vmem:[%s2501] sm:$0xf]
  %v2503 = vld [vmem:[%s2501 + $0x4] sm:$0xf]
  %v2504 = vld [vmem:[%s2501 + $0x8] sm:$0xf]
  %v2505 = vld [vmem:[%s2501 + $0xc] sm:$0xf]
  %s2506 = scalar_lea.vmem %s9, 1
  %v2507 = vld [vmem:[%s2506] sm:$0x1]
  %s2508 = scalar_lea.vmem %s10, 32
  %v2509 = vld [vmem:[%s2508] sm:$0xf]
  %v2510 = vld [vmem:[%s2508 + $0x4] sm:$0xf]
  %v2511 = vld [vmem:[%s2508 + $0x8] sm:$0xf]
  %v2512 = vld [vmem:[%s2508 + $0xc] sm:$0xf]
  %v2513 = vld [vmem:[%s2508 + $0x10] sm:$0xf]
  %v2514 = vld [vmem:[%s2508 + $0x14] sm:$0xf]
  %v2515 = vld [vmem:[%s2508 + $0x18] sm:$0xf]
  %v2516 = vld [vmem:[%s2508 + $0x1c] sm:$0xf]
  %s2517 = scalar_lea.vmem %s11, 1
  %v2518 = vld [vmem:[%s2517] sm:$0x1]
  %v2519 = vpack.c.bf16 %v2500, %v2499
  %v2521 = vlaneseq
  %v2522 = vshrl.u32 %v2521, 7
  %v2523 = vsub.s32 0, %v2522
  %v2524 = vrot.slane %v2507, %v2523
  %v2530 = vunpack.c.l.b16 %v2502
  %v2531 = vunpack.c.l.b16 %v2503
  %v2532 = vunpack.c.l.b16 %v2504
  %v2533 = vunpack.c.l.b16 %v2505
  %v2534 = vpack.c.b16 %v2531, %v2530
  %v2535 = vpack.c.b16 %v2533, %v2532
  %v2539 = vsel %vm76, %v2519, 0
  %2541 = vmatprep.subr.bf16.mxu0 0
  %2542 = vmatpush1.bf16.msra.mxu0 %v2534
  %2543 = vmatprep.subr.bf16.mxu0 0
  %2544 = vmatpush1.bf16.msra.mxu0 %v2535
  %2545 = vmatprep.subr.bf16.mxu0 0
  %2546 = vmatpush1.bf16.msra.mxu0 0
  %2547 = vmatprep.subr.bf16.mxu0 0
  %2548 = vmatpush1.bf16.msra.mxu0 0
  %2549 = vmatprep.subr.bf16.mxu0 0
  %2550 = vmatpush1.bf16.msra.mxu0 0
  %2551 = vmatprep.subr.bf16.mxu0 0
  %2552 = vmatpush1.bf16.msra.mxu0 0
  %2553 = vmatprep.subr.bf16.mxu0 0
  %2554 = vmatpush1.bf16.msra.mxu0 0
  %2555 = vmatprep.subr.bf16.mxu0 0
  %2556 = vmatpush1.bf16.msra.mxu0 0
  %2557 = vmatprep.subr.bf16.mxu0 0
  %2558 = vmatpush1.bf16.msra.mxu0 0
  %2559 = vmatprep.subr.bf16.mxu0 0
  %2560 = vmatpush1.bf16.msra.mxu0 0
  %2561 = vmatprep.subr.bf16.mxu0 0
  %2562 = vmatpush1.bf16.msra.mxu0 0
  %2563 = vmatprep.subr.bf16.mxu0 0
  %2564 = vmatpush1.bf16.msra.mxu0 0
  %2565 = vmatprep.subr.bf16.mxu0 0
  %2566 = vmatpush1.bf16.msra.mxu0 0
  %2567 = vmatprep.subr.bf16.mxu0 0
  %2568 = vmatpush1.bf16.msra.mxu0 0
  %2569 = vmatprep.subr.bf16.mxu0 0
  %2570 = vmatpush1.bf16.msra.mxu0 0
  %2571 = vmatprep.subr.bf16.mxu0 0
  %2572 = vmatpush1.bf16.msra.mxu0 0
  %2573 = vmatprep.mubr.bf16.mxu0 0
  %2574 = vmatmul.mubr.bf16.gmra.mrb[0].mxu0 %v2539
  %v2575 = vpop.f32.mrb[0].mxu0
  %v2576 = vadd.f32 %v2524, %v2575
  %v2577 = vpop.f32.mrb[0].mxu0
  %v2578 = vpop.f32.mrb[0].mxu0
  %v2579 = vadd.f32 %v2524, %v2578
  %v2580 = vpop.f32.mrb[0].mxu0
  %2581 = vdwg.mxu0
  %v2582 = vmax.f32 %v2576, 0.0
  %v2583 = vmax.f32 %v2579, 0.0
  %v2584 = vpack.c.bf16 %v2583, %v2582
  %v2586 = vlaneseq
  %v2587 = vshrl.u32 %v2586, 7
  %v2588 = vsub.s32 0, %v2587
  %v2589 = vrot.slane %v2518, %v2588
  %v2599 = vunpack.c.l.b16 %v2509
  %v2600 = vunpack.c.l.b16 %v2510
  %v2601 = vunpack.c.l.b16 %v2511
  %v2602 = vunpack.c.l.b16 %v2512
  %v2603 = vunpack.c.l.b16 %v2513
  %v2604 = vunpack.c.l.b16 %v2514
  %v2605 = vunpack.c.l.b16 %v2515
  %v2606 = vunpack.c.l.b16 %v2516
  %v2607 = vpack.c.b16 %v2600, %v2599
  %v2608 = vpack.c.b16 %v2602, %v2601
  %v2609 = vpack.c.b16 %v2604, %v2603
  %v2610 = vpack.c.b16 %v2606, %v2605
  %v2616 = vsel %vm1292, %v2584, 0
  %2618 = vmatprep.subr.bf16.mxu0 0
  %2619 = vmatpush1.bf16.msra.mxu0 %v2607
  %2620 = vmatprep.subr.bf16.mxu0 0
  %2621 = vmatpush1.bf16.msra.mxu0 %v2608
  %2622 = vmatprep.subr.bf16.mxu0 0
  %2623 = vmatpush1.bf16.msra.mxu0 %v2609
  %2624 = vmatprep.subr.bf16.mxu0 0
  %2625 = vmatpush1.bf16.msra.mxu0 %v2610
  %2626 = vmatprep.subr.bf16.mxu0 0
  %2627 = vmatpush1.bf16.msra.mxu0 0
  %2628 = vmatprep.subr.bf16.mxu0 0
  %2629 = vmatpush1.bf16.msra.mxu0 0
  %2630 = vmatprep.subr.bf16.mxu0 0
  %2631 = vmatpush1.bf16.msra.mxu0 0
  %2632 = vmatprep.subr.bf16.mxu0 0
  %2633 = vmatpush1.bf16.msra.mxu0 0
  %2634 = vmatprep.subr.bf16.mxu0 0
  %2635 = vmatpush1.bf16.msra.mxu0 0
  %2636 = vmatprep.subr.bf16.mxu0 0
  %2637 = vmatpush1.bf16.msra.mxu0 0
  %2638 = vmatprep.subr.bf16.mxu0 0
  %2639 = vmatpush1.bf16.msra.mxu0 0
  %2640 = vmatprep.subr.bf16.mxu0 0
  %2641 = vmatpush1.bf16.msra.mxu0 0
  %2642 = vmatprep.subr.bf16.mxu0 0
  %2643 = vmatpush1.bf16.msra.mxu0 0
  %2644 = vmatprep.subr.bf16.mxu0 0
  %2645 = vmatpush1.bf16.msra.mxu0 0
  %2646 = vmatprep.subr.bf16.mxu0 0
  %2647 = vmatpush1.bf16.msra.mxu0 0
  %2648 = vmatprep.subr.bf16.mxu0 0
  %2649 = vmatpush1.bf16.msra.mxu0 0
  %2650 = vmatprep.mubr.bf16.mxu0 0
  %2651 = vmatmul.mubr.bf16.gmra.mrb[0].mxu0 %v2616
  %v2652 = vpop.f32.mrb[0].mxu0
  %v2653 = vadd.f32 %v2589, %v2652
  %v2654 = vpop.f32.mrb[0].mxu0
  %v2655 = vpop.f32.mrb[0].mxu0
  %v2656 = vadd.f32 %v2589, %v2655
  %v2657 = vpop.f32.mrb[0].mxu0
  %2658 = vdwg.mxu0
  %v2659 = vadd.f32 %v2499, %v2653
  %v2660 = vadd.f32 %v2500, %v2656
  %s2661 = scalar_lea.vmem %s12, 1
  %v2662 = vld [vmem:[%s2661] sm:$0x1]
  %s2663 = scalar_lea.vmem %s13, 1
  %v2664 = vld [vmem:[%s2663] sm:$0x1]
  %v2665 = vsel %vm76, %v2659, 0.0
  %2666 = vadd.xlane.f32.xlu0 %v2665
  %v2667 = vpop.xlane.xlu0 %2666
  %v2668 = vsel %vm76, %v2660, 0.0
  %2669 = vadd.xlane.f32.xlu0 %v2668
  %v2670 = vpop.xlane.xlu0 %2669
  %v2671 = vmul.f32 %v2667, %v1145
  %v2672 = vmul.f32 %v2670, %v1145
  %v2673 = vsub.f32 %v2659, %v2671
  %v2674 = vsub.f32 %v2660, %v2672
  %v2675 = vmul.f32 %v2673, %v2673
  %v2676 = vmul.f32 %v2674, %v2674
  %v2677 = vsel %vm76, %v2675, 0.0
  %2678 = vadd.xlane.f32.xlu0 %v2677
  %v2679 = vpop.xlane.xlu0 %2678
  %v2680 = vsel %vm76, %v2676, 0.0
  %2681 = vadd.xlane.f32.xlu0 %v2680
  %v2682 = vpop.xlane.xlu0 %2681
  %v2683 = vmul.f32 %v2679, %v1145
  %v2684 = vmul.f32 %v2682, %v1145
  %v2685 = vadd.f32 %v2683, 1e-05
  %v2686 = vadd.f32 %v2684, 1e-05
  %v2687 = vrsqrt.pop %v2685
  %v2688 = vrsqrt.pop %v2686
  %v2689 = vmul.f32 %v2673, %v2687
  %v2690 = vmul.f32 %v2674, %v2688
  %v2692 = vlaneseq
  %v2693 = vshrl.u32 %v2692, 7
  %v2694 = vsub.s32 0, %v2693
  %v2695 = vrot.slane %v2662, %v2694
  %v2697 = vmul.f32 %v2689, %v2695
  %v2698 = vmul.f32 %v2690, %v2695
  %v2700 = vlaneseq
  %v2701 = vshrl.u32 %v2700, 7
  %v2702 = vsub.s32 0, %v2701
  %v2703 = vrot.slane %v2664, %v2702
  %v2705 = vadd.f32 %v2697, %v2703
  %v2706 = vadd.f32 %v2698, %v2703
  %v2707 = vpack.c.bf16 %v2705, %v2705
  %v2708 = vpack.c.bf16 %v2706, %v2706
  %vm2709 = vcmask 257024
  %2710 = vst.msk [vmem:[%s14] sm:$0xf] %vm2709, %v2707
  %2711 = vst.msk [vmem:[%s14 + $0x4] sm:$0xf] %vm2709, %v2708
  // Predicated region
  $region58: #{inst_transformer_forward.2} parent=0 // pred_check
    _
  $region59: #{inst_transformer_forward.2} parent=0 // pred_check_branch
    %2713 = sbr.rel (0) target = $region61
  $region60: #{inst_transformer_forward.2} parent=0 // pred_region
    _
  $region61: #{inst_transformer_forward.2} parent=0 // pred_fallthru
    _
  // Predicated region
  $region62: #{inst_transformer_forward.2} parent=0 // pred_check
    _
  $region63: #{inst_transformer_forward.2} parent=0 // pred_check_branch
    %2715 = sbr.rel (0) target = $region65
  $region64: #{inst_transformer_forward.2} parent=0 // pred_region
    _
  $region65: #{inst_transformer_forward.2} parent=0 // pred_fallthru
    _

// kernel: inst_transformer_forward.3
$region0: #{inst_transformer_forward.3}
  #allocation0 [shape = 'u32[]', space=smem, size = 0x4, offset = 0x4, fixed_abs, tag = 'smem constant byte address 0x4 - core index']
  #allocation1 [shape = 'u32[144,128]{1,0:T(1,128)}', space=vmem, size = 0x12000, scoped, tag = 'internal scratch']
  %s0 = inlined_call_operand.vmem [shape: f32[2,8,40], index: 0, kind: input, shape index: {}]
  %s1 = inlined_call_operand.vmem [shape: bf16[2,8,32], index: 1, kind: input, shape index: {}]
  %s2 = inlined_call_operand.vmem [shape: f32[2,1,8], index: 2, kind: input, shape index: {}]
  %s3 = inlined_call_operand.vmem [shape: f32[1,8,32], index: 3, kind: input, shape index: {}]
  %s4 = inlined_call_operand.vmem [shape: bf16[40,32], index: 4, kind: input, shape index: {}]
  %s5 = inlined_call_operand.vmem [shape: f32[1,32], index: 5, kind: input, shape index: {}]
  %s6 = inlined_call_operand.vmem [shape: bf16[2,32,96], index: 6, kind: input, shape index: {}]
  %s7 = inlined_call_operand.vmem [shape: f32[2,1,96], index: 7, kind: input, shape index: {}]
  %s8 = inlined_call_operand.vmem [shape: bf16[2,32,32], index: 8, kind: input, shape index: {}]
  %s9 = inlined_call_operand.vmem [shape: f32[2,1,32], index: 9, kind: input, shape index: {}]
  %s10 = inlined_call_operand.vmem [shape: f32[2,1,32], index: 10, kind: input, shape index: {}]
  %s11 = inlined_call_operand.vmem [shape: f32[2,1,32], index: 11, kind: input, shape index: {}]
  %s12 = inlined_call_operand.vmem [shape: bf16[2,32,32], index: 12, kind: input, shape index: {}]
  %s13 = inlined_call_operand.vmem [shape: f32[2,1,32], index: 13, kind: input, shape index: {}]
  %s14 = inlined_call_operand.vmem [shape: bf16[2,32,64], index: 14, kind: input, shape index: {}]
  %s15 = inlined_call_operand.vmem [shape: f32[2,1,64], index: 15, kind: input, shape index: {}]
  %s16 = inlined_call_operand.vmem [shape: bf16[2,32,32], index: 16, kind: input, shape index: {}]
  %s17 = inlined_call_operand.vmem [shape: f32[2,1,32], index: 17, kind: input, shape index: {}]
  %s18 = inlined_call_operand.vmem [shape: f32[2,1,32], index: 18, kind: input, shape index: {}]
  %s19 = inlined_call_operand.vmem [shape: f32[2,1,32], index: 19, kind: input, shape index: {}]
  %s20 = inlined_call_operand.vmem [shape: bf16[2,32,64], index: 20, kind: input, shape index: {}]
  %s21 = inlined_call_operand.vmem [shape: f32[2,1,64], index: 21, kind: input, shape index: {}]
  %s22 = inlined_call_operand.vmem [shape: bf16[2,64,32], index: 22, kind: input, shape index: {}]
  %s23 = inlined_call_operand.vmem [shape: f32[2,1,32], index: 23, kind: input, shape index: {}]
  %s24 = inlined_call_operand.vmem [shape: f32[2,1,32], index: 24, kind: input, shape index: {}]
  %s25 = inlined_call_operand.vmem [shape: f32[2,1,32], index: 25, kind: input, shape index: {}]
  %s26 = inlined_call_operand.vmem [shape: bf16[32,128], index: 26, kind: input, shape index: {}]
  %s27 = inlined_call_operand.vmem [shape: f32[1,128], index: 27, kind: input, shape index: {}]
  %s28 = inlined_call_operand.hbm [shape: f32[2,8,128], index: 28, kind: output, shape index: {}]
  %s29 = sld [smem:[#allocation0]]
  $region122: #{inst_transformer_forward.3} parent=0
    _
  %s31 = ssub.s32 1, %s29
  %s32 = scalar_select 0, %s31, %s29
  $region1: #{inst_transformer_forward.3} parent=0
    #allocation2 [shape = 'u8[8192]{0}', space=vmem, size = 0x2000, scoped, tag = 'output window, operand 0, single buffered']
    #allocation3 [shape = 's32[1]{0}', space=sflag, size = 0x4, scoped, tag = 'scoped memory for inst_transformer_forward.3']
    %33 = vsyncpa [#allocation3], 0
    // Predicated region
    $region2: #{inst_transformer_forward.3} parent=1 // pred_check
      _
    $region3: #{inst_transformer_forward.3} parent=1 // pred_check_branch
      %35 = sbr.rel (0) target = $region5
    $region4: #{inst_transformer_forward.3} parent=1 // pred_region
      _
    $region5: #{inst_transformer_forward.3} parent=1 // pred_fallthru
      _
    // Predicated region
    $region6: #{inst_transformer_forward.3} parent=1 // pred_check
      _
    $region7: #{inst_transformer_forward.3} parent=1 // pred_check_branch
      %37 = sbr.rel (0) target = $region9
    $region8: #{inst_transformer_forward.3} parent=1 // pred_region
      _
    $region9: #{inst_transformer_forward.3} parent=1 // pred_fallthru
      _
    // Predicated region
    $region10: #{inst_transformer_forward.3} parent=1 // pred_check
      _
    $region11: #{inst_transformer_forward.3} parent=1 // pred_check_branch
      %39 = sbr.rel (0) target = $region13
    $region12: #{inst_transformer_forward.3} parent=1 // pred_region
      _
    $region13: #{inst_transformer_forward.3} parent=1 // pred_fallthru
      _
    // Predicated region
    $region14: #{inst_transformer_forward.3} parent=1 // pred_check
      _
    $region15: #{inst_transformer_forward.3} parent=1 // pred_check_branch
      %41 = sbr.rel (0) target = $region17
    $region16: #{inst_transformer_forward.3} parent=1 // pred_region
      _
    $region17: #{inst_transformer_forward.3} parent=1 // pred_fallthru
      _
    // Predicated region
    $region18: #{inst_transformer_forward.3} parent=1 // pred_check
      _
    $region19: #{inst_transformer_forward.3} parent=1 // pred_check_branch
      %43 = sbr.rel (0) target = $region21
    $region20: #{inst_transformer_forward.3} parent=1 // pred_region
      _
    $region21: #{inst_transformer_forward.3} parent=1 // pred_fallthru
      _
    // Predicated region
    $region22: #{inst_transformer_forward.3} parent=1 // pred_check
      _
    $region23: #{inst_transformer_forward.3} parent=1 // pred_check_branch
      %45 = sbr.rel (0) target = $region25
    $region24: #{inst_transformer_forward.3} parent=1 // pred_region
      _
    $region25: #{inst_transformer_forward.3} parent=1 // pred_fallthru
      _
    // Predicated region
    $region26: #{inst_transformer_forward.3} parent=1 // pred_check
      _
    $region27: #{inst_transformer_forward.3} parent=1 // pred_check_branch
      %47 = sbr.rel (0) target = $region29
    $region28: #{inst_transformer_forward.3} parent=1 // pred_region
      _
    $region29: #{inst_transformer_forward.3} parent=1 // pred_fallthru
      _
    // Predicated region
    $region30: #{inst_transformer_forward.3} parent=1 // pred_check
      _
    $region31: #{inst_transformer_forward.3} parent=1 // pred_check_branch
      %49 = sbr.rel (0) target = $region33
    $region32: #{inst_transformer_forward.3} parent=1 // pred_region
      _
    $region33: #{inst_transformer_forward.3} parent=1 // pred_fallthru
      _
    // Predicated region
    $region34: #{inst_transformer_forward.3} parent=1 // pred_check
      _
    $region35: #{inst_transformer_forward.3} parent=1 // pred_check_branch
      %51 = sbr.rel (0) target = $region37
    $region36: #{inst_transformer_forward.3} parent=1 // pred_region
      _
    $region37: #{inst_transformer_forward.3} parent=1 // pred_fallthru
      _
    // Predicated region
    $region38: #{inst_transformer_forward.3} parent=1 // pred_check
      _
    $region39: #{inst_transformer_forward.3} parent=1 // pred_check_branch
      %53 = sbr.rel (0) target = $region41
    $region40: #{inst_transformer_forward.3} parent=1 // pred_region
      _
    $region41: #{inst_transformer_forward.3} parent=1 // pred_fallthru
      _
    // Predicated region
    $region42: #{inst_transformer_forward.3} parent=1 // pred_check
      _
    $region43: #{inst_transformer_forward.3} parent=1 // pred_check_branch
      %55 = sbr.rel (0) target = $region45
    $region44: #{inst_transformer_forward.3} parent=1 // pred_region
      _
    $region45: #{inst_transformer_forward.3} parent=1 // pred_fallthru
      _
    // Predicated region
    $region46: #{inst_transformer_forward.3} parent=1 // pred_check
      _
    $region47: #{inst_transformer_forward.3} parent=1 // pred_check_branch
      %57 = sbr.rel (0) target = $region49
    $region48: #{inst_transformer_forward.3} parent=1 // pred_region
      _
    $region49: #{inst_transformer_forward.3} parent=1 // pred_fallthru
      _
    // Predicated region
    $region50: #{inst_transformer_forward.3} parent=1 // pred_check
      _
    $region51: #{inst_transformer_forward.3} parent=1 // pred_check_branch
      %59 = sbr.rel (0) target = $region53
    $region52: #{inst_transformer_forward.3} parent=1 // pred_region
      _
    $region53: #{inst_transformer_forward.3} parent=1 // pred_fallthru
      _
    // Predicated region
    $region54: #{inst_transformer_forward.3} parent=1 // pred_check
      _
    $region55: #{inst_transformer_forward.3} parent=1 // pred_check_branch
      %61 = sbr.rel (0) target = $region57
    $region56: #{inst_transformer_forward.3} parent=1 // pred_region
      _
    $region57: #{inst_transformer_forward.3} parent=1 // pred_fallthru
      _
    // Predicated region
    $region58: #{inst_transformer_forward.3} parent=1 // pred_check
      _
    $region59: #{inst_transformer_forward.3} parent=1 // pred_check_branch
      %63 = sbr.rel (0) target = $region61
    $region60: #{inst_transformer_forward.3} parent=1 // pred_region
      _
    $region61: #{inst_transformer_forward.3} parent=1 // pred_fallthru
      _
    // Predicated region
    $region62: #{inst_transformer_forward.3} parent=1 // pred_check
      _
    $region63: #{inst_transformer_forward.3} parent=1 // pred_check_branch
      %65 = sbr.rel (0) target = $region65
    $region64: #{inst_transformer_forward.3} parent=1 // pred_region
      _
    $region65: #{inst_transformer_forward.3} parent=1 // pred_fallthru
      _
    // Predicated region
    $region66: #{inst_transformer_forward.3} parent=1 // pred_check
      _
    $region67: #{inst_transformer_forward.3} parent=1 // pred_check_branch
      %67 = sbr.rel (0) target = $region69
    $region68: #{inst_transformer_forward.3} parent=1 // pred_region
      _
    $region69: #{inst_transformer_forward.3} parent=1 // pred_fallthru
      _
    // Predicated region
    $region70: #{inst_transformer_forward.3} parent=1 // pred_check
      _
    $region71: #{inst_transformer_forward.3} parent=1 // pred_check_branch
      %69 = sbr.rel (0) target = $region73
    $region72: #{inst_transformer_forward.3} parent=1 // pred_region
      _
    $region73: #{inst_transformer_forward.3} parent=1 // pred_fallthru
      _
    // Predicated region
    $region74: #{inst_transformer_forward.3} parent=1 // pred_check
      _
    $region75: #{inst_transformer_forward.3} parent=1 // pred_check_branch
      %71 = sbr.rel (0) target = $region77
    $region76: #{inst_transformer_forward.3} parent=1 // pred_region
      _
    $region77: #{inst_transformer_forward.3} parent=1 // pred_fallthru
      _
    // Predicated region
    $region78: #{inst_transformer_forward.3} parent=1 // pred_check
      _
    $region79: #{inst_transformer_forward.3} parent=1 // pred_check_branch
      %73 = sbr.rel (0) target = $region81
    $region80: #{inst_transformer_forward.3} parent=1 // pred_region
      _
    $region81: #{inst_transformer_forward.3} parent=1 // pred_fallthru
      _
    // Predicated region
    $region82: #{inst_transformer_forward.3} parent=1 // pred_check
      _
    $region83: #{inst_transformer_forward.3} parent=1 // pred_check_branch
      %75 = sbr.rel (0) target = $region85
    $region84: #{inst_transformer_forward.3} parent=1 // pred_region
      _
    $region85: #{inst_transformer_forward.3} parent=1 // pred_fallthru
      _
    // Predicated region
    $region86: #{inst_transformer_forward.3} parent=1 // pred_check
      _
    $region87: #{inst_transformer_forward.3} parent=1 // pred_check_branch
      %77 = sbr.rel (0) target = $region89
    $region88: #{inst_transformer_forward.3} parent=1 // pred_region
      _
    $region89: #{inst_transformer_forward.3} parent=1 // pred_fallthru
      _
    // Predicated region
    $region90: #{inst_transformer_forward.3} parent=1 // pred_check
      _
    $region91: #{inst_transformer_forward.3} parent=1 // pred_check_branch
      %79 = sbr.rel (0) target = $region93
    $region92: #{inst_transformer_forward.3} parent=1 // pred_region
      _
    $region93: #{inst_transformer_forward.3} parent=1 // pred_fallthru
      _
    // Predicated region
    $region94: #{inst_transformer_forward.3} parent=1 // pred_check
      _
    $region95: #{inst_transformer_forward.3} parent=1 // pred_check_branch
      %81 = sbr.rel (0) target = $region97
    $region96: #{inst_transformer_forward.3} parent=1 // pred_region
      _
    $region97: #{inst_transformer_forward.3} parent=1 // pred_fallthru
      _
    // Predicated region
    $region98: #{inst_transformer_forward.3} parent=1 // pred_check
      _
    $region99: #{inst_transformer_forward.3} parent=1 // pred_check_branch
      %83 = sbr.rel (0) target = $region101
    $region100: #{inst_transformer_forward.3} parent=1 // pred_region
      _
    $region101: #{inst_transformer_forward.3} parent=1 // pred_fallthru
      _
    // Predicated region
    $region102: #{inst_transformer_forward.3} parent=1 // pred_check
      _
    $region103: #{inst_transformer_forward.3} parent=1 // pred_check_branch
      %85 = sbr.rel (0) target = $region105
    $region104: #{inst_transformer_forward.3} parent=1 // pred_region
      _
    $region105: #{inst_transformer_forward.3} parent=1 // pred_fallthru
      _
    // Predicated region
    $region106: #{inst_transformer_forward.3} parent=1 // pred_check
      _
    $region107: #{inst_transformer_forward.3} parent=1 // pred_check_branch
      %87 = sbr.rel (0) target = $region109
    $region108: #{inst_transformer_forward.3} parent=1 // pred_region
      _
    $region109: #{inst_transformer_forward.3} parent=1 // pred_fallthru
      _
    // Predicated region
    $region110: #{inst_transformer_forward.3} parent=1 // pred_check
      _
    $region111: #{inst_transformer_forward.3} parent=1 // pred_check_branch
      %89 = sbr.rel (0) target = $region113
    $region112: #{inst_transformer_forward.3} parent=1 // pred_region
      _
    $region113: #{inst_transformer_forward.3} parent=1 // pred_fallthru
      _
    %v91 = vld [vmem:[%s0] sm:$0xff]
    %v92 = vld [vmem:[%s0 + $0x8] sm:$0xff]
    %v93 = vld [vmem:[%s1] sm:$0xf]
    %v94 = vld [vmem:[%s1 + $0x4] sm:$0xf]
    %v95 = vld [vmem:[%s2] sm:$0x1]
    %v96 = vld [vmem:[%s2 + $0x1] sm:$0x1]
    %vm97 = vcmask 326656
    %v98 = vsel %vm97, %v91, 0.0
    %99 = vadd.xlane.f32.xlu0 %v98
    %v100 = vpop.xlane.xlu0 %99
    %v101 = vsel %vm97, %v92, 0.0
    %102 = vadd.xlane.f32.xlu0 %v101
    %v103 = vpop.xlane.xlu0 %102
    %v104 = vrcp.pop 40.0
    %v105 = vmul.f32 %v100, %v104
    %v106 = vmul.f32 %v103, %v104
    %vm107 = vcmp.ne.f32.partialorder %v105, 0.0
    %vm108 = vcmp.ne.f32.partialorder %v106, 0.0
    %v109 = vsel %vm107, 0.0, -1e+09
    %v110 = vsel %vm108, 0.0, -1e+09
    %v111 = vlaneseq
    %v112 = vshrl.u32 %v111, 7
    %v113 = vlaneseq
    %v114 = vand.u32 %v113, 127
    %vm115 = vcmp.le.s32.totalorder %v114, %v112
    %v116 = vsel %vm115, 0.0, -1e+09
    %v118 = vlaneseq
    %v119 = vshrl.u32 %v118, 7
    %v120 = vsub.s32 %v114, %v119
    %v121 = vrot.slane %v109, %v120
    %vm122 = vcmask 1042434
    %v123 = vsel %vm122, %v121, %v121
    %vm124 = vcmask 1043459
    %v125 = vsel %vm124, %v121, %v123
    %vm126 = vcmask 1044484
    %v127 = vsel %vm126, %v121, %v125
    %vm128 = vcmask 1045509
    %v129 = vsel %vm128, %v121, %v127
    %vm130 = vcmask 1046534
    %v131 = vsel %vm130, %v121, %v129
    %vm132 = vcmask 1047559
    %v133 = vsel %vm132, %v121, %v131
    %v135 = vadd.f32 %v116, %v133
    %v137 = vlaneseq
    %v138 = vshrl.u32 %v137, 7
    %v139 = vsub.s32 %v114, %v138
    %v140 = vrot.slane %v110, %v139
    %v141 = vsel %vm122, %v140, %v140
    %v142 = vsel %vm124, %v140, %v141
    %v143 = vsel %vm126, %v140, %v142
    %v144 = vsel %vm128, %v140, %v143
    %v145 = vsel %vm130, %v140, %v144
    %v146 = vsel %vm132, %v140, %v145
    %v148 = vadd.f32 %v116, %v146
    %v149 = vpack.c.bf16 %v92, %v91
    %v150 = vld [vmem:[%s4] sm:$0xf]
    %v151 = vld [vmem:[%s4 + $0x4] sm:$0xf]
    %v152 = vld [vmem:[%s4 + $0x8] sm:$0xf]
    %v153 = vld [vmem:[%s4 + $0xc] sm:$0xf]
    %v154 = vld [vmem:[%s4 + $0x10] sm:$0xf]
    %v155 = vld [vmem:[%s5] sm:$0x1]
    %v157 = vlaneseq
    %v158 = vshrl.u32 %v157, 7
    %v159 = vsub.s32 0, %v158
    %v160 = vrot.slane %v155, %v159
    %v167 = vunpack.c.l.b16 %v150
    %v168 = vunpack.c.l.b16 %v151
    %v169 = vunpack.c.l.b16 %v152
    %v170 = vunpack.c.l.b16 %v153
    %v171 = vunpack.c.l.b16 %v154
    %v172 = vpack.c.b16 %v168, %v167
    %v173 = vpack.c.b16 %v170, %v169
    %v174 = vpack.c.b16 %v171, %v171
    %v178 = vsel %vm97, %v149, 0
    %vm180 = vcmask 1043456
    %v182 = vsel %vm180, %v174, 0
    %184 = vmatprep.subr.bf16.mxu0 0
    %185 = vmatpush1.bf16.msra.mxu0 %v172
    %186 = vmatprep.subr.bf16.mxu0 0
    %187 = vmatpush1.bf16.msra.mxu0 %v173
    %188 = vmatprep.subr.bf16.mxu0 0
    %189 = vmatpush1.bf16.msra.mxu0 %v182
    %190 = vmatprep.subr.bf16.mxu0 0
    %191 = vmatpush1.bf16.msra.mxu0 0
    %192 = vmatprep.subr.bf16.mxu0 0
    %193 = vmatpush1.bf16.msra.mxu0 0
    %194 = vmatprep.subr.bf16.mxu0 0
    %195 = vmatpush1.bf16.msra.mxu0 0
    %196 = vmatprep.subr.bf16.mxu0 0
    %197 = vmatpush1.bf16.msra.mxu0 0
    %198 = vmatprep.subr.bf16.mxu0 0
    %199 = vmatpush1.bf16.msra.mxu0 0
    %200 = vmatprep.subr.bf16.mxu0 0
    %201 = vmatpush1.bf16.msra.mxu0 0
    %202 = vmatprep.subr.bf16.mxu0 0
    %203 = vmatpush1.bf16.msra.mxu0 0
    %204 = vmatprep.subr.bf16.mxu0 0
    %205 = vmatpush1.bf16.msra.mxu0 0
    %206 = vmatprep.subr.bf16.mxu0 0
    %207 = vmatpush1.bf16.msra.mxu0 0
    %208 = vmatprep.subr.bf16.mxu0 0
    %209 = vmatpush1.bf16.msra.mxu0 0
    %210 = vmatprep.subr.bf16.mxu0 0
    %211 = vmatpush1.bf16.msra.mxu0 0
    %212 = vmatprep.subr.bf16.mxu0 0
    %213 = vmatpush1.bf16.msra.mxu0 0
    %214 = vmatprep.subr.bf16.mxu0 0
    %215 = vmatpush1.bf16.msra.mxu0 0
    %216 = vmatprep.mubr.bf16.mxu0 0
    %217 = vmatmul.mubr.bf16.gmra.mrb[0].mxu0 %v178
    %v218 = vpop.f32.mrb[0].mxu0
    %v219 = vadd.f32 %v160, %v218
    %v220 = vpop.f32.mrb[0].mxu0
    %v221 = vpop.f32.mrb[0].mxu0
    %v222 = vadd.f32 %v160, %v221
    %v223 = vpop.f32.mrb[0].mxu0
    %224 = vdwg.mxu0
    %v225 = vld [vmem:[%s3] sm:$0xff]
    %v226 = vadd.f32 %v219, %v225
    %v227 = vadd.f32 %v222, %v225
    %v228 = vpack.c.bf16 %v227, %v226
    %v229 = vld [vmem:[%s6] sm:$0xf]
    %v230 = vld [vmem:[%s6 + $0x4] sm:$0xf]
    %v231 = vld [vmem:[%s6 + $0x8] sm:$0xf]
    %v232 = vld [vmem:[%s6 + $0xc] sm:$0xf]
    %v233 = vld [vmem:[%s7] sm:$0x1]
    %v235 = vlaneseq
    %v236 = vshrl.u32 %v235, 7
    %v237 = vsub.s32 0, %v236
    %v238 = vrot.slane %v233, %v237
    %v244 = vunpack.c.l.b16 %v229
    %v245 = vunpack.c.l.b16 %v230
    %v246 = vunpack.c.l.b16 %v231
    %v247 = vunpack.c.l.b16 %v232
    %v248 = vpack.c.b16 %v245, %v244
    %v249 = vpack.c.b16 %v247, %v246
    %vm252 = vcmask 261120
    %v254 = vsel %vm252, %v228, 0
    %256 = vmatprep.subr.bf16.mxu0 0
    %257 = vmatpush1.bf16.msra.mxu0 %v248
    %258 = vmatprep.subr.bf16.mxu0 0
    %259 = vmatpush1.bf16.msra.mxu0 %v249
    %260 = vmatprep.subr.bf16.mxu0 0
    %261 = vmatpush1.bf16.msra.mxu0 0
    %262 = vmatprep.subr.bf16.mxu0 0
    %263 = vmatpush1.bf16.msra.mxu0 0
    %264 = vmatprep.subr.bf16.mxu0 0
    %265 = vmatpush1.bf16.msra.mxu0 0
    %266 = vmatprep.subr.bf16.mxu0 0
    %267 = vmatpush1.bf16.msra.mxu0 0
    %268 = vmatprep.subr.bf16.mxu0 0
    %269 = vmatpush1.bf16.msra.mxu0 0
    %270 = vmatprep.subr.bf16.mxu0 0
    %271 = vmatpush1.bf16.msra.mxu0 0
    %272 = vmatprep.subr.bf16.mxu0 0
    %273 = vmatpush1.bf16.msra.mxu0 0
    %274 = vmatprep.subr.bf16.mxu0 0
    %275 = vmatpush1.bf16.msra.mxu0 0
    %276 = vmatprep.subr.bf16.mxu0 0
    %277 = vmatpush1.bf16.msra.mxu0 0
    %278 = vmatprep.subr.bf16.mxu0 0
    %279 = vmatpush1.bf16.msra.mxu0 0
    %280 = vmatprep.subr.bf16.mxu0 0
    %281 = vmatpush1.bf16.msra.mxu0 0
    %282 = vmatprep.subr.bf16.mxu0 0
    %283 = vmatpush1.bf16.msra.mxu0 0
    %284 = vmatprep.subr.bf16.mxu0 0
    %285 = vmatpush1.bf16.msra.mxu0 0
    %286 = vmatprep.subr.bf16.mxu0 0
    %287 = vmatpush1.bf16.msra.mxu0 0
    %288 = vmatprep.mubr.bf16.mxu0 0
    %289 = vmatmul.mubr.bf16.gmra.mrb[0].mxu0 %v254
    %v290 = vpop.f32.mrb[0].mxu0
    %v291 = vadd.f32 %v238, %v290
    %v292 = vpop.f32.mrb[0].mxu0
    %v293 = vpop.f32.mrb[0].mxu0
    %v294 = vadd.f32 %v238, %v293
    %v295 = vpop.f32.mrb[0].mxu0
    %296 = vdwg.mxu0
    %v297 = vld [vmem:[%s8] sm:$0xf]
    %v298 = vld [vmem:[%s8 + $0x4] sm:$0xf]
    %v299 = vld [vmem:[%s8 + $0x8] sm:$0xf]
    %v300 = vld [vmem:[%s8 + $0xc] sm:$0xf]
    %v301 = vld [vmem:[%s9] sm:$0x1]
    %v302 = vpack.c.bf16 %v291, %v291
    %304 = vrot.lane.b32.xlu0 %v302, 96
    %v305 = vpop.permute.xlu0 %304
    %vm306 = vcmask 64512
    %v308 = vsel %vm306, %v302, 0
    %v311 = vsel %vm306, %v305, 0
    %313 = vmatprep.subr.bf16.mxu0 0
    %314 = vmatpush1.bf16.xpose.msra.mxu0 %v311
    %315 = vmatprep.subr.bf16.mxu0 0
    %316 = vmatpush1.bf16.xpose.msra.mxu0 0
    %317 = vmatprep.subr.bf16.mxu0 0
    %318 = vmatpush1.bf16.xpose.msra.mxu0 0
    %319 = vmatprep.subr.bf16.mxu0 0
    %320 = vmatpush1.bf16.xpose.msra.mxu0 0
    %321 = vmatprep.subr.bf16.mxu0 0
    %322 = vmatpush1.bf16.xpose.msra.mxu0 0
    %323 = vmatprep.subr.bf16.mxu0 0
    %324 = vmatpush1.bf16.xpose.msra.mxu0 0
    %325 = vmatprep.subr.bf16.mxu0 0
    %326 = vmatpush1.bf16.xpose.msra.mxu0 0
    %327 = vmatprep.subr.bf16.mxu0 0
    %328 = vmatpush1.bf16.xpose.msra.mxu0 0
    %329 = vmatprep.subr.bf16.mxu0 0
    %330 = vmatpush1.bf16.xpose.msra.mxu0 0
    %331 = vmatprep.subr.bf16.mxu0 0
    %332 = vmatpush1.bf16.xpose.msra.mxu0 0
    %333 = vmatprep.subr.bf16.mxu0 0
    %334 = vmatpush1.bf16.xpose.msra.mxu0 0
    %335 = vmatprep.subr.bf16.mxu0 0
    %336 = vmatpush1.bf16.xpose.msra.mxu0 0
    %337 = vmatprep.subr.bf16.mxu0 0
    %338 = vmatpush1.bf16.xpose.msra.mxu0 0
    %339 = vmatprep.subr.bf16.mxu0 0
    %340 = vmatpush1.bf16.xpose.msra.mxu0 0
    %341 = vmatprep.subr.bf16.mxu0 0
    %342 = vmatpush1.bf16.xpose.msra.mxu0 0
    %343 = vmatprep.subr.bf16.mxu0 0
    %344 = vmatpush1.bf16.xpose.msra.mxu0 0
    %345 = vmatprep.mubr.bf16.mxu0 0
    %346 = vmatmul.mubr.bf16.gmra.mrb[0].mxu0 %v308
    %v347 = vpop.f32.mrb[0].mxu0
    %v348 = vadd.f32 0.0, %v347
    %v349 = vpop.f32.mrb[0].mxu0
    %v350 = vpop.f32.mrb[0].mxu0
    %v351 = vpop.f32.mrb[0].mxu0
    %352 = vdwg.mxu0
    %v353 = vmul.f32 %v348, 0.35355338
    %v354 = vadd.f32 %v353, %v135
    %355 = vrot.lane.b32.xlu0 %v302, 120
    %v356 = vpop.permute.xlu0 %355
    %357 = vrot.lane.b32.xlu0 %v302, 88
    %v358 = vpop.permute.xlu0 %357
    %v360 = vsel %vm306, %v356, 0
    %v363 = vsel %vm306, %v358, 0
    %365 = vmatprep.subr.bf16.mxu0 0
    %366 = vmatpush1.bf16.xpose.msra.mxu0 %v363
    %367 = vmatprep.subr.bf16.mxu0 0
    %368 = vmatpush1.bf16.xpose.msra.mxu0 0
    %369 = vmatprep.subr.bf16.mxu0 0
    %370 = vmatpush1.bf16.xpose.msra.mxu0 0
    %371 = vmatprep.subr.bf16.mxu0 0
    %372 = vmatpush1.bf16.xpose.msra.mxu0 0
    %373 = vmatprep.subr.bf16.mxu0 0
    %374 = vmatpush1.bf16.xpose.msra.mxu0 0
    %375 = vmatprep.subr.bf16.mxu0 0
    %376 = vmatpush1.bf16.xpose.msra.mxu0 0
    %377 = vmatprep.subr.bf16.mxu0 0
    %378 = vmatpush1.bf16.xpose.msra.mxu0 0
    %379 = vmatprep.subr.bf16.mxu0 0
    %380 = vmatpush1.bf16.xpose.msra.mxu0 0
    %381 = vmatprep.subr.bf16.mxu0 0
    %382 = vmatpush1.bf16.xpose.msra.mxu0 0
    %383 = vmatprep.subr.bf16.mxu0 0
    %384 = vmatpush1.bf16.xpose.msra.mxu0 0
    %385 = vmatprep.subr.bf16.mxu0 0
    %386 = vmatpush1.bf16.xpose.msra.mxu0 0
    %387 = vmatprep.subr.bf16.mxu0 0
    %388 = vmatpush1.bf16.xpose.msra.mxu0 0
    %389 = vmatprep.subr.bf16.mxu0 0
    %390 = vmatpush1.bf16.xpose.msra.mxu0 0
    %391 = vmatprep.subr.bf16.mxu0 0
    %392 = vmatpush1.bf16.xpose.msra.mxu0 0
    %393 = vmatprep.subr.bf16.mxu0 0
    %394 = vmatpush1.bf16.xpose.msra.mxu0 0
    %395 = vmatprep.subr.bf16.mxu0 0
    %396 = vmatpush1.bf16.xpose.msra.mxu0 0
    %397 = vmatprep.mubr.bf16.mxu0 0
    %398 = vmatmul.mubr.bf16.gmra.mrb[0].mxu0 %v360
    %v399 = vpop.f32.mrb[0].mxu0
    %v400 = vadd.f32 0.0, %v399
    %v401 = vpop.f32.mrb[0].mxu0
    %v402 = vpop.f32.mrb[0].mxu0
    %v403 = vpop.f32.mrb[0].mxu0
    %404 = vdwg.mxu0
    %v405 = vmul.f32 %v400, 0.35355338
    %v406 = vadd.f32 %v405, %v135
    %407 = vrot.lane.b32.xlu0 %v302, 112
    %v408 = vpop.permute.xlu0 %407
    %409 = vrot.lane.b32.xlu0 %v302, 80
    %v410 = vpop.permute.xlu0 %409
    %v412 = vsel %vm306, %v408, 0
    %v415 = vsel %vm306, %v410, 0
    %417 = vmatprep.subr.bf16.mxu0 0
    %418 = vmatpush1.bf16.xpose.msra.mxu0 %v415
    %419 = vmatprep.subr.bf16.mxu0 0
    %420 = vmatpush1.bf16.xpose.msra.mxu0 0
    %421 = vmatprep.subr.bf16.mxu0 0
    %422 = vmatpush1.bf16.xpose.msra.mxu0 0
    %423 = vmatprep.subr.bf16.mxu0 0
    %424 = vmatpush1.bf16.xpose.msra.mxu0 0
    %425 = vmatprep.subr.bf16.mxu0 0
    %426 = vmatpush1.bf16.xpose.msra.mxu0 0
    %427 = vmatprep.subr.bf16.mxu0 0
    %428 = vmatpush1.bf16.xpose.msra.mxu0 0
    %429 = vmatprep.subr.bf16.mxu0 0
    %430 = vmatpush1.bf16.xpose.msra.mxu0 0
    %431 = vmatprep.subr.bf16.mxu0 0
    %432 = vmatpush1.bf16.xpose.msra.mxu0 0
    %433 = vmatprep.subr.bf16.mxu0 0
    %434 = vmatpush1.bf16.xpose.msra.mxu0 0
    %435 = vmatprep.subr.bf16.mxu0 0
    %436 = vmatpush1.bf16.xpose.msra.mxu0 0
    %437 = vmatprep.subr.bf16.mxu0 0
    %438 = vmatpush1.bf16.xpose.msra.mxu0 0
    %439 = vmatprep.subr.bf16.mxu0 0
    %440 = vmatpush1.bf16.xpose.msra.mxu0 0
    %441 = vmatprep.subr.bf16.mxu0 0
    %442 = vmatpush1.bf16.xpose.msra.mxu0 0
    %443 = vmatprep.subr.bf16.mxu0 0
    %444 = vmatpush1.bf16.xpose.msra.mxu0 0
    %445 = vmatprep.subr.bf16.mxu0 0
    %446 = vmatpush1.bf16.xpose.msra.mxu0 0
    %447 = vmatprep.subr.bf16.mxu0 0
    %448 = vmatpush1.bf16.xpose.msra.mxu0 0
    %449 = vmatprep.mubr.bf16.mxu0 0
    %450 = vmatmul.mubr.bf16.gmra.mrb[0].mxu0 %v412
    %v451 = vpop.f32.mrb[0].mxu0
    %v452 = vadd.f32 0.0, %v451
    %v453 = vpop.f32.mrb[0].mxu0
    %v454 = vpop.f32.mrb[0].mxu0
    %v455 = vpop.f32.mrb[0].mxu0
    %456 = vdwg.mxu0
    %v457 = vmul.f32 %v452, 0.35355338
    %v458 = vadd.f32 %v457, %v135
    %459 = vrot.lane.b32.xlu0 %v302, 104
    %v460 = vpop.permute.xlu0 %459
    %461 = vrot.lane.b32.xlu0 %v302, 72
    %v462 = vpop.permute.xlu0 %461
    %v464 = vsel %vm306, %v460, 0
    %v467 = vsel %vm306, %v462, 0
    %469 = vmatprep.subr.bf16.mxu0 0
    %470 = vmatpush1.bf16.xpose.msra.mxu0 %v467
    %471 = vmatprep.subr.bf16.mxu0 0
    %472 = vmatpush1.bf16.xpose.msra.mxu0 0
    %473 = vmatprep.subr.bf16.mxu0 0
    %474 = vmatpush1.bf16.xpose.msra.mxu0 0
    %475 = vmatprep.subr.bf16.mxu0 0
    %476 = vmatpush1.bf16.xpose.msra.mxu0 0
    %477 = vmatprep.subr.bf16.mxu0 0
    %478 = vmatpush1.bf16.xpose.msra.mxu0 0
    %479 = vmatprep.subr.bf16.mxu0 0
    %480 = vmatpush1.bf16.xpose.msra.mxu0 0
    %481 = vmatprep.subr.bf16.mxu0 0
    %482 = vmatpush1.bf16.xpose.msra.mxu0 0
    %483 = vmatprep.subr.bf16.mxu0 0
    %484 = vmatpush1.bf16.xpose.msra.mxu0 0
    %485 = vmatprep.subr.bf16.mxu0 0
    %486 = vmatpush1.bf16.xpose.msra.mxu0 0
    %487 = vmatprep.subr.bf16.mxu0 0
    %488 = vmatpush1.bf16.xpose.msra.mxu0 0
    %489 = vmatprep.subr.bf16.mxu0 0
    %490 = vmatpush1.bf16.xpose.msra.mxu0 0
    %491 = vmatprep.subr.bf16.mxu0 0
    %492 = vmatpush1.bf16.xpose.msra.mxu0 0
    %493 = vmatprep.subr.bf16.mxu0 0
    %494 = vmatpush1.bf16.xpose.msra.mxu0 0
    %495 = vmatprep.subr.bf16.mxu0 0
    %496 = vmatpush1.bf16.xpose.msra.mxu0 0
    %497 = vmatprep.subr.bf16.mxu0 0
    %498 = vmatpush1.bf16.xpose.msra.mxu0 0
    %499 = vmatprep.subr.bf16.mxu0 0
    %500 = vmatpush1.bf16.xpose.msra.mxu0 0
    %501 = vmatprep.mubr.bf16.mxu0 0
    %502 = vmatmul.mubr.bf16.gmra.mrb[0].mxu0 %v464
    %v503 = vpop.f32.mrb[0].mxu0
    %v504 = vadd.f32 0.0, %v503
    %v505 = vpop.f32.mrb[0].mxu0
    %v506 = vpop.f32.mrb[0].mxu0
    %v507 = vpop.f32.mrb[0].mxu0
    %508 = vdwg.mxu0
    %v509 = vmul.f32 %v504, 0.35355338
    %v510 = vadd.f32 %v509, %v135
    %v511 = vpack.c.bf16 %v294, %v294
    %513 = vrot.lane.b32.xlu0 %v511, 96
    %v514 = vpop.permute.xlu0 %513
    %v516 = vsel %vm306, %v511, 0
    %v519 = vsel %vm306, %v514, 0
    %521 = vmatprep.subr.bf16.mxu0 0
    %522 = vmatpush1.bf16.xpose.msra.mxu0 %v519
    %523 = vmatprep.subr.bf16.mxu0 0
    %524 = vmatpush1.bf16.xpose.msra.mxu0 0
    %525 = vmatprep.subr.bf16.mxu0 0
    %526 = vmatpush1.bf16.xpose.msra.mxu0 0
    %527 = vmatprep.subr.bf16.mxu0 0
    %528 = vmatpush1.bf16.xpose.msra.mxu0 0
    %529 = vmatprep.subr.bf16.mxu0 0
    %530 = vmatpush1.bf16.xpose.msra.mxu0 0
    %531 = vmatprep.subr.bf16.mxu0 0
    %532 = vmatpush1.bf16.xpose.msra.mxu0 0
    %533 = vmatprep.subr.bf16.mxu0 0
    %534 = vmatpush1.bf16.xpose.msra.mxu0 0
    %535 = vmatprep.subr.bf16.mxu0 0
    %536 = vmatpush1.bf16.xpose.msra.mxu0 0
    %537 = vmatprep.subr.bf16.mxu0 0
    %538 = vmatpush1.bf16.xpose.msra.mxu0 0
    %539 = vmatprep.subr.bf16.mxu0 0
    %540 = vmatpush1.bf16.xpose.msra.mxu0 0
    %541 = vmatprep.subr.bf16.mxu0 0
    %542 = vmatpush1.bf16.xpose.msra.mxu0 0
    %543 = vmatprep.subr.bf16.mxu0 0
    %544 = vmatpush1.bf16.xpose.msra.mxu0 0
    %545 = vmatprep.subr.bf16.mxu0 0
    %546 = vmatpush1.bf16.xpose.msra.mxu0 0
    %547 = vmatprep.subr.bf16.mxu0 0
    %548 = vmatpush1.bf16.xpose.msra.mxu0 0
    %549 = vmatprep.subr.bf16.mxu0 0
    %550 = vmatpush1.bf16.xpose.msra.mxu0 0
    %551 = vmatprep.subr.bf16.mxu0 0
    %552 = vmatpush1.bf16.xpose.msra.mxu0 0
    %553 = vmatprep.mubr.bf16.mxu0 0
    %554 = vmatmul.mubr.bf16.gmra.mrb[0].mxu0 %v516
    %v555 = vpop.f32.mrb[0].mxu0
    %v556 = vadd.f32 0.0, %v555
    %v557 = vpop.f32.mrb[0].mxu0
    %v558 = vpop.f32.mrb[0].mxu0
    %v559 = vpop.f32.mrb[0].mxu0
    %560 = vdwg.mxu0
    %v561 = vmul.f32 %v556, 0.35355338
    %v562 = vadd.f32 %v561, %v148
    %563 = vrot.lane.b32.xlu0 %v511, 120
    %v564 = vpop.permute.xlu0 %563
    %565 = vrot.lane.b32.xlu0 %v511, 88
    %v566 = vpop.permute.xlu0 %565
    %v568 = vsel %vm306, %v564, 0
    %v571 = vsel %vm306, %v566, 0
    %573 = vmatprep.subr.bf16.mxu0 0
    %574 = vmatpush1.bf16.xpose.msra.mxu0 %v571
    %575 = vmatprep.subr.bf16.mxu0 0
    %576 = vmatpush1.bf16.xpose.msra.mxu0 0
    %577 = vmatprep.subr.bf16.mxu0 0
    %578 = vmatpush1.bf16.xpose.msra.mxu0 0
    %579 = vmatprep.subr.bf16.mxu0 0
    %580 = vmatpush1.bf16.xpose.msra.mxu0 0
    %581 = vmatprep.subr.bf16.mxu0 0
    %582 = vmatpush1.bf16.xpose.msra.mxu0 0
    %583 = vmatprep.subr.bf16.mxu0 0
    %584 = vmatpush1.bf16.xpose.msra.mxu0 0
    %585 = vmatprep.subr.bf16.mxu0 0
    %586 = vmatpush1.bf16.xpose.msra.mxu0 0
    %587 = vmatprep.subr.bf16.mxu0 0
    %588 = vmatpush1.bf16.xpose.msra.mxu0 0
    %589 = vmatprep.subr.bf16.mxu0 0
    %590 = vmatpush1.bf16.xpose.msra.mxu0 0
    %591 = vmatprep.subr.bf16.mxu0 0
    %592 = vmatpush1.bf16.xpose.msra.mxu0 0
    %593 = vmatprep.subr.bf16.mxu0 0
    %594 = vmatpush1.bf16.xpose.msra.mxu0 0
    %595 = vmatprep.subr.bf16.mxu0 0
    %596 = vmatpush1.bf16.xpose.msra.mxu0 0
    %597 = vmatprep.subr.bf16.mxu0 0
    %598 = vmatpush1.bf16.xpose.msra.mxu0 0
    %599 = vmatprep.subr.bf16.mxu0 0
    %600 = vmatpush1.bf16.xpose.msra.mxu0 0
    %601 = vmatprep.subr.bf16.mxu0 0
    %602 = vmatpush1.bf16.xpose.msra.mxu0 0
    %603 = vmatprep.subr.bf16.mxu0 0
    %604 = vmatpush1.bf16.xpose.msra.mxu0 0
    %605 = vmatprep.mubr.bf16.mxu0 0
    %606 = vmatmul.mubr.bf16.gmra.mrb[0].mxu0 %v568
    %v607 = vpop.f32.mrb[0].mxu0
    %v608 = vadd.f32 0.0, %v607
    %v609 = vpop.f32.mrb[0].mxu0
    %v610 = vpop.f32.mrb[0].mxu0
    %v611 = vpop.f32.mrb[0].mxu0
    %612 = vdwg.mxu0
    %v613 = vmul.f32 %v608, 0.35355338
    %v614 = vadd.f32 %v613, %v148
    %615 = vrot.lane.b32.xlu0 %v511, 112
    %v616 = vpop.permute.xlu0 %615
    %617 = vrot.lane.b32.xlu0 %v511, 80
    %v618 = vpop.permute.xlu0 %617
    %v620 = vsel %vm306, %v616, 0
    %v623 = vsel %vm306, %v618, 0
    %625 = vmatprep.subr.bf16.mxu0 0
    %626 = vmatpush1.bf16.xpose.msra.mxu0 %v623
    %627 = vmatprep.subr.bf16.mxu0 0
    %628 = vmatpush1.bf16.xpose.msra.mxu0 0
    %629 = vmatprep.subr.bf16.mxu0 0
    %630 = vmatpush1.bf16.xpose.msra.mxu0 0
    %631 = vmatprep.subr.bf16.mxu0 0
    %632 = vmatpush1.bf16.xpose.msra.mxu0 0
    %633 = vmatprep.subr.bf16.mxu0 0
    %634 = vmatpush1.bf16.xpose.msra.mxu0 0
    %635 = vmatprep.subr.bf16.mxu0 0
    %636 = vmatpush1.bf16.xpose.msra.mxu0 0
    %637 = vmatprep.subr.bf16.mxu0 0
    %638 = vmatpush1.bf16.xpose.msra.mxu0 0
    %639 = vmatprep.subr.bf16.mxu0 0
    %640 = vmatpush1.bf16.xpose.msra.mxu0 0
    %641 = vmatprep.subr.bf16.mxu0 0
    %642 = vmatpush1.bf16.xpose.msra.mxu0 0
    %643 = vmatprep.subr.bf16.mxu0 0
    %644 = vmatpush1.bf16.xpose.msra.mxu0 0
    %645 = vmatprep.subr.bf16.mxu0 0
    %646 = vmatpush1.bf16.xpose.msra.mxu0 0
    %647 = vmatprep.subr.bf16.mxu0 0
    %648 = vmatpush1.bf16.xpose.msra.mxu0 0
    %649 = vmatprep.subr.bf16.mxu0 0
    %650 = vmatpush1.bf16.xpose.msra.mxu0 0
    %651 = vmatprep.subr.bf16.mxu0 0
    %652 = vmatpush1.bf16.xpose.msra.mxu0 0
    %653 = vmatprep.subr.bf16.mxu0 0
    %654 = vmatpush1.bf16.xpose.msra.mxu0 0
    %655 = vmatprep.subr.bf16.mxu0 0
    %656 = vmatpush1.bf16.xpose.msra.mxu0 0
    %657 = vmatprep.mubr.bf16.mxu0 0
    %658 = vmatmul.mubr.bf16.gmra.mrb[0].mxu0 %v620
    %v659 = vpop.f32.mrb[0].mxu0
    %v660 = vadd.f32 0.0, %v659
    %v661 = vpop.f32.mrb[0].mxu0
    %v662 = vpop.f32.mrb[0].mxu0
    %v663 = vpop.f32.mrb[0].mxu0
    %664 = vdwg.mxu0
    %v665 = vmul.f32 %v660, 0.35355338
    %v666 = vadd.f32 %v665, %v148
    %667 = vrot.lane.b32.xlu0 %v511, 104
    %v668 = vpop.permute.xlu0 %667
    %669 = vrot.lane.b32.xlu0 %v511, 72
    %v670 = vpop.permute.xlu0 %669
    %v672 = vsel %vm306, %v668, 0
    %v675 = vsel %vm306, %v670, 0
    %677 = vmatprep.subr.bf16.mxu0 0
    %678 = vmatpush1.bf16.xpose.msra.mxu0 %v675
    %679 = vmatprep.subr.bf16.mxu0 0
    %680 = vmatpush1.bf16.xpose.msra.mxu0 0
    %681 = vmatprep.subr.bf16.mxu0 0
    %682 = vmatpush1.bf16.xpose.msra.mxu0 0
    %683 = vmatprep.subr.bf16.mxu0 0
    %684 = vmatpush1.bf16.xpose.msra.mxu0 0
    %685 = vmatprep.subr.bf16.mxu0 0
    %686 = vmatpush1.bf16.xpose.msra.mxu0 0
    %687 = vmatprep.subr.bf16.mxu0 0
    %688 = vmatpush1.bf16.xpose.msra.mxu0 0
    %689 = vmatprep.subr.bf16.mxu0 0
    %690 = vmatpush1.bf16.xpose.msra.mxu0 0
    %691 = vmatprep.subr.bf16.mxu0 0
    %692 = vmatpush1.bf16.xpose.msra.mxu0 0
    %693 = vmatprep.subr.bf16.mxu0 0
    %694 = vmatpush1.bf16.xpose.msra.mxu0 0
    %695 = vmatprep.subr.bf16.mxu0 0
    %696 = vmatpush1.bf16.xpose.msra.mxu0 0
    %697 = vmatprep.subr.bf16.mxu0 0
    %698 = vmatpush1.bf16.xpose.msra.mxu0 0
    %699 = vmatprep.subr.bf16.mxu0 0
    %700 = vmatpush1.bf16.xpose.msra.mxu0 0
    %701 = vmatprep.subr.bf16.mxu0 0
    %702 = vmatpush1.bf16.xpose.msra.mxu0 0
    %703 = vmatprep.subr.bf16.mxu0 0
    %704 = vmatpush1.bf16.xpose.msra.mxu0 0
    %705 = vmatprep.subr.bf16.mxu0 0
    %706 = vmatpush1.bf16.xpose.msra.mxu0 0
    %707 = vmatprep.subr.bf16.mxu0 0
    %708 = vmatpush1.bf16.xpose.msra.mxu0 0
    %709 = vmatprep.mubr.bf16.mxu0 0
    %710 = vmatmul.mubr.bf16.gmra.mrb[0].mxu0 %v672
    %v711 = vpop.f32.mrb[0].mxu0
    %v712 = vadd.f32 0.0, %v711
    %v713 = vpop.f32.mrb[0].mxu0
    %v714 = vpop.f32.mrb[0].mxu0
    %v715 = vpop.f32.mrb[0].mxu0
    %716 = vdwg.mxu0
    %v717 = vmul.f32 %v712, 0.35355338
    %v718 = vadd.f32 %v717, %v148
    %v719 = vsel %vm306, %v354, -inf
    %720 = vmax.xlane.f32.xlu0 %v719
    %v721 = vpop.xlane.xlu0 %720
    %v722 = vsel %vm306, %v406, -inf
    %723 = vmax.xlane.f32.xlu0 %v722
    %v724 = vpop.xlane.xlu0 %723
    %v725 = vsel %vm306, %v458, -inf
    %726 = vmax.xlane.f32.xlu0 %v725
    %v727 = vpop.xlane.xlu0 %726
    %v728 = vsel %vm306, %v510, -inf
    %729 = vmax.xlane.f32.xlu0 %v728
    %v730 = vpop.xlane.xlu0 %729
    %v731 = vsel %vm306, %v562, -inf
    %732 = vmax.xlane.f32.xlu0 %v731
    %v733 = vpop.xlane.xlu0 %732
    %v734 = vsel %vm306, %v614, -inf
    %735 = vmax.xlane.f32.xlu0 %v734
    %v736 = vpop.xlane.xlu0 %735
    %v737 = vsel %vm306, %v666, -inf
    %738 = vmax.xlane.f32.xlu0 %v737
    %v739 = vpop.xlane.xlu0 %738
    %v740 = vsel %vm306, %v718, -inf
    %741 = vmax.xlane.f32.xlu0 %v740
    %v742 = vpop.xlane.xlu0 %741
    %v743 = vsub.f32 %v354, %v721
    %v744 = vsub.f32 %v406, %v724
    %v745 = vsub.f32 %v458, %v727
    %v746 = vsub.f32 %v510, %v730
    %v747 = vsub.f32 %v562, %v733
    %v748 = vsub.f32 %v614, %v736
    %v749 = vsub.f32 %v666, %v739
    %v750 = vsub.f32 %v718, %v742
    %v751 = vmul.f32 %v743, 1.442695
    %v752 = vpow.pop %v751
    %v753 = vmul.f32 %v744, 1.442695
    %v754 = vpow.pop %v753
    %v755 = vmul.f32 %v745, 1.442695
    %v756 = vpow.pop %v755
    %v757 = vmul.f32 %v746, 1.442695
    %v758 = vpow.pop %v757
    %v759 = vmul.f32 %v747, 1.442695
    %v760 = vpow.pop %v759
    %v761 = vmul.f32 %v748, 1.442695
    %v762 = vpow.pop %v761
    %v763 = vmul.f32 %v749, 1.442695
    %v764 = vpow.pop %v763
    %v765 = vmul.f32 %v750, 1.442695
    %v766 = vpow.pop %v765
    %v767 = vsel %vm306, %v752, 0.0
    %768 = vadd.xlane.f32.xlu0 %v767
    %v769 = vpop.xlane.xlu0 %768
    %v770 = vsel %vm306, %v754, 0.0
    %771 = vadd.xlane.f32.xlu0 %v770
    %v772 = vpop.xlane.xlu0 %771
    %v773 = vsel %vm306, %v756, 0.0
    %774 = vadd.xlane.f32.xlu0 %v773
    %v775 = vpop.xlane.xlu0 %774
    %v776 = vsel %vm306, %v758, 0.0
    %777 = vadd.xlane.f32.xlu0 %v776
    %v778 = vpop.xlane.xlu0 %777
    %v779 = vsel %vm306, %v760, 0.0
    %780 = vadd.xlane.f32.xlu0 %v779
    %v781 = vpop.xlane.xlu0 %780
    %v782 = vsel %vm306, %v762, 0.0
    %783 = vadd.xlane.f32.xlu0 %v782
    %v784 = vpop.xlane.xlu0 %783
    %v785 = vsel %vm306, %v764, 0.0
    %786 = vadd.xlane.f32.xlu0 %v785
    %v787 = vpop.xlane.xlu0 %786
    %v788 = vsel %vm306, %v766, 0.0
    %789 = vadd.xlane.f32.xlu0 %v788
    %v790 = vpop.xlane.xlu0 %789
    %v791 = vrcp.pop %v769
    %v792 = vrcp.pop %v772
    %v793 = vrcp.pop %v775
    %v794 = vrcp.pop %v778
    %v795 = vrcp.pop %v781
    %v796 = vrcp.pop %v784
    %v797 = vrcp.pop %v787
    %v798 = vrcp.pop %v790
    %v799 = vmul.f32 %v752, %v791
    %v800 = vmul.f32 %v754, %v792
    %v801 = vmul.f32 %v756, %v793
    %v802 = vmul.f32 %v758, %v794
    %v803 = vmul.f32 %v760, %v795
    %v804 = vmul.f32 %v762, %v796
    %v805 = vmul.f32 %v764, %v797
    %v806 = vmul.f32 %v766, %v798
    %v807 = vpack.c.bf16 %v800, %v799
    %v808 = vpack.c.bf16 %v802, %v801
    %v809 = vpack.c.bf16 %v804, %v803
    %v810 = vpack.c.bf16 %v806, %v805
    %811 = vrot.lane.b32.xlu0 %v302, 64
    %v812 = vpop.permute.xlu0 %811
    %v814 = vsel %vm306, %v807, 0
    %v817 = vsel %vm180, %v812, 0
    %819 = vmatprep.subr.bf16.mxu0 0
    %820 = vmatpush1.bf16.msra.mxu0 %v817
    %821 = vmatprep.subr.bf16.mxu0 0
    %822 = vmatpush1.bf16.msra.mxu0 0
    %823 = vmatprep.subr.bf16.mxu0 0
    %824 = vmatpush1.bf16.msra.mxu0 0
    %825 = vmatprep.subr.bf16.mxu0 0
    %826 = vmatpush1.bf16.msra.mxu0 0
    %827 = vmatprep.subr.bf16.mxu0 0
    %828 = vmatpush1.bf16.msra.mxu0 0
    %829 = vmatprep.subr.bf16.mxu0 0
    %830 = vmatpush1.bf16.msra.mxu0 0
    %831 = vmatprep.subr.bf16.mxu0 0
    %832 = vmatpush1.bf16.msra.mxu0 0
    %833 = vmatprep.subr.bf16.mxu0 0
    %834 = vmatpush1.bf16.msra.mxu0 0
    %835 = vmatprep.subr.bf16.mxu0 0
    %836 = vmatpush1.bf16.msra.mxu0 0
    %837 = vmatprep.subr.bf16.mxu0 0
    %838 = vmatpush1.bf16.msra.mxu0 0
    %839 = vmatprep.subr.bf16.mxu0 0
    %840 = vmatpush1.bf16.msra.mxu0 0
    %841 = vmatprep.subr.bf16.mxu0 0
    %842 = vmatpush1.bf16.msra.mxu0 0
    %843 = vmatprep.subr.bf16.mxu0 0
    %844 = vmatpush1.bf16.msra.mxu0 0
    %845 = vmatprep.subr.bf16.mxu0 0
    %846 = vmatpush1.bf16.msra.mxu0 0
    %847 = vmatprep.subr.bf16.mxu0 0
    %848 = vmatpush1.bf16.msra.mxu0 0
    %849 = vmatprep.subr.bf16.mxu0 0
    %850 = vmatpush1.bf16.msra.mxu0 0
    %851 = vmatprep.mubr.bf16.mxu0 0
    %852 = vmatmul.mubr.bf16.gmra.mrb[0].mxu0 %v814
    %v853 = vpop.f32.mrb[0].mxu0
    %v854 = vadd.f32 0.0, %v853
    %v855 = vpop.f32.mrb[0].mxu0
    %v856 = vpop.f32.mrb[0].mxu0
    %v857 = vpop.f32.mrb[0].mxu0
    %858 = vdwg.mxu0
    %v860 = vrot.slane %v807, 4
    %861 = vrot.lane.b32.xlu0 %v302, 56
    %v862 = vpop.permute.xlu0 %861
    %v864 = vsel %vm306, %v860, 0
    %v867 = vsel %vm180, %v862, 0
    %869 = vmatprep.subr.bf16.mxu0 0
    %870 = vmatpush1.bf16.msra.mxu0 %v867
    %871 = vmatprep.subr.bf16.mxu0 0
    %872 = vmatpush1.bf16.msra.mxu0 0
    %873 = vmatprep.subr.bf16.mxu0 0
    %874 = vmatpush1.bf16.msra.mxu0 0
    %875 = vmatprep.subr.bf16.mxu0 0
    %876 = vmatpush1.bf16.msra.mxu0 0
    %877 = vmatprep.subr.bf16.mxu0 0
    %878 = vmatpush1.bf16.msra.mxu0 0
    %879 = vmatprep.subr.bf16.mxu0 0
    %880 = vmatpush1.bf16.msra.mxu0 0
    %881 = vmatprep.subr.bf16.mxu0 0
    %882 = vmatpush1.bf16.msra.mxu0 0
    %883 = vmatprep.subr.bf16.mxu0 0
    %884 = vmatpush1.bf16.msra.mxu0 0
    %885 = vmatprep.subr.bf16.mxu0 0
    %886 = vmatpush1.bf16.msra.mxu0 0
    %887 = vmatprep.subr.bf16.mxu0 0
    %888 = vmatpush1.bf16.msra.mxu0 0
    %889 = vmatprep.subr.bf16.mxu0 0
    %890 = vmatpush1.bf16.msra.mxu0 0
    %891 = vmatprep.subr.bf16.mxu0 0
    %892 = vmatpush1.bf16.msra.mxu0 0
    %893 = vmatprep.subr.bf16.mxu0 0
    %894 = vmatpush1.bf16.msra.mxu0 0
    %895 = vmatprep.subr.bf16.mxu0 0
    %896 = vmatpush1.bf16.msra.mxu0 0
    %897 = vmatprep.subr.bf16.mxu0 0
    %898 = vmatpush1.bf16.msra.mxu0 0
    %899 = vmatprep.subr.bf16.mxu0 0
    %900 = vmatpush1.bf16.msra.mxu0 0
    %901 = vmatprep.mubr.bf16.mxu0 0
    %902 = vmatmul.mubr.bf16.gmra.mrb[0].mxu0 %v864
    %v903 = vpop.f32.mrb[0].mxu0
    %v904 = vadd.f32 0.0, %v903
    %v905 = vpop.f32.mrb[0].mxu0
    %v906 = vpop.f32.mrb[0].mxu0
    %v907 = vpop.f32.mrb[0].mxu0
    %908 = vdwg.mxu0
    %909 = vrot.lane.b32.xlu0 %v302, 48
    %v910 = vpop.permute.xlu0 %909
    %v912 = vsel %vm306, %v808, 0
    %v915 = vsel %vm180, %v910, 0
    %917 = vmatprep.subr.bf16.mxu0 0
    %918 = vmatpush1.bf16.msra.mxu0 %v915
    %919 = vmatprep.subr.bf16.mxu0 0
    %920 = vmatpush1.bf16.msra.mxu0 0
    %921 = vmatprep.subr.bf16.mxu0 0
    %922 = vmatpush1.bf16.msra.mxu0 0
    %923 = vmatprep.subr.bf16.mxu0 0
    %924 = vmatpush1.bf16.msra.mxu0 0
    %925 = vmatprep.subr.bf16.mxu0 0
    %926 = vmatpush1.bf16.msra.mxu0 0
    %927 = vmatprep.subr.bf16.mxu0 0
    %928 = vmatpush1.bf16.msra.mxu0 0
    %929 = vmatprep.subr.bf16.mxu0 0
    %930 = vmatpush1.bf16.msra.mxu0 0
    %931 = vmatprep.subr.bf16.mxu0 0
    %932 = vmatpush1.bf16.msra.mxu0 0
    %933 = vmatprep.subr.bf16.mxu0 0
    %934 = vmatpush1.bf16.msra.mxu0 0
    %935 = vmatprep.subr.bf16.mxu0 0
    %936 = vmatpush1.bf16.msra.mxu0 0
    %937 = vmatprep.subr.bf16.mxu0 0
    %938 = vmatpush1.bf16.msra.mxu0 0
    %939 = vmatprep.subr.bf16.mxu0 0
    %940 = vmatpush1.bf16.msra.mxu0 0
    %941 = vmatprep.subr.bf16.mxu0 0
    %942 = vmatpush1.bf16.msra.mxu0 0
    %943 = vmatprep.subr.bf16.mxu0 0
    %944 = vmatpush1.bf16.msra.mxu0 0
    %945 = vmatprep.subr.bf16.mxu0 0
    %946 = vmatpush1.bf16.msra.mxu0 0
    %947 = vmatprep.subr.bf16.mxu0 0
    %948 = vmatpush1.bf16.msra.mxu0 0
    %949 = vmatprep.mubr.bf16.mxu0 0
    %950 = vmatmul.mubr.bf16.gmra.mrb[0].mxu0 %v912
    %v951 = vpop.f32.mrb[0].mxu0
    %v952 = vadd.f32 0.0, %v951
    %v953 = vpop.f32.mrb[0].mxu0
    %v954 = vpop.f32.mrb[0].mxu0
    %v955 = vpop.f32.mrb[0].mxu0
    %956 = vdwg.mxu0
    %v958 = vrot.slane %v808, 4
    %959 = vrot.lane.b32.xlu0 %v302, 40
    %v960 = vpop.permute.xlu0 %959
    %v962 = vsel %vm306, %v958, 0
    %v965 = vsel %vm180, %v960, 0
    %967 = vmatprep.subr.bf16.mxu0 0
    %968 = vmatpush1.bf16.msra.mxu0 %v965
    %969 = vmatprep.subr.bf16.mxu0 0
    %970 = vmatpush1.bf16.msra.mxu0 0
    %971 = vmatprep.subr.bf16.mxu0 0
    %972 = vmatpush1.bf16.msra.mxu0 0
    %973 = vmatprep.subr.bf16.mxu0 0
    %974 = vmatpush1.bf16.msra.mxu0 0
    %975 = vmatprep.subr.bf16.mxu0 0
    %976 = vmatpush1.bf16.msra.mxu0 0
    %977 = vmatprep.subr.bf16.mxu0 0
    %978 = vmatpush1.bf16.msra.mxu0 0
    %979 = vmatprep.subr.bf16.mxu0 0
    %980 = vmatpush1.bf16.msra.mxu0 0
    %981 = vmatprep.subr.bf16.mxu0 0
    %982 = vmatpush1.bf16.msra.mxu0 0
    %983 = vmatprep.subr.bf16.mxu0 0
    %984 = vmatpush1.bf16.msra.mxu0 0
    %985 = vmatprep.subr.bf16.mxu0 0
    %986 = vmatpush1.bf16.msra.mxu0 0
    %987 = vmatprep.subr.bf16.mxu0 0
    %988 = vmatpush1.bf16.msra.mxu0 0
    %989 = vmatprep.subr.bf16.mxu0 0
    %990 = vmatpush1.bf16.msra.mxu0 0
    %991 = vmatprep.subr.bf16.mxu0 0
    %992 = vmatpush1.bf16.msra.mxu0 0
    %993 = vmatprep.subr.bf16.mxu0 0
    %994 = vmatpush1.bf16.msra.mxu0 0
    %995 = vmatprep.subr.bf16.mxu0 0
    %996 = vmatpush1.bf16.msra.mxu0 0
    %997 = vmatprep.subr.bf16.mxu0 0
    %998 = vmatpush1.bf16.msra.mxu0 0
    %999 = vmatprep.mubr.bf16.mxu0 0
    %1000 = vmatmul.mubr.bf16.gmra.mrb[0].mxu0 %v962
    %v1001 = vpop.f32.mrb[0].mxu0
    %v1002 = vadd.f32 0.0, %v1001
    %v1003 = vpop.f32.mrb[0].mxu0
    %v1004 = vpop.f32.mrb[0].mxu0
    %v1005 = vpop.f32.mrb[0].mxu0
    %1006 = vdwg.mxu0
    %1008 = vrot.lane.b32.xlu0 %v904, 8
    %v1009 = vpop.permute.xlu0 %1008
    %1012 = vrot.lane.b32.xlu0 %v952, 16
    %v1013 = vpop.permute.xlu0 %1012
    %1016 = vrot.lane.b32.xlu0 %v1002, 24
    %v1017 = vpop.permute.xlu0 %1016
    %v1019 = vsel %vm306, %v854, %v1009
    %vm1020 = vcmask 130048
    %v1021 = vsel %vm1020, %v1019, %v1013
    %vm1022 = vcmask 195584
    %v1023 = vsel %vm1022, %v1021, %v1017
    %1024 = vrot.lane.b32.xlu0 %v511, 64
    %v1025 = vpop.permute.xlu0 %1024
    %v1027 = vsel %vm306, %v809, 0
    %v1030 = vsel %vm180, %v1025, 0
    %1032 = vmatprep.subr.bf16.mxu0 0
    %1033 = vmatpush1.bf16.msra.mxu0 %v1030
    %1034 = vmatprep.subr.bf16.mxu0 0
    %1035 = vmatpush1.bf16.msra.mxu0 0
    %1036 = vmatprep.subr.bf16.mxu0 0
    %1037 = vmatpush1.bf16.msra.mxu0 0
    %1038 = vmatprep.subr.bf16.mxu0 0
    %1039 = vmatpush1.bf16.msra.mxu0 0
    %1040 = vmatprep.subr.bf16.mxu0 0
    %1041 = vmatpush1.bf16.msra.mxu0 0
    %1042 = vmatprep.subr.bf16.mxu0 0
    %1043 = vmatpush1.bf16.msra.mxu0 0
    %1044 = vmatprep.subr.bf16.mxu0 0
    %1045 = vmatpush1.bf16.msra.mxu0 0
    %1046 = vmatprep.subr.bf16.mxu0 0
    %1047 = vmatpush1.bf16.msra.mxu0 0
    %1048 = vmatprep.subr.bf16.mxu0 0
    %1049 = vmatpush1.bf16.msra.mxu0 0
    %1050 = vmatprep.subr.bf16.mxu0 0
    %1051 = vmatpush1.bf16.msra.mxu0 0
    %1052 = vmatprep.subr.bf16.mxu0 0
    %1053 = vmatpush1.bf16.msra.mxu0 0
    %1054 = vmatprep.subr.bf16.mxu0 0
    %1055 = vmatpush1.bf16.msra.mxu0 0
    %1056 = vmatprep.subr.bf16.mxu0 0
    %1057 = vmatpush1.bf16.msra.mxu0 0
    %1058 = vmatprep.subr.bf16.mxu0 0
    %1059 = vmatpush1.bf16.msra.mxu0 0
    %1060 = vmatprep.subr.bf16.mxu0 0
    %1061 = vmatpush1.bf16.msra.mxu0 0
    %1062 = vmatprep.subr.bf16.mxu0 0
    %1063 = vmatpush1.bf16.msra.mxu0 0
    %1064 = vmatprep.mubr.bf16.mxu0 0
    %1065 = vmatmul.mubr.bf16.gmra.mrb[0].mxu0 %v1027
    %v1066 = vpop.f32.mrb[0].mxu0
    %v1067 = vadd.f32 0.0, %v1066
    %v1068 = vpop.f32.mrb[0].mxu0
    %v1069 = vpop.f32.mrb[0].mxu0
    %v1070 = vpop.f32.mrb[0].mxu0
    %1071 = vdwg.mxu0
    %v1073 = vrot.slane %v809, 4
    %1074 = vrot.lane.b32.xlu0 %v511, 56
    %v1075 = vpop.permute.xlu0 %1074
    %v1077 = vsel %vm306, %v1073, 0
    %v1080 = vsel %vm180, %v1075, 0
    %1082 = vmatprep.subr.bf16.mxu0 0
    %1083 = vmatpush1.bf16.msra.mxu0 %v1080
    %1084 = vmatprep.subr.bf16.mxu0 0
    %1085 = vmatpush1.bf16.msra.mxu0 0
    %1086 = vmatprep.subr.bf16.mxu0 0
    %1087 = vmatpush1.bf16.msra.mxu0 0
    %1088 = vmatprep.subr.bf16.mxu0 0
    %1089 = vmatpush1.bf16.msra.mxu0 0
    %1090 = vmatprep.subr.bf16.mxu0 0
    %1091 = vmatpush1.bf16.msra.mxu0 0
    %1092 = vmatprep.subr.bf16.mxu0 0
    %1093 = vmatpush1.bf16.msra.mxu0 0
    %1094 = vmatprep.subr.bf16.mxu0 0
    %1095 = vmatpush1.bf16.msra.mxu0 0
    %1096 = vmatprep.subr.bf16.mxu0 0
    %1097 = vmatpush1.bf16.msra.mxu0 0
    %1098 = vmatprep.subr.bf16.mxu0 0
    %1099 = vmatpush1.bf16.msra.mxu0 0
    %1100 = vmatprep.subr.bf16.mxu0 0
    %1101 = vmatpush1.bf16.msra.mxu0 0
    %1102 = vmatprep.subr.bf16.mxu0 0
    %1103 = vmatpush1.bf16.msra.mxu0 0
    %1104 = vmatprep.subr.bf16.mxu0 0
    %1105 = vmatpush1.bf16.msra.mxu0 0
    %1106 = vmatprep.subr.bf16.mxu0 0
    %1107 = vmatpush1.bf16.msra.mxu0 0
    %1108 = vmatprep.subr.bf16.mxu0 0
    %1109 = vmatpush1.bf16.msra.mxu0 0
    %1110 = vmatprep.subr.bf16.mxu0 0
    %1111 = vmatpush1.bf16.msra.mxu0 0
    %1112 = vmatprep.subr.bf16.mxu0 0
    %1113 = vmatpush1.bf16.msra.mxu0 0
    %1114 = vmatprep.mubr.bf16.mxu0 0
    %1115 = vmatmul.mubr.bf16.gmra.mrb[0].mxu0 %v1077
    %v1116 = vpop.f32.mrb[0].mxu0
    %v1117 = vadd.f32 0.0, %v1116
    %v1118 = vpop.f32.mrb[0].mxu0
    %v1119 = vpop.f32.mrb[0].mxu0
    %v1120 = vpop.f32.mrb[0].mxu0
    %1121 = vdwg.mxu0
    %1122 = vrot.lane.b32.xlu0 %v511, 48
    %v1123 = vpop.permute.xlu0 %1122
    %v1125 = vsel %vm306, %v810, 0
    %v1128 = vsel %vm180, %v1123, 0
    %1130 = vmatprep.subr.bf16.mxu0 0
    %1131 = vmatpush1.bf16.msra.mxu0 %v1128
    %1132 = vmatprep.subr.bf16.mxu0 0
    %1133 = vmatpush1.bf16.msra.mxu0 0
    %1134 = vmatprep.subr.bf16.mxu0 0
    %1135 = vmatpush1.bf16.msra.mxu0 0
    %1136 = vmatprep.subr.bf16.mxu0 0
    %1137 = vmatpush1.bf16.msra.mxu0 0
    %1138 = vmatprep.subr.bf16.mxu0 0
    %1139 = vmatpush1.bf16.msra.mxu0 0
    %1140 = vmatprep.subr.bf16.mxu0 0
    %1141 = vmatpush1.bf16.msra.mxu0 0
    %1142 = vmatprep.subr.bf16.mxu0 0
    %1143 = vmatpush1.bf16.msra.mxu0 0
    %1144 = vmatprep.subr.bf16.mxu0 0
    %1145 = vmatpush1.bf16.msra.mxu0 0
    %1146 = vmatprep.subr.bf16.mxu0 0
    %1147 = vmatpush1.bf16.msra.mxu0 0
    %1148 = vmatprep.subr.bf16.mxu0 0
    %1149 = vmatpush1.bf16.msra.mxu0 0
    %1150 = vmatprep.subr.bf16.mxu0 0
    %1151 = vmatpush1.bf16.msra.mxu0 0
    %1152 = vmatprep.subr.bf16.mxu0 0
    %1153 = vmatpush1.bf16.msra.mxu0 0
    %1154 = vmatprep.subr.bf16.mxu0 0
    %1155 = vmatpush1.bf16.msra.mxu0 0
    %1156 = vmatprep.subr.bf16.mxu0 0
    %1157 = vmatpush1.bf16.msra.mxu0 0
    %1158 = vmatprep.subr.bf16.mxu0 0
    %1159 = vmatpush1.bf16.msra.mxu0 0
    %1160 = vmatprep.subr.bf16.mxu0 0
    %1161 = vmatpush1.bf16.msra.mxu0 0
    %1162 = vmatprep.mubr.bf16.mxu0 0
    %1163 = vmatmul.mubr.bf16.gmra.mrb[0].mxu0 %v1125
    %v1164 = vpop.f32.mrb[0].mxu0
    %v1165 = vadd.f32 0.0, %v1164
    %v1166 = vpop.f32.mrb[0].mxu0
    %v1167 = vpop.f32.mrb[0].mxu0
    %v1168 = vpop.f32.mrb[0].mxu0
    %1169 = vdwg.mxu0
    %v1171 = vrot.slane %v810, 4
    %1172 = vrot.lane.b32.xlu0 %v511, 40
    %v1173 = vpop.permute.xlu0 %1172
    %v1175 = vsel %vm306, %v1171, 0
    %v1178 = vsel %vm180, %v1173, 0
    %1180 = vmatprep.subr.bf16.mxu0 0
    %1181 = vmatpush1.bf16.msra.mxu0 %v1178
    %1182 = vmatprep.subr.bf16.mxu0 0
    %1183 = vmatpush1.bf16.msra.mxu0 0
    %1184 = vmatprep.subr.bf16.mxu0 0
    %1185 = vmatpush1.bf16.msra.mxu0 0
    %1186 = vmatprep.subr.bf16.mxu0 0
    %1187 = vmatpush1.bf16.msra.mxu0 0
    %1188 = vmatprep.subr.bf16.mxu0 0
    %1189 = vmatpush1.bf16.msra.mxu0 0
    %1190 = vmatprep.subr.bf16.mxu0 0
    %1191 = vmatpush1.bf16.msra.mxu0 0
    %1192 = vmatprep.subr.bf16.mxu0 0
    %1193 = vmatpush1.bf16.msra.mxu0 0
    %1194 = vmatprep.subr.bf16.mxu0 0
    %1195 = vmatpush1.bf16.msra.mxu0 0
    %1196 = vmatprep.subr.bf16.mxu0 0
    %1197 = vmatpush1.bf16.msra.mxu0 0
    %1198 = vmatprep.subr.bf16.mxu0 0
    %1199 = vmatpush1.bf16.msra.mxu0 0
    %1200 = vmatprep.subr.bf16.mxu0 0
    %1201 = vmatpush1.bf16.msra.mxu0 0
    %1202 = vmatprep.subr.bf16.mxu0 0
    %1203 = vmatpush1.bf16.msra.mxu0 0
    %1204 = vmatprep.subr.bf16.mxu0 0
    %1205 = vmatpush1.bf16.msra.mxu0 0
    %1206 = vmatprep.subr.bf16.mxu0 0
    %1207 = vmatpush1.bf16.msra.mxu0 0
    %1208 = vmatprep.subr.bf16.mxu0 0
    %1209 = vmatpush1.bf16.msra.mxu0 0
    %1210 = vmatprep.subr.bf16.mxu0 0
    %1211 = vmatpush1.bf16.msra.mxu0 0
    %1212 = vmatprep.mubr.bf16.mxu0 0
    %1213 = vmatmul.mubr.bf16.gmra.mrb[0].mxu0 %v1175
    %v1214 = vpop.f32.mrb[0].mxu0
    %v1215 = vadd.f32 0.0, %v1214
    %v1216 = vpop.f32.mrb[0].mxu0
    %v1217 = vpop.f32.mrb[0].mxu0
    %v1218 = vpop.f32.mrb[0].mxu0
    %1219 = vdwg.mxu0
    %1221 = vrot.lane.b32.xlu0 %v1117, 8
    %v1222 = vpop.permute.xlu0 %1221
    %1225 = vrot.lane.b32.xlu0 %v1165, 16
    %v1226 = vpop.permute.xlu0 %1225
    %1229 = vrot.lane.b32.xlu0 %v1215, 24
    %v1230 = vpop.permute.xlu0 %1229
    %v1232 = vsel %vm306, %v1067, %v1222
    %v1233 = vsel %vm1020, %v1232, %v1226
    %v1234 = vsel %vm1022, %v1233, %v1230
    %v1235 = vpack.c.bf16 %v1234, %v1023
    %v1237 = vlaneseq
    %v1238 = vshrl.u32 %v1237, 7
    %v1239 = vsub.s32 0, %v1238
    %v1240 = vrot.slane %v301, %v1239
    %v1246 = vunpack.c.l.b16 %v297
    %v1247 = vunpack.c.l.b16 %v298
    %v1248 = vunpack.c.l.b16 %v299
    %v1249 = vunpack.c.l.b16 %v300
    %v1250 = vpack.c.b16 %v1247, %v1246
    %v1251 = vpack.c.b16 %v1249, %v1248
    %v1255 = vsel %vm252, %v1235, 0
    %1257 = vmatprep.subr.bf16.mxu0 0
    %1258 = vmatpush1.bf16.msra.mxu0 %v1250
    %1259 = vmatprep.subr.bf16.mxu0 0
    %1260 = vmatpush1.bf16.msra.mxu0 %v1251
    %1261 = vmatprep.subr.bf16.mxu0 0
    %1262 = vmatpush1.bf16.msra.mxu0 0
    %1263 = vmatprep.subr.bf16.mxu0 0
    %1264 = vmatpush1.bf16.msra.mxu0 0
    %1265 = vmatprep.subr.bf16.mxu0 0
    %1266 = vmatpush1.bf16.msra.mxu0 0
    %1267 = vmatprep.subr.bf16.mxu0 0
    %1268 = vmatpush1.bf16.msra.mxu0 0
    %1269 = vmatprep.subr.bf16.mxu0 0
    %1270 = vmatpush1.bf16.msra.mxu0 0
    %1271 = vmatprep.subr.bf16.mxu0 0
    %1272 = vmatpush1.bf16.msra.mxu0 0
    %1273 = vmatprep.subr.bf16.mxu0 0
    %1274 = vmatpush1.bf16.msra.mxu0 0
    %1275 = vmatprep.subr.bf16.mxu0 0
    %1276 = vmatpush1.bf16.msra.mxu0 0
    %1277 = vmatprep.subr.bf16.mxu0 0
    %1278 = vmatpush1.bf16.msra.mxu0 0
    %1279 = vmatprep.subr.bf16.mxu0 0
    %1280 = vmatpush1.bf16.msra.mxu0 0
    %1281 = vmatprep.subr.bf16.mxu0 0
    %1282 = vmatpush1.bf16.msra.mxu0 0
    %1283 = vmatprep.subr.bf16.mxu0 0
    %1284 = vmatpush1.bf16.msra.mxu0 0
    %1285 = vmatprep.subr.bf16.mxu0 0
    %1286 = vmatpush1.bf16.msra.mxu0 0
    %1287 = vmatprep.subr.bf16.mxu0 0
    %1288 = vmatpush1.bf16.msra.mxu0 0
    %1289 = vmatprep.mubr.bf16.mxu0 0
    %1290 = vmatmul.mubr.bf16.gmra.mrb[0].mxu0 %v1255
    %v1291 = vpop.f32.mrb[0].mxu0
    %v1292 = vadd.f32 %v1240, %v1291
    %v1293 = vpop.f32.mrb[0].mxu0
    %v1294 = vpop.f32.mrb[0].mxu0
    %v1295 = vadd.f32 %v1240, %v1294
    %v1296 = vpop.f32.mrb[0].mxu0
    %1297 = vdwg.mxu0
    %v1298 = vadd.f32 %v226, %v1292
    %v1299 = vadd.f32 %v227, %v1295
    %v1300 = vld [vmem:[%s10] sm:$0x1]
    %v1301 = vld [vmem:[%s11] sm:$0x1]
    %v1302 = vsel %vm252, %v1298, 0.0
    %1303 = vadd.xlane.f32.xlu0 %v1302
    %v1304 = vpop.xlane.xlu0 %1303
    %v1305 = vsel %vm252, %v1299, 0.0
    %1306 = vadd.xlane.f32.xlu0 %v1305
    %v1307 = vpop.xlane.xlu0 %1306
    %v1308 = vrcp.pop 32.0
    %v1309 = vmul.f32 %v1304, %v1308
    %v1310 = vmul.f32 %v1307, %v1308
    %v1311 = vsub.f32 %v1298, %v1309
    %v1312 = vsub.f32 %v1299, %v1310
    %v1313 = vmul.f32 %v1311, %v1311
    %v1314 = vmul.f32 %v1312, %v1312
    %v1315 = vsel %vm252, %v1313, 0.0
    %1316 = vadd.xlane.f32.xlu0 %v1315
    %v1317 = vpop.xlane.xlu0 %1316
    %v1318 = vsel %vm252, %v1314, 0.0
    %1319 = vadd.xlane.f32.xlu0 %v1318
    %v1320 = vpop.xlane.xlu0 %1319
    %v1321 = vmul.f32 %v1317, %v1308
    %v1322 = vmul.f32 %v1320, %v1308
    %v1323 = vadd.f32 %v1321, 1e-05
    %v1324 = vadd.f32 %v1322, 1e-05
    %v1325 = vrsqrt.pop %v1323
    %v1326 = vrsqrt.pop %v1324
    %v1327 = vmul.f32 %v1311, %v1325
    %v1328 = vmul.f32 %v1312, %v1326
    %v1330 = vlaneseq
    %v1331 = vshrl.u32 %v1330, 7
    %v1332 = vsub.s32 0, %v1331
    %v1333 = vrot.slane %v1300, %v1332
    %v1335 = vmul.f32 %v1327, %v1333
    %v1336 = vmul.f32 %v1328, %v1333
    %v1338 = vlaneseq
    %v1339 = vshrl.u32 %v1338, 7
    %v1340 = vsub.s32 0, %v1339
    %v1341 = vrot.slane %v1301, %v1340
    %v1343 = vadd.f32 %v1335, %v1341
    %v1344 = vadd.f32 %v1336, %v1341
    %v1345 = vpack.c.bf16 %v1344, %v1343
    %v1346 = vld [vmem:[%s12] sm:$0xf]
    %v1347 = vld [vmem:[%s12 + $0x4] sm:$0xf]
    %v1348 = vld [vmem:[%s12 + $0x8] sm:$0xf]
    %v1349 = vld [vmem:[%s12 + $0xc] sm:$0xf]
    %v1350 = vld [vmem:[%s13] sm:$0x1]
    %v1352 = vlaneseq
    %v1353 = vshrl.u32 %v1352, 7
    %v1354 = vsub.s32 0, %v1353
    %v1355 = vrot.slane %v1350, %v1354
    %v1361 = vunpack.c.l.b16 %v1346
    %v1362 = vunpack.c.l.b16 %v1347
    %v1363 = vunpack.c.l.b16 %v1348
    %v1364 = vunpack.c.l.b16 %v1349
    %v1365 = vpack.c.b16 %v1362, %v1361
    %v1366 = vpack.c.b16 %v1364, %v1363
    %v1370 = vsel %vm252, %v1345, 0
    %1372 = vmatprep.subr.bf16.mxu0 0
    %1373 = vmatpush1.bf16.msra.mxu0 %v1365
    %1374 = vmatprep.subr.bf16.mxu0 0
    %1375 = vmatpush1.bf16.msra.mxu0 %v1366
    %1376 = vmatprep.subr.bf16.mxu0 0
    %1377 = vmatpush1.bf16.msra.mxu0 0
    %1378 = vmatprep.subr.bf16.mxu0 0
    %1379 = vmatpush1.bf16.msra.mxu0 0
    %1380 = vmatprep.subr.bf16.mxu0 0
    %1381 = vmatpush1.bf16.msra.mxu0 0
    %1382 = vmatprep.subr.bf16.mxu0 0
    %1383 = vmatpush1.bf16.msra.mxu0 0
    %1384 = vmatprep.subr.bf16.mxu0 0
    %1385 = vmatpush1.bf16.msra.mxu0 0
    %1386 = vmatprep.subr.bf16.mxu0 0
    %1387 = vmatpush1.bf16.msra.mxu0 0
    %1388 = vmatprep.subr.bf16.mxu0 0
    %1389 = vmatpush1.bf16.msra.mxu0 0
    %1390 = vmatprep.subr.bf16.mxu0 0
    %1391 = vmatpush1.bf16.msra.mxu0 0
    %1392 = vmatprep.subr.bf16.mxu0 0
    %1393 = vmatpush1.bf16.msra.mxu0 0
    %1394 = vmatprep.subr.bf16.mxu0 0
    %1395 = vmatpush1.bf16.msra.mxu0 0
    %1396 = vmatprep.subr.bf16.mxu0 0
    %1397 = vmatpush1.bf16.msra.mxu0 0
    %1398 = vmatprep.subr.bf16.mxu0 0
    %1399 = vmatpush1.bf16.msra.mxu0 0
    %1400 = vmatprep.subr.bf16.mxu0 0
    %1401 = vmatpush1.bf16.msra.mxu0 0
    %1402 = vmatprep.subr.bf16.mxu0 0
    %1403 = vmatpush1.bf16.msra.mxu0 0
    %1404 = vmatprep.mubr.bf16.mxu0 0
    %1405 = vmatmul.mubr.bf16.gmra.mrb[0].mxu0 %v1370
    %v1406 = vpop.f32.mrb[0].mxu0
    %v1407 = vadd.f32 %v1355, %v1406
    %v1408 = vpop.f32.mrb[0].mxu0
    %v1409 = vpop.f32.mrb[0].mxu0
    %v1410 = vadd.f32 %v1355, %v1409
    %v1411 = vpop.f32.mrb[0].mxu0
    %1412 = vdwg.mxu0
    %v1413 = vld [vmem:[%s14] sm:$0xf]
    %v1414 = vld [vmem:[%s14 + $0x4] sm:$0xf]
    %v1415 = vld [vmem:[%s14 + $0x8] sm:$0xf]
    %v1416 = vld [vmem:[%s14 + $0xc] sm:$0xf]
    %v1417 = vld [vmem:[%s15] sm:$0x1]
    %v1419 = vlaneseq
    %v1420 = vshrl.u32 %v1419, 7
    %v1421 = vsub.s32 0, %v1420
    %v1422 = vrot.slane %v1417, %v1421
    %v1426 = vunpack.c.l.b16 %v93
    %v1427 = vunpack.c.l.b16 %v94
    %v1428 = vpack.c.b16 %v1427, %v1426
    %v1433 = vunpack.c.l.b16 %v1413
    %v1434 = vunpack.c.l.b16 %v1414
    %v1435 = vunpack.c.l.b16 %v1415
    %v1436 = vunpack.c.l.b16 %v1416
    %v1437 = vpack.c.b16 %v1434, %v1433
    %v1438 = vpack.c.b16 %v1436, %v1435
    %v1442 = vsel %vm252, %v1428, 0
    %1444 = vmatprep.subr.bf16.mxu0 0
    %1445 = vmatpush1.bf16.msra.mxu0 %v1437
    %1446 = vmatprep.subr.bf16.mxu0 0
    %1447 = vmatpush1.bf16.msra.mxu0 %v1438
    %1448 = vmatprep.subr.bf16.mxu0 0
    %1449 = vmatpush1.bf16.msra.mxu0 0
    %1450 = vmatprep.subr.bf16.mxu0 0
    %1451 = vmatpush1.bf16.msra.mxu0 0
    %1452 = vmatprep.subr.bf16.mxu0 0
    %1453 = vmatpush1.bf16.msra.mxu0 0
    %1454 = vmatprep.subr.bf16.mxu0 0
    %1455 = vmatpush1.bf16.msra.mxu0 0
    %1456 = vmatprep.subr.bf16.mxu0 0
    %1457 = vmatpush1.bf16.msra.mxu0 0
    %1458 = vmatprep.subr.bf16.mxu0 0
    %1459 = vmatpush1.bf16.msra.mxu0 0
    %1460 = vmatprep.subr.bf16.mxu0 0
    %1461 = vmatpush1.bf16.msra.mxu0 0
    %1462 = vmatprep.subr.bf16.mxu0 0
    %1463 = vmatpush1.bf16.msra.mxu0 0
    %1464 = vmatprep.subr.bf16.mxu0 0
    %1465 = vmatpush1.bf16.msra.mxu0 0
    %1466 = vmatprep.subr.bf16.mxu0 0
    %1467 = vmatpush1.bf16.msra.mxu0 0
    %1468 = vmatprep.subr.bf16.mxu0 0
    %1469 = vmatpush1.bf16.msra.mxu0 0
    %1470 = vmatprep.subr.bf16.mxu0 0
    %1471 = vmatpush1.bf16.msra.mxu0 0
    %1472 = vmatprep.subr.bf16.mxu0 0
    %1473 = vmatpush1.bf16.msra.mxu0 0
    %1474 = vmatprep.subr.bf16.mxu0 0
    %1475 = vmatpush1.bf16.msra.mxu0 0
    %1476 = vmatprep.mubr.bf16.mxu0 0
    %1477 = vmatmul.mubr.bf16.gmra.mrb[0].mxu0 %v1442
    %v1478 = vpop.f32.mrb[0].mxu0
    %v1479 = vadd.f32 %v1422, %v1478
    %v1480 = vpop.f32.mrb[0].mxu0
    %v1481 = vpop.f32.mrb[0].mxu0
    %v1482 = vadd.f32 %v1422, %v1481
    %v1483 = vpop.f32.mrb[0].mxu0
    %1484 = vdwg.mxu0
    %v1485 = vld [vmem:[%s16] sm:$0xf]
    %v1486 = vld [vmem:[%s16 + $0x4] sm:$0xf]
    %v1487 = vld [vmem:[%s16 + $0x8] sm:$0xf]
    %v1488 = vld [vmem:[%s16 + $0xc] sm:$0xf]
    %v1489 = vld [vmem:[%s17] sm:$0x1]
    %v1490 = vpack.c.bf16 %v1407, %v1407
    %v1491 = vpack.c.bf16 %v1479, %v1479
    %v1493 = vsel %vm306, %v1490, 0
    %v1496 = vsel %vm306, %v1491, 0
    %1498 = vmatprep.subr.bf16.mxu0 0
    %1499 = vmatpush1.bf16.xpose.msra.mxu0 %v1496
    %1500 = vmatprep.subr.bf16.mxu0 0
    %1501 = vmatpush1.bf16.xpose.msra.mxu0 0
    %1502 = vmatprep.subr.bf16.mxu0 0
    %1503 = vmatpush1.bf16.xpose.msra.mxu0 0
    %1504 = vmatprep.subr.bf16.mxu0 0
    %1505 = vmatpush1.bf16.xpose.msra.mxu0 0
    %1506 = vmatprep.subr.bf16.mxu0 0
    %1507 = vmatpush1.bf16.xpose.msra.mxu0 0
    %1508 = vmatprep.subr.bf16.mxu0 0
    %1509 = vmatpush1.bf16.xpose.msra.mxu0 0
    %1510 = vmatprep.subr.bf16.mxu0 0
    %1511 = vmatpush1.bf16.xpose.msra.mxu0 0
    %1512 = vmatprep.subr.bf16.mxu0 0
    %1513 = vmatpush1.bf16.xpose.msra.mxu0 0
    %1514 = vmatprep.subr.bf16.mxu0 0
    %1515 = vmatpush1.bf16.xpose.msra.mxu0 0
    %1516 = vmatprep.subr.bf16.mxu0 0
    %1517 = vmatpush1.bf16.xpose.msra.mxu0 0
    %1518 = vmatprep.subr.bf16.mxu0 0
    %1519 = vmatpush1.bf16.xpose.msra.mxu0 0
    %1520 = vmatprep.subr.bf16.mxu0 0
    %1521 = vmatpush1.bf16.xpose.msra.mxu0 0
    %1522 = vmatprep.subr.bf16.mxu0 0
    %1523 = vmatpush1.bf16.xpose.msra.mxu0 0
    %1524 = vmatprep.subr.bf16.mxu0 0
    %1525 = vmatpush1.bf16.xpose.msra.mxu0 0
    %1526 = vmatprep.subr.bf16.mxu0 0
    %1527 = vmatpush1.bf16.xpose.msra.mxu0 0
    %1528 = vmatprep.subr.bf16.mxu0 0
    %1529 = vmatpush1.bf16.xpose.msra.mxu0 0
    %1530 = vmatprep.mubr.bf16.mxu0 0
    %1531 = vmatmul.mubr.bf16.gmra.mrb[0].mxu0 %v1493
    %v1532 = vpop.f32.mrb[0].mxu0
    %v1533 = vadd.f32 0.0, %v1532
    %v1534 = vpop.f32.mrb[0].mxu0
    %v1535 = vpop.f32.mrb[0].mxu0
    %v1536 = vpop.f32.mrb[0].mxu0
    %1537 = vdwg.mxu0
    %v1538 = vmul.f32 %v1533, 0.35355338
    %v1540 = vlaneseq
    %v1541 = vshrl.u32 %v1540, 7
    %v1542 = vsub.s32 0, %v1541
    %v1543 = vrot.slane %v95, %v1542
    %v1545 = vadd.f32 %v1538, %v1543
    %1547 = vrot.lane.b32.xlu0 %v1490, 120
    %v1548 = vpop.permute.xlu0 %1547
    %1550 = vrot.lane.b32.xlu0 %v1491, 120
    %v1551 = vpop.permute.xlu0 %1550
    %v1553 = vsel %vm306, %v1548, 0
    %v1556 = vsel %vm306, %v1551, 0
    %1558 = vmatprep.subr.bf16.mxu0 0
    %1559 = vmatpush1.bf16.xpose.msra.mxu0 %v1556
    %1560 = vmatprep.subr.bf16.mxu0 0
    %1561 = vmatpush1.bf16.xpose.msra.mxu0 0
    %1562 = vmatprep.subr.bf16.mxu0 0
    %1563 = vmatpush1.bf16.xpose.msra.mxu0 0
    %1564 = vmatprep.subr.bf16.mxu0 0
    %1565 = vmatpush1.bf16.xpose.msra.mxu0 0
    %1566 = vmatprep.subr.bf16.mxu0 0
    %1567 = vmatpush1.bf16.xpose.msra.mxu0 0
    %1568 = vmatprep.subr.bf16.mxu0 0
    %1569 = vmatpush1.bf16.xpose.msra.mxu0 0
    %1570 = vmatprep.subr.bf16.mxu0 0
    %1571 = vmatpush1.bf16.xpose.msra.mxu0 0
    %1572 = vmatprep.subr.bf16.mxu0 0
    %1573 = vmatpush1.bf16.xpose.msra.mxu0 0
    %1574 = vmatprep.subr.bf16.mxu0 0
    %1575 = vmatpush1.bf16.xpose.msra.mxu0 0
    %1576 = vmatprep.subr.bf16.mxu0 0
    %1577 = vmatpush1.bf16.xpose.msra.mxu0 0
    %1578 = vmatprep.subr.bf16.mxu0 0
    %1579 = vmatpush1.bf16.xpose.msra.mxu0 0
    %1580 = vmatprep.subr.bf16.mxu0 0
    %1581 = vmatpush1.bf16.xpose.msra.mxu0 0
    %1582 = vmatprep.subr.bf16.mxu0 0
    %1583 = vmatpush1.bf16.xpose.msra.mxu0 0
    %1584 = vmatprep.subr.bf16.mxu0 0
    %1585 = vmatpush1.bf16.xpose.msra.mxu0 0
    %1586 = vmatprep.subr.bf16.mxu0 0
    %1587 = vmatpush1.bf16.xpose.msra.mxu0 0
    %1588 = vmatprep.subr.bf16.mxu0 0
    %1589 = vmatpush1.bf16.xpose.msra.mxu0 0
    %1590 = vmatprep.mubr.bf16.mxu0 0
    %1591 = vmatmul.mubr.bf16.gmra.mrb[0].mxu0 %v1553
    %v1592 = vpop.f32.mrb[0].mxu0
    %v1593 = vadd.f32 0.0, %v1592
    %v1594 = vpop.f32.mrb[0].mxu0
    %v1595 = vpop.f32.mrb[0].mxu0
    %v1596 = vpop.f32.mrb[0].mxu0
    %1597 = vdwg.mxu0
    %v1598 = vmul.f32 %v1593, 0.35355338
    %v1599 = vadd.f32 %v1598, %v1543
    %1600 = vrot.lane.b32.xlu0 %v1490, 112
    %v1601 = vpop.permute.xlu0 %1600
    %1602 = vrot.lane.b32.xlu0 %v1491, 112
    %v1603 = vpop.permute.xlu0 %1602
    %v1605 = vsel %vm306, %v1601, 0
    %v1608 = vsel %vm306, %v1603, 0
    %1610 = vmatprep.subr.bf16.mxu0 0
    %1611 = vmatpush1.bf16.xpose.msra.mxu0 %v1608
    %1612 = vmatprep.subr.bf16.mxu0 0
    %1613 = vmatpush1.bf16.xpose.msra.mxu0 0
    %1614 = vmatprep.subr.bf16.mxu0 0
    %1615 = vmatpush1.bf16.xpose.msra.mxu0 0
    %1616 = vmatprep.subr.bf16.mxu0 0
    %1617 = vmatpush1.bf16.xpose.msra.mxu0 0
    %1618 = vmatprep.subr.bf16.mxu0 0
    %1619 = vmatpush1.bf16.xpose.msra.mxu0 0
    %1620 = vmatprep.subr.bf16.mxu0 0
    %1621 = vmatpush1.bf16.xpose.msra.mxu0 0
    %1622 = vmatprep.subr.bf16.mxu0 0
    %1623 = vmatpush1.bf16.xpose.msra.mxu0 0
    %1624 = vmatprep.subr.bf16.mxu0 0
    %1625 = vmatpush1.bf16.xpose.msra.mxu0 0
    %1626 = vmatprep.subr.bf16.mxu0 0
    %1627 = vmatpush1.bf16.xpose.msra.mxu0 0
    %1628 = vmatprep.subr.bf16.mxu0 0
    %1629 = vmatpush1.bf16.xpose.msra.mxu0 0
    %1630 = vmatprep.subr.bf16.mxu0 0
    %1631 = vmatpush1.bf16.xpose.msra.mxu0 0
    %1632 = vmatprep.subr.bf16.mxu0 0
    %1633 = vmatpush1.bf16.xpose.msra.mxu0 0
    %1634 = vmatprep.subr.bf16.mxu0 0
    %1635 = vmatpush1.bf16.xpose.msra.mxu0 0
    %1636 = vmatprep.subr.bf16.mxu0 0
    %1637 = vmatpush1.bf16.xpose.msra.mxu0 0
    %1638 = vmatprep.subr.bf16.mxu0 0
    %1639 = vmatpush1.bf16.xpose.msra.mxu0 0
    %1640 = vmatprep.subr.bf16.mxu0 0
    %1641 = vmatpush1.bf16.xpose.msra.mxu0 0
    %1642 = vmatprep.mubr.bf16.mxu0 0
    %1643 = vmatmul.mubr.bf16.gmra.mrb[0].mxu0 %v1605
    %v1644 = vpop.f32.mrb[0].mxu0
    %v1645 = vadd.f32 0.0, %v1644
    %v1646 = vpop.f32.mrb[0].mxu0
    %v1647 = vpop.f32.mrb[0].mxu0
    %v1648 = vpop.f32.mrb[0].mxu0
    %1649 = vdwg.mxu0
    %v1650 = vmul.f32 %v1645, 0.35355338
    %v1651 = vadd.f32 %v1650, %v1543
    %1652 = vrot.lane.b32.xlu0 %v1490, 104
    %v1653 = vpop.permute.xlu0 %1652
    %1654 = vrot.lane.b32.xlu0 %v1491, 104
    %v1655 = vpop.permute.xlu0 %1654
    %v1657 = vsel %vm306, %v1653, 0
    %v1660 = vsel %vm306, %v1655, 0
    %1662 = vmatprep.subr.bf16.mxu0 0
    %1663 = vmatpush1.bf16.xpose.msra.mxu0 %v1660
    %1664 = vmatprep.subr.bf16.mxu0 0
    %1665 = vmatpush1.bf16.xpose.msra.mxu0 0
    %1666 = vmatprep.subr.bf16.mxu0 0
    %1667 = vmatpush1.bf16.xpose.msra.mxu0 0
    %1668 = vmatprep.subr.bf16.mxu0 0
    %1669 = vmatpush1.bf16.xpose.msra.mxu0 0
    %1670 = vmatprep.subr.bf16.mxu0 0
    %1671 = vmatpush1.bf16.xpose.msra.mxu0 0
    %1672 = vmatprep.subr.bf16.mxu0 0
    %1673 = vmatpush1.bf16.xpose.msra.mxu0 0
    %1674 = vmatprep.subr.bf16.mxu0 0
    %1675 = vmatpush1.bf16.xpose.msra.mxu0 0
    %1676 = vmatprep.subr.bf16.mxu0 0
    %1677 = vmatpush1.bf16.xpose.msra.mxu0 0
    %1678 = vmatprep.subr.bf16.mxu0 0
    %1679 = vmatpush1.bf16.xpose.msra.mxu0 0
    %1680 = vmatprep.subr.bf16.mxu0 0
    %1681 = vmatpush1.bf16.xpose.msra.mxu0 0
    %1682 = vmatprep.subr.bf16.mxu0 0
    %1683 = vmatpush1.bf16.xpose.msra.mxu0 0
    %1684 = vmatprep.subr.bf16.mxu0 0
    %1685 = vmatpush1.bf16.xpose.msra.mxu0 0
    %1686 = vmatprep.subr.bf16.mxu0 0
    %1687 = vmatpush1.bf16.xpose.msra.mxu0 0
    %1688 = vmatprep.subr.bf16.mxu0 0
    %1689 = vmatpush1.bf16.xpose.msra.mxu0 0
    %1690 = vmatprep.subr.bf16.mxu0 0
    %1691 = vmatpush1.bf16.xpose.msra.mxu0 0
    %1692 = vmatprep.subr.bf16.mxu0 0
    %1693 = vmatpush1.bf16.xpose.msra.mxu0 0
    %1694 = vmatprep.mubr.bf16.mxu0 0
    %1695 = vmatmul.mubr.bf16.gmra.mrb[0].mxu0 %v1657
    %v1696 = vpop.f32.mrb[0].mxu0
    %v1697 = vadd.f32 0.0, %v1696
    %v1698 = vpop.f32.mrb[0].mxu0
    %v1699 = vpop.f32.mrb[0].mxu0
    %v1700 = vpop.f32.mrb[0].mxu0
    %1701 = vdwg.mxu0
    %v1702 = vmul.f32 %v1697, 0.35355338
    %v1703 = vadd.f32 %v1702, %v1543
    %v1704 = vpack.c.bf16 %v1410, %v1410
    %v1705 = vpack.c.bf16 %v1482, %v1482
    %v1707 = vsel %vm306, %v1704, 0
    %v1710 = vsel %vm306, %v1705, 0
    %1712 = vmatprep.subr.bf16.mxu0 0
    %1713 = vmatpush1.bf16.xpose.msra.mxu0 %v1710
    %1714 = vmatprep.subr.bf16.mxu0 0
    %1715 = vmatpush1.bf16.xpose.msra.mxu0 0
    %1716 = vmatprep.subr.bf16.mxu0 0
    %1717 = vmatpush1.bf16.xpose.msra.mxu0 0
    %1718 = vmatprep.subr.bf16.mxu0 0
    %1719 = vmatpush1.bf16.xpose.msra.mxu0 0
    %1720 = vmatprep.subr.bf16.mxu0 0
    %1721 = vmatpush1.bf16.xpose.msra.mxu0 0
    %1722 = vmatprep.subr.bf16.mxu0 0
    %1723 = vmatpush1.bf16.xpose.msra.mxu0 0
    %1724 = vmatprep.subr.bf16.mxu0 0
    %1725 = vmatpush1.bf16.xpose.msra.mxu0 0
    %1726 = vmatprep.subr.bf16.mxu0 0
    %1727 = vmatpush1.bf16.xpose.msra.mxu0 0
    %1728 = vmatprep.subr.bf16.mxu0 0
    %1729 = vmatpush1.bf16.xpose.msra.mxu0 0
    %1730 = vmatprep.subr.bf16.mxu0 0
    %1731 = vmatpush1.bf16.xpose.msra.mxu0 0
    %1732 = vmatprep.subr.bf16.mxu0 0
    %1733 = vmatpush1.bf16.xpose.msra.mxu0 0
    %1734 = vmatprep.subr.bf16.mxu0 0
    %1735 = vmatpush1.bf16.xpose.msra.mxu0 0
    %1736 = vmatprep.subr.bf16.mxu0 0
    %1737 = vmatpush1.bf16.xpose.msra.mxu0 0
    %1738 = vmatprep.subr.bf16.mxu0 0
    %1739 = vmatpush1.bf16.xpose.msra.mxu0 0
    %1740 = vmatprep.subr.bf16.mxu0 0
    %1741 = vmatpush1.bf16.xpose.msra.mxu0 0
    %1742 = vmatprep.subr.bf16.mxu0 0
    %1743 = vmatpush1.bf16.xpose.msra.mxu0 0
    %1744 = vmatprep.mubr.bf16.mxu0 0
    %1745 = vmatmul.mubr.bf16.gmra.mrb[0].mxu0 %v1707
    %v1746 = vpop.f32.mrb[0].mxu0
    %v1747 = vadd.f32 0.0, %v1746
    %v1748 = vpop.f32.mrb[0].mxu0
    %v1749 = vpop.f32.mrb[0].mxu0
    %v1750 = vpop.f32.mrb[0].mxu0
    %1751 = vdwg.mxu0
    %v1752 = vmul.f32 %v1747, 0.35355338
    %v1754 = vlaneseq
    %v1755 = vshrl.u32 %v1754, 7
    %v1756 = vsub.s32 0, %v1755
    %v1757 = vrot.slane %v96, %v1756
    %v1759 = vadd.f32 %v1752, %v1757
    %1761 = vrot.lane.b32.xlu0 %v1704, 120
    %v1762 = vpop.permute.xlu0 %1761
    %1764 = vrot.lane.b32.xlu0 %v1705, 120
    %v1765 = vpop.permute.xlu0 %1764
    %v1767 = vsel %vm306, %v1762, 0
    %v1770 = vsel %vm306, %v1765, 0
    %1772 = vmatprep.subr.bf16.mxu0 0
    %1773 = vmatpush1.bf16.xpose.msra.mxu0 %v1770
    %1774 = vmatprep.subr.bf16.mxu0 0
    %1775 = vmatpush1.bf16.xpose.msra.mxu0 0
    %1776 = vmatprep.subr.bf16.mxu0 0
    %1777 = vmatpush1.bf16.xpose.msra.mxu0 0
    %1778 = vmatprep.subr.bf16.mxu0 0
    %1779 = vmatpush1.bf16.xpose.msra.mxu0 0
    %1780 = vmatprep.subr.bf16.mxu0 0
    %1781 = vmatpush1.bf16.xpose.msra.mxu0 0
    %1782 = vmatprep.subr.bf16.mxu0 0
    %1783 = vmatpush1.bf16.xpose.msra.mxu0 0
    %1784 = vmatprep.subr.bf16.mxu0 0
    %1785 = vmatpush1.bf16.xpose.msra.mxu0 0
    %1786 = vmatprep.subr.bf16.mxu0 0
    %1787 = vmatpush1.bf16.xpose.msra.mxu0 0
    %1788 = vmatprep.subr.bf16.mxu0 0
    %1789 = vmatpush1.bf16.xpose.msra.mxu0 0
    %1790 = vmatprep.subr.bf16.mxu0 0
    %1791 = vmatpush1.bf16.xpose.msra.mxu0 0
    %1792 = vmatprep.subr.bf16.mxu0 0
    %1793 = vmatpush1.bf16.xpose.msra.mxu0 0
    %1794 = vmatprep.subr.bf16.mxu0 0
    %1795 = vmatpush1.bf16.xpose.msra.mxu0 0
    %1796 = vmatprep.subr.bf16.mxu0 0
    %1797 = vmatpush1.bf16.xpose.msra.mxu0 0
    %1798 = vmatprep.subr.bf16.mxu0 0
    %1799 = vmatpush1.bf16.xpose.msra.mxu0 0
    %1800 = vmatprep.subr.bf16.mxu0 0
    %1801 = vmatpush1.bf16.xpose.msra.mxu0 0
    %1802 = vmatprep.subr.bf16.mxu0 0
    %1803 = vmatpush1.bf16.xpose.msra.mxu0 0
    %1804 = vmatprep.mubr.bf16.mxu0 0
    %1805 = vmatmul.mubr.bf16.gmra.mrb[0].mxu0 %v1767
    %v1806 = vpop.f32.mrb[0].mxu0
    %v1807 = vadd.f32 0.0, %v1806
    %v1808 = vpop.f32.mrb[0].mxu0
    %v1809 = vpop.f32.mrb[0].mxu0
    %v1810 = vpop.f32.mrb[0].mxu0
    %1811 = vdwg.mxu0
    %v1812 = vmul.f32 %v1807, 0.35355338
    %v1813 = vadd.f32 %v1812, %v1757
    %1814 = vrot.lane.b32.xlu0 %v1704, 112
    %v1815 = vpop.permute.xlu0 %1814
    %1816 = vrot.lane.b32.xlu0 %v1705, 112
    %v1817 = vpop.permute.xlu0 %1816
    %v1819 = vsel %vm306, %v1815, 0
    %v1822 = vsel %vm306, %v1817, 0
    %1824 = vmatprep.subr.bf16.mxu0 0
    %1825 = vmatpush1.bf16.xpose.msra.mxu0 %v1822
    %1826 = vmatprep.subr.bf16.mxu0 0
    %1827 = vmatpush1.bf16.xpose.msra.mxu0 0
    %1828 = vmatprep.subr.bf16.mxu0 0
    %1829 = vmatpush1.bf16.xpose.msra.mxu0 0
    %1830 = vmatprep.subr.bf16.mxu0 0
    %1831 = vmatpush1.bf16.xpose.msra.mxu0 0
    %1832 = vmatprep.subr.bf16.mxu0 0
    %1833 = vmatpush1.bf16.xpose.msra.mxu0 0
    %1834 = vmatprep.subr.bf16.mxu0 0
    %1835 = vmatpush1.bf16.xpose.msra.mxu0 0
    %1836 = vmatprep.subr.bf16.mxu0 0
    %1837 = vmatpush1.bf16.xpose.msra.mxu0 0
    %1838 = vmatprep.subr.bf16.mxu0 0
    %1839 = vmatpush1.bf16.xpose.msra.mxu0 0
    %1840 = vmatprep.subr.bf16.mxu0 0
    %1841 = vmatpush1.bf16.xpose.msra.mxu0 0
    %1842 = vmatprep.subr.bf16.mxu0 0
    %1843 = vmatpush1.bf16.xpose.msra.mxu0 0
    %1844 = vmatprep.subr.bf16.mxu0 0
    %1845 = vmatpush1.bf16.xpose.msra.mxu0 0
    %1846 = vmatprep.subr.bf16.mxu0 0
    %1847 = vmatpush1.bf16.xpose.msra.mxu0 0
    %1848 = vmatprep.subr.bf16.mxu0 0
    %1849 = vmatpush1.bf16.xpose.msra.mxu0 0
    %1850 = vmatprep.subr.bf16.mxu0 0
    %1851 = vmatpush1.bf16.xpose.msra.mxu0 0
    %1852 = vmatprep.subr.bf16.mxu0 0
    %1853 = vmatpush1.bf16.xpose.msra.mxu0 0
    %1854 = vmatprep.subr.bf16.mxu0 0
    %1855 = vmatpush1.bf16.xpose.msra.mxu0 0
    %1856 = vmatprep.mubr.bf16.mxu0 0
    %1857 = vmatmul.mubr.bf16.gmra.mrb[0].mxu0 %v1819
    %v1858 = vpop.f32.mrb[0].mxu0
    %v1859 = vadd.f32 0.0, %v1858
    %v1860 = vpop.f32.mrb[0].mxu0
    %v1861 = vpop.f32.mrb[0].mxu0
    %v1862 = vpop.f32.mrb[0].mxu0
    %1863 = vdwg.mxu0
    %v1864 = vmul.f32 %v1859, 0.35355338
    %v1865 = vadd.f32 %v1864, %v1757
    %1866 = vrot.lane.b32.xlu0 %v1704, 104
    %v1867 = vpop.permute.xlu0 %1866
    %1868 = vrot.lane.b32.xlu0 %v1705, 104
    %v1869 = vpop.permute.xlu0 %1868
    %v1871 = vsel %vm306, %v1867, 0
    %v1874 = vsel %vm306, %v1869, 0
    %1876 = vmatprep.subr.bf16.mxu0 0
    %1877 = vmatpush1.bf16.xpose.msra.mxu0 %v1874
    %1878 = vmatprep.subr.bf16.mxu0 0
    %1879 = vmatpush1.bf16.xpose.msra.mxu0 0
    %1880 = vmatprep.subr.bf16.mxu0 0
    %1881 = vmatpush1.bf16.xpose.msra.mxu0 0
    %1882 = vmatprep.subr.bf16.mxu0 0
    %1883 = vmatpush1.bf16.xpose.msra.mxu0 0
    %1884 = vmatprep.subr.bf16.mxu0 0
    %1885 = vmatpush1.bf16.xpose.msra.mxu0 0
    %1886 = vmatprep.subr.bf16.mxu0 0
    %1887 = vmatpush1.bf16.xpose.msra.mxu0 0
    %1888 = vmatprep.subr.bf16.mxu0 0
    %1889 = vmatpush1.bf16.xpose.msra.mxu0 0
    %1890 = vmatprep.subr.bf16.mxu0 0
    %1891 = vmatpush1.bf16.xpose.msra.mxu0 0
    %1892 = vmatprep.subr.bf16.mxu0 0
    %1893 = vmatpush1.bf16.xpose.msra.mxu0 0
    %1894 = vmatprep.subr.bf16.mxu0 0
    %1895 = vmatpush1.bf16.xpose.msra.mxu0 0
    %1896 = vmatprep.subr.bf16.mxu0 0
    %1897 = vmatpush1.bf16.xpose.msra.mxu0 0
    %1898 = vmatprep.subr.bf16.mxu0 0
    %1899 = vmatpush1.bf16.xpose.msra.mxu0 0
    %1900 = vmatprep.subr.bf16.mxu0 0
    %1901 = vmatpush1.bf16.xpose.msra.mxu0 0
    %1902 = vmatprep.subr.bf16.mxu0 0
    %1903 = vmatpush1.bf16.xpose.msra.mxu0 0
    %1904 = vmatprep.subr.bf16.mxu0 0
    %1905 = vmatpush1.bf16.xpose.msra.mxu0 0
    %1906 = vmatprep.subr.bf16.mxu0 0
    %1907 = vmatpush1.bf16.xpose.msra.mxu0 0
    %1908 = vmatprep.mubr.bf16.mxu0 0
    %1909 = vmatmul.mubr.bf16.gmra.mrb[0].mxu0 %v1871
    %v1910 = vpop.f32.mrb[0].mxu0
    %v1911 = vadd.f32 0.0, %v1910
    %v1912 = vpop.f32.mrb[0].mxu0
    %v1913 = vpop.f32.mrb[0].mxu0
    %v1914 = vpop.f32.mrb[0].mxu0
    %1915 = vdwg.mxu0
    %v1916 = vmul.f32 %v1911, 0.35355338
    %v1917 = vadd.f32 %v1916, %v1757
    %v1918 = vsel %vm306, %v1545, -inf
    %1919 = vmax.xlane.f32.xlu0 %v1918
    %v1920 = vpop.xlane.xlu0 %1919
    %v1921 = vsel %vm306, %v1599, -inf
    %1922 = vmax.xlane.f32.xlu0 %v1921
    %v1923 = vpop.xlane.xlu0 %1922
    %v1924 = vsel %vm306, %v1651, -inf
    %1925 = vmax.xlane.f32.xlu0 %v1924
    %v1926 = vpop.xlane.xlu0 %1925
    %v1927 = vsel %vm306, %v1703, -inf
    %1928 = vmax.xlane.f32.xlu0 %v1927
    %v1929 = vpop.xlane.xlu0 %1928
    %v1930 = vsel %vm306, %v1759, -inf
    %1931 = vmax.xlane.f32.xlu0 %v1930
    %v1932 = vpop.xlane.xlu0 %1931
    %v1933 = vsel %vm306, %v1813, -inf
    %1934 = vmax.xlane.f32.xlu0 %v1933
    %v1935 = vpop.xlane.xlu0 %1934
    %v1936 = vsel %vm306, %v1865, -inf
    %1937 = vmax.xlane.f32.xlu0 %v1936
    %v1938 = vpop.xlane.xlu0 %1937
    %v1939 = vsel %vm306, %v1917, -inf
    %1940 = vmax.xlane.f32.xlu0 %v1939
    %v1941 = vpop.xlane.xlu0 %1940
    %v1942 = vsub.f32 %v1545, %v1920
    %v1943 = vsub.f32 %v1599, %v1923
    %v1944 = vsub.f32 %v1651, %v1926
    %v1945 = vsub.f32 %v1703, %v1929
    %v1946 = vsub.f32 %v1759, %v1932
    %v1947 = vsub.f32 %v1813, %v1935
    %v1948 = vsub.f32 %v1865, %v1938
    %v1949 = vsub.f32 %v1917, %v1941
    %v1950 = vmul.f32 %v1942, 1.442695
    %v1951 = vpow.pop %v1950
    %v1952 = vmul.f32 %v1943, 1.442695
    %v1953 = vpow.pop %v1952
    %v1954 = vmul.f32 %v1944, 1.442695
    %v1955 = vpow.pop %v1954
    %v1956 = vmul.f32 %v1945, 1.442695
    %v1957 = vpow.pop %v1956
    %v1958 = vmul.f32 %v1946, 1.442695
    %v1959 = vpow.pop %v1958
    %v1960 = vmul.f32 %v1947, 1.442695
    %v1961 = vpow.pop %v1960
    %v1962 = vmul.f32 %v1948, 1.442695
    %v1963 = vpow.pop %v1962
    %v1964 = vmul.f32 %v1949, 1.442695
    %v1965 = vpow.pop %v1964
    %v1966 = vsel %vm306, %v1951, 0.0
    %1967 = vadd.xlane.f32.xlu0 %v1966
    %v1968 = vpop.xlane.xlu0 %1967
    %v1969 = vsel %vm306, %v1953, 0.0
    %1970 = vadd.xlane.f32.xlu0 %v1969
    %v1971 = vpop.xlane.xlu0 %1970
    %v1972 = vsel %vm306, %v1955, 0.0
    %1973 = vadd.xlane.f32.xlu0 %v1972
    %v1974 = vpop.xlane.xlu0 %1973
    %v1975 = vsel %vm306, %v1957, 0.0
    %1976 = vadd.xlane.f32.xlu0 %v1975
    %v1977 = vpop.xlane.xlu0 %1976
    %v1978 = vsel %vm306, %v1959, 0.0
    %1979 = vadd.xlane.f32.xlu0 %v1978
    %v1980 = vpop.xlane.xlu0 %1979
    %v1981 = vsel %vm306, %v1961, 0.0
    %1982 = vadd.xlane.f32.xlu0 %v1981
    %v1983 = vpop.xlane.xlu0 %1982
    %v1984 = vsel %vm306, %v1963, 0.0
    %1985 = vadd.xlane.f32.xlu0 %v1984
    %v1986 = vpop.xlane.xlu0 %1985
    %v1987 = vsel %vm306, %v1965, 0.0
    %1988 = vadd.xlane.f32.xlu0 %v1987
    %v1989 = vpop.xlane.xlu0 %1988
    %v1990 = vrcp.pop %v1968
    %v1991 = vrcp.pop %v1971
    %v1992 = vrcp.pop %v1974
    %v1993 = vrcp.pop %v1977
    %v1994 = vrcp.pop %v1980
    %v1995 = vrcp.pop %v1983
    %v1996 = vrcp.pop %v1986
    %v1997 = vrcp.pop %v1989
    %v1998 = vmul.f32 %v1951, %v1990
    %v1999 = vmul.f32 %v1953, %v1991
    %v2000 = vmul.f32 %v1955, %v1992
    %v2001 = vmul.f32 %v1957, %v1993
    %v2002 = vmul.f32 %v1959, %v1994
    %v2003 = vmul.f32 %v1961, %v1995
    %v2004 = vmul.f32 %v1963, %v1996
    %v2005 = vmul.f32 %v1965, %v1997
    %v2006 = vpack.c.bf16 %v1999, %v1998
    %v2007 = vpack.c.bf16 %v2001, %v2000
    %v2008 = vpack.c.bf16 %v2003, %v2002
    %v2009 = vpack.c.bf16 %v2005, %v2004
    %2010 = vrot.lane.b32.xlu0 %v1491, 96
    %v2011 = vpop.permute.xlu0 %2010
    %v2013 = vsel %vm306, %v2006, 0
    %v2016 = vsel %vm180, %v2011, 0
    %2018 = vmatprep.subr.bf16.mxu0 0
    %2019 = vmatpush1.bf16.msra.mxu0 %v2016
    %2020 = vmatprep.subr.bf16.mxu0 0
    %2021 = vmatpush1.bf16.msra.mxu0 0
    %2022 = vmatprep.subr.bf16.mxu0 0
    %2023 = vmatpush1.bf16.msra.mxu0 0
    %2024 = vmatprep.subr.bf16.mxu0 0
    %2025 = vmatpush1.bf16.msra.mxu0 0
    %2026 = vmatprep.subr.bf16.mxu0 0
    %2027 = vmatpush1.bf16.msra.mxu0 0
    %2028 = vmatprep.subr.bf16.mxu0 0
    %2029 = vmatpush1.bf16.msra.mxu0 0
    %2030 = vmatprep.subr.bf16.mxu0 0
    %2031 = vmatpush1.bf16.msra.mxu0 0
    %2032 = vmatprep.subr.bf16.mxu0 0
    %2033 = vmatpush1.bf16.msra.mxu0 0
    %2034 = vmatprep.subr.bf16.mxu0 0
    %2035 = vmatpush1.bf16.msra.mxu0 0
    %2036 = vmatprep.subr.bf16.mxu0 0
    %2037 = vmatpush1.bf16.msra.mxu0 0
    %2038 = vmatprep.subr.bf16.mxu0 0
    %2039 = vmatpush1.bf16.msra.mxu0 0
    %2040 = vmatprep.subr.bf16.mxu0 0
    %2041 = vmatpush1.bf16.msra.mxu0 0
    %2042 = vmatprep.subr.bf16.mxu0 0
    %2043 = vmatpush1.bf16.msra.mxu0 0
    %2044 = vmatprep.subr.bf16.mxu0 0
    %2045 = vmatpush1.bf16.msra.mxu0 0
    %2046 = vmatprep.subr.bf16.mxu0 0
    %2047 = vmatpush1.bf16.msra.mxu0 0
    %2048 = vmatprep.subr.bf16.mxu0 0
    %2049 = vmatpush1.bf16.msra.mxu0 0
    %2050 = vmatprep.mubr.bf16.mxu0 0
    %2051 = vmatmul.mubr.bf16.gmra.mrb[0].mxu0 %v2013
    %v2052 = vpop.f32.mrb[0].mxu0
    %v2053 = vadd.f32 0.0, %v2052
    %v2054 = vpop.f32.mrb[0].mxu0
    %v2055 = vpop.f32.mrb[0].mxu0
    %v2056 = vpop.f32.mrb[0].mxu0
    %2057 = vdwg.mxu0
    %v2059 = vrot.slane %v2006, 4
    %2060 = vrot.lane.b32.xlu0 %v1491, 88
    %v2061 = vpop.permute.xlu0 %2060
    %v2063 = vsel %vm306, %v2059, 0
    %v2066 = vsel %vm180, %v2061, 0
    %2068 = vmatprep.subr.bf16.mxu0 0
    %2069 = vmatpush1.bf16.msra.mxu0 %v2066
    %2070 = vmatprep.subr.bf16.mxu0 0
    %2071 = vmatpush1.bf16.msra.mxu0 0
    %2072 = vmatprep.subr.bf16.mxu0 0
    %2073 = vmatpush1.bf16.msra.mxu0 0
    %2074 = vmatprep.subr.bf16.mxu0 0
    %2075 = vmatpush1.bf16.msra.mxu0 0
    %2076 = vmatprep.subr.bf16.mxu0 0
    %2077 = vmatpush1.bf16.msra.mxu0 0
    %2078 = vmatprep.subr.bf16.mxu0 0
    %2079 = vmatpush1.bf16.msra.mxu0 0
    %2080 = vmatprep.subr.bf16.mxu0 0
    %2081 = vmatpush1.bf16.msra.mxu0 0
    %2082 = vmatprep.subr.bf16.mxu0 0
    %2083 = vmatpush1.bf16.msra.mxu0 0
    %2084 = vmatprep.subr.bf16.mxu0 0
    %2085 = vmatpush1.bf16.msra.mxu0 0
    %2086 = vmatprep.subr.bf16.mxu0 0
    %2087 = vmatpush1.bf16.msra.mxu0 0
    %2088 = vmatprep.subr.bf16.mxu0 0
    %2089 = vmatpush1.bf16.msra.mxu0 0
    %2090 = vmatprep.subr.bf16.mxu0 0
    %2091 = vmatpush1.bf16.msra.mxu0 0
    %2092 = vmatprep.subr.bf16.mxu0 0
    %2093 = vmatpush1.bf16.msra.mxu0 0
    %2094 = vmatprep.subr.bf16.mxu0 0
    %2095 = vmatpush1.bf16.msra.mxu0 0
    %2096 = vmatprep.subr.bf16.mxu0 0
    %2097 = vmatpush1.bf16.msra.mxu0 0
    %2098 = vmatprep.subr.bf16.mxu0 0
    %2099 = vmatpush1.bf16.msra.mxu0 0
    %2100 = vmatprep.mubr.bf16.mxu0 0
    %2101 = vmatmul.mubr.bf16.gmra.mrb[0].mxu0 %v2063
    %v2102 = vpop.f32.mrb[0].mxu0
    %v2103 = vadd.f32 0.0, %v2102
    %v2104 = vpop.f32.mrb[0].mxu0
    %v2105 = vpop.f32.mrb[0].mxu0
    %v2106 = vpop.f32.mrb[0].mxu0
    %2107 = vdwg.mxu0
    %2108 = vrot.lane.b32.xlu0 %v1491, 80
    %v2109 = vpop.permute.xlu0 %2108
    %v2111 = vsel %vm306, %v2007, 0
    %v2114 = vsel %vm180, %v2109, 0
    %2116 = vmatprep.subr.bf16.mxu0 0
    %2117 = vmatpush1.bf16.msra.mxu0 %v2114
    %2118 = vmatprep.subr.bf16.mxu0 0
    %2119 = vmatpush1.bf16.msra.mxu0 0
    %2120 = vmatprep.subr.bf16.mxu0 0
    %2121 = vmatpush1.bf16.msra.mxu0 0
    %2122 = vmatprep.subr.bf16.mxu0 0
    %2123 = vmatpush1.bf16.msra.mxu0 0
    %2124 = vmatprep.subr.bf16.mxu0 0
    %2125 = vmatpush1.bf16.msra.mxu0 0
    %2126 = vmatprep.subr.bf16.mxu0 0
    %2127 = vmatpush1.bf16.msra.mxu0 0
    %2128 = vmatprep.subr.bf16.mxu0 0
    %2129 = vmatpush1.bf16.msra.mxu0 0
    %2130 = vmatprep.subr.bf16.mxu0 0
    %2131 = vmatpush1.bf16.msra.mxu0 0
    %2132 = vmatprep.subr.bf16.mxu0 0
    %2133 = vmatpush1.bf16.msra.mxu0 0
    %2134 = vmatprep.subr.bf16.mxu0 0
    %2135 = vmatpush1.bf16.msra.mxu0 0
    %2136 = vmatprep.subr.bf16.mxu0 0
    %2137 = vmatpush1.bf16.msra.mxu0 0
    %2138 = vmatprep.subr.bf16.mxu0 0
    %2139 = vmatpush1.bf16.msra.mxu0 0
    %2140 = vmatprep.subr.bf16.mxu0 0
    %2141 = vmatpush1.bf16.msra.mxu0 0
    %2142 = vmatprep.subr.bf16.mxu0 0
    %2143 = vmatpush1.bf16.msra.mxu0 0
    %2144 = vmatprep.subr.bf16.mxu0 0
    %2145 = vmatpush1.bf16.msra.mxu0 0
    %2146 = vmatprep.subr.bf16.mxu0 0
    %2147 = vmatpush1.bf16.msra.mxu0 0
    %2148 = vmatprep.mubr.bf16.mxu0 0
    %2149 = vmatmul.mubr.bf16.gmra.mrb[0].mxu0 %v2111
    %v2150 = vpop.f32.mrb[0].mxu0
    %v2151 = vadd.f32 0.0, %v2150
    %v2152 = vpop.f32.mrb[0].mxu0
    %v2153 = vpop.f32.mrb[0].mxu0
    %v2154 = vpop.f32.mrb[0].mxu0
    %2155 = vdwg.mxu0
    %v2157 = vrot.slane %v2007, 4
    %2158 = vrot.lane.b32.xlu0 %v1491, 72
    %v2159 = vpop.permute.xlu0 %2158
    %v2161 = vsel %vm306, %v2157, 0
    %v2164 = vsel %vm180, %v2159, 0
    %2166 = vmatprep.subr.bf16.mxu0 0
    %2167 = vmatpush1.bf16.msra.mxu0 %v2164
    %2168 = vmatprep.subr.bf16.mxu0 0
    %2169 = vmatpush1.bf16.msra.mxu0 0
    %2170 = vmatprep.subr.bf16.mxu0 0
    %2171 = vmatpush1.bf16.msra.mxu0 0
    %2172 = vmatprep.subr.bf16.mxu0 0
    %2173 = vmatpush1.bf16.msra.mxu0 0
    %2174 = vmatprep.subr.bf16.mxu0 0
    %2175 = vmatpush1.bf16.msra.mxu0 0
    %2176 = vmatprep.subr.bf16.mxu0 0
    %2177 = vmatpush1.bf16.msra.mxu0 0
    %2178 = vmatprep.subr.bf16.mxu0 0
    %2179 = vmatpush1.bf16.msra.mxu0 0
    %2180 = vmatprep.subr.bf16.mxu0 0
    %2181 = vmatpush1.bf16.msra.mxu0 0
    %2182 = vmatprep.subr.bf16.mxu0 0
    %2183 = vmatpush1.bf16.msra.mxu0 0
    %2184 = vmatprep.subr.bf16.mxu0 0
    %2185 = vmatpush1.bf16.msra.mxu0 0
    %2186 = vmatprep.subr.bf16.mxu0 0
    %2187 = vmatpush1.bf16.msra.mxu0 0
    %2188 = vmatprep.subr.bf16.mxu0 0
    %2189 = vmatpush1.bf16.msra.mxu0 0
    %2190 = vmatprep.subr.bf16.mxu0 0
    %2191 = vmatpush1.bf16.msra.mxu0 0
    %2192 = vmatprep.subr.bf16.mxu0 0
    %2193 = vmatpush1.bf16.msra.mxu0 0
    %2194 = vmatprep.subr.bf16.mxu0 0
    %2195 = vmatpush1.bf16.msra.mxu0 0
    %2196 = vmatprep.subr.bf16.mxu0 0
    %2197 = vmatpush1.bf16.msra.mxu0 0
    %2198 = vmatprep.mubr.bf16.mxu0 0
    %2199 = vmatmul.mubr.bf16.gmra.mrb[0].mxu0 %v2161
    %v2200 = vpop.f32.mrb[0].mxu0
    %v2201 = vadd.f32 0.0, %v2200
    %v2202 = vpop.f32.mrb[0].mxu0
    %v2203 = vpop.f32.mrb[0].mxu0
    %v2204 = vpop.f32.mrb[0].mxu0
    %2205 = vdwg.mxu0
    %2207 = vrot.lane.b32.xlu0 %v2103, 8
    %v2208 = vpop.permute.xlu0 %2207
    %2211 = vrot.lane.b32.xlu0 %v2151, 16
    %v2212 = vpop.permute.xlu0 %2211
    %2215 = vrot.lane.b32.xlu0 %v2201, 24
    %v2216 = vpop.permute.xlu0 %2215
    %v2218 = vsel %vm306, %v2053, %v2208
    %v2219 = vsel %vm1020, %v2218, %v2212
    %v2220 = vsel %vm1022, %v2219, %v2216
    %2221 = vrot.lane.b32.xlu0 %v1705, 96
    %v2222 = vpop.permute.xlu0 %2221
    %v2224 = vsel %vm306, %v2008, 0
    %v2227 = vsel %vm180, %v2222, 0
    %2229 = vmatprep.subr.bf16.mxu0 0
    %2230 = vmatpush1.bf16.msra.mxu0 %v2227
    %2231 = vmatprep.subr.bf16.mxu0 0
    %2232 = vmatpush1.bf16.msra.mxu0 0
    %2233 = vmatprep.subr.bf16.mxu0 0
    %2234 = vmatpush1.bf16.msra.mxu0 0
    %2235 = vmatprep.subr.bf16.mxu0 0
    %2236 = vmatpush1.bf16.msra.mxu0 0
    %2237 = vmatprep.subr.bf16.mxu0 0
    %2238 = vmatpush1.bf16.msra.mxu0 0
    %2239 = vmatprep.subr.bf16.mxu0 0
    %2240 = vmatpush1.bf16.msra.mxu0 0
    %2241 = vmatprep.subr.bf16.mxu0 0
    %2242 = vmatpush1.bf16.msra.mxu0 0
    %2243 = vmatprep.subr.bf16.mxu0 0
    %2244 = vmatpush1.bf16.msra.mxu0 0
    %2245 = vmatprep.subr.bf16.mxu0 0
    %2246 = vmatpush1.bf16.msra.mxu0 0
    %2247 = vmatprep.subr.bf16.mxu0 0
    %2248 = vmatpush1.bf16.msra.mxu0 0
    %2249 = vmatprep.subr.bf16.mxu0 0
    %2250 = vmatpush1.bf16.msra.mxu0 0
    %2251 = vmatprep.subr.bf16.mxu0 0
    %2252 = vmatpush1.bf16.msra.mxu0 0
    %2253 = vmatprep.subr.bf16.mxu0 0
    %2254 = vmatpush1.bf16.msra.mxu0 0
    %2255 = vmatprep.subr.bf16.mxu0 0
    %2256 = vmatpush1.bf16.msra.mxu0 0
    %2257 = vmatprep.subr.bf16.mxu0 0
    %2258 = vmatpush1.bf16.msra.mxu0 0
    %2259 = vmatprep.subr.bf16.mxu0 0
    %2260 = vmatpush1.bf16.msra.mxu0 0
    %2261 = vmatprep.mubr.bf16.mxu0 0
    %2262 = vmatmul.mubr.bf16.gmra.mrb[0].mxu0 %v2224
    %v2263 = vpop.f32.mrb[0].mxu0
    %v2264 = vadd.f32 0.0, %v2263
    %v2265 = vpop.f32.mrb[0].mxu0
    %v2266 = vpop.f32.mrb[0].mxu0
    %v2267 = vpop.f32.mrb[0].mxu0
    %2268 = vdwg.mxu0
    %v2270 = vrot.slane %v2008, 4
    %2271 = vrot.lane.b32.xlu0 %v1705, 88
    %v2272 = vpop.permute.xlu0 %2271
    %v2274 = vsel %vm306, %v2270, 0
    %v2277 = vsel %vm180, %v2272, 0
    %2279 = vmatprep.subr.bf16.mxu0 0
    %2280 = vmatpush1.bf16.msra.mxu0 %v2277
    %2281 = vmatprep.subr.bf16.mxu0 0
    %2282 = vmatpush1.bf16.msra.mxu0 0
    %2283 = vmatprep.subr.bf16.mxu0 0
    %2284 = vmatpush1.bf16.msra.mxu0 0
    %2285 = vmatprep.subr.bf16.mxu0 0
    %2286 = vmatpush1.bf16.msra.mxu0 0
    %2287 = vmatprep.subr.bf16.mxu0 0
    %2288 = vmatpush1.bf16.msra.mxu0 0
    %2289 = vmatprep.subr.bf16.mxu0 0
    %2290 = vmatpush1.bf16.msra.mxu0 0
    %2291 = vmatprep.subr.bf16.mxu0 0
    %2292 = vmatpush1.bf16.msra.mxu0 0
    %2293 = vmatprep.subr.bf16.mxu0 0
    %2294 = vmatpush1.bf16.msra.mxu0 0
    %2295 = vmatprep.subr.bf16.mxu0 0
    %2296 = vmatpush1.bf16.msra.mxu0 0
    %2297 = vmatprep.subr.bf16.mxu0 0
    %2298 = vmatpush1.bf16.msra.mxu0 0
    %2299 = vmatprep.subr.bf16.mxu0 0
    %2300 = vmatpush1.bf16.msra.mxu0 0
    %2301 = vmatprep.subr.bf16.mxu0 0
    %2302 = vmatpush1.bf16.msra.mxu0 0
    %2303 = vmatprep.subr.bf16.mxu0 0
    %2304 = vmatpush1.bf16.msra.mxu0 0
    %2305 = vmatprep.subr.bf16.mxu0 0
    %2306 = vmatpush1.bf16.msra.mxu0 0
    %2307 = vmatprep.subr.bf16.mxu0 0
    %2308 = vmatpush1.bf16.msra.mxu0 0
    %2309 = vmatprep.subr.bf16.mxu0 0
    %2310 = vmatpush1.bf16.msra.mxu0 0
    %2311 = vmatprep.mubr.bf16.mxu0 0
    %2312 = vmatmul.mubr.bf16.gmra.mrb[0].mxu0 %v2274
    %v2313 = vpop.f32.mrb[0].mxu0
    %v2314 = vadd.f32 0.0, %v2313
    %v2315 = vpop.f32.mrb[0].mxu0
    %v2316 = vpop.f32.mrb[0].mxu0
    %v2317 = vpop.f32.mrb[0].mxu0
    %2318 = vdwg.mxu0
    %2319 = vrot.lane.b32.xlu0 %v1705, 80
    %v2320 = vpop.permute.xlu0 %2319
    %v2322 = vsel %vm306, %v2009, 0
    %v2325 = vsel %vm180, %v2320, 0
    %2327 = vmatprep.subr.bf16.mxu0 0
    %2328 = vmatpush1.bf16.msra.mxu0 %v2325
    %2329 = vmatprep.subr.bf16.mxu0 0
    %2330 = vmatpush1.bf16.msra.mxu0 0
    %2331 = vmatprep.subr.bf16.mxu0 0
    %2332 = vmatpush1.bf16.msra.mxu0 0
    %2333 = vmatprep.subr.bf16.mxu0 0
    %2334 = vmatpush1.bf16.msra.mxu0 0
    %2335 = vmatprep.subr.bf16.mxu0 0
    %2336 = vmatpush1.bf16.msra.mxu0 0
    %2337 = vmatprep.subr.bf16.mxu0 0
    %2338 = vmatpush1.bf16.msra.mxu0 0
    %2339 = vmatprep.subr.bf16.mxu0 0
    %2340 = vmatpush1.bf16.msra.mxu0 0
    %2341 = vmatprep.subr.bf16.mxu0 0
    %2342 = vmatpush1.bf16.msra.mxu0 0
    %2343 = vmatprep.subr.bf16.mxu0 0
    %2344 = vmatpush1.bf16.msra.mxu0 0
    %2345 = vmatprep.subr.bf16.mxu0 0
    %2346 = vmatpush1.bf16.msra.mxu0 0
    %2347 = vmatprep.subr.bf16.mxu0 0
    %2348 = vmatpush1.bf16.msra.mxu0 0
    %2349 = vmatprep.subr.bf16.mxu0 0
    %2350 = vmatpush1.bf16.msra.mxu0 0
    %2351 = vmatprep.subr.bf16.mxu0 0
    %2352 = vmatpush1.bf16.msra.mxu0 0
    %2353 = vmatprep.subr.bf16.mxu0 0
    %2354 = vmatpush1.bf16.msra.mxu0 0
    %2355 = vmatprep.subr.bf16.mxu0 0
    %2356 = vmatpush1.bf16.msra.mxu0 0
    %2357 = vmatprep.subr.bf16.mxu0 0
    %2358 = vmatpush1.bf16.msra.mxu0 0
    %2359 = vmatprep.mubr.bf16.mxu0 0
    %2360 = vmatmul.mubr.bf16.gmra.mrb[0].mxu0 %v2322
    %v2361 = vpop.f32.mrb[0].mxu0
    %v2362 = vadd.f32 0.0, %v2361
    %v2363 = vpop.f32.mrb[0].mxu0
    %v2364 = vpop.f32.mrb[0].mxu0
    %v2365 = vpop.f32.mrb[0].mxu0
    %2366 = vdwg.mxu0
    %v2368 = vrot.slane %v2009, 4
    %2369 = vrot.lane.b32.xlu0 %v1705, 72
    %v2370 = vpop.permute.xlu0 %2369
    %v2372 = vsel %vm306, %v2368, 0
    %v2375 = vsel %vm180, %v2370, 0
    %2377 = vmatprep.subr.bf16.mxu0 0
    %2378 = vmatpush1.bf16.msra.mxu0 %v2375
    %2379 = vmatprep.subr.bf16.mxu0 0
    %2380 = vmatpush1.bf16.msra.mxu0 0
    %2381 = vmatprep.subr.bf16.mxu0 0
    %2382 = vmatpush1.bf16.msra.mxu0 0
    %2383 = vmatprep.subr.bf16.mxu0 0
    %2384 = vmatpush1.bf16.msra.mxu0 0
    %2385 = vmatprep.subr.bf16.mxu0 0
    %2386 = vmatpush1.bf16.msra.mxu0 0
    %2387 = vmatprep.subr.bf16.mxu0 0
    %2388 = vmatpush1.bf16.msra.mxu0 0
    %2389 = vmatprep.subr.bf16.mxu0 0
    %2390 = vmatpush1.bf16.msra.mxu0 0
    %2391 = vmatprep.subr.bf16.mxu0 0
    %2392 = vmatpush1.bf16.msra.mxu0 0
    %2393 = vmatprep.subr.bf16.mxu0 0
    %2394 = vmatpush1.bf16.msra.mxu0 0
    %2395 = vmatprep.subr.bf16.mxu0 0
    %2396 = vmatpush1.bf16.msra.mxu0 0
    %2397 = vmatprep.subr.bf16.mxu0 0
    %2398 = vmatpush1.bf16.msra.mxu0 0
    %2399 = vmatprep.subr.bf16.mxu0 0
    %2400 = vmatpush1.bf16.msra.mxu0 0
    %2401 = vmatprep.subr.bf16.mxu0 0
    %2402 = vmatpush1.bf16.msra.mxu0 0
    %2403 = vmatprep.subr.bf16.mxu0 0
    %2404 = vmatpush1.bf16.msra.mxu0 0
    %2405 = vmatprep.subr.bf16.mxu0 0
    %2406 = vmatpush1.bf16.msra.mxu0 0
    %2407 = vmatprep.subr.bf16.mxu0 0
    %2408 = vmatpush1.bf16.msra.mxu0 0
    %2409 = vmatprep.mubr.bf16.mxu0 0
    %2410 = vmatmul.mubr.bf16.gmra.mrb[0].mxu0 %v2372
    %v2411 = vpop.f32.mrb[0].mxu0
    %v2412 = vadd.f32 0.0, %v2411
    %v2413 = vpop.f32.mrb[0].mxu0
    %v2414 = vpop.f32.mrb[0].mxu0
    %v2415 = vpop.f32.mrb[0].mxu0
    %2416 = vdwg.mxu0
    %2418 = vrot.lane.b32.xlu0 %v2314, 8
    %v2419 = vpop.permute.xlu0 %2418
    %2422 = vrot.lane.b32.xlu0 %v2362, 16
    %v2423 = vpop.permute.xlu0 %2422
    %2426 = vrot.lane.b32.xlu0 %v2412, 24
    %v2427 = vpop.permute.xlu0 %2426
    %v2429 = vsel %vm306, %v2264, %v2419
    %v2430 = vsel %vm1020, %v2429, %v2423
    %v2431 = vsel %vm1022, %v2430, %v2427
    %v2432 = vpack.c.bf16 %v2431, %v2220
    %v2434 = vlaneseq
    %v2435 = vshrl.u32 %v2434, 7
    %v2436 = vsub.s32 0, %v2435
    %v2437 = vrot.slane %v1489, %v2436
    %v2443 = vunpack.c.l.b16 %v1485
    %v2444 = vunpack.c.l.b16 %v1486
    %v2445 = vunpack.c.l.b16 %v1487
    %v2446 = vunpack.c.l.b16 %v1488
    %v2447 = vpack.c.b16 %v2444, %v2443
    %v2448 = vpack.c.b16 %v2446, %v2445
    %v2452 = vsel %vm252, %v2432, 0
    %2454 = vmatprep.subr.bf16.mxu0 0
    %2455 = vmatpush1.bf16.msra.mxu0 %v2447
    %2456 = vmatprep.subr.bf16.mxu0 0
    %2457 = vmatpush1.bf16.msra.mxu0 %v2448
    %2458 = vmatprep.subr.bf16.mxu0 0
    %2459 = vmatpush1.bf16.msra.mxu0 0
    %2460 = vmatprep.subr.bf16.mxu0 0
    %2461 = vmatpush1.bf16.msra.mxu0 0
    %2462 = vmatprep.subr.bf16.mxu0 0
    %2463 = vmatpush1.bf16.msra.mxu0 0
    %2464 = vmatprep.subr.bf16.mxu0 0
    %2465 = vmatpush1.bf16.msra.mxu0 0
    %2466 = vmatprep.subr.bf16.mxu0 0
    %2467 = vmatpush1.bf16.msra.mxu0 0
    %2468 = vmatprep.subr.bf16.mxu0 0
    %2469 = vmatpush1.bf16.msra.mxu0 0
    %2470 = vmatprep.subr.bf16.mxu0 0
    %2471 = vmatpush1.bf16.msra.mxu0 0
    %2472 = vmatprep.subr.bf16.mxu0 0
    %2473 = vmatpush1.bf16.msra.mxu0 0
    %2474 = vmatprep.subr.bf16.mxu0 0
    %2475 = vmatpush1.bf16.msra.mxu0 0
    %2476 = vmatprep.subr.bf16.mxu0 0
    %2477 = vmatpush1.bf16.msra.mxu0 0
    %2478 = vmatprep.subr.bf16.mxu0 0
    %2479 = vmatpush1.bf16.msra.mxu0 0
    %2480 = vmatprep.subr.bf16.mxu0 0
    %2481 = vmatpush1.bf16.msra.mxu0 0
    %2482 = vmatprep.subr.bf16.mxu0 0
    %2483 = vmatpush1.bf16.msra.mxu0 0
    %2484 = vmatprep.subr.bf16.mxu0 0
    %2485 = vmatpush1.bf16.msra.mxu0 0
    %2486 = vmatprep.mubr.bf16.mxu0 0
    %2487 = vmatmul.mubr.bf16.gmra.mrb[0].mxu0 %v2452
    %v2488 = vpop.f32.mrb[0].mxu0
    %v2489 = vadd.f32 %v2437, %v2488
    %v2490 = vpop.f32.mrb[0].mxu0
    %v2491 = vpop.f32.mrb[0].mxu0
    %v2492 = vadd.f32 %v2437, %v2491
    %v2493 = vpop.f32.mrb[0].mxu0
    %2494 = vdwg.mxu0
    %v2495 = vadd.f32 %v1343, %v2489
    %v2496 = vadd.f32 %v1344, %v2492
    %v2497 = vld [vmem:[%s18] sm:$0x1]
    %v2498 = vld [vmem:[%s19] sm:$0x1]
    %v2499 = vsel %vm252, %v2495, 0.0
    %2500 = vadd.xlane.f32.xlu0 %v2499
    %v2501 = vpop.xlane.xlu0 %2500
    %v2502 = vsel %vm252, %v2496, 0.0
    %2503 = vadd.xlane.f32.xlu0 %v2502
    %v2504 = vpop.xlane.xlu0 %2503
    %v2505 = vmul.f32 %v2501, %v1308
    %v2506 = vmul.f32 %v2504, %v1308
    %v2507 = vsub.f32 %v2495, %v2505
    %v2508 = vsub.f32 %v2496, %v2506
    %v2509 = vmul.f32 %v2507, %v2507
    %v2510 = vmul.f32 %v2508, %v2508
    %v2511 = vsel %vm252, %v2509, 0.0
    %2512 = vadd.xlane.f32.xlu0 %v2511
    %v2513 = vpop.xlane.xlu0 %2512
    %v2514 = vsel %vm252, %v2510, 0.0
    %2515 = vadd.xlane.f32.xlu0 %v2514
    %v2516 = vpop.xlane.xlu0 %2515
    %v2517 = vmul.f32 %v2513, %v1308
    %v2518 = vmul.f32 %v2516, %v1308
    %v2519 = vadd.f32 %v2517, 1e-05
    %v2520 = vadd.f32 %v2518, 1e-05
    %v2521 = vrsqrt.pop %v2519
    %v2522 = vrsqrt.pop %v2520
    %v2523 = vmul.f32 %v2507, %v2521
    %v2524 = vmul.f32 %v2508, %v2522
    %v2526 = vlaneseq
    %v2527 = vshrl.u32 %v2526, 7
    %v2528 = vsub.s32 0, %v2527
    %v2529 = vrot.slane %v2497, %v2528
    %v2531 = vmul.f32 %v2523, %v2529
    %v2532 = vmul.f32 %v2524, %v2529
    %v2534 = vlaneseq
    %v2535 = vshrl.u32 %v2534, 7
    %v2536 = vsub.s32 0, %v2535
    %v2537 = vrot.slane %v2498, %v2536
    %v2539 = vadd.f32 %v2531, %v2537
    %v2540 = vadd.f32 %v2532, %v2537
    %v2541 = vld [vmem:[%s20] sm:$0xf]
    %v2542 = vld [vmem:[%s20 + $0x4] sm:$0xf]
    %v2543 = vld [vmem:[%s20 + $0x8] sm:$0xf]
    %v2544 = vld [vmem:[%s20 + $0xc] sm:$0xf]
    %v2545 = vld [vmem:[%s21] sm:$0x1]
    %v2546 = vld [vmem:[%s22] sm:$0xf]
    %v2547 = vld [vmem:[%s22 + $0x4] sm:$0xf]
    %v2548 = vld [vmem:[%s22 + $0x8] sm:$0xf]
    %v2549 = vld [vmem:[%s22 + $0xc] sm:$0xf]
    %v2550 = vld [vmem:[%s22 + $0x10] sm:$0xf]
    %v2551 = vld [vmem:[%s22 + $0x14] sm:$0xf]
    %v2552 = vld [vmem:[%s22 + $0x18] sm:$0xf]
    %v2553 = vld [vmem:[%s22 + $0x1c] sm:$0xf]
    %v2554 = vld [vmem:[%s23] sm:$0x1]
    %v2555 = vpack.c.bf16 %v2540, %v2539
    %v2557 = vlaneseq
    %v2558 = vshrl.u32 %v2557, 7
    %v2559 = vsub.s32 0, %v2558
    %v2560 = vrot.slane %v2545, %v2559
    %v2566 = vunpack.c.l.b16 %v2541
    %v2567 = vunpack.c.l.b16 %v2542
    %v2568 = vunpack.c.l.b16 %v2543
    %v2569 = vunpack.c.l.b16 %v2544
    %v2570 = vpack.c.b16 %v2567, %v2566
    %v2571 = vpack.c.b16 %v2569, %v2568
    %v2575 = vsel %vm252, %v2555, 0
    %2577 = vmatprep.subr.bf16.mxu0 0
    %2578 = vmatpush1.bf16.msra.mxu0 %v2570
    %2579 = vmatprep.subr.bf16.mxu0 0
    %2580 = vmatpush1.bf16.msra.mxu0 %v2571
    %2581 = vmatprep.subr.bf16.mxu0 0
    %2582 = vmatpush1.bf16.msra.mxu0 0
    %2583 = vmatprep.subr.bf16.mxu0 0
    %2584 = vmatpush1.bf16.msra.mxu0 0
    %2585 = vmatprep.subr.bf16.mxu0 0
    %2586 = vmatpush1.bf16.msra.mxu0 0
    %2587 = vmatprep.subr.bf16.mxu0 0
    %2588 = vmatpush1.bf16.msra.mxu0 0
    %2589 = vmatprep.subr.bf16.mxu0 0
    %2590 = vmatpush1.bf16.msra.mxu0 0
    %2591 = vmatprep.subr.bf16.mxu0 0
    %2592 = vmatpush1.bf16.msra.mxu0 0
    %2593 = vmatprep.subr.bf16.mxu0 0
    %2594 = vmatpush1.bf16.msra.mxu0 0
    %2595 = vmatprep.subr.bf16.mxu0 0
    %2596 = vmatpush1.bf16.msra.mxu0 0
    %2597 = vmatprep.subr.bf16.mxu0 0
    %2598 = vmatpush1.bf16.msra.mxu0 0
    %2599 = vmatprep.subr.bf16.mxu0 0
    %2600 = vmatpush1.bf16.msra.mxu0 0
    %2601 = vmatprep.subr.bf16.mxu0 0
    %2602 = vmatpush1.bf16.msra.mxu0 0
    %2603 = vmatprep.subr.bf16.mxu0 0
    %2604 = vmatpush1.bf16.msra.mxu0 0
    %2605 = vmatprep.subr.bf16.mxu0 0
    %2606 = vmatpush1.bf16.msra.mxu0 0
    %2607 = vmatprep.subr.bf16.mxu0 0
    %2608 = vmatpush1.bf16.msra.mxu0 0
    %2609 = vmatprep.mubr.bf16.mxu0 0
    %2610 = vmatmul.mubr.bf16.gmra.mrb[0].mxu0 %v2575
    %v2611 = vpop.f32.mrb[0].mxu0
    %v2612 = vadd.f32 %v2560, %v2611
    %v2613 = vpop.f32.mrb[0].mxu0
    %v2614 = vpop.f32.mrb[0].mxu0
    %v2615 = vadd.f32 %v2560, %v2614
    %v2616 = vpop.f32.mrb[0].mxu0
    %2617 = vdwg.mxu0
    %v2618 = vmax.f32 %v2612, 0.0
    %v2619 = vmax.f32 %v2615, 0.0
    %v2620 = vpack.c.bf16 %v2619, %v2618
    %v2622 = vlaneseq
    %v2623 = vshrl.u32 %v2622, 7
    %v2624 = vsub.s32 0, %v2623
    %v2625 = vrot.slane %v2554, %v2624
    %v2635 = vunpack.c.l.b16 %v2546
    %v2636 = vunpack.c.l.b16 %v2547
    %v2637 = vunpack.c.l.b16 %v2548
    %v2638 = vunpack.c.l.b16 %v2549
    %v2639 = vunpack.c.l.b16 %v2550
    %v2640 = vunpack.c.l.b16 %v2551
    %v2641 = vunpack.c.l.b16 %v2552
    %v2642 = vunpack.c.l.b16 %v2553
    %v2643 = vpack.c.b16 %v2636, %v2635
    %v2644 = vpack.c.b16 %v2638, %v2637
    %v2645 = vpack.c.b16 %v2640, %v2639
    %v2646 = vpack.c.b16 %v2642, %v2641
    %vm2651 = vcmask 523264
    %v2653 = vsel %vm2651, %v2620, 0
    %2655 = vmatprep.subr.bf16.mxu0 0
    %2656 = vmatpush1.bf16.msra.mxu0 %v2643
    %2657 = vmatprep.subr.bf16.mxu0 0
    %2658 = vmatpush1.bf16.msra.mxu0 %v2644
    %2659 = vmatprep.subr.bf16.mxu0 0
    %2660 = vmatpush1.bf16.msra.mxu0 %v2645
    %2661 = vmatprep.subr.bf16.mxu0 0
    %2662 = vmatpush1.bf16.msra.mxu0 %v2646
    %2663 = vmatprep.subr.bf16.mxu0 0
    %2664 = vmatpush1.bf16.msra.mxu0 0
    %2665 = vmatprep.subr.bf16.mxu0 0
    %2666 = vmatpush1.bf16.msra.mxu0 0
    %2667 = vmatprep.subr.bf16.mxu0 0
    %2668 = vmatpush1.bf16.msra.mxu0 0
    %2669 = vmatprep.subr.bf16.mxu0 0
    %2670 = vmatpush1.bf16.msra.mxu0 0
    %2671 = vmatprep.subr.bf16.mxu0 0
    %2672 = vmatpush1.bf16.msra.mxu0 0
    %2673 = vmatprep.subr.bf16.mxu0 0
    %2674 = vmatpush1.bf16.msra.mxu0 0
    %2675 = vmatprep.subr.bf16.mxu0 0
    %2676 = vmatpush1.bf16.msra.mxu0 0
    %2677 = vmatprep.subr.bf16.mxu0 0
    %2678 = vmatpush1.bf16.msra.mxu0 0
    %2679 = vmatprep.subr.bf16.mxu0 0
    %2680 = vmatpush1.bf16.msra.mxu0 0
    %2681 = vmatprep.subr.bf16.mxu0 0
    %2682 = vmatpush1.bf16.msra.mxu0 0
    %2683 = vmatprep.subr.bf16.mxu0 0
    %2684 = vmatpush1.bf16.msra.mxu0 0
    %2685 = vmatprep.subr.bf16.mxu0 0
    %2686 = vmatpush1.bf16.msra.mxu0 0
    %2687 = vmatprep.mubr.bf16.mxu0 0
    %2688 = vmatmul.mubr.bf16.gmra.mrb[0].mxu0 %v2653
    %v2689 = vpop.f32.mrb[0].mxu0
    %v2690 = vadd.f32 %v2625, %v2689
    %v2691 = vpop.f32.mrb[0].mxu0
    %v2692 = vpop.f32.mrb[0].mxu0
    %v2693 = vadd.f32 %v2625, %v2692
    %v2694 = vpop.f32.mrb[0].mxu0
    %2695 = vdwg.mxu0
    %v2696 = vadd.f32 %v2539, %v2690
    %v2697 = vadd.f32 %v2540, %v2693
    %v2698 = vld [vmem:[%s24] sm:$0x1]
    %v2699 = vld [vmem:[%s25] sm:$0x1]
    %v2700 = vsel %vm252, %v2696, 0.0
    %2701 = vadd.xlane.f32.xlu0 %v2700
    %v2702 = vpop.xlane.xlu0 %2701
    %v2703 = vsel %vm252, %v2697, 0.0
    %2704 = vadd.xlane.f32.xlu0 %v2703
    %v2705 = vpop.xlane.xlu0 %2704
    %v2706 = vmul.f32 %v2702, %v1308
    %v2707 = vmul.f32 %v2705, %v1308
    %v2708 = vsub.f32 %v2696, %v2706
    %v2709 = vsub.f32 %v2697, %v2707
    %v2710 = vmul.f32 %v2708, %v2708
    %v2711 = vmul.f32 %v2709, %v2709
    %v2712 = vsel %vm252, %v2710, 0.0
    %2713 = vadd.xlane.f32.xlu0 %v2712
    %v2714 = vpop.xlane.xlu0 %2713
    %v2715 = vsel %vm252, %v2711, 0.0
    %2716 = vadd.xlane.f32.xlu0 %v2715
    %v2717 = vpop.xlane.xlu0 %2716
    %v2718 = vmul.f32 %v2714, %v1308
    %v2719 = vmul.f32 %v2717, %v1308
    %v2720 = vadd.f32 %v2718, 1e-05
    %v2721 = vadd.f32 %v2719, 1e-05
    %v2722 = vrsqrt.pop %v2720
    %v2723 = vrsqrt.pop %v2721
    %v2724 = vmul.f32 %v2708, %v2722
    %v2725 = vmul.f32 %v2709, %v2723
    %v2727 = vlaneseq
    %v2728 = vshrl.u32 %v2727, 7
    %v2729 = vsub.s32 0, %v2728
    %v2730 = vrot.slane %v2698, %v2729
    %v2732 = vmul.f32 %v2724, %v2730
    %v2733 = vmul.f32 %v2725, %v2730
    %v2735 = vlaneseq
    %v2736 = vshrl.u32 %v2735, 7
    %v2737 = vsub.s32 0, %v2736
    %v2738 = vrot.slane %v2699, %v2737
    %v2740 = vadd.f32 %v2732, %v2738
    %v2741 = vadd.f32 %v2733, %v2738
    %v2742 = vpack.c.bf16 %v2741, %v2740
    %s2743 = scalar_lea.vmem %s6, 16
    %v2744 = vld [vmem:[%s2743] sm:$0xf]
    %v2745 = vld [vmem:[%s2743 + $0x4] sm:$0xf]
    %v2746 = vld [vmem:[%s2743 + $0x8] sm:$0xf]
    %v2747 = vld [vmem:[%s2743 + $0xc] sm:$0xf]
    %s2748 = scalar_lea.vmem %s7, 1
    %v2749 = vld [vmem:[%s2748] sm:$0x1]
    %v2751 = vlaneseq
    %v2752 = vshrl.u32 %v2751, 7
    %v2753 = vsub.s32 0, %v2752
    %v2754 = vrot.slane %v2749, %v2753
    %v2760 = vunpack.c.l.b16 %v2744
    %v2761 = vunpack.c.l.b16 %v2745
    %v2762 = vunpack.c.l.b16 %v2746
    %v2763 = vunpack.c.l.b16 %v2747
    %v2764 = vpack.c.b16 %v2761, %v2760
    %v2765 = vpack.c.b16 %v2763, %v2762
    %v2769 = vsel %vm252, %v2742, 0
    %2771 = vmatprep.subr.bf16.mxu0 0
    %2772 = vmatpush1.bf16.msra.mxu0 %v2764
    %2773 = vmatprep.subr.bf16.mxu0 0
    %2774 = vmatpush1.bf16.msra.mxu0 %v2765
    %2775 = vmatprep.subr.bf16.mxu0 0
    %2776 = vmatpush1.bf16.msra.mxu0 0
    %2777 = vmatprep.subr.bf16.mxu0 0
    %2778 = vmatpush1.bf16.msra.mxu0 0
    %2779 = vmatprep.subr.bf16.mxu0 0
    %2780 = vmatpush1.bf16.msra.mxu0 0
    %2781 = vmatprep.subr.bf16.mxu0 0
    %2782 = vmatpush1.bf16.msra.mxu0 0
    %2783 = vmatprep.subr.bf16.mxu0 0
    %2784 = vmatpush1.bf16.msra.mxu0 0
    %2785 = vmatprep.subr.bf16.mxu0 0
    %2786 = vmatpush1.bf16.msra.mxu0 0
    %2787 = vmatprep.subr.bf16.mxu0 0
    %2788 = vmatpush1.bf16.msra.mxu0 0
    %2789 = vmatprep.subr.bf16.mxu0 0
    %2790 = vmatpush1.bf16.msra.mxu0 0
    %2791 = vmatprep.subr.bf16.mxu0 0
    %2792 = vmatpush1.bf16.msra.mxu0 0
    %2793 = vmatprep.subr.bf16.mxu0 0
    %2794 = vmatpush1.bf16.msra.mxu0 0
    %2795 = vmatprep.subr.bf16.mxu0 0
    %2796 = vmatpush1.bf16.msra.mxu0 0
    %2797 = vmatprep.subr.bf16.mxu0 0
    %2798 = vmatpush1.bf16.msra.mxu0 0
    %2799 = vmatprep.subr.bf16.mxu0 0
    %2800 = vmatpush1.bf16.msra.mxu0 0
    %2801 = vmatprep.subr.bf16.mxu0 0
    %2802 = vmatpush1.bf16.msra.mxu0 0
    %2803 = vmatprep.mubr.bf16.mxu0 0
    %2804 = vmatmul.mubr.bf16.gmra.mrb[0].mxu0 %v2769
    %v2805 = vpop.f32.mrb[0].mxu0
    %v2806 = vadd.f32 %v2754, %v2805
    %v2807 = vpop.f32.mrb[0].mxu0
    %v2808 = vpop.f32.mrb[0].mxu0
    %v2809 = vadd.f32 %v2754, %v2808
    %v2810 = vpop.f32.mrb[0].mxu0
    %2811 = vdwg.mxu0
    %s2812 = scalar_lea.vmem %s8, 16
    %v2813 = vld [vmem:[%s2812] sm:$0xf]
    %v2814 = vld [vmem:[%s2812 + $0x4] sm:$0xf]
    %v2815 = vld [vmem:[%s2812 + $0x8] sm:$0xf]
    %v2816 = vld [vmem:[%s2812 + $0xc] sm:$0xf]
    %s2817 = scalar_lea.vmem %s9, 1
    %v2818 = vld [vmem:[%s2817] sm:$0x1]
    %v2819 = vpack.c.bf16 %v2806, %v2806
    %2821 = vrot.lane.b32.xlu0 %v2819, 96
    %v2822 = vpop.permute.xlu0 %2821
    %v2824 = vsel %vm306, %v2819, 0
    %v2827 = vsel %vm306, %v2822, 0
    %2829 = vmatprep.subr.bf16.mxu0 0
    %2830 = vmatpush1.bf16.xpose.msra.mxu0 %v2827
    %2831 = vmatprep.subr.bf16.mxu0 0
    %2832 = vmatpush1.bf16.xpose.msra.mxu0 0
    %2833 = vmatprep.subr.bf16.mxu0 0
    %2834 = vmatpush1.bf16.xpose.msra.mxu0 0
    %2835 = vmatprep.subr.bf16.mxu0 0
    %2836 = vmatpush1.bf16.xpose.msra.mxu0 0
    %2837 = vmatprep.subr.bf16.mxu0 0
    %2838 = vmatpush1.bf16.xpose.msra.mxu0 0
    %2839 = vmatprep.subr.bf16.mxu0 0
    %2840 = vmatpush1.bf16.xpose.msra.mxu0 0
    %2841 = vmatprep.subr.bf16.mxu0 0
    %2842 = vmatpush1.bf16.xpose.msra.mxu0 0
    %2843 = vmatprep.subr.bf16.mxu0 0
    %2844 = vmatpush1.bf16.xpose.msra.mxu0 0
    %2845 = vmatprep.subr.bf16.mxu0 0
    %2846 = vmatpush1.bf16.xpose.msra.mxu0 0
    %2847 = vmatprep.subr.bf16.mxu0 0
    %2848 = vmatpush1.bf16.xpose.msra.mxu0 0
    %2849 = vmatprep.subr.bf16.mxu0 0
    %2850 = vmatpush1.bf16.xpose.msra.mxu0 0
    %2851 = vmatprep.subr.bf16.mxu0 0
    %2852 = vmatpush1.bf16.xpose.msra.mxu0 0
    %2853 = vmatprep.subr.bf16.mxu0 0
    %2854 = vmatpush1.bf16.xpose.msra.mxu0 0
    %2855 = vmatprep.subr.bf16.mxu0 0
    %2856 = vmatpush1.bf16.xpose.msra.mxu0 0
    %2857 = vmatprep.subr.bf16.mxu0 0
    %2858 = vmatpush1.bf16.xpose.msra.mxu0 0
    %2859 = vmatprep.subr.bf16.mxu0 0
    %2860 = vmatpush1.bf16.xpose.msra.mxu0 0
    %2861 = vmatprep.mubr.bf16.mxu0 0
    %2862 = vmatmul.mubr.bf16.gmra.mrb[0].mxu0 %v2824
    %v2863 = vpop.f32.mrb[0].mxu0
    %v2864 = vadd.f32 0.0, %v2863
    %v2865 = vpop.f32.mrb[0].mxu0
    %v2866 = vpop.f32.mrb[0].mxu0
    %v2867 = vpop.f32.mrb[0].mxu0
    %2868 = vdwg.mxu0
    %v2869 = vmul.f32 %v2864, 0.35355338
    %v2870 = vadd.f32 %v2869, %v135
    %2871 = vrot.lane.b32.xlu0 %v2819, 120
    %v2872 = vpop.permute.xlu0 %2871
    %2873 = vrot.lane.b32.xlu0 %v2819, 88
    %v2874 = vpop.permute.xlu0 %2873
    %v2876 = vsel %vm306, %v2872, 0
    %v2879 = vsel %vm306, %v2874, 0
    %2881 = vmatprep.subr.bf16.mxu0 0
    %2882 = vmatpush1.bf16.xpose.msra.mxu0 %v2879
    %2883 = vmatprep.subr.bf16.mxu0 0
    %2884 = vmatpush1.bf16.xpose.msra.mxu0 0
    %2885 = vmatprep.subr.bf16.mxu0 0
    %2886 = vmatpush1.bf16.xpose.msra.mxu0 0
    %2887 = vmatprep.subr.bf16.mxu0 0
    %2888 = vmatpush1.bf16.xpose.msra.mxu0 0
    %2889 = vmatprep.subr.bf16.mxu0 0
    %2890 = vmatpush1.bf16.xpose.msra.mxu0 0
    %2891 = vmatprep.subr.bf16.mxu0 0
    %2892 = vmatpush1.bf16.xpose.msra.mxu0 0
    %2893 = vmatprep.subr.bf16.mxu0 0
    %2894 = vmatpush1.bf16.xpose.msra.mxu0 0
    %2895 = vmatprep.subr.bf16.mxu0 0
    %2896 = vmatpush1.bf16.xpose.msra.mxu0 0
    %2897 = vmatprep.subr.bf16.mxu0 0
    %2898 = vmatpush1.bf16.xpose.msra.mxu0 0
    %2899 = vmatprep.subr.bf16.mxu0 0
    %2900 = vmatpush1.bf16.xpose.msra.mxu0 0
    %2901 = vmatprep.subr.bf16.mxu0 0
    %2902 = vmatpush1.bf16.xpose.msra.mxu0 0
    %2903 = vmatprep.subr.bf16.mxu0 0
    %2904 = vmatpush1.bf16.xpose.msra.mxu0 0
    %2905 = vmatprep.subr.bf16.mxu0 0
    %2906 = vmatpush1.bf16.xpose.msra.mxu0 0
    %2907 = vmatprep.subr.bf16.mxu0 0
    %2908 = vmatpush1.bf16.xpose.msra.mxu0 0
    %2909 = vmatprep.subr.bf16.mxu0 0
    %2910 = vmatpush1.bf16.xpose.msra.mxu0 0
    %2911 = vmatprep.subr.bf16.mxu0 0
    %2912 = vmatpush1.bf16.xpose.msra.mxu0 0
    %2913 = vmatprep.mubr.bf16.mxu0 0
    %2914 = vmatmul.mubr.bf16.gmra.mrb[0].mxu0 %v2876
    %v2915 = vpop.f32.mrb[0].mxu0
    %v2916 = vadd.f32 0.0, %v2915
    %v2917 = vpop.f32.mrb[0].mxu0
    %v2918 = vpop.f32.mrb[0].mxu0
    %v2919 = vpop.f32.mrb[0].mxu0
    %2920 = vdwg.mxu0
    %v2921 = vmul.f32 %v2916, 0.35355338
    %v2922 = vadd.f32 %v2921, %v135
    %2923 = vrot.lane.b32.xlu0 %v2819, 112
    %v2924 = vpop.permute.xlu0 %2923
    %2925 = vrot.lane.b32.xlu0 %v2819, 80
    %v2926 = vpop.permute.xlu0 %2925
    %v2928 = vsel %vm306, %v2924, 0
    %v2931 = vsel %vm306, %v2926, 0
    %2933 = vmatprep.subr.bf16.mxu0 0
    %2934 = vmatpush1.bf16.xpose.msra.mxu0 %v2931
    %2935 = vmatprep.subr.bf16.mxu0 0
    %2936 = vmatpush1.bf16.xpose.msra.mxu0 0
    %2937 = vmatprep.subr.bf16.mxu0 0
    %2938 = vmatpush1.bf16.xpose.msra.mxu0 0
    %2939 = vmatprep.subr.bf16.mxu0 0
    %2940 = vmatpush1.bf16.xpose.msra.mxu0 0
    %2941 = vmatprep.subr.bf16.mxu0 0
    %2942 = vmatpush1.bf16.xpose.msra.mxu0 0
    %2943 = vmatprep.subr.bf16.mxu0 0
    %2944 = vmatpush1.bf16.xpose.msra.mxu0 0
    %2945 = vmatprep.subr.bf16.mxu0 0
    %2946 = vmatpush1.bf16.xpose.msra.mxu0 0
    %2947 = vmatprep.subr.bf16.mxu0 0
    %2948 = vmatpush1.bf16.xpose.msra.mxu0 0
    %2949 = vmatprep.subr.bf16.mxu0 0
    %2950 = vmatpush1.bf16.xpose.msra.mxu0 0
    %2951 = vmatprep.subr.bf16.mxu0 0
    %2952 = vmatpush1.bf16.xpose.msra.mxu0 0
    %2953 = vmatprep.subr.bf16.mxu0 0
    %2954 = vmatpush1.bf16.xpose.msra.mxu0 0
    %2955 = vmatprep.subr.bf16.mxu0 0
    %2956 = vmatpush1.bf16.xpose.msra.mxu0 0
    %2957 = vmatprep.subr.bf16.mxu0 0
    %2958 = vmatpush1.bf16.xpose.msra.mxu0 0
    %2959 = vmatprep.subr.bf16.mxu0 0
    %2960 = vmatpush1.bf16.xpose.msra.mxu0 0
    %2961 = vmatprep.subr.bf16.mxu0 0
    %2962 = vmatpush1.bf16.xpose.msra.mxu0 0
    %2963 = vmatprep.subr.bf16.mxu0 0
    %2964 = vmatpush1.bf16.xpose.msra.mxu0 0
    %2965 = vmatprep.mubr.bf16.mxu0 0
    %2966 = vmatmul.mubr.bf16.gmra.mrb[0].mxu0 %v2928
    %v2967 = vpop.f32.mrb[0].mxu0
    %v2968 = vadd.f32 0.0, %v2967
    %v2969 = vpop.f32.mrb[0].mxu0
    %v2970 = vpop.f32.mrb[0].mxu0
    %v2971 = vpop.f32.mrb[0].mxu0
    %2972 = vdwg.mxu0
    %v2973 = vmul.f32 %v2968, 0.35355338
    %v2974 = vadd.f32 %v2973, %v135
    %2975 = vrot.lane.b32.xlu0 %v2819, 104
    %v2976 = vpop.permute.xlu0 %2975
    %2977 = vrot.lane.b32.xlu0 %v2819, 72
    %v2978 = vpop.permute.xlu0 %2977
    %v2980 = vsel %vm306, %v2976, 0
    %v2983 = vsel %vm306, %v2978, 0
    %2985 = vmatprep.subr.bf16.mxu0 0
    %2986 = vmatpush1.bf16.xpose.msra.mxu0 %v2983
    %2987 = vmatprep.subr.bf16.mxu0 0
    %2988 = vmatpush1.bf16.xpose.msra.mxu0 0
    %2989 = vmatprep.subr.bf16.mxu0 0
    %2990 = vmatpush1.bf16.xpose.msra.mxu0 0
    %2991 = vmatprep.subr.bf16.mxu0 0
    %2992 = vmatpush1.bf16.xpose.msra.mxu0 0
    %2993 = vmatprep.subr.bf16.mxu0 0
    %2994 = vmatpush1.bf16.xpose.msra.mxu0 0
    %2995 = vmatprep.subr.bf16.mxu0 0
    %2996 = vmatpush1.bf16.xpose.msra.mxu0 0
    %2997 = vmatprep.subr.bf16.mxu0 0
    %2998 = vmatpush1.bf16.xpose.msra.mxu0 0
    %2999 = vmatprep.subr.bf16.mxu0 0
    %3000 = vmatpush1.bf16.xpose.msra.mxu0 0
    %3001 = vmatprep.subr.bf16.mxu0 0
    %3002 = vmatpush1.bf16.xpose.msra.mxu0 0
    %3003 = vmatprep.subr.bf16.mxu0 0
    %3004 = vmatpush1.bf16.xpose.msra.mxu0 0
    %3005 = vmatprep.subr.bf16.mxu0 0
    %3006 = vmatpush1.bf16.xpose.msra.mxu0 0
    %3007 = vmatprep.subr.bf16.mxu0 0
    %3008 = vmatpush1.bf16.xpose.msra.mxu0 0
    %3009 = vmatprep.subr.bf16.mxu0 0
    %3010 = vmatpush1.bf16.xpose.msra.mxu0 0
    %3011 = vmatprep.subr.bf16.mxu0 0
    %3012 = vmatpush1.bf16.xpose.msra.mxu0 0
    %3013 = vmatprep.subr.bf16.mxu0 0
    %3014 = vmatpush1.bf16.xpose.msra.mxu0 0
    %3015 = vmatprep.subr.bf16.mxu0 0
    %3016 = vmatpush1.bf16.xpose.msra.mxu0 0
    %3017 = vmatprep.mubr.bf16.mxu0 0
    %3018 = vmatmul.mubr.bf16.gmra.mrb[0].mxu0 %v2980
    %v3019 = vpop.f32.mrb[0].mxu0
    %v3020 = vadd.f32 0.0, %v3019
    %v3021 = vpop.f32.mrb[0].mxu0
    %v3022 = vpop.f32.mrb[0].mxu0
    %v3023 = vpop.f32.mrb[0].mxu0
    %3024 = vdwg.mxu0
    %v3025 = vmul.f32 %v3020, 0.35355338
    %v3026 = vadd.f32 %v3025, %v135
    %v3027 = vpack.c.bf16 %v2809, %v2809
    %3029 = vrot.lane.b32.xlu0 %v3027, 96
    %v3030 = vpop.permute.xlu0 %3029
    %v3032 = vsel %vm306, %v3027, 0
    %v3035 = vsel %vm306, %v3030, 0
    %3037 = vmatprep.subr.bf16.mxu0 0
    %3038 = vmatpush1.bf16.xpose.msra.mxu0 %v3035
    %3039 = vmatprep.subr.bf16.mxu0 0
    %3040 = vmatpush1.bf16.xpose.msra.mxu0 0
    %3041 = vmatprep.subr.bf16.mxu0 0
    %3042 = vmatpush1.bf16.xpose.msra.mxu0 0
    %3043 = vmatprep.subr.bf16.mxu0 0
    %3044 = vmatpush1.bf16.xpose.msra.mxu0 0
    %3045 = vmatprep.subr.bf16.mxu0 0
    %3046 = vmatpush1.bf16.xpose.msra.mxu0 0
    %3047 = vmatprep.subr.bf16.mxu0 0
    %3048 = vmatpush1.bf16.xpose.msra.mxu0 0
    %3049 = vmatprep.subr.bf16.mxu0 0
    %3050 = vmatpush1.bf16.xpose.msra.mxu0 0
    %3051 = vmatprep.subr.bf16.mxu0 0
    %3052 = vmatpush1.bf16.xpose.msra.mxu0 0
    %3053 = vmatprep.subr.bf16.mxu0 0
    %3054 = vmatpush1.bf16.xpose.msra.mxu0 0
    %3055 = vmatprep.subr.bf16.mxu0 0
    %3056 = vmatpush1.bf16.xpose.msra.mxu0 0
    %3057 = vmatprep.subr.bf16.mxu0 0
    %3058 = vmatpush1.bf16.xpose.msra.mxu0 0
    %3059 = vmatprep.subr.bf16.mxu0 0
    %3060 = vmatpush1.bf16.xpose.msra.mxu0 0
    %3061 = vmatprep.subr.bf16.mxu0 0
    %3062 = vmatpush1.bf16.xpose.msra.mxu0 0
    %3063 = vmatprep.subr.bf16.mxu0 0
    %3064 = vmatpush1.bf16.xpose.msra.mxu0 0
    %3065 = vmatprep.subr.bf16.mxu0 0
    %3066 = vmatpush1.bf16.xpose.msra.mxu0 0
    %3067 = vmatprep.subr.bf16.mxu0 0
    %3068 = vmatpush1.bf16.xpose.msra.mxu0 0
    %3069 = vmatprep.mubr.bf16.mxu0 0
    %3070 = vmatmul.mubr.bf16.gmra.mrb[0].mxu0 %v3032
    %v3071 = vpop.f32.mrb[0].mxu0
    %v3072 = vadd.f32 0.0, %v3071
    %v3073 = vpop.f32.mrb[0].mxu0
    %v3074 = vpop.f32.mrb[0].mxu0
    %v3075 = vpop.f32.mrb[0].mxu0
    %3076 = vdwg.mxu0
    %v3077 = vmul.f32 %v3072, 0.35355338
    %v3078 = vadd.f32 %v3077, %v148
    %3079 = vrot.lane.b32.xlu0 %v3027, 120
    %v3080 = vpop.permute.xlu0 %3079
    %3081 = vrot.lane.b32.xlu0 %v3027, 88
    %v3082 = vpop.permute.xlu0 %3081
    %v3084 = vsel %vm306, %v3080, 0
    %v3087 = vsel %vm306, %v3082, 0
    %3089 = vmatprep.subr.bf16.mxu0 0
    %3090 = vmatpush1.bf16.xpose.msra.mxu0 %v3087
    %3091 = vmatprep.subr.bf16.mxu0 0
    %3092 = vmatpush1.bf16.xpose.msra.mxu0 0
    %3093 = vmatprep.subr.bf16.mxu0 0
    %3094 = vmatpush1.bf16.xpose.msra.mxu0 0
    %3095 = vmatprep.subr.bf16.mxu0 0
    %3096 = vmatpush1.bf16.xpose.msra.mxu0 0
    %3097 = vmatprep.subr.bf16.mxu0 0
    %3098 = vmatpush1.bf16.xpose.msra.mxu0 0
    %3099 = vmatprep.subr.bf16.mxu0 0
    %3100 = vmatpush1.bf16.xpose.msra.mxu0 0
    %3101 = vmatprep.subr.bf16.mxu0 0
    %3102 = vmatpush1.bf16.xpose.msra.mxu0 0
    %3103 = vmatprep.subr.bf16.mxu0 0
    %3104 = vmatpush1.bf16.xpose.msra.mxu0 0
    %3105 = vmatprep.subr.bf16.mxu0 0
    %3106 = vmatpush1.bf16.xpose.msra.mxu0 0
    %3107 = vmatprep.subr.bf16.mxu0 0
    %3108 = vmatpush1.bf16.xpose.msra.mxu0 0
    %3109 = vmatprep.subr.bf16.mxu0 0
    %3110 = vmatpush1.bf16.xpose.msra.mxu0 0
    %3111 = vmatprep.subr.bf16.mxu0 0
    %3112 = vmatpush1.bf16.xpose.msra.mxu0 0
    %3113 = vmatprep.subr.bf16.mxu0 0
    %3114 = vmatpush1.bf16.xpose.msra.mxu0 0
    %3115 = vmatprep.subr.bf16.mxu0 0
    %3116 = vmatpush1.bf16.xpose.msra.mxu0 0
    %3117 = vmatprep.subr.bf16.mxu0 0
    %3118 = vmatpush1.bf16.xpose.msra.mxu0 0
    %3119 = vmatprep.subr.bf16.mxu0 0
    %3120 = vmatpush1.bf16.xpose.msra.mxu0 0
    %3121 = vmatprep.mubr.bf16.mxu0 0
    %3122 = vmatmul.mubr.bf16.gmra.mrb[0].mxu0 %v3084
    %v3123 = vpop.f32.mrb[0].mxu0
    %v3124 = vadd.f32 0.0, %v3123
    %v3125 = vpop.f32.mrb[0].mxu0
    %v3126 = vpop.f32.mrb[0].mxu0
    %v3127 = vpop.f32.mrb[0].mxu0
    %3128 = vdwg.mxu0
    %v3129 = vmul.f32 %v3124, 0.35355338
    %v3130 = vadd.f32 %v3129, %v148
    %3131 = vrot.lane.b32.xlu0 %v3027, 112
    %v3132 = vpop.permute.xlu0 %3131
    %3133 = vrot.lane.b32.xlu0 %v3027, 80
    %v3134 = vpop.permute.xlu0 %3133
    %v3136 = vsel %vm306, %v3132, 0
    %v3139 = vsel %vm306, %v3134, 0
    %3141 = vmatprep.subr.bf16.mxu0 0
    %3142 = vmatpush1.bf16.xpose.msra.mxu0 %v3139
    %3143 = vmatprep.subr.bf16.mxu0 0
    %3144 = vmatpush1.bf16.xpose.msra.mxu0 0
    %3145 = vmatprep.subr.bf16.mxu0 0
    %3146 = vmatpush1.bf16.xpose.msra.mxu0 0
    %3147 = vmatprep.subr.bf16.mxu0 0
    %3148 = vmatpush1.bf16.xpose.msra.mxu0 0
    %3149 = vmatprep.subr.bf16.mxu0 0
    %3150 = vmatpush1.bf16.xpose.msra.mxu0 0
    %3151 = vmatprep.subr.bf16.mxu0 0
    %3152 = vmatpush1.bf16.xpose.msra.mxu0 0
    %3153 = vmatprep.subr.bf16.mxu0 0
    %3154 = vmatpush1.bf16.xpose.msra.mxu0 0
    %3155 = vmatprep.subr.bf16.mxu0 0
    %3156 = vmatpush1.bf16.xpose.msra.mxu0 0
    %3157 = vmatprep.subr.bf16.mxu0 0
    %3158 = vmatpush1.bf16.xpose.msra.mxu0 0
    %3159 = vmatprep.subr.bf16.mxu0 0
    %3160 = vmatpush1.bf16.xpose.msra.mxu0 0
    %3161 = vmatprep.subr.bf16.mxu0 0
    %3162 = vmatpush1.bf16.xpose.msra.mxu0 0
    %3163 = vmatprep.subr.bf16.mxu0 0
    %3164 = vmatpush1.bf16.xpose.msra.mxu0 0
    %3165 = vmatprep.subr.bf16.mxu0 0
    %3166 = vmatpush1.bf16.xpose.msra.mxu0 0
    %3167 = vmatprep.subr.bf16.mxu0 0
    %3168 = vmatpush1.bf16.xpose.msra.mxu0 0
    %3169 = vmatprep.subr.bf16.mxu0 0
    %3170 = vmatpush1.bf16.xpose.msra.mxu0 0
    %3171 = vmatprep.subr.bf16.mxu0 0
    %3172 = vmatpush1.bf16.xpose.msra.mxu0 0
    %3173 = vmatprep.mubr.bf16.mxu0 0
    %3174 = vmatmul.mubr.bf16.gmra.mrb[0].mxu0 %v3136
    %v3175 = vpop.f32.mrb[0].mxu0
    %v3176 = vadd.f32 0.0, %v3175
    %v3177 = vpop.f32.mrb[0].mxu0
    %v3178 = vpop.f32.mrb[0].mxu0
    %v3179 = vpop.f32.mrb[0].mxu0
    %3180 = vdwg.mxu0
    %v3181 = vmul.f32 %v3176, 0.35355338
    %v3182 = vadd.f32 %v3181, %v148
    %3183 = vrot.lane.b32.xlu0 %v3027, 104
    %v3184 = vpop.permute.xlu0 %3183
    %3185 = vrot.lane.b32.xlu0 %v3027, 72
    %v3186 = vpop.permute.xlu0 %3185
    %v3188 = vsel %vm306, %v3184, 0
    %v3191 = vsel %vm306, %v3186, 0
    %3193 = vmatprep.subr.bf16.mxu0 0
    %3194 = vmatpush1.bf16.xpose.msra.mxu0 %v3191
    %3195 = vmatprep.subr.bf16.mxu0 0
    %3196 = vmatpush1.bf16.xpose.msra.mxu0 0
    %3197 = vmatprep.subr.bf16.mxu0 0
    %3198 = vmatpush1.bf16.xpose.msra.mxu0 0
    %3199 = vmatprep.subr.bf16.mxu0 0
    %3200 = vmatpush1.bf16.xpose.msra.mxu0 0
    %3201 = vmatprep.subr.bf16.mxu0 0
    %3202 = vmatpush1.bf16.xpose.msra.mxu0 0
    %3203 = vmatprep.subr.bf16.mxu0 0
    %3204 = vmatpush1.bf16.xpose.msra.mxu0 0
    %3205 = vmatprep.subr.bf16.mxu0 0
    %3206 = vmatpush1.bf16.xpose.msra.mxu0 0
    %3207 = vmatprep.subr.bf16.mxu0 0
    %3208 = vmatpush1.bf16.xpose.msra.mxu0 0
    %3209 = vmatprep.subr.bf16.mxu0 0
    %3210 = vmatpush1.bf16.xpose.msra.mxu0 0
    %3211 = vmatprep.subr.bf16.mxu0 0
    %3212 = vmatpush1.bf16.xpose.msra.mxu0 0
    %3213 = vmatprep.subr.bf16.mxu0 0
    %3214 = vmatpush1.bf16.xpose.msra.mxu0 0
    %3215 = vmatprep.subr.bf16.mxu0 0
    %3216 = vmatpush1.bf16.xpose.msra.mxu0 0
    %3217 = vmatprep.subr.bf16.mxu0 0
    %3218 = vmatpush1.bf16.xpose.msra.mxu0 0
    %3219 = vmatprep.subr.bf16.mxu0 0
    %3220 = vmatpush1.bf16.xpose.msra.mxu0 0
    %3221 = vmatprep.subr.bf16.mxu0 0
    %3222 = vmatpush1.bf16.xpose.msra.mxu0 0
    %3223 = vmatprep.subr.bf16.mxu0 0
    %3224 = vmatpush1.bf16.xpose.msra.mxu0 0
    %3225 = vmatprep.mubr.bf16.mxu0 0
    %3226 = vmatmul.mubr.bf16.gmra.mrb[0].mxu0 %v3188
    %v3227 = vpop.f32.mrb[0].mxu0
    %v3228 = vadd.f32 0.0, %v3227
    %v3229 = vpop.f32.mrb[0].mxu0
    %v3230 = vpop.f32.mrb[0].mxu0
    %v3231 = vpop.f32.mrb[0].mxu0
    %3232 = vdwg.mxu0
    %v3233 = vmul.f32 %v3228, 0.35355338
    %v3234 = vadd.f32 %v3233, %v148
    %v3235 = vsel %vm306, %v2870, -inf
    %3236 = vmax.xlane.f32.xlu0 %v3235
    %v3237 = vpop.xlane.xlu0 %3236
    %v3238 = vsel %vm306, %v2922, -inf
    %3239 = vmax.xlane.f32.xlu0 %v3238
    %v3240 = vpop.xlane.xlu0 %3239
    %v3241 = vsel %vm306, %v2974, -inf
    %3242 = vmax.xlane.f32.xlu0 %v3241
    %v3243 = vpop.xlane.xlu0 %3242
    %v3244 = vsel %vm306, %v3026, -inf
    %3245 = vmax.xlane.f32.xlu0 %v3244
    %v3246 = vpop.xlane.xlu0 %3245
    %v3247 = vsel %vm306, %v3078, -inf
    %3248 = vmax.xlane.f32.xlu0 %v3247
    %v3249 = vpop.xlane.xlu0 %3248
    %v3250 = vsel %vm306, %v3130, -inf
    %3251 = vmax.xlane.f32.xlu0 %v3250
    %v3252 = vpop.xlane.xlu0 %3251
    %v3253 = vsel %vm306, %v3182, -inf
    %3254 = vmax.xlane.f32.xlu0 %v3253
    %v3255 = vpop.xlane.xlu0 %3254
    %v3256 = vsel %vm306, %v3234, -inf
    %3257 = vmax.xlane.f32.xlu0 %v3256
    %v3258 = vpop.xlane.xlu0 %3257
    %v3259 = vsub.f32 %v2870, %v3237
    %v3260 = vsub.f32 %v2922, %v3240
    %v3261 = vsub.f32 %v2974, %v3243
    %v3262 = vsub.f32 %v3026, %v3246
    %v3263 = vsub.f32 %v3078, %v3249
    %v3264 = vsub.f32 %v3130, %v3252
    %v3265 = vsub.f32 %v3182, %v3255
    %v3266 = vsub.f32 %v3234, %v3258
    %v3267 = vmul.f32 %v3259, 1.442695
    %v3268 = vpow.pop %v3267
    %v3269 = vmul.f32 %v3260, 1.442695
    %v3270 = vpow.pop %v3269
    %v3271 = vmul.f32 %v3261, 1.442695
    %v3272 = vpow.pop %v3271
    %v3273 = vmul.f32 %v3262, 1.442695
    %v3274 = vpow.pop %v3273
    %v3275 = vmul.f32 %v3263, 1.442695
    %v3276 = vpow.pop %v3275
    %v3277 = vmul.f32 %v3264, 1.442695
    %v3278 = vpow.pop %v3277
    %v3279 = vmul.f32 %v3265, 1.442695
    %v3280 = vpow.pop %v3279
    %v3281 = vmul.f32 %v3266, 1.442695
    %v3282 = vpow.pop %v3281
    %v3283 = vsel %vm306, %v3268, 0.0
    %3284 = vadd.xlane.f32.xlu0 %v3283
    %v3285 = vpop.xlane.xlu0 %3284
    %v3286 = vsel %vm306, %v3270, 0.0
    %3287 = vadd.xlane.f32.xlu0 %v3286
    %v3288 = vpop.xlane.xlu0 %3287
    %v3289 = vsel %vm306, %v3272, 0.0
    %3290 = vadd.xlane.f32.xlu0 %v3289
    %v3291 = vpop.xlane.xlu0 %3290
    %v3292 = vsel %vm306, %v3274, 0.0
    %3293 = vadd.xlane.f32.xlu0 %v3292
    %v3294 = vpop.xlane.xlu0 %3293
    %v3295 = vsel %vm306, %v3276, 0.0
    %3296 = vadd.xlane.f32.xlu0 %v3295
    %v3297 = vpop.xlane.xlu0 %3296
    %v3298 = vsel %vm306, %v3278, 0.0
    %3299 = vadd.xlane.f32.xlu0 %v3298
    %v3300 = vpop.xlane.xlu0 %3299
    %v3301 = vsel %vm306, %v3280, 0.0
    %3302 = vadd.xlane.f32.xlu0 %v3301
    %v3303 = vpop.xlane.xlu0 %3302
    %v3304 = vsel %vm306, %v3282, 0.0
    %3305 = vadd.xlane.f32.xlu0 %v3304
    %v3306 = vpop.xlane.xlu0 %3305
    %v3307 = vrcp.pop %v3285
    %v3308 = vrcp.pop %v3288
    %v3309 = vrcp.pop %v3291
    %v3310 = vrcp.pop %v3294
    %v3311 = vrcp.pop %v3297
    %v3312 = vrcp.pop %v3300
    %v3313 = vrcp.pop %v3303
    %v3314 = vrcp.pop %v3306
    %v3315 = vmul.f32 %v3268, %v3307
    %v3316 = vmul.f32 %v3270, %v3308
    %v3317 = vmul.f32 %v3272, %v3309
    %v3318 = vmul.f32 %v3274, %v3310
    %v3319 = vmul.f32 %v3276, %v3311
    %v3320 = vmul.f32 %v3278, %v3312
    %v3321 = vmul.f32 %v3280, %v3313
    %v3322 = vmul.f32 %v3282, %v3314
    %v3323 = vpack.c.bf16 %v3316, %v3315
    %v3324 = vpack.c.bf16 %v3318, %v3317
    %v3325 = vpack.c.bf16 %v3320, %v3319
    %v3326 = vpack.c.bf16 %v3322, %v3321
    %3327 = vrot.lane.b32.xlu0 %v2819, 64
    %v3328 = vpop.permute.xlu0 %3327
    %v3330 = vsel %vm306, %v3323, 0
    %v3333 = vsel %vm180, %v3328, 0
    %3335 = vmatprep.subr.bf16.mxu0 0
    %3336 = vmatpush1.bf16.msra.mxu0 %v3333
    %3337 = vmatprep.subr.bf16.mxu0 0
    %3338 = vmatpush1.bf16.msra.mxu0 0
    %3339 = vmatprep.subr.bf16.mxu0 0
    %3340 = vmatpush1.bf16.msra.mxu0 0
    %3341 = vmatprep.subr.bf16.mxu0 0
    %3342 = vmatpush1.bf16.msra.mxu0 0
    %3343 = vmatprep.subr.bf16.mxu0 0
    %3344 = vmatpush1.bf16.msra.mxu0 0
    %3345 = vmatprep.subr.bf16.mxu0 0
    %3346 = vmatpush1.bf16.msra.mxu0 0
    %3347 = vmatprep.subr.bf16.mxu0 0
    %3348 = vmatpush1.bf16.msra.mxu0 0
    %3349 = vmatprep.subr.bf16.mxu0 0
    %3350 = vmatpush1.bf16.msra.mxu0 0
    %3351 = vmatprep.subr.bf16.mxu0 0
    %3352 = vmatpush1.bf16.msra.mxu0 0
    %3353 = vmatprep.subr.bf16.mxu0 0
    %3354 = vmatpush1.bf16.msra.mxu0 0
    %3355 = vmatprep.subr.bf16.mxu0 0
    %3356 = vmatpush1.bf16.msra.mxu0 0
    %3357 = vmatprep.subr.bf16.mxu0 0
    %3358 = vmatpush1.bf16.msra.mxu0 0
    %3359 = vmatprep.subr.bf16.mxu0 0
    %3360 = vmatpush1.bf16.msra.mxu0 0
    %3361 = vmatprep.subr.bf16.mxu0 0
    %3362 = vmatpush1.bf16.msra.mxu0 0
    %3363 = vmatprep.subr.bf16.mxu0 0
    %3364 = vmatpush1.bf16.msra.mxu0 0
    %3365 = vmatprep.subr.bf16.mxu0 0
    %3366 = vmatpush1.bf16.msra.mxu0 0
    %3367 = vmatprep.mubr.bf16.mxu0 0
    %3368 = vmatmul.mubr.bf16.gmra.mrb[0].mxu0 %v3330
    %v3369 = vpop.f32.mrb[0].mxu0
    %v3370 = vadd.f32 0.0, %v3369
    %v3371 = vpop.f32.mrb[0].mxu0
    %v3372 = vpop.f32.mrb[0].mxu0
    %v3373 = vpop.f32.mrb[0].mxu0
    %3374 = vdwg.mxu0
    %v3376 = vrot.slane %v3323, 4
    %3377 = vrot.lane.b32.xlu0 %v2819, 56
    %v3378 = vpop.permute.xlu0 %3377
    %v3380 = vsel %vm306, %v3376, 0
    %v3383 = vsel %vm180, %v3378, 0
    %3385 = vmatprep.subr.bf16.mxu0 0
    %3386 = vmatpush1.bf16.msra.mxu0 %v3383
    %3387 = vmatprep.subr.bf16.mxu0 0
    %3388 = vmatpush1.bf16.msra.mxu0 0
    %3389 = vmatprep.subr.bf16.mxu0 0
    %3390 = vmatpush1.bf16.msra.mxu0 0
    %3391 = vmatprep.subr.bf16.mxu0 0
    %3392 = vmatpush1.bf16.msra.mxu0 0
    %3393 = vmatprep.subr.bf16.mxu0 0
    %3394 = vmatpush1.bf16.msra.mxu0 0
    %3395 = vmatprep.subr.bf16.mxu0 0
    %3396 = vmatpush1.bf16.msra.mxu0 0
    %3397 = vmatprep.subr.bf16.mxu0 0
    %3398 = vmatpush1.bf16.msra.mxu0 0
    %3399 = vmatprep.subr.bf16.mxu0 0
    %3400 = vmatpush1.bf16.msra.mxu0 0
    %3401 = vmatprep.subr.bf16.mxu0 0
    %3402 = vmatpush1.bf16.msra.mxu0 0
    %3403 = vmatprep.subr.bf16.mxu0 0
    %3404 = vmatpush1.bf16.msra.mxu0 0
    %3405 = vmatprep.subr.bf16.mxu0 0
    %3406 = vmatpush1.bf16.msra.mxu0 0
    %3407 = vmatprep.subr.bf16.mxu0 0
    %3408 = vmatpush1.bf16.msra.mxu0 0
    %3409 = vmatprep.subr.bf16.mxu0 0
    %3410 = vmatpush1.bf16.msra.mxu0 0
    %3411 = vmatprep.subr.bf16.mxu0 0
    %3412 = vmatpush1.bf16.msra.mxu0 0
    %3413 = vmatprep.subr.bf16.mxu0 0
    %3414 = vmatpush1.bf16.msra.mxu0 0
    %3415 = vmatprep.subr.bf16.mxu0 0
    %3416 = vmatpush1.bf16.msra.mxu0 0
    %3417 = vmatprep.mubr.bf16.mxu0 0
    %3418 = vmatmul.mubr.bf16.gmra.mrb[0].mxu0 %v3380
    %v3419 = vpop.f32.mrb[0].mxu0
    %v3420 = vadd.f32 0.0, %v3419
    %v3421 = vpop.f32.mrb[0].mxu0
    %v3422 = vpop.f32.mrb[0].mxu0
    %v3423 = vpop.f32.mrb[0].mxu0
    %3424 = vdwg.mxu0
    %3425 = vrot.lane.b32.xlu0 %v2819, 48
    %v3426 = vpop.permute.xlu0 %3425
    %v3428 = vsel %vm306, %v3324, 0
    %v3431 = vsel %vm180, %v3426, 0
    %3433 = vmatprep.subr.bf16.mxu0 0
    %3434 = vmatpush1.bf16.msra.mxu0 %v3431
    %3435 = vmatprep.subr.bf16.mxu0 0
    %3436 = vmatpush1.bf16.msra.mxu0 0
    %3437 = vmatprep.subr.bf16.mxu0 0
    %3438 = vmatpush1.bf16.msra.mxu0 0
    %3439 = vmatprep.subr.bf16.mxu0 0
    %3440 = vmatpush1.bf16.msra.mxu0 0
    %3441 = vmatprep.subr.bf16.mxu0 0
    %3442 = vmatpush1.bf16.msra.mxu0 0
    %3443 = vmatprep.subr.bf16.mxu0 0
    %3444 = vmatpush1.bf16.msra.mxu0 0
    %3445 = vmatprep.subr.bf16.mxu0 0
    %3446 = vmatpush1.bf16.msra.mxu0 0
    %3447 = vmatprep.subr.bf16.mxu0 0
    %3448 = vmatpush1.bf16.msra.mxu0 0
    %3449 = vmatprep.subr.bf16.mxu0 0
    %3450 = vmatpush1.bf16.msra.mxu0 0
    %3451 = vmatprep.subr.bf16.mxu0 0
    %3452 = vmatpush1.bf16.msra.mxu0 0
    %3453 = vmatprep.subr.bf16.mxu0 0
    %3454 = vmatpush1.bf16.msra.mxu0 0
    %3455 = vmatprep.subr.bf16.mxu0 0
    %3456 = vmatpush1.bf16.msra.mxu0 0
    %3457 = vmatprep.subr.bf16.mxu0 0
    %3458 = vmatpush1.bf16.msra.mxu0 0
    %3459 = vmatprep.subr.bf16.mxu0 0
    %3460 = vmatpush1.bf16.msra.mxu0 0
    %3461 = vmatprep.subr.bf16.mxu0 0
    %3462 = vmatpush1.bf16.msra.mxu0 0
    %3463 = vmatprep.subr.bf16.mxu0 0
    %3464 = vmatpush1.bf16.msra.mxu0 0
    %3465 = vmatprep.mubr.bf16.mxu0 0
    %3466 = vmatmul.mubr.bf16.gmra.mrb[0].mxu0 %v3428
    %v3467 = vpop.f32.mrb[0].mxu0
    %v3468 = vadd.f32 0.0, %v3467
    %v3469 = vpop.f32.mrb[0].mxu0
    %v3470 = vpop.f32.mrb[0].mxu0
    %v3471 = vpop.f32.mrb[0].mxu0
    %3472 = vdwg.mxu0
    %v3474 = vrot.slane %v3324, 4
    %3475 = vrot.lane.b32.xlu0 %v2819, 40
    %v3476 = vpop.permute.xlu0 %3475
    %v3478 = vsel %vm306, %v3474, 0
    %v3481 = vsel %vm180, %v3476, 0
    %3483 = vmatprep.subr.bf16.mxu0 0
    %3484 = vmatpush1.bf16.msra.mxu0 %v3481
    %3485 = vmatprep.subr.bf16.mxu0 0
    %3486 = vmatpush1.bf16.msra.mxu0 0
    %3487 = vmatprep.subr.bf16.mxu0 0
    %3488 = vmatpush1.bf16.msra.mxu0 0
    %3489 = vmatprep.subr.bf16.mxu0 0
    %3490 = vmatpush1.bf16.msra.mxu0 0
    %3491 = vmatprep.subr.bf16.mxu0 0
    %3492 = vmatpush1.bf16.msra.mxu0 0
    %3493 = vmatprep.subr.bf16.mxu0 0
    %3494 = vmatpush1.bf16.msra.mxu0 0
    %3495 = vmatprep.subr.bf16.mxu0 0
    %3496 = vmatpush1.bf16.msra.mxu0 0
    %3497 = vmatprep.subr.bf16.mxu0 0
    %3498 = vmatpush1.bf16.msra.mxu0 0
    %3499 = vmatprep.subr.bf16.mxu0 0
    %3500 = vmatpush1.bf16.msra.mxu0 0
    %3501 = vmatprep.subr.bf16.mxu0 0
    %3502 = vmatpush1.bf16.msra.mxu0 0
    %3503 = vmatprep.subr.bf16.mxu0 0
    %3504 = vmatpush1.bf16.msra.mxu0 0
    %3505 = vmatprep.subr.bf16.mxu0 0
    %3506 = vmatpush1.bf16.msra.mxu0 0
    %3507 = vmatprep.subr.bf16.mxu0 0
    %3508 = vmatpush1.bf16.msra.mxu0 0
    %3509 = vmatprep.subr.bf16.mxu0 0
    %3510 = vmatpush1.bf16.msra.mxu0 0
    %3511 = vmatprep.subr.bf16.mxu0 0
    %3512 = vmatpush1.bf16.msra.mxu0 0
    %3513 = vmatprep.subr.bf16.mxu0 0
    %3514 = vmatpush1.bf16.msra.mxu0 0
    %3515 = vmatprep.mubr.bf16.mxu0 0
    %3516 = vmatmul.mubr.bf16.gmra.mrb[0].mxu0 %v3478
    %v3517 = vpop.f32.mrb[0].mxu0
    %v3518 = vadd.f32 0.0, %v3517
    %v3519 = vpop.f32.mrb[0].mxu0
    %v3520 = vpop.f32.mrb[0].mxu0
    %v3521 = vpop.f32.mrb[0].mxu0
    %3522 = vdwg.mxu0
    %3524 = vrot.lane.b32.xlu0 %v3420, 8
    %v3525 = vpop.permute.xlu0 %3524
    %3528 = vrot.lane.b32.xlu0 %v3468, 16
    %v3529 = vpop.permute.xlu0 %3528
    %3532 = vrot.lane.b32.xlu0 %v3518, 24
    %v3533 = vpop.permute.xlu0 %3532
    %v3535 = vsel %vm306, %v3370, %v3525
    %v3536 = vsel %vm1020, %v3535, %v3529
    %v3537 = vsel %vm1022, %v3536, %v3533
    %3538 = vrot.lane.b32.xlu0 %v3027, 64
    %v3539 = vpop.permute.xlu0 %3538
    %v3541 = vsel %vm306, %v3325, 0
    %v3544 = vsel %vm180, %v3539, 0
    %3546 = vmatprep.subr.bf16.mxu0 0
    %3547 = vmatpush1.bf16.msra.mxu0 %v3544
    %3548 = vmatprep.subr.bf16.mxu0 0
    %3549 = vmatpush1.bf16.msra.mxu0 0
    %3550 = vmatprep.subr.bf16.mxu0 0
    %3551 = vmatpush1.bf16.msra.mxu0 0
    %3552 = vmatprep.subr.bf16.mxu0 0
    %3553 = vmatpush1.bf16.msra.mxu0 0
    %3554 = vmatprep.subr.bf16.mxu0 0
    %3555 = vmatpush1.bf16.msra.mxu0 0
    %3556 = vmatprep.subr.bf16.mxu0 0
    %3557 = vmatpush1.bf16.msra.mxu0 0
    %3558 = vmatprep.subr.bf16.mxu0 0
    %3559 = vmatpush1.bf16.msra.mxu0 0
    %3560 = vmatprep.subr.bf16.mxu0 0
    %3561 = vmatpush1.bf16.msra.mxu0 0
    %3562 = vmatprep.subr.bf16.mxu0 0
    %3563 = vmatpush1.bf16.msra.mxu0 0
    %3564 = vmatprep.subr.bf16.mxu0 0
    %3565 = vmatpush1.bf16.msra.mxu0 0
    %3566 = vmatprep.subr.bf16.mxu0 0
    %3567 = vmatpush1.bf16.msra.mxu0 0
    %3568 = vmatprep.subr.bf16.mxu0 0
    %3569 = vmatpush1.bf16.msra.mxu0 0
    %3570 = vmatprep.subr.bf16.mxu0 0
    %3571 = vmatpush1.bf16.msra.mxu0 0
    %3572 = vmatprep.subr.bf16.mxu0 0
    %3573 = vmatpush1.bf16.msra.mxu0 0
    %3574 = vmatprep.subr.bf16.mxu0 0
    %3575 = vmatpush1.bf16.msra.mxu0 0
    %3576 = vmatprep.subr.bf16.mxu0 0
    %3577 = vmatpush1.bf16.msra.mxu0 0
    %3578 = vmatprep.mubr.bf16.mxu0 0
    %3579 = vmatmul.mubr.bf16.gmra.mrb[0].mxu0 %v3541
    %v3580 = vpop.f32.mrb[0].mxu0
    %v3581 = vadd.f32 0.0, %v3580
    %v3582 = vpop.f32.mrb[0].mxu0
    %v3583 = vpop.f32.mrb[0].mxu0
    %v3584 = vpop.f32.mrb[0].mxu0
    %3585 = vdwg.mxu0
    %v3587 = vrot.slane %v3325, 4
    %3588 = vrot.lane.b32.xlu0 %v3027, 56
    %v3589 = vpop.permute.xlu0 %3588
    %v3591 = vsel %vm306, %v3587, 0
    %v3594 = vsel %vm180, %v3589, 0
    %3596 = vmatprep.subr.bf16.mxu0 0
    %3597 = vmatpush1.bf16.msra.mxu0 %v3594
    %3598 = vmatprep.subr.bf16.mxu0 0
    %3599 = vmatpush1.bf16.msra.mxu0 0
    %3600 = vmatprep.subr.bf16.mxu0 0
    %3601 = vmatpush1.bf16.msra.mxu0 0
    %3602 = vmatprep.subr.bf16.mxu0 0
    %3603 = vmatpush1.bf16.msra.mxu0 0
    %3604 = vmatprep.subr.bf16.mxu0 0
    %3605 = vmatpush1.bf16.msra.mxu0 0
    %3606 = vmatprep.subr.bf16.mxu0 0
    %3607 = vmatpush1.bf16.msra.mxu0 0
    %3608 = vmatprep.subr.bf16.mxu0 0
    %3609 = vmatpush1.bf16.msra.mxu0 0
    %3610 = vmatprep.subr.bf16.mxu0 0
    %3611 = vmatpush1.bf16.msra.mxu0 0
    %3612 = vmatprep.subr.bf16.mxu0 0
    %3613 = vmatpush1.bf16.msra.mxu0 0
    %3614 = vmatprep.subr.bf16.mxu0 0
    %3615 = vmatpush1.bf16.msra.mxu0 0
    %3616 = vmatprep.subr.bf16.mxu0 0
    %3617 = vmatpush1.bf16.msra.mxu0 0
    %3618 = vmatprep.subr.bf16.mxu0 0
    %3619 = vmatpush1.bf16.msra.mxu0 0
    %3620 = vmatprep.subr.bf16.mxu0 0
    %3621 = vmatpush1.bf16.msra.mxu0 0
    %3622 = vmatprep.subr.bf16.mxu0 0
    %3623 = vmatpush1.bf16.msra.mxu0 0
    %3624 = vmatprep.subr.bf16.mxu0 0
    %3625 = vmatpush1.bf16.msra.mxu0 0
    %3626 = vmatprep.subr.bf16.mxu0 0
    %3627 = vmatpush1.bf16.msra.mxu0 0
    %3628 = vmatprep.mubr.bf16.mxu0 0
    %3629 = vmatmul.mubr.bf16.gmra.mrb[0].mxu0 %v3591
    %v3630 = vpop.f32.mrb[0].mxu0
    %v3631 = vadd.f32 0.0, %v3630
    %v3632 = vpop.f32.mrb[0].mxu0
    %v3633 = vpop.f32.mrb[0].mxu0
    %v3634 = vpop.f32.mrb[0].mxu0
    %3635 = vdwg.mxu0
    %3636 = vrot.lane.b32.xlu0 %v3027, 48
    %v3637 = vpop.permute.xlu0 %3636
    %v3639 = vsel %vm306, %v3326, 0
    %v3642 = vsel %vm180, %v3637, 0
    %3644 = vmatprep.subr.bf16.mxu0 0
    %3645 = vmatpush1.bf16.msra.mxu0 %v3642
    %3646 = vmatprep.subr.bf16.mxu0 0
    %3647 = vmatpush1.bf16.msra.mxu0 0
    %3648 = vmatprep.subr.bf16.mxu0 0
    %3649 = vmatpush1.bf16.msra.mxu0 0
    %3650 = vmatprep.subr.bf16.mxu0 0
    %3651 = vmatpush1.bf16.msra.mxu0 0
    %3652 = vmatprep.subr.bf16.mxu0 0
    %3653 = vmatpush1.bf16.msra.mxu0 0
    %3654 = vmatprep.subr.bf16.mxu0 0
    %3655 = vmatpush1.bf16.msra.mxu0 0
    %3656 = vmatprep.subr.bf16.mxu0 0
    %3657 = vmatpush1.bf16.msra.mxu0 0
    %3658 = vmatprep.subr.bf16.mxu0 0
    %3659 = vmatpush1.bf16.msra.mxu0 0
    %3660 = vmatprep.subr.bf16.mxu0 0
    %3661 = vmatpush1.bf16.msra.mxu0 0
    %3662 = vmatprep.subr.bf16.mxu0 0
    %3663 = vmatpush1.bf16.msra.mxu0 0
    %3664 = vmatprep.subr.bf16.mxu0 0
    %3665 = vmatpush1.bf16.msra.mxu0 0
    %3666 = vmatprep.subr.bf16.mxu0 0
    %3667 = vmatpush1.bf16.msra.mxu0 0
    %3668 = vmatprep.subr.bf16.mxu0 0
    %3669 = vmatpush1.bf16.msra.mxu0 0
    %3670 = vmatprep.subr.bf16.mxu0 0
    %3671 = vmatpush1.bf16.msra.mxu0 0
    %3672 = vmatprep.subr.bf16.mxu0 0
    %3673 = vmatpush1.bf16.msra.mxu0 0
    %3674 = vmatprep.subr.bf16.mxu0 0
    %3675 = vmatpush1.bf16.msra.mxu0 0
    %3676 = vmatprep.mubr.bf16.mxu0 0
    %3677 = vmatmul.mubr.bf16.gmra.mrb[0].mxu0 %v3639
    %v3678 = vpop.f32.mrb[0].mxu0
    %v3679 = vadd.f32 0.0, %v3678
    %v3680 = vpop.f32.mrb[0].mxu0
    %v3681 = vpop.f32.mrb[0].mxu0
    %v3682 = vpop.f32.mrb[0].mxu0
    %3683 = vdwg.mxu0
    %v3685 = vrot.slane %v3326, 4
    %3686 = vrot.lane.b32.xlu0 %v3027, 40
    %v3687 = vpop.permute.xlu0 %3686
    %v3689 = vsel %vm306, %v3685, 0
    %v3692 = vsel %vm180, %v3687, 0
    %3694 = vmatprep.subr.bf16.mxu0 0
    %3695 = vmatpush1.bf16.msra.mxu0 %v3692
    %3696 = vmatprep.subr.bf16.mxu0 0
    %3697 = vmatpush1.bf16.msra.mxu0 0
    %3698 = vmatprep.subr.bf16.mxu0 0
    %3699 = vmatpush1.bf16.msra.mxu0 0
    %3700 = vmatprep.subr.bf16.mxu0 0
    %3701 = vmatpush1.bf16.msra.mxu0 0
    %3702 = vmatprep.subr.bf16.mxu0 0
    %3703 = vmatpush1.bf16.msra.mxu0 0
    %3704 = vmatprep.subr.bf16.mxu0 0
    %3705 = vmatpush1.bf16.msra.mxu0 0
    %3706 = vmatprep.subr.bf16.mxu0 0
    %3707 = vmatpush1.bf16.msra.mxu0 0
    %3708 = vmatprep.subr.bf16.mxu0 0
    %3709 = vmatpush1.bf16.msra.mxu0 0
    %3710 = vmatprep.subr.bf16.mxu0 0
    %3711 = vmatpush1.bf16.msra.mxu0 0
    %3712 = vmatprep.subr.bf16.mxu0 0
    %3713 = vmatpush1.bf16.msra.mxu0 0
    %3714 = vmatprep.subr.bf16.mxu0 0
    %3715 = vmatpush1.bf16.msra.mxu0 0
    %3716 = vmatprep.subr.bf16.mxu0 0
    %3717 = vmatpush1.bf16.msra.mxu0 0
    %3718 = vmatprep.subr.bf16.mxu0 0
    %3719 = vmatpush1.bf16.msra.mxu0 0
    %3720 = vmatprep.subr.bf16.mxu0 0
    %3721 = vmatpush1.bf16.msra.mxu0 0
    %3722 = vmatprep.subr.bf16.mxu0 0
    %3723 = vmatpush1.bf16.msra.mxu0 0
    %3724 = vmatprep.subr.bf16.mxu0 0
    %3725 = vmatpush1.bf16.msra.mxu0 0
    %3726 = vmatprep.mubr.bf16.mxu0 0
    %3727 = vmatmul.mubr.bf16.gmra.mrb[0].mxu0 %v3689
    %v3728 = vpop.f32.mrb[0].mxu0
    %v3729 = vadd.f32 0.0, %v3728
    %v3730 = vpop.f32.mrb[0].mxu0
    %v3731 = vpop.f32.mrb[0].mxu0
    %v3732 = vpop.f32.mrb[0].mxu0
    %3733 = vdwg.mxu0
    %3735 = vrot.lane.b32.xlu0 %v3631, 8
    %v3736 = vpop.permute.xlu0 %3735
    %3739 = vrot.lane.b32.xlu0 %v3679, 16
    %v3740 = vpop.permute.xlu0 %3739
    %3743 = vrot.lane.b32.xlu0 %v3729, 24
    %v3744 = vpop.permute.xlu0 %3743
    %v3746 = vsel %vm306, %v3581, %v3736
    %v3747 = vsel %vm1020, %v3746, %v3740
    %v3748 = vsel %vm1022, %v3747, %v3744
    %v3749 = vpack.c.bf16 %v3748, %v3537
    %v3751 = vlaneseq
    %v3752 = vshrl.u32 %v3751, 7
    %v3753 = vsub.s32 0, %v3752
    %v3754 = vrot.slane %v2818, %v3753
    %v3760 = vunpack.c.l.b16 %v2813
    %v3761 = vunpack.c.l.b16 %v2814
    %v3762 = vunpack.c.l.b16 %v2815
    %v3763 = vunpack.c.l.b16 %v2816
    %v3764 = vpack.c.b16 %v3761, %v3760
    %v3765 = vpack.c.b16 %v3763, %v3762
    %v3769 = vsel %vm252, %v3749, 0
    %3771 = vmatprep.subr.bf16.mxu0 0
    %3772 = vmatpush1.bf16.msra.mxu0 %v3764
    %3773 = vmatprep.subr.bf16.mxu0 0
    %3774 = vmatpush1.bf16.msra.mxu0 %v3765
    %3775 = vmatprep.subr.bf16.mxu0 0
    %3776 = vmatpush1.bf16.msra.mxu0 0
    %3777 = vmatprep.subr.bf16.mxu0 0
    %3778 = vmatpush1.bf16.msra.mxu0 0
    %3779 = vmatprep.subr.bf16.mxu0 0
    %3780 = vmatpush1.bf16.msra.mxu0 0
    %3781 = vmatprep.subr.bf16.mxu0 0
    %3782 = vmatpush1.bf16.msra.mxu0 0
    %3783 = vmatprep.subr.bf16.mxu0 0
    %3784 = vmatpush1.bf16.msra.mxu0 0
    %3785 = vmatprep.subr.bf16.mxu0 0
    %3786 = vmatpush1.bf16.msra.mxu0 0
    %3787 = vmatprep.subr.bf16.mxu0 0
    %3788 = vmatpush1.bf16.msra.mxu0 0
    %3789 = vmatprep.subr.bf16.mxu0 0
    %3790 = vmatpush1.bf16.msra.mxu0 0
    %3791 = vmatprep.subr.bf16.mxu0 0
    %3792 = vmatpush1.bf16.msra.mxu0 0
    %3793 = vmatprep.subr.bf16.mxu0 0
    %3794 = vmatpush1.bf16.msra.mxu0 0
    %3795 = vmatprep.subr.bf16.mxu0 0
    %3796 = vmatpush1.bf16.msra.mxu0 0
    %3797 = vmatprep.subr.bf16.mxu0 0
    %3798 = vmatpush1.bf16.msra.mxu0 0
    %3799 = vmatprep.subr.bf16.mxu0 0
    %3800 = vmatpush1.bf16.msra.mxu0 0
    %3801 = vmatprep.subr.bf16.mxu0 0
    %3802 = vmatpush1.bf16.msra.mxu0 0
    %3803 = vmatprep.mubr.bf16.mxu0 0
    %3804 = vmatmul.mubr.bf16.gmra.mrb[0].mxu0 %v3769
    %v3805 = vpop.f32.mrb[0].mxu0
    %v3806 = vadd.f32 %v3754, %v3805
    %v3807 = vpop.f32.mrb[0].mxu0
    %v3808 = vpop.f32.mrb[0].mxu0
    %v3809 = vadd.f32 %v3754, %v3808
    %v3810 = vpop.f32.mrb[0].mxu0
    %3811 = vdwg.mxu0
    %v3812 = vadd.f32 %v2740, %v3806
    %v3813 = vadd.f32 %v2741, %v3809
    %s3814 = scalar_lea.vmem %s10, 1
    %v3815 = vld [vmem:[%s3814] sm:$0x1]
    %s3816 = scalar_lea.vmem %s11, 1
    %v3817 = vld [vmem:[%s3816] sm:$0x1]
    %v3818 = vsel %vm252, %v3812, 0.0
    %3819 = vadd.xlane.f32.xlu0 %v3818
    %v3820 = vpop.xlane.xlu0 %3819
    %v3821 = vsel %vm252, %v3813, 0.0
    %3822 = vadd.xlane.f32.xlu0 %v3821
    %v3823 = vpop.xlane.xlu0 %3822
    %v3824 = vmul.f32 %v3820, %v1308
    %v3825 = vmul.f32 %v3823, %v1308
    %v3826 = vsub.f32 %v3812, %v3824
    %v3827 = vsub.f32 %v3813, %v3825
    %v3828 = vmul.f32 %v3826, %v3826
    %v3829 = vmul.f32 %v3827, %v3827
    %v3830 = vsel %vm252, %v3828, 0.0
    %3831 = vadd.xlane.f32.xlu0 %v3830
    %v3832 = vpop.xlane.xlu0 %3831
    %v3833 = vsel %vm252, %v3829, 0.0
    %3834 = vadd.xlane.f32.xlu0 %v3833
    %v3835 = vpop.xlane.xlu0 %3834
    %v3836 = vmul.f32 %v3832, %v1308
    %v3837 = vmul.f32 %v3835, %v1308
    %v3838 = vadd.f32 %v3836, 1e-05
    %v3839 = vadd.f32 %v3837, 1e-05
    %v3840 = vrsqrt.pop %v3838
    %v3841 = vrsqrt.pop %v3839
    %v3842 = vmul.f32 %v3826, %v3840
    %v3843 = vmul.f32 %v3827, %v3841
    %v3845 = vlaneseq
    %v3846 = vshrl.u32 %v3845, 7
    %v3847 = vsub.s32 0, %v3846
    %v3848 = vrot.slane %v3815, %v3847
    %v3850 = vmul.f32 %v3842, %v3848
    %v3851 = vmul.f32 %v3843, %v3848
    %v3853 = vlaneseq
    %v3854 = vshrl.u32 %v3853, 7
    %v3855 = vsub.s32 0, %v3854
    %v3856 = vrot.slane %v3817, %v3855
    %v3858 = vadd.f32 %v3850, %v3856
    %v3859 = vadd.f32 %v3851, %v3856
    %v3860 = vpack.c.bf16 %v3859, %v3858
    %s3861 = scalar_lea.vmem %s12, 16
    %v3862 = vld [vmem:[%s3861] sm:$0xf]
    %v3863 = vld [vmem:[%s3861 + $0x4] sm:$0xf]
    %v3864 = vld [vmem:[%s3861 + $0x8] sm:$0xf]
    %v3865 = vld [vmem:[%s3861 + $0xc] sm:$0xf]
    %s3866 = scalar_lea.vmem %s13, 1
    %v3867 = vld [vmem:[%s3866] sm:$0x1]
    %v3869 = vlaneseq
    %v3870 = vshrl.u32 %v3869, 7
    %v3871 = vsub.s32 0, %v3870
    %v3872 = vrot.slane %v3867, %v3871
    %v3878 = vunpack.c.l.b16 %v3862
    %v3879 = vunpack.c.l.b16 %v3863
    %v3880 = vunpack.c.l.b16 %v3864
    %v3881 = vunpack.c.l.b16 %v3865
    %v3882 = vpack.c.b16 %v3879, %v3878
    %v3883 = vpack.c.b16 %v3881, %v3880
    %v3887 = vsel %vm252, %v3860, 0
    %3889 = vmatprep.subr.bf16.mxu0 0
    %3890 = vmatpush1.bf16.msra.mxu0 %v3882
    %3891 = vmatprep.subr.bf16.mxu0 0
    %3892 = vmatpush1.bf16.msra.mxu0 %v3883
    %3893 = vmatprep.subr.bf16.mxu0 0
    %3894 = vmatpush1.bf16.msra.mxu0 0
    %3895 = vmatprep.subr.bf16.mxu0 0
    %3896 = vmatpush1.bf16.msra.mxu0 0
    %3897 = vmatprep.subr.bf16.mxu0 0
    %3898 = vmatpush1.bf16.msra.mxu0 0
    %3899 = vmatprep.subr.bf16.mxu0 0
    %3900 = vmatpush1.bf16.msra.mxu0 0
    %3901 = vmatprep.subr.bf16.mxu0 0
    %3902 = vmatpush1.bf16.msra.mxu0 0
    %3903 = vmatprep.subr.bf16.mxu0 0
    %3904 = vmatpush1.bf16.msra.mxu0 0
    %3905 = vmatprep.subr.bf16.mxu0 0
    %3906 = vmatpush1.bf16.msra.mxu0 0
    %3907 = vmatprep.subr.bf16.mxu0 0
    %3908 = vmatpush1.bf16.msra.mxu0 0
    %3909 = vmatprep.subr.bf16.mxu0 0
    %3910 = vmatpush1.bf16.msra.mxu0 0
    %3911 = vmatprep.subr.bf16.mxu0 0
    %3912 = vmatpush1.bf16.msra.mxu0 0
    %3913 = vmatprep.subr.bf16.mxu0 0
    %3914 = vmatpush1.bf16.msra.mxu0 0
    %3915 = vmatprep.subr.bf16.mxu0 0
    %3916 = vmatpush1.bf16.msra.mxu0 0
    %3917 = vmatprep.subr.bf16.mxu0 0
    %3918 = vmatpush1.bf16.msra.mxu0 0
    %3919 = vmatprep.subr.bf16.mxu0 0
    %3920 = vmatpush1.bf16.msra.mxu0 0
    %3921 = vmatprep.mubr.bf16.mxu0 0
    %3922 = vmatmul.mubr.bf16.gmra.mrb[0].mxu0 %v3887
    %v3923 = vpop.f32.mrb[0].mxu0
    %v3924 = vadd.f32 %v3872, %v3923
    %v3925 = vpop.f32.mrb[0].mxu0
    %v3926 = vpop.f32.mrb[0].mxu0
    %v3927 = vadd.f32 %v3872, %v3926
    %v3928 = vpop.f32.mrb[0].mxu0
    %3929 = vdwg.mxu0
    %s3930 = scalar_lea.vmem %s14, 16
    %v3931 = vld [vmem:[%s3930] sm:$0xf]
    %v3932 = vld [vmem:[%s3930 + $0x4] sm:$0xf]
    %v3933 = vld [vmem:[%s3930 + $0x8] sm:$0xf]
    %v3934 = vld [vmem:[%s3930 + $0xc] sm:$0xf]
    %s3935 = scalar_lea.vmem %s15, 1
    %v3936 = vld [vmem:[%s3935] sm:$0x1]
    %v3938 = vlaneseq
    %v3939 = vshrl.u32 %v3938, 7
    %v3940 = vsub.s32 0, %v3939
    %v3941 = vrot.slane %v3936, %v3940
    %v3947 = vunpack.c.l.b16 %v3931
    %v3948 = vunpack.c.l.b16 %v3932
    %v3949 = vunpack.c.l.b16 %v3933
    %v3950 = vunpack.c.l.b16 %v3934
    %v3951 = vpack.c.b16 %v3948, %v3947
    %v3952 = vpack.c.b16 %v3950, %v3949
    %3955 = vmatprep.subr.bf16.mxu0 0
    %3956 = vmatpush1.bf16.msra.mxu0 %v3951
    %3957 = vmatprep.subr.bf16.mxu0 0
    %3958 = vmatpush1.bf16.msra.mxu0 %v3952
    %3959 = vmatprep.subr.bf16.mxu0 0
    %3960 = vmatpush1.bf16.msra.mxu0 0
    %3961 = vmatprep.subr.bf16.mxu0 0
    %3962 = vmatpush1.bf16.msra.mxu0 0
    %3963 = vmatprep.subr.bf16.mxu0 0
    %3964 = vmatpush1.bf16.msra.mxu0 0
    %3965 = vmatprep.subr.bf16.mxu0 0
    %3966 = vmatpush1.bf16.msra.mxu0 0
    %3967 = vmatprep.subr.bf16.mxu0 0
    %3968 = vmatpush1.bf16.msra.mxu0 0
    %3969 = vmatprep.subr.bf16.mxu0 0
    %3970 = vmatpush1.bf16.msra.mxu0 0
    %3971 = vmatprep.subr.bf16.mxu0 0
    %3972 = vmatpush1.bf16.msra.mxu0 0
    %3973 = vmatprep.subr.bf16.mxu0 0
    %3974 = vmatpush1.bf16.msra.mxu0 0
    %3975 = vmatprep.subr.bf16.mxu0 0
    %3976 = vmatpush1.bf16.msra.mxu0 0
    %3977 = vmatprep.subr.bf16.mxu0 0
    %3978 = vmatpush1.bf16.msra.mxu0 0
    %3979 = vmatprep.subr.bf16.mxu0 0
    %3980 = vmatpush1.bf16.msra.mxu0 0
    %3981 = vmatprep.subr.bf16.mxu0 0
    %3982 = vmatpush1.bf16.msra.mxu0 0
    %3983 = vmatprep.subr.bf16.mxu0 0
    %3984 = vmatpush1.bf16.msra.mxu0 0
    %3985 = vmatprep.subr.bf16.mxu0 0
    %3986 = vmatpush1.bf16.msra.mxu0 0
    %3987 = vmatprep.mubr.bf16.mxu0 0
    %3988 = vmatmul.mubr.bf16.gmra.mrb[0].mxu0 %v1442
    %v3989 = vpop.f32.mrb[0].mxu0
    %v3990 = vadd.f32 %v3941, %v3989
    %v3991 = vpop.f32.mrb[0].mxu0
    %v3992 = vpop.f32.mrb[0].mxu0
    %v3993 = vadd.f32 %v3941, %v3992
    %v3994 = vpop.f32.mrb[0].mxu0
    %3995 = vdwg.mxu0
    %s3996 = scalar_lea.vmem %s16, 16
    %v3997 = vld [vmem:[%s3996] sm:$0xf]
    %v3998 = vld [vmem:[%s3996 + $0x4] sm:$0xf]
    %v3999 = vld [vmem:[%s3996 + $0x8] sm:$0xf]
    %v4000 = vld [vmem:[%s3996 + $0xc] sm:$0xf]
    %s4001 = scalar_lea.vmem %s17, 1
    %v4002 = vld [vmem:[%s4001] sm:$0x1]
    %v4003 = vpack.c.bf16 %v3924, %v3924
    %v4004 = vpack.c.bf16 %v3990, %v3990
    %v4006 = vsel %vm306, %v4003, 0
    %v4009 = vsel %vm306, %v4004, 0
    %4011 = vmatprep.subr.bf16.mxu0 0
    %4012 = vmatpush1.bf16.xpose.msra.mxu0 %v4009
    %4013 = vmatprep.subr.bf16.mxu0 0
    %4014 = vmatpush1.bf16.xpose.msra.mxu0 0
    %4015 = vmatprep.subr.bf16.mxu0 0
    %4016 = vmatpush1.bf16.xpose.msra.mxu0 0
    %4017 = vmatprep.subr.bf16.mxu0 0
    %4018 = vmatpush1.bf16.xpose.msra.mxu0 0
    %4019 = vmatprep.subr.bf16.mxu0 0
    %4020 = vmatpush1.bf16.xpose.msra.mxu0 0
    %4021 = vmatprep.subr.bf16.mxu0 0
    %4022 = vmatpush1.bf16.xpose.msra.mxu0 0
    %4023 = vmatprep.subr.bf16.mxu0 0
    %4024 = vmatpush1.bf16.xpose.msra.mxu0 0
    %4025 = vmatprep.subr.bf16.mxu0 0
    %4026 = vmatpush1.bf16.xpose.msra.mxu0 0
    %4027 = vmatprep.subr.bf16.mxu0 0
    %4028 = vmatpush1.bf16.xpose.msra.mxu0 0
    %4029 = vmatprep.subr.bf16.mxu0 0
    %4030 = vmatpush1.bf16.xpose.msra.mxu0 0
    %4031 = vmatprep.subr.bf16.mxu0 0
    %4032 = vmatpush1.bf16.xpose.msra.mxu0 0
    %4033 = vmatprep.subr.bf16.mxu0 0
    %4034 = vmatpush1.bf16.xpose.msra.mxu0 0
    %4035 = vmatprep.subr.bf16.mxu0 0
    %4036 = vmatpush1.bf16.xpose.msra.mxu0 0
    %4037 = vmatprep.subr.bf16.mxu0 0
    %4038 = vmatpush1.bf16.xpose.msra.mxu0 0
    %4039 = vmatprep.subr.bf16.mxu0 0
    %4040 = vmatpush1.bf16.xpose.msra.mxu0 0
    %4041 = vmatprep.subr.bf16.mxu0 0
    %4042 = vmatpush1.bf16.xpose.msra.mxu0 0
    %4043 = vmatprep.mubr.bf16.mxu0 0
    %4044 = vmatmul.mubr.bf16.gmra.mrb[0].mxu0 %v4006
    %v4045 = vpop.f32.mrb[0].mxu0
    %v4046 = vadd.f32 0.0, %v4045
    %v4047 = vpop.f32.mrb[0].mxu0
    %v4048 = vpop.f32.mrb[0].mxu0
    %v4049 = vpop.f32.mrb[0].mxu0
    %4050 = vdwg.mxu0
    %v4051 = vmul.f32 %v4046, 0.35355338
    %v4052 = vadd.f32 %v4051, %v1543
    %4054 = vrot.lane.b32.xlu0 %v4003, 120
    %v4055 = vpop.permute.xlu0 %4054
    %4057 = vrot.lane.b32.xlu0 %v4004, 120
    %v4058 = vpop.permute.xlu0 %4057
    %v4060 = vsel %vm306, %v4055, 0
    %v4063 = vsel %vm306, %v4058, 0
    %4065 = vmatprep.subr.bf16.mxu0 0
    %4066 = vmatpush1.bf16.xpose.msra.mxu0 %v4063
    %4067 = vmatprep.subr.bf16.mxu0 0
    %4068 = vmatpush1.bf16.xpose.msra.mxu0 0
    %4069 = vmatprep.subr.bf16.mxu0 0
    %4070 = vmatpush1.bf16.xpose.msra.mxu0 0
    %4071 = vmatprep.subr.bf16.mxu0 0
    %4072 = vmatpush1.bf16.xpose.msra.mxu0 0
    %4073 = vmatprep.subr.bf16.mxu0 0
    %4074 = vmatpush1.bf16.xpose.msra.mxu0 0
    %4075 = vmatprep.subr.bf16.mxu0 0
    %4076 = vmatpush1.bf16.xpose.msra.mxu0 0
    %4077 = vmatprep.subr.bf16.mxu0 0
    %4078 = vmatpush1.bf16.xpose.msra.mxu0 0
    %4079 = vmatprep.subr.bf16.mxu0 0
    %4080 = vmatpush1.bf16.xpose.msra.mxu0 0
    %4081 = vmatprep.subr.bf16.mxu0 0
    %4082 = vmatpush1.bf16.xpose.msra.mxu0 0
    %4083 = vmatprep.subr.bf16.mxu0 0
    %4084 = vmatpush1.bf16.xpose.msra.mxu0 0
    %4085 = vmatprep.subr.bf16.mxu0 0
    %4086 = vmatpush1.bf16.xpose.msra.mxu0 0
    %4087 = vmatprep.subr.bf16.mxu0 0
    %4088 = vmatpush1.bf16.xpose.msra.mxu0 0
    %4089 = vmatprep.subr.bf16.mxu0 0
    %4090 = vmatpush1.bf16.xpose.msra.mxu0 0
    %4091 = vmatprep.subr.bf16.mxu0 0
    %4092 = vmatpush1.bf16.xpose.msra.mxu0 0
    %4093 = vmatprep.subr.bf16.mxu0 0
    %4094 = vmatpush1.bf16.xpose.msra.mxu0 0
    %4095 = vmatprep.subr.bf16.mxu0 0
    %4096 = vmatpush1.bf16.xpose.msra.mxu0 0
    %4097 = vmatprep.mubr.bf16.mxu0 0
    %4098 = vmatmul.mubr.bf16.gmra.mrb[0].mxu0 %v4060
    %v4099 = vpop.f32.mrb[0].mxu0
    %v4100 = vadd.f32 0.0, %v4099
    %v4101 = vpop.f32.mrb[0].mxu0
    %v4102 = vpop.f32.mrb[0].mxu0
    %v4103 = vpop.f32.mrb[0].mxu0
    %4104 = vdwg.mxu0
    %v4105 = vmul.f32 %v4100, 0.35355338
    %v4106 = vadd.f32 %v4105, %v1543
    %4107 = vrot.lane.b32.xlu0 %v4003, 112
    %v4108 = vpop.permute.xlu0 %4107
    %4109 = vrot.lane.b32.xlu0 %v4004, 112
    %v4110 = vpop.permute.xlu0 %4109
    %v4112 = vsel %vm306, %v4108, 0
    %v4115 = vsel %vm306, %v4110, 0
    %4117 = vmatprep.subr.bf16.mxu0 0
    %4118 = vmatpush1.bf16.xpose.msra.mxu0 %v4115
    %4119 = vmatprep.subr.bf16.mxu0 0
    %4120 = vmatpush1.bf16.xpose.msra.mxu0 0
    %4121 = vmatprep.subr.bf16.mxu0 0
    %4122 = vmatpush1.bf16.xpose.msra.mxu0 0
    %4123 = vmatprep.subr.bf16.mxu0 0
    %4124 = vmatpush1.bf16.xpose.msra.mxu0 0
    %4125 = vmatprep.subr.bf16.mxu0 0
    %4126 = vmatpush1.bf16.xpose.msra.mxu0 0
    %4127 = vmatprep.subr.bf16.mxu0 0
    %4128 = vmatpush1.bf16.xpose.msra.mxu0 0
    %4129 = vmatprep.subr.bf16.mxu0 0
    %4130 = vmatpush1.bf16.xpose.msra.mxu0 0
    %4131 = vmatprep.subr.bf16.mxu0 0
    %4132 = vmatpush1.bf16.xpose.msra.mxu0 0
    %4133 = vmatprep.subr.bf16.mxu0 0
    %4134 = vmatpush1.bf16.xpose.msra.mxu0 0
    %4135 = vmatprep.subr.bf16.mxu0 0
    %4136 = vmatpush1.bf16.xpose.msra.mxu0 0
    %4137 = vmatprep.subr.bf16.mxu0 0
    %4138 = vmatpush1.bf16.xpose.msra.mxu0 0
    %4139 = vmatprep.subr.bf16.mxu0 0
    %4140 = vmatpush1.bf16.xpose.msra.mxu0 0
    %4141 = vmatprep.subr.bf16.mxu0 0
    %4142 = vmatpush1.bf16.xpose.msra.mxu0 0
    %4143 = vmatprep.subr.bf16.mxu0 0
    %4144 = vmatpush1.bf16.xpose.msra.mxu0 0
    %4145 = vmatprep.subr.bf16.mxu0 0
    %4146 = vmatpush1.bf16.xpose.msra.mxu0 0
    %4147 = vmatprep.subr.bf16.mxu0 0
    %4148 = vmatpush1.bf16.xpose.msra.mxu0 0
    %4149 = vmatprep.mubr.bf16.mxu0 0
    %4150 = vmatmul.mubr.bf16.gmra.mrb[0].mxu0 %v4112
    %v4151 = vpop.f32.mrb[0].mxu0
    %v4152 = vadd.f32 0.0, %v4151
    %v4153 = vpop.f32.mrb[0].mxu0
    %v4154 = vpop.f32.mrb[0].mxu0
    %v4155 = vpop.f32.mrb[0].mxu0
    %4156 = vdwg.mxu0
    %v4157 = vmul.f32 %v4152, 0.35355338
    %v4158 = vadd.f32 %v4157, %v1543
    %4159 = vrot.lane.b32.xlu0 %v4003, 104
    %v4160 = vpop.permute.xlu0 %4159
    %4161 = vrot.lane.b32.xlu0 %v4004, 104
    %v4162 = vpop.permute.xlu0 %4161
    %v4164 = vsel %vm306, %v4160, 0
    %v4167 = vsel %vm306, %v4162, 0
    %4169 = vmatprep.subr.bf16.mxu0 0
    %4170 = vmatpush1.bf16.xpose.msra.mxu0 %v4167
    %4171 = vmatprep.subr.bf16.mxu0 0
    %4172 = vmatpush1.bf16.xpose.msra.mxu0 0
    %4173 = vmatprep.subr.bf16.mxu0 0
    %4174 = vmatpush1.bf16.xpose.msra.mxu0 0
    %4175 = vmatprep.subr.bf16.mxu0 0
    %4176 = vmatpush1.bf16.xpose.msra.mxu0 0
    %4177 = vmatprep.subr.bf16.mxu0 0
    %4178 = vmatpush1.bf16.xpose.msra.mxu0 0
    %4179 = vmatprep.subr.bf16.mxu0 0
    %4180 = vmatpush1.bf16.xpose.msra.mxu0 0
    %4181 = vmatprep.subr.bf16.mxu0 0
    %4182 = vmatpush1.bf16.xpose.msra.mxu0 0
    %4183 = vmatprep.subr.bf16.mxu0 0
    %4184 = vmatpush1.bf16.xpose.msra.mxu0 0
    %4185 = vmatprep.subr.bf16.mxu0 0
    %4186 = vmatpush1.bf16.xpose.msra.mxu0 0
    %4187 = vmatprep.subr.bf16.mxu0 0
    %4188 = vmatpush1.bf16.xpose.msra.mxu0 0
    %4189 = vmatprep.subr.bf16.mxu0 0
    %4190 = vmatpush1.bf16.xpose.msra.mxu0 0
    %4191 = vmatprep.subr.bf16.mxu0 0
    %4192 = vmatpush1.bf16.xpose.msra.mxu0 0
    %4193 = vmatprep.subr.bf16.mxu0 0
    %4194 = vmatpush1.bf16.xpose.msra.mxu0 0
    %4195 = vmatprep.subr.bf16.mxu0 0
    %4196 = vmatpush1.bf16.xpose.msra.mxu0 0
    %4197 = vmatprep.subr.bf16.mxu0 0
    %4198 = vmatpush1.bf16.xpose.msra.mxu0 0
    %4199 = vmatprep.subr.bf16.mxu0 0
    %4200 = vmatpush1.bf16.xpose.msra.mxu0 0
    %4201 = vmatprep.mubr.bf16.mxu0 0
    %4202 = vmatmul.mubr.bf16.gmra.mrb[0].mxu0 %v4164
    %v4203 = vpop.f32.mrb[0].mxu0
    %v4204 = vadd.f32 0.0, %v4203
    %v4205 = vpop.f32.mrb[0].mxu0
    %v4206 = vpop.f32.mrb[0].mxu0
    %v4207 = vpop.f32.mrb[0].mxu0
    %4208 = vdwg.mxu0
    %v4209 = vmul.f32 %v4204, 0.35355338
    %v4210 = vadd.f32 %v4209, %v1543
    %v4211 = vpack.c.bf16 %v3927, %v3927
    %v4212 = vpack.c.bf16 %v3993, %v3993
    %v4214 = vsel %vm306, %v4211, 0
    %v4217 = vsel %vm306, %v4212, 0
    %4219 = vmatprep.subr.bf16.mxu0 0
    %4220 = vmatpush1.bf16.xpose.msra.mxu0 %v4217
    %4221 = vmatprep.subr.bf16.mxu0 0
    %4222 = vmatpush1.bf16.xpose.msra.mxu0 0
    %4223 = vmatprep.subr.bf16.mxu0 0
    %4224 = vmatpush1.bf16.xpose.msra.mxu0 0
    %4225 = vmatprep.subr.bf16.mxu0 0
    %4226 = vmatpush1.bf16.xpose.msra.mxu0 0
    %4227 = vmatprep.subr.bf16.mxu0 0
    %4228 = vmatpush1.bf16.xpose.msra.mxu0 0
    %4229 = vmatprep.subr.bf16.mxu0 0
    %4230 = vmatpush1.bf16.xpose.msra.mxu0 0
    %4231 = vmatprep.subr.bf16.mxu0 0
    %4232 = vmatpush1.bf16.xpose.msra.mxu0 0
    %4233 = vmatprep.subr.bf16.mxu0 0
    %4234 = vmatpush1.bf16.xpose.msra.mxu0 0
    %4235 = vmatprep.subr.bf16.mxu0 0
    %4236 = vmatpush1.bf16.xpose.msra.mxu0 0
    %4237 = vmatprep.subr.bf16.mxu0 0
    %4238 = vmatpush1.bf16.xpose.msra.mxu0 0
    %4239 = vmatprep.subr.bf16.mxu0 0
    %4240 = vmatpush1.bf16.xpose.msra.mxu0 0
    %4241 = vmatprep.subr.bf16.mxu0 0
    %4242 = vmatpush1.bf16.xpose.msra.mxu0 0
    %4243 = vmatprep.subr.bf16.mxu0 0
    %4244 = vmatpush1.bf16.xpose.msra.mxu0 0
    %4245 = vmatprep.subr.bf16.mxu0 0
    %4246 = vmatpush1.bf16.xpose.msra.mxu0 0
    %4247 = vmatprep.subr.bf16.mxu0 0
    %4248 = vmatpush1.bf16.xpose.msra.mxu0 0
    %4249 = vmatprep.subr.bf16.mxu0 0
    %4250 = vmatpush1.bf16.xpose.msra.mxu0 0
    %4251 = vmatprep.mubr.bf16.mxu0 0
    %4252 = vmatmul.mubr.bf16.gmra.mrb[0].mxu0 %v4214
    %v4253 = vpop.f32.mrb[0].mxu0
    %v4254 = vadd.f32 0.0, %v4253
    %v4255 = vpop.f32.mrb[0].mxu0
    %v4256 = vpop.f32.mrb[0].mxu0
    %v4257 = vpop.f32.mrb[0].mxu0
    %4258 = vdwg.mxu0
    %v4259 = vmul.f32 %v4254, 0.35355338
    %v4260 = vadd.f32 %v4259, %v1757
    %4262 = vrot.lane.b32.xlu0 %v4211, 120
    %v4263 = vpop.permute.xlu0 %4262
    %4265 = vrot.lane.b32.xlu0 %v4212, 120
    %v4266 = vpop.permute.xlu0 %4265
    %v4268 = vsel %vm306, %v4263, 0
    %v4271 = vsel %vm306, %v4266, 0
    %4273 = vmatprep.subr.bf16.mxu0 0
    %4274 = vmatpush1.bf16.xpose.msra.mxu0 %v4271
    %4275 = vmatprep.subr.bf16.mxu0 0
    %4276 = vmatpush1.bf16.xpose.msra.mxu0 0
    %4277 = vmatprep.subr.bf16.mxu0 0
    %4278 = vmatpush1.bf16.xpose.msra.mxu0 0
    %4279 = vmatprep.subr.bf16.mxu0 0
    %4280 = vmatpush1.bf16.xpose.msra.mxu0 0
    %4281 = vmatprep.subr.bf16.mxu0 0
    %4282 = vmatpush1.bf16.xpose.msra.mxu0 0
    %4283 = vmatprep.subr.bf16.mxu0 0
    %4284 = vmatpush1.bf16.xpose.msra.mxu0 0
    %4285 = vmatprep.subr.bf16.mxu0 0
    %4286 = vmatpush1.bf16.xpose.msra.mxu0 0
    %4287 = vmatprep.subr.bf16.mxu0 0
    %4288 = vmatpush1.bf16.xpose.msra.mxu0 0
    %4289 = vmatprep.subr.bf16.mxu0 0
    %4290 = vmatpush1.bf16.xpose.msra.mxu0 0
    %4291 = vmatprep.subr.bf16.mxu0 0
    %4292 = vmatpush1.bf16.xpose.msra.mxu0 0
    %4293 = vmatprep.subr.bf16.mxu0 0
    %4294 = vmatpush1.bf16.xpose.msra.mxu0 0
    %4295 = vmatprep.subr.bf16.mxu0 0
    %4296 = vmatpush1.bf16.xpose.msra.mxu0 0
    %4297 = vmatprep.subr.bf16.mxu0 0
    %4298 = vmatpush1.bf16.xpose.msra.mxu0 0
    %4299 = vmatprep.subr.bf16.mxu0 0
    %4300 = vmatpush1.bf16.xpose.msra.mxu0 0
    %4301 = vmatprep.subr.bf16.mxu0 0
    %4302 = vmatpush1.bf16.xpose.msra.mxu0 0
    %4303 = vmatprep.subr.bf16.mxu0 0
    %4304 = vmatpush1.bf16.xpose.msra.mxu0 0
    %4305 = vmatprep.mubr.bf16.mxu0 0
    %4306 = vmatmul.mubr.bf16.gmra.mrb[0].mxu0 %v4268
    %v4307 = vpop.f32.mrb[0].mxu0
    %v4308 = vadd.f32 0.0, %v4307
    %v4309 = vpop.f32.mrb[0].mxu0
    %v4310 = vpop.f32.mrb[0].mxu0
    %v4311 = vpop.f32.mrb[0].mxu0
    %4312 = vdwg.mxu0
    %v4313 = vmul.f32 %v4308, 0.35355338
    %v4314 = vadd.f32 %v4313, %v1757
    %4315 = vrot.lane.b32.xlu0 %v4211, 112
    %v4316 = vpop.permute.xlu0 %4315
    %4317 = vrot.lane.b32.xlu0 %v4212, 112
    %v4318 = vpop.permute.xlu0 %4317
    %v4320 = vsel %vm306, %v4316, 0
    %v4323 = vsel %vm306, %v4318, 0
    %4325 = vmatprep.subr.bf16.mxu0 0
    %4326 = vmatpush1.bf16.xpose.msra.mxu0 %v4323
    %4327 = vmatprep.subr.bf16.mxu0 0
    %4328 = vmatpush1.bf16.xpose.msra.mxu0 0
    %4329 = vmatprep.subr.bf16.mxu0 0
    %4330 = vmatpush1.bf16.xpose.msra.mxu0 0
    %4331 = vmatprep.subr.bf16.mxu0 0
    %4332 = vmatpush1.bf16.xpose.msra.mxu0 0
    %4333 = vmatprep.subr.bf16.mxu0 0
    %4334 = vmatpush1.bf16.xpose.msra.mxu0 0
    %4335 = vmatprep.subr.bf16.mxu0 0
    %4336 = vmatpush1.bf16.xpose.msra.mxu0 0
    %4337 = vmatprep.subr.bf16.mxu0 0
    %4338 = vmatpush1.bf16.xpose.msra.mxu0 0
    %4339 = vmatprep.subr.bf16.mxu0 0
    %4340 = vmatpush1.bf16.xpose.msra.mxu0 0
    %4341 = vmatprep.subr.bf16.mxu0 0
    %4342 = vmatpush1.bf16.xpose.msra.mxu0 0
    %4343 = vmatprep.subr.bf16.mxu0 0
    %4344 = vmatpush1.bf16.xpose.msra.mxu0 0
    %4345 = vmatprep.subr.bf16.mxu0 0
    %4346 = vmatpush1.bf16.xpose.msra.mxu0 0
    %4347 = vmatprep.subr.bf16.mxu0 0
    %4348 = vmatpush1.bf16.xpose.msra.mxu0 0
    %4349 = vmatprep.subr.bf16.mxu0 0
    %4350 = vmatpush1.bf16.xpose.msra.mxu0 0
    %4351 = vmatprep.subr.bf16.mxu0 0
    %4352 = vmatpush1.bf16.xpose.msra.mxu0 0
    %4353 = vmatprep.subr.bf16.mxu0 0
    %4354 = vmatpush1.bf16.xpose.msra.mxu0 0
    %4355 = vmatprep.subr.bf16.mxu0 0
    %4356 = vmatpush1.bf16.xpose.msra.mxu0 0
    %4357 = vmatprep.mubr.bf16.mxu0 0
    %4358 = vmatmul.mubr.bf16.gmra.mrb[0].mxu0 %v4320
    %v4359 = vpop.f32.mrb[0].mxu0
    %v4360 = vadd.f32 0.0, %v4359
    %v4361 = vpop.f32.mrb[0].mxu0
    %v4362 = vpop.f32.mrb[0].mxu0
    %v4363 = vpop.f32.mrb[0].mxu0
    %4364 = vdwg.mxu0
    %v4365 = vmul.f32 %v4360, 0.35355338
    %v4366 = vadd.f32 %v4365, %v1757
    %4367 = vrot.lane.b32.xlu0 %v4211, 104
    %v4368 = vpop.permute.xlu0 %4367
    %4369 = vrot.lane.b32.xlu0 %v4212, 104
    %v4370 = vpop.permute.xlu0 %4369
    %v4372 = vsel %vm306, %v4368, 0
    %v4375 = vsel %vm306, %v4370, 0
    %4377 = vmatprep.subr.bf16.mxu0 0
    %4378 = vmatpush1.bf16.xpose.msra.mxu0 %v4375
    %4379 = vmatprep.subr.bf16.mxu0 0
    %4380 = vmatpush1.bf16.xpose.msra.mxu0 0
    %4381 = vmatprep.subr.bf16.mxu0 0
    %4382 = vmatpush1.bf16.xpose.msra.mxu0 0
    %4383 = vmatprep.subr.bf16.mxu0 0
    %4384 = vmatpush1.bf16.xpose.msra.mxu0 0
    %4385 = vmatprep.subr.bf16.mxu0 0
    %4386 = vmatpush1.bf16.xpose.msra.mxu0 0
    %4387 = vmatprep.subr.bf16.mxu0 0
    %4388 = vmatpush1.bf16.xpose.msra.mxu0 0
    %4389 = vmatprep.subr.bf16.mxu0 0
    %4390 = vmatpush1.bf16.xpose.msra.mxu0 0
    %4391 = vmatprep.subr.bf16.mxu0 0
    %4392 = vmatpush1.bf16.xpose.msra.mxu0 0
    %4393 = vmatprep.subr.bf16.mxu0 0
    %4394 = vmatpush1.bf16.xpose.msra.mxu0 0
    %4395 = vmatprep.subr.bf16.mxu0 0
    %4396 = vmatpush1.bf16.xpose.msra.mxu0 0
    %4397 = vmatprep.subr.bf16.mxu0 0
    %4398 = vmatpush1.bf16.xpose.msra.mxu0 0
    %4399 = vmatprep.subr.bf16.mxu0 0
    %4400 = vmatpush1.bf16.xpose.msra.mxu0 0
    %4401 = vmatprep.subr.bf16.mxu0 0
    %4402 = vmatpush1.bf16.xpose.msra.mxu0 0
    %4403 = vmatprep.subr.bf16.mxu0 0
    %4404 = vmatpush1.bf16.xpose.msra.mxu0 0
    %4405 = vmatprep.subr.bf16.mxu0 0
    %4406 = vmatpush1.bf16.xpose.msra.mxu0 0
    %4407 = vmatprep.subr.bf16.mxu0 0
    %4408 = vmatpush1.bf16.xpose.msra.mxu0 0
    %4409 = vmatprep.mubr.bf16.mxu0 0
    %4410 = vmatmul.mubr.bf16.gmra.mrb[0].mxu0 %v4372
    %v4411 = vpop.f32.mrb[0].mxu0
    %v4412 = vadd.f32 0.0, %v4411
    %v4413 = vpop.f32.mrb[0].mxu0
    %v4414 = vpop.f32.mrb[0].mxu0
    %v4415 = vpop.f32.mrb[0].mxu0
    %4416 = vdwg.mxu0
    %v4417 = vmul.f32 %v4412, 0.35355338
    %v4418 = vadd.f32 %v4417, %v1757
    %v4419 = vsel %vm306, %v4052, -inf
    %4420 = vmax.xlane.f32.xlu0 %v4419
    %v4421 = vpop.xlane.xlu0 %4420
    %v4422 = vsel %vm306, %v4106, -inf
    %4423 = vmax.xlane.f32.xlu0 %v4422
    %v4424 = vpop.xlane.xlu0 %4423
    %v4425 = vsel %vm306, %v4158, -inf
    %4426 = vmax.xlane.f32.xlu0 %v4425
    %v4427 = vpop.xlane.xlu0 %4426
    %v4428 = vsel %vm306, %v4210, -inf
    %4429 = vmax.xlane.f32.xlu0 %v4428
    %v4430 = vpop.xlane.xlu0 %4429
    %v4431 = vsel %vm306, %v4260, -inf
    %4432 = vmax.xlane.f32.xlu0 %v4431
    %v4433 = vpop.xlane.xlu0 %4432
    %v4434 = vsel %vm306, %v4314, -inf
    %4435 = vmax.xlane.f32.xlu0 %v4434
    %v4436 = vpop.xlane.xlu0 %4435
    %v4437 = vsel %vm306, %v4366, -inf
    %4438 = vmax.xlane.f32.xlu0 %v4437
    %v4439 = vpop.xlane.xlu0 %4438
    %v4440 = vsel %vm306, %v4418, -inf
    %4441 = vmax.xlane.f32.xlu0 %v4440
    %v4442 = vpop.xlane.xlu0 %4441
    %v4443 = vsub.f32 %v4052, %v4421
    %v4444 = vsub.f32 %v4106, %v4424
    %v4445 = vsub.f32 %v4158, %v4427
    %v4446 = vsub.f32 %v4210, %v4430
    %v4447 = vsub.f32 %v4260, %v4433
    %v4448 = vsub.f32 %v4314, %v4436
    %v4449 = vsub.f32 %v4366, %v4439
    %v4450 = vsub.f32 %v4418, %v4442
    %v4451 = vmul.f32 %v4443, 1.442695
    %v4452 = vpow.pop %v4451
    %v4453 = vmul.f32 %v4444, 1.442695
    %v4454 = vpow.pop %v4453
    %v4455 = vmul.f32 %v4445, 1.442695
    %v4456 = vpow.pop %v4455
    %v4457 = vmul.f32 %v4446, 1.442695
    %v4458 = vpow.pop %v4457
    %v4459 = vmul.f32 %v4447, 1.442695
    %v4460 = vpow.pop %v4459
    %v4461 = vmul.f32 %v4448, 1.442695
    %v4462 = vpow.pop %v4461
    %v4463 = vmul.f32 %v4449, 1.442695
    %v4464 = vpow.pop %v4463
    %v4465 = vmul.f32 %v4450, 1.442695
    %v4466 = vpow.pop %v4465
    %v4467 = vsel %vm306, %v4452, 0.0
    %4468 = vadd.xlane.f32.xlu0 %v4467
    %v4469 = vpop.xlane.xlu0 %4468
    %v4470 = vsel %vm306, %v4454, 0.0
    %4471 = vadd.xlane.f32.xlu0 %v4470
    %v4472 = vpop.xlane.xlu0 %4471
    %v4473 = vsel %vm306, %v4456, 0.0
    %4474 = vadd.xlane.f32.xlu0 %v4473
    %v4475 = vpop.xlane.xlu0 %4474
    %v4476 = vsel %vm306, %v4458, 0.0
    %4477 = vadd.xlane.f32.xlu0 %v4476
    %v4478 = vpop.xlane.xlu0 %4477
    %v4479 = vsel %vm306, %v4460, 0.0
    %4480 = vadd.xlane.f32.xlu0 %v4479
    %v4481 = vpop.xlane.xlu0 %4480
    %v4482 = vsel %vm306, %v4462, 0.0
    %4483 = vadd.xlane.f32.xlu0 %v4482
    %v4484 = vpop.xlane.xlu0 %4483
    %v4485 = vsel %vm306, %v4464, 0.0
    %4486 = vadd.xlane.f32.xlu0 %v4485
    %v4487 = vpop.xlane.xlu0 %4486
    %v4488 = vsel %vm306, %v4466, 0.0
    %4489 = vadd.xlane.f32.xlu0 %v4488
    %v4490 = vpop.xlane.xlu0 %4489
    %v4491 = vrcp.pop %v4469
    %v4492 = vrcp.pop %v4472
    %v4493 = vrcp.pop %v4475
    %v4494 = vrcp.pop %v4478
    %v4495 = vrcp.pop %v4481
    %v4496 = vrcp.pop %v4484
    %v4497 = vrcp.pop %v4487
    %v4498 = vrcp.pop %v4490
    %v4499 = vmul.f32 %v4452, %v4491
    %v4500 = vmul.f32 %v4454, %v4492
    %v4501 = vmul.f32 %v4456, %v4493
    %v4502 = vmul.f32 %v4458, %v4494
    %v4503 = vmul.f32 %v4460, %v4495
    %v4504 = vmul.f32 %v4462, %v4496
    %v4505 = vmul.f32 %v4464, %v4497
    %v4506 = vmul.f32 %v4466, %v4498
    %v4507 = vpack.c.bf16 %v4500, %v4499
    %v4508 = vpack.c.bf16 %v4502, %v4501
    %v4509 = vpack.c.bf16 %v4504, %v4503
    %v4510 = vpack.c.bf16 %v4506, %v4505
    %4511 = vrot.lane.b32.xlu0 %v4004, 96
    %v4512 = vpop.permute.xlu0 %4511
    %v4514 = vsel %vm306, %v4507, 0
    %v4517 = vsel %vm180, %v4512, 0
    %4519 = vmatprep.subr.bf16.mxu0 0
    %4520 = vmatpush1.bf16.msra.mxu0 %v4517
    %4521 = vmatprep.subr.bf16.mxu0 0
    %4522 = vmatpush1.bf16.msra.mxu0 0
    %4523 = vmatprep.subr.bf16.mxu0 0
    %4524 = vmatpush1.bf16.msra.mxu0 0
    %4525 = vmatprep.subr.bf16.mxu0 0
    %4526 = vmatpush1.bf16.msra.mxu0 0
    %4527 = vmatprep.subr.bf16.mxu0 0
    %4528 = vmatpush1.bf16.msra.mxu0 0
    %4529 = vmatprep.subr.bf16.mxu0 0
    %4530 = vmatpush1.bf16.msra.mxu0 0
    %4531 = vmatprep.subr.bf16.mxu0 0
    %4532 = vmatpush1.bf16.msra.mxu0 0
    %4533 = vmatprep.subr.bf16.mxu0 0
    %4534 = vmatpush1.bf16.msra.mxu0 0
    %4535 = vmatprep.subr.bf16.mxu0 0
    %4536 = vmatpush1.bf16.msra.mxu0 0
    %4537 = vmatprep.subr.bf16.mxu0 0
    %4538 = vmatpush1.bf16.msra.mxu0 0
    %4539 = vmatprep.subr.bf16.mxu0 0
    %4540 = vmatpush1.bf16.msra.mxu0 0
    %4541 = vmatprep.subr.bf16.mxu0 0
    %4542 = vmatpush1.bf16.msra.mxu0 0
    %4543 = vmatprep.subr.bf16.mxu0 0
    %4544 = vmatpush1.bf16.msra.mxu0 0
    %4545 = vmatprep.subr.bf16.mxu0 0
    %4546 = vmatpush1.bf16.msra.mxu0 0
    %4547 = vmatprep.subr.bf16.mxu0 0
    %4548 = vmatpush1.bf16.msra.mxu0 0
    %4549 = vmatprep.subr.bf16.mxu0 0
    %4550 = vmatpush1.bf16.msra.mxu0 0
    %4551 = vmatprep.mubr.bf16.mxu0 0
    %4552 = vmatmul.mubr.bf16.gmra.mrb[0].mxu0 %v4514
    %v4553 = vpop.f32.mrb[0].mxu0
    %v4554 = vadd.f32 0.0, %v4553
    %v4555 = vpop.f32.mrb[0].mxu0
    %v4556 = vpop.f32.mrb[0].mxu0
    %v4557 = vpop.f32.mrb[0].mxu0
    %4558 = vdwg.mxu0
    %v4560 = vrot.slane %v4507, 4
    %4561 = vrot.lane.b32.xlu0 %v4004, 88
    %v4562 = vpop.permute.xlu0 %4561
    %v4564 = vsel %vm306, %v4560, 0
    %v4567 = vsel %vm180, %v4562, 0
    %4569 = vmatprep.subr.bf16.mxu0 0
    %4570 = vmatpush1.bf16.msra.mxu0 %v4567
    %4571 = vmatprep.subr.bf16.mxu0 0
    %4572 = vmatpush1.bf16.msra.mxu0 0
    %4573 = vmatprep.subr.bf16.mxu0 0
    %4574 = vmatpush1.bf16.msra.mxu0 0
    %4575 = vmatprep.subr.bf16.mxu0 0
    %4576 = vmatpush1.bf16.msra.mxu0 0
    %4577 = vmatprep.subr.bf16.mxu0 0
    %4578 = vmatpush1.bf16.msra.mxu0 0
    %4579 = vmatprep.subr.bf16.mxu0 0
    %4580 = vmatpush1.bf16.msra.mxu0 0
    %4581 = vmatprep.subr.bf16.mxu0 0
    %4582 = vmatpush1.bf16.msra.mxu0 0
    %4583 = vmatprep.subr.bf16.mxu0 0
    %4584 = vmatpush1.bf16.msra.mxu0 0
    %4585 = vmatprep.subr.bf16.mxu0 0
    %4586 = vmatpush1.bf16.msra.mxu0 0
    %4587 = vmatprep.subr.bf16.mxu0 0
    %4588 = vmatpush1.bf16.msra.mxu0 0
    %4589 = vmatprep.subr.bf16.mxu0 0
    %4590 = vmatpush1.bf16.msra.mxu0 0
    %4591 = vmatprep.subr.bf16.mxu0 0
    %4592 = vmatpush1.bf16.msra.mxu0 0
    %4593 = vmatprep.subr.bf16.mxu0 0
    %4594 = vmatpush1.bf16.msra.mxu0 0
    %4595 = vmatprep.subr.bf16.mxu0 0
    %4596 = vmatpush1.bf16.msra.mxu0 0
    %4597 = vmatprep.subr.bf16.mxu0 0
    %4598 = vmatpush1.bf16.msra.mxu0 0
    %4599 = vmatprep.subr.bf16.mxu0 0
    %4600 = vmatpush1.bf16.msra.mxu0 0
    %4601 = vmatprep.mubr.bf16.mxu0 0
    %4602 = vmatmul.mubr.bf16.gmra.mrb[0].mxu0 %v4564
    %v4603 = vpop.f32.mrb[0].mxu0
    %v4604 = vadd.f32 0.0, %v4603
    %v4605 = vpop.f32.mrb[0].mxu0
    %v4606 = vpop.f32.mrb[0].mxu0
    %v4607 = vpop.f32.mrb[0].mxu0
    %4608 = vdwg.mxu0
    %4609 = vrot.lane.b32.xlu0 %v4004, 80
    %v4610 = vpop.permute.xlu0 %4609
    %v4612 = vsel %vm306, %v4508, 0
    %v4615 = vsel %vm180, %v4610, 0
    %4617 = vmatprep.subr.bf16.mxu0 0
    %4618 = vmatpush1.bf16.msra.mxu0 %v4615
    %4619 = vmatprep.subr.bf16.mxu0 0
    %4620 = vmatpush1.bf16.msra.mxu0 0
    %4621 = vmatprep.subr.bf16.mxu0 0
    %4622 = vmatpush1.bf16.msra.mxu0 0
    %4623 = vmatprep.subr.bf16.mxu0 0
    %4624 = vmatpush1.bf16.msra.mxu0 0
    %4625 = vmatprep.subr.bf16.mxu0 0
    %4626 = vmatpush1.bf16.msra.mxu0 0
    %4627 = vmatprep.subr.bf16.mxu0 0
    %4628 = vmatpush1.bf16.msra.mxu0 0
    %4629 = vmatprep.subr.bf16.mxu0 0
    %4630 = vmatpush1.bf16.msra.mxu0 0
    %4631 = vmatprep.subr.bf16.mxu0 0
    %4632 = vmatpush1.bf16.msra.mxu0 0
    %4633 = vmatprep.subr.bf16.mxu0 0
    %4634 = vmatpush1.bf16.msra.mxu0 0
    %4635 = vmatprep.subr.bf16.mxu0 0
    %4636 = vmatpush1.bf16.msra.mxu0 0
    %4637 = vmatprep.subr.bf16.mxu0 0
    %4638 = vmatpush1.bf16.msra.mxu0 0
    %4639 = vmatprep.subr.bf16.mxu0 0
    %4640 = vmatpush1.bf16.msra.mxu0 0
    %4641 = vmatprep.subr.bf16.mxu0 0
    %4642 = vmatpush1.bf16.msra.mxu0 0
    %4643 = vmatprep.subr.bf16.mxu0 0
    %4644 = vmatpush1.bf16.msra.mxu0 0
    %4645 = vmatprep.subr.bf16.mxu0 0
    %4646 = vmatpush1.bf16.msra.mxu0 0
    %4647 = vmatprep.subr.bf16.mxu0 0
    %4648 = vmatpush1.bf16.msra.mxu0 0
    %4649 = vmatprep.mubr.bf16.mxu0 0
    %4650 = vmatmul.mubr.bf16.gmra.mrb[0].mxu0 %v4612
    %v4651 = vpop.f32.mrb[0].mxu0
    %v4652 = vadd.f32 0.0, %v4651
    %v4653 = vpop.f32.mrb[0].mxu0
    %v4654 = vpop.f32.mrb[0].mxu0
    %v4655 = vpop.f32.mrb[0].mxu0
    %4656 = vdwg.mxu0
    %v4658 = vrot.slane %v4508, 4
    %4659 = vrot.lane.b32.xlu0 %v4004, 72
    %v4660 = vpop.permute.xlu0 %4659
    %v4662 = vsel %vm306, %v4658, 0
    %v4665 = vsel %vm180, %v4660, 0
    %4667 = vmatprep.subr.bf16.mxu0 0
    %4668 = vmatpush1.bf16.msra.mxu0 %v4665
    %4669 = vmatprep.subr.bf16.mxu0 0
    %4670 = vmatpush1.bf16.msra.mxu0 0
    %4671 = vmatprep.subr.bf16.mxu0 0
    %4672 = vmatpush1.bf16.msra.mxu0 0
    %4673 = vmatprep.subr.bf16.mxu0 0
    %4674 = vmatpush1.bf16.msra.mxu0 0
    %4675 = vmatprep.subr.bf16.mxu0 0
    %4676 = vmatpush1.bf16.msra.mxu0 0
    %4677 = vmatprep.subr.bf16.mxu0 0
    %4678 = vmatpush1.bf16.msra.mxu0 0
    %4679 = vmatprep.subr.bf16.mxu0 0
    %4680 = vmatpush1.bf16.msra.mxu0 0
    %4681 = vmatprep.subr.bf16.mxu0 0
    %4682 = vmatpush1.bf16.msra.mxu0 0
    %4683 = vmatprep.subr.bf16.mxu0 0
    %4684 = vmatpush1.bf16.msra.mxu0 0
    %4685 = vmatprep.subr.bf16.mxu0 0
    %4686 = vmatpush1.bf16.msra.mxu0 0
    %4687 = vmatprep.subr.bf16.mxu0 0
    %4688 = vmatpush1.bf16.msra.mxu0 0
    %4689 = vmatprep.subr.bf16.mxu0 0
    %4690 = vmatpush1.bf16.msra.mxu0 0
    %4691 = vmatprep.subr.bf16.mxu0 0
    %4692 = vmatpush1.bf16.msra.mxu0 0
    %4693 = vmatprep.subr.bf16.mxu0 0
    %4694 = vmatpush1.bf16.msra.mxu0 0
    %4695 = vmatprep.subr.bf16.mxu0 0
    %4696 = vmatpush1.bf16.msra.mxu0 0
    %4697 = vmatprep.subr.bf16.mxu0 0
    %4698 = vmatpush1.bf16.msra.mxu0 0
    %4699 = vmatprep.mubr.bf16.mxu0 0
    %4700 = vmatmul.mubr.bf16.gmra.mrb[0].mxu0 %v4662
    %v4701 = vpop.f32.mrb[0].mxu0
    %v4702 = vadd.f32 0.0, %v4701
    %v4703 = vpop.f32.mrb[0].mxu0
    %v4704 = vpop.f32.mrb[0].mxu0
    %v4705 = vpop.f32.mrb[0].mxu0
    %4706 = vdwg.mxu0
    %4708 = vrot.lane.b32.xlu0 %v4604, 8
    %v4709 = vpop.permute.xlu0 %4708
    %4712 = vrot.lane.b32.xlu0 %v4652, 16
    %v4713 = vpop.permute.xlu0 %4712
    %4716 = vrot.lane.b32.xlu0 %v4702, 24
    %v4717 = vpop.permute.xlu0 %4716
    %v4719 = vsel %vm306, %v4554, %v4709
    %v4720 = vsel %vm1020, %v4719, %v4713
    %v4721 = vsel %vm1022, %v4720, %v4717
    %4722 = vrot.lane.b32.xlu0 %v4212, 96
    %v4723 = vpop.permute.xlu0 %4722
    %v4725 = vsel %vm306, %v4509, 0
    %v4728 = vsel %vm180, %v4723, 0
    %4730 = vmatprep.subr.bf16.mxu0 0
    %4731 = vmatpush1.bf16.msra.mxu0 %v4728
    %4732 = vmatprep.subr.bf16.mxu0 0
    %4733 = vmatpush1.bf16.msra.mxu0 0
    %4734 = vmatprep.subr.bf16.mxu0 0
    %4735 = vmatpush1.bf16.msra.mxu0 0
    %4736 = vmatprep.subr.bf16.mxu0 0
    %4737 = vmatpush1.bf16.msra.mxu0 0
    %4738 = vmatprep.subr.bf16.mxu0 0
    %4739 = vmatpush1.bf16.msra.mxu0 0
    %4740 = vmatprep.subr.bf16.mxu0 0
    %4741 = vmatpush1.bf16.msra.mxu0 0
    %4742 = vmatprep.subr.bf16.mxu0 0
    %4743 = vmatpush1.bf16.msra.mxu0 0
    %4744 = vmatprep.subr.bf16.mxu0 0
    %4745 = vmatpush1.bf16.msra.mxu0 0
    %4746 = vmatprep.subr.bf16.mxu0 0
    %4747 = vmatpush1.bf16.msra.mxu0 0
    %4748 = vmatprep.subr.bf16.mxu0 0
    %4749 = vmatpush1.bf16.msra.mxu0 0
    %4750 = vmatprep.subr.bf16.mxu0 0
    %4751 = vmatpush1.bf16.msra.mxu0 0
    %4752 = vmatprep.subr.bf16.mxu0 0
    %4753 = vmatpush1.bf16.msra.mxu0 0
    %4754 = vmatprep.subr.bf16.mxu0 0
    %4755 = vmatpush1.bf16.msra.mxu0 0
    %4756 = vmatprep.subr.bf16.mxu0 0
    %4757 = vmatpush1.bf16.msra.mxu0 0
    %4758 = vmatprep.subr.bf16.mxu0 0
    %4759 = vmatpush1.bf16.msra.mxu0 0
    %4760 = vmatprep.subr.bf16.mxu0 0
    %4761 = vmatpush1.bf16.msra.mxu0 0
    %4762 = vmatprep.mubr.bf16.mxu0 0
    %4763 = vmatmul.mubr.bf16.gmra.mrb[0].mxu0 %v4725
    %v4764 = vpop.f32.mrb[0].mxu0
    %v4765 = vadd.f32 0.0, %v4764
    %v4766 = vpop.f32.mrb[0].mxu0
    %v4767 = vpop.f32.mrb[0].mxu0
    %v4768 = vpop.f32.mrb[0].mxu0
    %4769 = vdwg.mxu0
    %v4771 = vrot.slane %v4509, 4
    %4772 = vrot.lane.b32.xlu0 %v4212, 88
    %v4773 = vpop.permute.xlu0 %4772
    %v4775 = vsel %vm306, %v4771, 0
    %v4778 = vsel %vm180, %v4773, 0
    %4780 = vmatprep.subr.bf16.mxu0 0
    %4781 = vmatpush1.bf16.msra.mxu0 %v4778
    %4782 = vmatprep.subr.bf16.mxu0 0
    %4783 = vmatpush1.bf16.msra.mxu0 0
    %4784 = vmatprep.subr.bf16.mxu0 0
    %4785 = vmatpush1.bf16.msra.mxu0 0
    %4786 = vmatprep.subr.bf16.mxu0 0
    %4787 = vmatpush1.bf16.msra.mxu0 0
    %4788 = vmatprep.subr.bf16.mxu0 0
    %4789 = vmatpush1.bf16.msra.mxu0 0
    %4790 = vmatprep.subr.bf16.mxu0 0
    %4791 = vmatpush1.bf16.msra.mxu0 0
    %4792 = vmatprep.subr.bf16.mxu0 0
    %4793 = vmatpush1.bf16.msra.mxu0 0
    %4794 = vmatprep.subr.bf16.mxu0 0
    %4795 = vmatpush1.bf16.msra.mxu0 0
    %4796 = vmatprep.subr.bf16.mxu0 0
    %4797 = vmatpush1.bf16.msra.mxu0 0
    %4798 = vmatprep.subr.bf16.mxu0 0
    %4799 = vmatpush1.bf16.msra.mxu0 0
    %4800 = vmatprep.subr.bf16.mxu0 0
    %4801 = vmatpush1.bf16.msra.mxu0 0
    %4802 = vmatprep.subr.bf16.mxu0 0
    %4803 = vmatpush1.bf16.msra.mxu0 0
    %4804 = vmatprep.subr.bf16.mxu0 0
    %4805 = vmatpush1.bf16.msra.mxu0 0
    %4806 = vmatprep.subr.bf16.mxu0 0
    %4807 = vmatpush1.bf16.msra.mxu0 0
    %4808 = vmatprep.subr.bf16.mxu0 0
    %4809 = vmatpush1.bf16.msra.mxu0 0
    %4810 = vmatprep.subr.bf16.mxu0 0
    %4811 = vmatpush1.bf16.msra.mxu0 0
    %4812 = vmatprep.mubr.bf16.mxu0 0
    %4813 = vmatmul.mubr.bf16.gmra.mrb[0].mxu0 %v4775
    %v4814 = vpop.f32.mrb[0].mxu0
    %v4815 = vadd.f32 0.0, %v4814
    %v4816 = vpop.f32.mrb[0].mxu0
    %v4817 = vpop.f32.mrb[0].mxu0
    %v4818 = vpop.f32.mrb[0].mxu0
    %4819 = vdwg.mxu0
    %4820 = vrot.lane.b32.xlu0 %v4212, 80
    %v4821 = vpop.permute.xlu0 %4820
    %v4823 = vsel %vm306, %v4510, 0
    %v4826 = vsel %vm180, %v4821, 0
    %4828 = vmatprep.subr.bf16.mxu0 0
    %4829 = vmatpush1.bf16.msra.mxu0 %v4826
    %4830 = vmatprep.subr.bf16.mxu0 0
    %4831 = vmatpush1.bf16.msra.mxu0 0
    %4832 = vmatprep.subr.bf16.mxu0 0
    %4833 = vmatpush1.bf16.msra.mxu0 0
    %4834 = vmatprep.subr.bf16.mxu0 0
    %4835 = vmatpush1.bf16.msra.mxu0 0
    %4836 = vmatprep.subr.bf16.mxu0 0
    %4837 = vmatpush1.bf16.msra.mxu0 0
    %4838 = vmatprep.subr.bf16.mxu0 0
    %4839 = vmatpush1.bf16.msra.mxu0 0
    %4840 = vmatprep.subr.bf16.mxu0 0
    %4841 = vmatpush1.bf16.msra.mxu0 0
    %4842 = vmatprep.subr.bf16.mxu0 0
    %4843 = vmatpush1.bf16.msra.mxu0 0
    %4844 = vmatprep.subr.bf16.mxu0 0
    %4845 = vmatpush1.bf16.msra.mxu0 0
    %4846 = vmatprep.subr.bf16.mxu0 0
    %4847 = vmatpush1.bf16.msra.mxu0 0
    %4848 = vmatprep.subr.bf16.mxu0 0
    %4849 = vmatpush1.bf16.msra.mxu0 0
    %4850 = vmatprep.subr.bf16.mxu0 0
    %4851 = vmatpush1.bf16.msra.mxu0 0
    %4852 = vmatprep.subr.bf16.mxu0 0
    %4853 = vmatpush1.bf16.msra.mxu0 0
    %4854 = vmatprep.subr.bf16.mxu0 0
    %4855 = vmatpush1.bf16.msra.mxu0 0
    %4856 = vmatprep.subr.bf16.mxu0 0
    %4857 = vmatpush1.bf16.msra.mxu0 0
    %4858 = vmatprep.subr.bf16.mxu0 0
    %4859 = vmatpush1.bf16.msra.mxu0 0
    %4860 = vmatprep.mubr.bf16.mxu0 0
    %4861 = vmatmul.mubr.bf16.gmra.mrb[0].mxu0 %v4823
    %v4862 = vpop.f32.mrb[0].mxu0
    %v4863 = vadd.f32 0.0, %v4862
    %v4864 = vpop.f32.mrb[0].mxu0
    %v4865 = vpop.f32.mrb[0].mxu0
    %v4866 = vpop.f32.mrb[0].mxu0
    %4867 = vdwg.mxu0
    %v4869 = vrot.slane %v4510, 4
    %4870 = vrot.lane.b32.xlu0 %v4212, 72
    %v4871 = vpop.permute.xlu0 %4870
    %v4873 = vsel %vm306, %v4869, 0
    %v4876 = vsel %vm180, %v4871, 0
    %4878 = vmatprep.subr.bf16.mxu0 0
    %4879 = vmatpush1.bf16.msra.mxu0 %v4876
    %4880 = vmatprep.subr.bf16.mxu0 0
    %4881 = vmatpush1.bf16.msra.mxu0 0
    %4882 = vmatprep.subr.bf16.mxu0 0
    %4883 = vmatpush1.bf16.msra.mxu0 0
    %4884 = vmatprep.subr.bf16.mxu0 0
    %4885 = vmatpush1.bf16.msra.mxu0 0
    %4886 = vmatprep.subr.bf16.mxu0 0
    %4887 = vmatpush1.bf16.msra.mxu0 0
    %4888 = vmatprep.subr.bf16.mxu0 0
    %4889 = vmatpush1.bf16.msra.mxu0 0
    %4890 = vmatprep.subr.bf16.mxu0 0
    %4891 = vmatpush1.bf16.msra.mxu0 0
    %4892 = vmatprep.subr.bf16.mxu0 0
    %4893 = vmatpush1.bf16.msra.mxu0 0
    %4894 = vmatprep.subr.bf16.mxu0 0
    %4895 = vmatpush1.bf16.msra.mxu0 0
    %4896 = vmatprep.subr.bf16.mxu0 0
    %4897 = vmatpush1.bf16.msra.mxu0 0
    %4898 = vmatprep.subr.bf16.mxu0 0
    %4899 = vmatpush1.bf16.msra.mxu0 0
    %4900 = vmatprep.subr.bf16.mxu0 0
    %4901 = vmatpush1.bf16.msra.mxu0 0
    %4902 = vmatprep.subr.bf16.mxu0 0
    %4903 = vmatpush1.bf16.msra.mxu0 0
    %4904 = vmatprep.subr.bf16.mxu0 0
    %4905 = vmatpush1.bf16.msra.mxu0 0
    %4906 = vmatprep.subr.bf16.mxu0 0
    %4907 = vmatpush1.bf16.msra.mxu0 0
    %4908 = vmatprep.subr.bf16.mxu0 0
    %4909 = vmatpush1.bf16.msra.mxu0 0
    %4910 = vmatprep.mubr.bf16.mxu0 0
    %4911 = vmatmul.mubr.bf16.gmra.mrb[0].mxu0 %v4873
    %v4912 = vpop.f32.mrb[0].mxu0
    %v4913 = vadd.f32 0.0, %v4912
    %v4914 = vpop.f32.mrb[0].mxu0
    %v4915 = vpop.f32.mrb[0].mxu0
    %v4916 = vpop.f32.mrb[0].mxu0
    %4917 = vdwg.mxu0
    %4919 = vrot.lane.b32.xlu0 %v4815, 8
    %v4920 = vpop.permute.xlu0 %4919
    %4923 = vrot.lane.b32.xlu0 %v4863, 16
    %v4924 = vpop.permute.xlu0 %4923
    %4927 = vrot.lane.b32.xlu0 %v4913, 24
    %v4928 = vpop.permute.xlu0 %4927
    %v4930 = vsel %vm306, %v4765, %v4920
    %v4931 = vsel %vm1020, %v4930, %v4924
    %v4932 = vsel %vm1022, %v4931, %v4928
    %v4933 = vpack.c.bf16 %v4932, %v4721
    %v4935 = vlaneseq
    %v4936 = vshrl.u32 %v4935, 7
    %v4937 = vsub.s32 0, %v4936
    %v4938 = vrot.slane %v4002, %v4937
    %v4944 = vunpack.c.l.b16 %v3997
    %v4945 = vunpack.c.l.b16 %v3998
    %v4946 = vunpack.c.l.b16 %v3999
    %v4947 = vunpack.c.l.b16 %v4000
    %v4948 = vpack.c.b16 %v4945, %v4944
    %v4949 = vpack.c.b16 %v4947, %v4946
    %v4953 = vsel %vm252, %v4933, 0
    %4955 = vmatprep.subr.bf16.mxu0 0
    %4956 = vmatpush1.bf16.msra.mxu0 %v4948
    %4957 = vmatprep.subr.bf16.mxu0 0
    %4958 = vmatpush1.bf16.msra.mxu0 %v4949
    %4959 = vmatprep.subr.bf16.mxu0 0
    %4960 = vmatpush1.bf16.msra.mxu0 0
    %4961 = vmatprep.subr.bf16.mxu0 0
    %4962 = vmatpush1.bf16.msra.mxu0 0
    %4963 = vmatprep.subr.bf16.mxu0 0
    %4964 = vmatpush1.bf16.msra.mxu0 0
    %4965 = vmatprep.subr.bf16.mxu0 0
    %4966 = vmatpush1.bf16.msra.mxu0 0
    %4967 = vmatprep.subr.bf16.mxu0 0
    %4968 = vmatpush1.bf16.msra.mxu0 0
    %4969 = vmatprep.subr.bf16.mxu0 0
    %4970 = vmatpush1.bf16.msra.mxu0 0
    %4971 = vmatprep.subr.bf16.mxu0 0
    %4972 = vmatpush1.bf16.msra.mxu0 0
    %4973 = vmatprep.subr.bf16.mxu0 0
    %4974 = vmatpush1.bf16.msra.mxu0 0
    %4975 = vmatprep.subr.bf16.mxu0 0
    %4976 = vmatpush1.bf16.msra.mxu0 0
    %4977 = vmatprep.subr.bf16.mxu0 0
    %4978 = vmatpush1.bf16.msra.mxu0 0
    %4979 = vmatprep.subr.bf16.mxu0 0
    %4980 = vmatpush1.bf16.msra.mxu0 0
    %4981 = vmatprep.subr.bf16.mxu0 0
    %4982 = vmatpush1.bf16.msra.mxu0 0
    %4983 = vmatprep.subr.bf16.mxu0 0
    %4984 = vmatpush1.bf16.msra.mxu0 0
    %4985 = vmatprep.subr.bf16.mxu0 0
    %4986 = vmatpush1.bf16.msra.mxu0 0
    %4987 = vmatprep.mubr.bf16.mxu0 0
    %4988 = vmatmul.mubr.bf16.gmra.mrb[0].mxu0 %v4953
    %v4989 = vpop.f32.mrb[0].mxu0
    %v4990 = vadd.f32 %v4938, %v4989
    %v4991 = vpop.f32.mrb[0].mxu0
    %v4992 = vpop.f32.mrb[0].mxu0
    %v4993 = vadd.f32 %v4938, %v4992
    %v4994 = vpop.f32.mrb[0].mxu0
    %4995 = vdwg.mxu0
    %v4996 = vadd.f32 %v3858, %v4990
    %v4997 = vadd.f32 %v3859, %v4993
    %s4998 = scalar_lea.vmem %s18, 1
    %v4999 = vld [vmem:[%s4998] sm:$0x1]
    %s5000 = scalar_lea.vmem %s19, 1
    %v5001 = vld [vmem:[%s5000] sm:$0x1]
    %v5002 = vsel %vm252, %v4996, 0.0
    %5003 = vadd.xlane.f32.xlu0 %v5002
    %v5004 = vpop.xlane.xlu0 %5003
    %v5005 = vsel %vm252, %v4997, 0.0
    %5006 = vadd.xlane.f32.xlu0 %v5005
    %v5007 = vpop.xlane.xlu0 %5006
    %v5008 = vmul.f32 %v5004, %v1308
    %v5009 = vmul.f32 %v5007, %v1308
    %v5010 = vsub.f32 %v4996, %v5008
    %v5011 = vsub.f32 %v4997, %v5009
    %v5012 = vmul.f32 %v5010, %v5010
    %v5013 = vmul.f32 %v5011, %v5011
    %v5014 = vsel %vm252, %v5012, 0.0
    %5015 = vadd.xlane.f32.xlu0 %v5014
    %v5016 = vpop.xlane.xlu0 %5015
    %v5017 = vsel %vm252, %v5013, 0.0
    %5018 = vadd.xlane.f32.xlu0 %v5017
    %v5019 = vpop.xlane.xlu0 %5018
    %v5020 = vmul.f32 %v5016, %v1308
    %v5021 = vmul.f32 %v5019, %v1308
    %v5022 = vadd.f32 %v5020, 1e-05
    %v5023 = vadd.f32 %v5021, 1e-05
    %v5024 = vrsqrt.pop %v5022
    %v5025 = vrsqrt.pop %v5023
    %v5026 = vmul.f32 %v5010, %v5024
    %v5027 = vmul.f32 %v5011, %v5025
    %v5029 = vlaneseq
    %v5030 = vshrl.u32 %v5029, 7
    %v5031 = vsub.s32 0, %v5030
    %v5032 = vrot.slane %v4999, %v5031
    %v5034 = vmul.f32 %v5026, %v5032
    %v5035 = vmul.f32 %v5027, %v5032
    %v5037 = vlaneseq
    %v5038 = vshrl.u32 %v5037, 7
    %v5039 = vsub.s32 0, %v5038
    %v5040 = vrot.slane %v5001, %v5039
    %v5042 = vadd.f32 %v5034, %v5040
    %v5043 = vadd.f32 %v5035, %v5040
    %s5044 = scalar_lea.vmem %s20, 16
    %v5045 = vld [vmem:[%s5044] sm:$0xf]
    %v5046 = vld [vmem:[%s5044 + $0x4] sm:$0xf]
    %v5047 = vld [vmem:[%s5044 + $0x8] sm:$0xf]
    %v5048 = vld [vmem:[%s5044 + $0xc] sm:$0xf]
    %s5049 = scalar_lea.vmem %s21, 1
    %v5050 = vld [vmem:[%s5049] sm:$0x1]
    %s5051 = scalar_lea.vmem %s22, 32
    %v5052 = vld [vmem:[%s5051] sm:$0xf]
    %v5053 = vld [vmem:[%s5051 + $0x4] sm:$0xf]
    %v5054 = vld [vmem:[%s5051 + $0x8] sm:$0xf]
    %v5055 = vld [vmem:[%s5051 + $0xc] sm:$0xf]
    %v5056 = vld [vmem:[%s5051 + $0x10] sm:$0xf]
    %v5057 = vld [vmem:[%s5051 + $0x14] sm:$0xf]
    %v5058 = vld [vmem:[%s5051 + $0x18] sm:$0xf]
    %v5059 = vld [vmem:[%s5051 + $0x1c] sm:$0xf]
    %s5060 = scalar_lea.vmem %s23, 1
    %v5061 = vld [vmem:[%s5060] sm:$0x1]
    %v5062 = vpack.c.bf16 %v5043, %v5042
    %v5064 = vlaneseq
    %v5065 = vshrl.u32 %v5064, 7
    %v5066 = vsub.s32 0, %v5065
    %v5067 = vrot.slane %v5050, %v5066
    %v5073 = vunpack.c.l.b16 %v5045
    %v5074 = vunpack.c.l.b16 %v5046
    %v5075 = vunpack.c.l.b16 %v5047
    %v5076 = vunpack.c.l.b16 %v5048
    %v5077 = vpack.c.b16 %v5074, %v5073
    %v5078 = vpack.c.b16 %v5076, %v5075
    %v5082 = vsel %vm252, %v5062, 0
    %5084 = vmatprep.subr.bf16.mxu0 0
    %5085 = vmatpush1.bf16.msra.mxu0 %v5077
    %5086 = vmatprep.subr.bf16.mxu0 0
    %5087 = vmatpush1.bf16.msra.mxu0 %v5078
    %5088 = vmatprep.subr.bf16.mxu0 0
    %5089 = vmatpush1.bf16.msra.mxu0 0
    %5090 = vmatprep.subr.bf16.mxu0 0
    %5091 = vmatpush1.bf16.msra.mxu0 0
    %5092 = vmatprep.subr.bf16.mxu0 0
    %5093 = vmatpush1.bf16.msra.mxu0 0
    %5094 = vmatprep.subr.bf16.mxu0 0
    %5095 = vmatpush1.bf16.msra.mxu0 0
    %5096 = vmatprep.subr.bf16.mxu0 0
    %5097 = vmatpush1.bf16.msra.mxu0 0
    %5098 = vmatprep.subr.bf16.mxu0 0
    %5099 = vmatpush1.bf16.msra.mxu0 0
    %5100 = vmatprep.subr.bf16.mxu0 0
    %5101 = vmatpush1.bf16.msra.mxu0 0
    %5102 = vmatprep.subr.bf16.mxu0 0
    %5103 = vmatpush1.bf16.msra.mxu0 0
    %5104 = vmatprep.subr.bf16.mxu0 0
    %5105 = vmatpush1.bf16.msra.mxu0 0
    %5106 = vmatprep.subr.bf16.mxu0 0
    %5107 = vmatpush1.bf16.msra.mxu0 0
    %5108 = vmatprep.subr.bf16.mxu0 0
    %5109 = vmatpush1.bf16.msra.mxu0 0
    %5110 = vmatprep.subr.bf16.mxu0 0
    %5111 = vmatpush1.bf16.msra.mxu0 0
    %5112 = vmatprep.subr.bf16.mxu0 0
    %5113 = vmatpush1.bf16.msra.mxu0 0
    %5114 = vmatprep.subr.bf16.mxu0 0
    %5115 = vmatpush1.bf16.msra.mxu0 0
    %5116 = vmatprep.mubr.bf16.mxu0 0
    %5117 = vmatmul.mubr.bf16.gmra.mrb[0].mxu0 %v5082
    %v5118 = vpop.f32.mrb[0].mxu0
    %v5119 = vadd.f32 %v5067, %v5118
    %v5120 = vpop.f32.mrb[0].mxu0
    %v5121 = vpop.f32.mrb[0].mxu0
    %v5122 = vadd.f32 %v5067, %v5121
    %v5123 = vpop.f32.mrb[0].mxu0
    %5124 = vdwg.mxu0
    %v5125 = vmax.f32 %v5119, 0.0
    %v5126 = vmax.f32 %v5122, 0.0
    %v5127 = vpack.c.bf16 %v5126, %v5125
    %v5129 = vlaneseq
    %v5130 = vshrl.u32 %v5129, 7
    %v5131 = vsub.s32 0, %v5130
    %v5132 = vrot.slane %v5061, %v5131
    %v5142 = vunpack.c.l.b16 %v5052
    %v5143 = vunpack.c.l.b16 %v5053
    %v5144 = vunpack.c.l.b16 %v5054
    %v5145 = vunpack.c.l.b16 %v5055
    %v5146 = vunpack.c.l.b16 %v5056
    %v5147 = vunpack.c.l.b16 %v5057
    %v5148 = vunpack.c.l.b16 %v5058
    %v5149 = vunpack.c.l.b16 %v5059
    %v5150 = vpack.c.b16 %v5143, %v5142
    %v5151 = vpack.c.b16 %v5145, %v5144
    %v5152 = vpack.c.b16 %v5147, %v5146
    %v5153 = vpack.c.b16 %v5149, %v5148
    %v5159 = vsel %vm2651, %v5127, 0
    %5161 = vmatprep.subr.bf16.mxu0 0
    %5162 = vmatpush1.bf16.msra.mxu0 %v5150
    %5163 = vmatprep.subr.bf16.mxu0 0
    %5164 = vmatpush1.bf16.msra.mxu0 %v5151
    %5165 = vmatprep.subr.bf16.mxu0 0
    %5166 = vmatpush1.bf16.msra.mxu0 %v5152
    %5167 = vmatprep.subr.bf16.mxu0 0
    %5168 = vmatpush1.bf16.msra.mxu0 %v5153
    %5169 = vmatprep.subr.bf16.mxu0 0
    %5170 = vmatpush1.bf16.msra.mxu0 0
    %5171 = vmatprep.subr.bf16.mxu0 0
    %5172 = vmatpush1.bf16.msra.mxu0 0
    %5173 = vmatprep.subr.bf16.mxu0 0
    %5174 = vmatpush1.bf16.msra.mxu0 0
    %5175 = vmatprep.subr.bf16.mxu0 0
    %5176 = vmatpush1.bf16.msra.mxu0 0
    %5177 = vmatprep.subr.bf16.mxu0 0
    %5178 = vmatpush1.bf16.msra.mxu0 0
    %5179 = vmatprep.subr.bf16.mxu0 0
    %5180 = vmatpush1.bf16.msra.mxu0 0
    %5181 = vmatprep.subr.bf16.mxu0 0
    %5182 = vmatpush1.bf16.msra.mxu0 0
    %5183 = vmatprep.subr.bf16.mxu0 0
    %5184 = vmatpush1.bf16.msra.mxu0 0
    %5185 = vmatprep.subr.bf16.mxu0 0
    %5186 = vmatpush1.bf16.msra.mxu0 0
    %5187 = vmatprep.subr.bf16.mxu0 0
    %5188 = vmatpush1.bf16.msra.mxu0 0
    %5189 = vmatprep.subr.bf16.mxu0 0
    %5190 = vmatpush1.bf16.msra.mxu0 0
    %5191 = vmatprep.subr.bf16.mxu0 0
    %5192 = vmatpush1.bf16.msra.mxu0 0
    %5193 = vmatprep.mubr.bf16.mxu0 0
    %5194 = vmatmul.mubr.bf16.gmra.mrb[0].mxu0 %v5159
    %v5195 = vpop.f32.mrb[0].mxu0
    %v5196 = vadd.f32 %v5132, %v5195
    %v5197 = vpop.f32.mrb[0].mxu0
    %v5198 = vpop.f32.mrb[0].mxu0
    %v5199 = vadd.f32 %v5132, %v5198
    %v5200 = vpop.f32.mrb[0].mxu0
    %5201 = vdwg.mxu0
    %v5202 = vadd.f32 %v5042, %v5196
    %v5203 = vadd.f32 %v5043, %v5199
    %s5204 = scalar_lea.vmem %s24, 1
    %v5205 = vld [vmem:[%s5204] sm:$0x1]
    %s5206 = scalar_lea.vmem %s25, 1
    %v5207 = vld [vmem:[%s5206] sm:$0x1]
    %v5208 = vsel %vm252, %v5202, 0.0
    %5209 = vadd.xlane.f32.xlu0 %v5208
    %v5210 = vpop.xlane.xlu0 %5209
    %v5211 = vsel %vm252, %v5203, 0.0
    %5212 = vadd.xlane.f32.xlu0 %v5211
    %v5213 = vpop.xlane.xlu0 %5212
    %v5214 = vmul.f32 %v5210, %v1308
    %v5215 = vmul.f32 %v5213, %v1308
    %v5216 = vsub.f32 %v5202, %v5214
    %v5217 = vsub.f32 %v5203, %v5215
    %v5218 = vmul.f32 %v5216, %v5216
    %v5219 = vmul.f32 %v5217, %v5217
    %v5220 = vsel %vm252, %v5218, 0.0
    %5221 = vadd.xlane.f32.xlu0 %v5220
    %v5222 = vpop.xlane.xlu0 %5221
    %v5223 = vsel %vm252, %v5219, 0.0
    %5224 = vadd.xlane.f32.xlu0 %v5223
    %v5225 = vpop.xlane.xlu0 %5224
    %v5226 = vmul.f32 %v5222, %v1308
    %v5227 = vmul.f32 %v5225, %v1308
    %v5228 = vadd.f32 %v5226, 1e-05
    %v5229 = vadd.f32 %v5227, 1e-05
    %v5230 = vrsqrt.pop %v5228
    %v5231 = vrsqrt.pop %v5229
    %v5232 = vmul.f32 %v5216, %v5230
    %v5233 = vmul.f32 %v5217, %v5231
    %v5235 = vlaneseq
    %v5236 = vshrl.u32 %v5235, 7
    %v5237 = vsub.s32 0, %v5236
    %v5238 = vrot.slane %v5205, %v5237
    %v5240 = vmul.f32 %v5232, %v5238
    %v5241 = vmul.f32 %v5233, %v5238
    %v5243 = vlaneseq
    %v5244 = vshrl.u32 %v5243, 7
    %v5245 = vsub.s32 0, %v5244
    %v5246 = vrot.slane %v5207, %v5245
    %v5248 = vadd.f32 %v5240, %v5246
    %v5249 = vadd.f32 %v5241, %v5246
    %v5250 = vpack.c.bf16 %v5249, %v5248
    %v5251 = vld [vmem:[%s26] sm:$0xf]
    %v5252 = vld [vmem:[%s26 + $0x4] sm:$0xf]
    %v5253 = vld [vmem:[%s26 + $0x8] sm:$0xf]
    %v5254 = vld [vmem:[%s26 + $0xc] sm:$0xf]
    %v5255 = vld [vmem:[%s27] sm:$0x1]
    %v5257 = vlaneseq
    %v5258 = vshrl.u32 %v5257, 7
    %v5259 = vsub.s32 0, %v5258
    %v5260 = vrot.slane %v5255, %v5259
    %v5266 = vunpack.c.l.b16 %v5251
    %v5267 = vunpack.c.l.b16 %v5252
    %v5268 = vunpack.c.l.b16 %v5253
    %v5269 = vunpack.c.l.b16 %v5254
    %v5270 = vpack.c.b16 %v5267, %v5266
    %v5271 = vpack.c.b16 %v5269, %v5268
    %v5275 = vsel %vm252, %v5250, 0
    %5277 = vmatprep.subr.bf16.mxu0 0
    %5278 = vmatpush1.bf16.msra.mxu0 %v5270
    %5279 = vmatprep.subr.bf16.mxu0 0
    %5280 = vmatpush1.bf16.msra.mxu0 %v5271
    %5281 = vmatprep.subr.bf16.mxu0 0
    %5282 = vmatpush1.bf16.msra.mxu0 0
    %5283 = vmatprep.subr.bf16.mxu0 0
    %5284 = vmatpush1.bf16.msra.mxu0 0
    %5285 = vmatprep.subr.bf16.mxu0 0
    %5286 = vmatpush1.bf16.msra.mxu0 0
    %5287 = vmatprep.subr.bf16.mxu0 0
    %5288 = vmatpush1.bf16.msra.mxu0 0
    %5289 = vmatprep.subr.bf16.mxu0 0
    %5290 = vmatpush1.bf16.msra.mxu0 0
    %5291 = vmatprep.subr.bf16.mxu0 0
    %5292 = vmatpush1.bf16.msra.mxu0 0
    %5293 = vmatprep.subr.bf16.mxu0 0
    %5294 = vmatpush1.bf16.msra.mxu0 0
    %5295 = vmatprep.subr.bf16.mxu0 0
    %5296 = vmatpush1.bf16.msra.mxu0 0
    %5297 = vmatprep.subr.bf16.mxu0 0
    %5298 = vmatpush1.bf16.msra.mxu0 0
    %5299 = vmatprep.subr.bf16.mxu0 0
    %5300 = vmatpush1.bf16.msra.mxu0 0
    %5301 = vmatprep.subr.bf16.mxu0 0
    %5302 = vmatpush1.bf16.msra.mxu0 0
    %5303 = vmatprep.subr.bf16.mxu0 0
    %5304 = vmatpush1.bf16.msra.mxu0 0
    %5305 = vmatprep.subr.bf16.mxu0 0
    %5306 = vmatpush1.bf16.msra.mxu0 0
    %5307 = vmatprep.subr.bf16.mxu0 0
    %5308 = vmatpush1.bf16.msra.mxu0 0
    %5309 = vmatprep.mubr.bf16.mxu0 0
    %5310 = vmatmul.mubr.bf16.gmra.mrb[0].mxu0 %v5275
    %v5311 = vpop.f32.mrb[0].mxu0
    %v5312 = vadd.f32 %v5260, %v5311
    %v5313 = vpop.f32.mrb[0].mxu0
    %v5314 = vpop.f32.mrb[0].mxu0
    %v5315 = vadd.f32 %v5260, %v5314
    %v5316 = vpop.f32.mrb[0].mxu0
    %5317 = vdwg.mxu0
    %5318 = vst [vmem:[#allocation2] sm:$0xff] %v5312
    %5319 = vst [vmem:[#allocation2 + $0x8] sm:$0xff] %v5315
    // Predicated region
    $region114: #{inst_transformer_forward.3} parent=1 // pred_check
      _
    $region115: #{inst_transformer_forward.3} parent=1 // pred_check_branch
      %5321 = sbr.rel (0) target = $region117
    $region116: #{inst_transformer_forward.3} parent=1 // pred_region
      %s5323 = ssub.s32 256, 256
      %5324 = vsyncadd [#allocation3], %s5323
      %s5325 = sshll.u32 [#allocation2], 4
      %s5326 = int_to_ptr.vmem [resolvable:$true] %s5325
      %5331 = dma.vmem_to_hbm [thread:$0]  %s5326, 256, %s28, [#allocation3], 128, 128, 8
    $region117: #{inst_transformer_forward.3} parent=1 // pred_fallthru
      _
    // Predicated region
    $region118: #{inst_transformer_forward.3} parent=1 // pred_check
      _
    $region119: #{inst_transformer_forward.3} parent=1 // pred_check_branch
      %5333 = sbr.rel (0) target = $region121
    $region120: #{inst_transformer_forward.3} parent=1 // pred_region
      %5334 = dma.done [#allocation3], 256
    $region121: #{inst_transformer_forward.3} parent=1 // pred_fallthru
      _
    %5335 = vsyncpa [#allocation3], 1

</llo_original>
